<compile_context>
chip_gen: v7x
topology: tpu7x:2x2x1
jax: 0.10.0
libtpu: 0.0.40
codegen_flags: <defaults>
</compile_context>

<pallas_src>
import numpy as np
import jax
import jax.numpy as jnp
from jax.experimental import pallas as pl
from jax.experimental.pallas import tpu as pltpu


# Architecture constants fixed by the PyTorch module.
_H = 4                      # coarse spatial height (latent is 4x4)
_W = 4                      # coarse spatial width
_CHANNELS = (48, 24, 12, 3)  # 48 -> 24 -> 12 -> 3
_KSIZE, _STRIDE, _PAD = 4, 2, 1


# ---------------------------------------------------------------------------
# In-kernel: one ConvTranspose2d(k=4, s=2, p=1) layer, per image.
# ---------------------------------------------------------------------------
def _deconv_layer(in_ref, w_ref, b_ref, *, S, Cin, Cout, act, write):
    """One transposed-conv layer via 4 sub-kernel GEMMs.

    in_ref : (S, S, H+2, (W+2)*Cin) zero-padded planar layout; element
             [sh, sw, 1+a, (1+b)*Cin + c] holds the activation at fine pixel
             (S*a + sh, S*b + sw), channel c.
    w_ref  : (2, 2, 4*W*Cin, W*Cout) bf16 block-diagonal GEMM weights
             (one (ru, rv) sub-kernel per leading index pair).
    b_ref  : (1, W*Cout) f32, bias tiled over the W column blocks.
    write  : write(plane_h, plane_w, block) stores one (H, W*Cout) f32 block,
             the output sub-plane at fine offsets (plane_h, plane_w) of the
             2S x 2S output sub-pixel grid.
    """
    H, W = _H, _W
    for ru in range(2):
        for rv in range(2):
            w = w_ref[ru, rv]                            # (4*W*Cin, W*Cout) bf16
            blocks = []
            for al in range(S):
                for be in range(S):
                    taps = []
                    for dh in range(2):
                        th = al + ru + dh - 1            # fine-row offset analysis
                        dlh, rph = th // S, th % S       # coarse shift / sub-plane
                        for dw in range(2):
                            tw = be + rv + dw - 1
                            dlw, rpw = tw // S, tw % S
                            taps.append(
                                in_ref[rph, rpw,
                                       1 + dlh:1 + dlh + H,
                                       (1 + dlw) * Cin:(1 + dlw + W) * Cin])
                    # (H, 4*W*Cin): K ordering = (dh, dw, b, c)
                    blocks.append(jnp.concatenate(taps, axis=1))
            lhs = blocks[0] if len(blocks) == 1 else jnp.concatenate(blocks, axis=0)
            acc = jnp.dot(lhs.astype(jnp.bfloat16), w,
                          preferred_element_type=jnp.float32)   # (S*S*H, W*Cout)
            acc = acc + b_ref[...]
            if act == "relu":
                acc = jnp.maximum(acc, 0.0)
            else:
                # exp() runs on the EUP; exact divide keeps the output in [0, 1].
                acc = 1.0 / (1.0 + jnp.exp(-acc))
            for al in range(S):
                for be in range(S):
                    idx = al * S + be
                    blk = acc[idx * H:(idx + 1) * H, :]          # (H, W*Cout)
                    write(2 * al + ru, 2 * be + rv, blk)


def _decoder_kernel(x_ref, w1_ref, b1_ref, w2_ref, b2_ref, w3_ref, b3_ref,
                    o_ref, s2_ref, s3_ref):
    H, W = _H, _W
    c0, c1, c2, c3 = _CHANNELS

    # deconv1: 48 -> 24, ReLU   (fine 4x4 -> 8x8; planar S = 1 -> 2)
    s2_ref[...] = jnp.zeros(s2_ref.shape, s2_ref.dtype)

    def write1(ph, pw, blk):
        s2_ref[ph, pw, 1:1 + H, c1:(1 + W) * c1] = blk.astype(s2_ref.dtype)

    _deconv_layer(x_ref, w1_ref, b1_ref, S=1, Cin=c0, Cout=c1,
                  act="relu", write=write1)

    # deconv2: 24 -> 12, ReLU   (8x8 -> 16x16; planar S = 2 -> 4)
    s3_ref[...] = jnp.zeros(s3_ref.shape, s3_ref.dtype)

    def write2(ph, pw, blk):
        s3_ref[ph, pw, 1:1 + H, c2:(1 + W) * c2] = blk.astype(s3_ref.dtype)

    _deconv_layer(s2_ref, w2_ref, b2_ref, S=2, Cin=c1, Cout=c2,
                  act="relu", write=write2)

    # deconv3: 12 -> 3, Sigmoid (16x16 -> 32x32; planar S = 4 -> 8)
    def write3(ph, pw, blk):
        o_ref[ph, pw, :, :] = blk.astype(o_ref.dtype)

    _deconv_layer(s3_ref, w3_ref, b3_ref, S=4, Cin=c2, Cout=c3,
                  act="sigmoid", write=write3)


# ---------------------------------------------------------------------------
# Host-side one-time weight preparation and layout glue.
# ---------------------------------------------------------------------------
def prepare_decoder_params(params):
    """Transform PyTorch-layout ConvTranspose2d params into bf16 block-diagonal
    GEMM matrices (done once, outside the jitted forward)."""
    prepped = {}
    for i in range(3):
        w = np.asarray(jax.device_get(params[f"w{i + 1}"]), np.float32)
        b = np.asarray(jax.device_get(params[f"b{i + 1}"]), np.float32)
        cin, cout = w.shape[0], w.shape[1]
        g = np.zeros((2, 2, 4 * _W * cin, _W * cout), np.float32)
        for ru in range(2):
            for rv in range(2):
                for dh in range(2):
                    for dw in range(2):
                        kh = (_KSIZE - 1) - ru - 2 * dh
                        kw = (_KSIZE - 1) - rv - 2 * dw
                        tap = w[:, :, kh, kw]                    # (cin, cout)
                        t = 2 * dh + dw
                        for col in range(_W):
                            r0 = t * _W * cin + col * cin
                            q0 = col * cout
                            g[ru, rv, r0:r0 + cin, q0:q0 + cout] = tap
        prepped[f"g{i + 1}"] = jnp.asarray(g, jnp.bfloat16)
        prepped[f"bias{i + 1}"] = jnp.asarray(np.tile(b, _W)[None, :], jnp.float32)
    return prepped


def _prep_input(x):
    # (N, 48, 4, 4) NCHW -> zero-padded planar layout (N, 1, 1, 6, 6*48)
    n = x.shape[0]
    xh = jnp.transpose(x, (0, 2, 3, 1))
    xh = jnp.pad(xh, ((0, 0), (1, 1), (1, 1), (0, 0)))
    return xh.reshape(n, 1, 1, _H + 2, (_W + 2) * _CHANNELS[0]).astype(jnp.float32)


def _unshuffle_output(y):
    # (N, 8, 8, 4, 4*3) planar -> NCHW (N, 3, 32, 32)
    n = y.shape[0]
    y = y.reshape(n, 8, 8, _H, _W, _CHANNELS[3])      # (n, sh, sw, a, b, c)
    y = jnp.transpose(y, (0, 5, 3, 1, 4, 2))          # (n, c, a, sh, b, sw)
    return y.reshape(n, _CHANNELS[3], 8 * _H, 8 * _W)


@jax.jit
def decoder_forward(prepped, x):
    n = x.shape[0]
    c0, c1, c2, c3 = _CHANNELS
    xp = _prep_input(x)
    grid_spec = pltpu.PrefetchScalarGridSpec(
        num_scalar_prefetch=0,
        grid=(n,),
        in_specs=[
            pl.BlockSpec((None, 1, 1, _H + 2, (_W + 2) * c0),
                         lambda i: (i, 0, 0, 0, 0)),
            pl.BlockSpec((2, 2, 4 * _W * c0, _W * c1), lambda i: (0, 0, 0, 0)),
            pl.BlockSpec((1, _W * c1), lambda i: (0, 0)),
            pl.BlockSpec((2, 2, 4 * _W * c1, _W * c2), lambda i: (0, 0, 0, 0)),
            pl.BlockSpec((1, _W * c2), lambda i: (0, 0)),
            pl.BlockSpec((2, 2, 4 * _W * c2, _W * c3), lambda i: (0, 0, 0, 0)),
            pl.BlockSpec((1, _W * c3), lambda i: (0, 0)),
        ],
        out_specs=pl.BlockSpec((None, 8, 8, _H, _W * c3),
                               lambda i: (i, 0, 0, 0, 0)),
        scratch_shapes=[
            pltpu.VMEM((2, 2, _H + 2, (_W + 2) * c1), jnp.float32),
            pltpu.VMEM((4, 4, _H + 2, (_W + 2) * c2), jnp.float32),
        ],
    )
    y = pl.pallas_call(
        _decoder_kernel,
        out_shape=jax.ShapeDtypeStruct((n, 8, 8, _H, _W * c3), jnp.float32),
        grid_spec=grid_spec,
        compiler_params=pltpu.CompilerParams(
            dimension_semantics=("parallel",)),
    )(xp, prepped["g1"], prepped["bias1"], prepped["g2"], prepped["bias2"],
      prepped["g3"], prepped["bias3"])
    return _unshuffle_output(y)


# ---------------------------------------------------------------------------
# Reference (pure JAX) and deterministic setup.
# ---------------------------------------------------------------------------
def _decoder_reference(params, x):
    def deconv(x, w, b):
        k, s, p = _KSIZE, _STRIDE, _PAD
        w_conv = jnp.transpose(w[:, :, ::-1, ::-1], (1, 0, 2, 3))
        y = jax.lax.conv_general_dilated(
            x, w_conv, window_strides=(1, 1),
            padding=((k - 1 - p, k - 1 - p), (k - 1 - p, k - 1 - p)),
            lhs_dilation=(s, s),
            dimension_numbers=("NCHW", "OIHW", "NCHW"))
        return y + b[None, :, None, None]

    x = jax.nn.relu(deconv(x, params["w1"], params["b1"]))
    x = jax.nn.relu(deconv(x, params["w2"], params["b2"]))
    return jax.nn.sigmoid(deconv(x, params["w3"], params["b3"]))


def init_params(key):
    ks = jax.random.split(key, 6)

    def uinit(k, shape, fan_in):
        bound = 1.0 / np.sqrt(float(fan_in))
        return jax.random.uniform(k, shape, jnp.float32, -bound, bound)

    cs = _CHANNELS
    p = {}
    for i in range(3):
        cin, cout = cs[i], cs[i + 1]
        fan = cin * _KSIZE * _KSIZE
        p[f"w{i + 1}"] = uinit(ks[2 * i], (cin, cout, _KSIZE, _KSIZE), fan)
        p[f"b{i + 1}"] = uinit(ks[2 * i + 1], (cout,), fan)
    return p


if __name__ == "__main__":
    key = jax.random.PRNGKey(0)
    pkey, xkey = jax.random.split(key)
    params = init_params(pkey)
    # Latent input consistent with the Decoder: (N, 48, 4, 4) -> (N, 3, 32, 32)
    x = jax.random.normal(xkey, (2, _CHANNELS[0], _H, _W), jnp.float32)

    prepped = prepare_decoder_params(params)
    out = decoder_forward(prepped, x)
    out = jax.block_until_ready(out)

    assert out.shape == (2, 3, 32, 32), out.shape
    assert bool(jnp.all(jnp.isfinite(out)))
    assert bool(jnp.all((out >= 0.0) & (out <= 1.0)))

    ref = _decoder_reference(params, x)
    max_err = float(jnp.max(jnp.abs(out - ref)))
    assert max_err < 5e-2, f"max abs error vs reference: {max_err}"

    print("KERNEL_OK")
</pallas_src>

<mosaic_0001>
module attributes {stable_mosaic.version = 11 : i64} {
  func.func @_decoder_kernel(%arg0: i32, %arg1: memref<1x1x1x6x288xf32, #tpu.memory_space<vmem>>, %arg2: memref<2x2x768x96xbf16, #tpu.memory_space<vmem>>, %arg3: memref<1x96xf32, #tpu.memory_space<vmem>>, %arg4: memref<2x2x384x48xbf16, #tpu.memory_space<vmem>>, %arg5: memref<1x48xf32, #tpu.memory_space<vmem>>, %arg6: memref<2x2x192x12xbf16, #tpu.memory_space<vmem>>, %arg7: memref<1x12xf32, #tpu.memory_space<vmem>>, %arg8: memref<1x8x8x4x12xf32, #tpu.memory_space<vmem>>, %arg9: memref<2x2x6x144xf32, #tpu.memory_space<vmem>>, %arg10: memref<4x4x6x72xf32, #tpu.memory_space<vmem>>) attributes {dimension_semantics = [#tpu.dimension_semantics<parallel>], iteration_bounds = array<i64: 2>, scalar_prefetch = 0 : i64, scratch_operands = 2 : i64, tpu.core_type = #tpu.core_type<tc>, window_params = [{transform_indices = @transform_0, window_bounds = array<i64: 1, 1, 1, 6, 288>}, {pipeline_mode = #tpu.pipeline_mode<synchronous>, transform_indices = @transform_1, window_bounds = array<i64: 2, 2, 768, 96>}, {pipeline_mode = #tpu.pipeline_mode<synchronous>, transform_indices = @transform_2, window_bounds = array<i64: 1, 96>}, {pipeline_mode = #tpu.pipeline_mode<synchronous>, transform_indices = @transform_3, window_bounds = array<i64: 2, 2, 384, 48>}, {pipeline_mode = #tpu.pipeline_mode<synchronous>, transform_indices = @transform_4, window_bounds = array<i64: 1, 48>}, {pipeline_mode = #tpu.pipeline_mode<synchronous>, transform_indices = @transform_5, window_bounds = array<i64: 2, 2, 192, 12>}, {pipeline_mode = #tpu.pipeline_mode<synchronous>, transform_indices = @transform_6, window_bounds = array<i64: 1, 12>}, {transform_indices = @transform_7, window_bounds = array<i64: 1, 8, 8, 4, 12>}]} {
    %cst = arith.constant 0.000000e+00 : f32
    %0 = vector.broadcast %cst : f32 to vector<2x2x6x144xf32>
    %c0 = arith.constant 0 : index
    %c0_0 = arith.constant 0 : index
    %c0_1 = arith.constant 0 : index
    %c0_2 = arith.constant 0 : index
    %1 = vector.load %arg9[%c0, %c0_0, %c0_1, %c0_2] : memref<2x2x6x144xf32, #tpu.memory_space<vmem>>, vector<2x2x6x144xf32>
    tpu.vector_store %arg9[%c0, %c0_0, %c0_1, %c0_2], %0 {strides = array<i32>} : memref<2x2x6x144xf32, #tpu.memory_space<vmem>>, vector<2x2x6x144xf32>,
    %c0_3 = arith.constant 0 : index
    %c0_4 = arith.constant 0 : index
    %c0_5 = arith.constant 0 : index
    %c0_6 = arith.constant 0 : index
    %2 = vector.load %arg2[%c0_3, %c0_4, %c0_5, %c0_6] : memref<2x2x768x96xbf16, #tpu.memory_space<vmem>>, vector<1x1x768x96xbf16>
    %3 = vector.shape_cast %2 : vector<1x1x768x96xbf16> to vector<768x96xbf16>
    %c0_7 = arith.constant 0 : index
    %c0_8 = arith.constant 0 : index
    %c0_9 = arith.constant 0 : index
    %c0_10 = arith.constant 0 : index
    %c0_11 = arith.constant 0 : index
    %4 = vector.load %arg1[%c0_7, %c0_8, %c0_9, %c0_10, %c0_11] : memref<1x1x1x6x288xf32, #tpu.memory_space<vmem>>, vector<1x1x1x4x192xf32>
    %5 = vector.shape_cast %4 : vector<1x1x1x4x192xf32> to vector<4x192xf32>
    %c0_12 = arith.constant 0 : index
    %c0_13 = arith.constant 0 : index
    %c0_14 = arith.constant 0 : index
    %c0_15 = arith.constant 0 : index
    %c48 = arith.constant 48 : index
    %6 = vector.load %arg1[%c0_12, %c0_13, %c0_14, %c0_15, %c48] : memref<1x1x1x6x288xf32, #tpu.memory_space<vmem>>, vector<1x1x1x4x192xf32>
    %7 = vector.shape_cast %6 : vector<1x1x1x4x192xf32> to vector<4x192xf32>
    %c0_16 = arith.constant 0 : index
    %c0_17 = arith.constant 0 : index
    %c0_18 = arith.constant 0 : index
    %c1 = arith.constant 1 : index
    %c0_19 = arith.constant 0 : index
    %8 = vector.load %arg1[%c0_16, %c0_17, %c0_18, %c1, %c0_19] : memref<1x1x1x6x288xf32, #tpu.memory_space<vmem>>, vector<1x1x1x4x192xf32>
    %9 = vector.shape_cast %8 : vector<1x1x1x4x192xf32> to vector<4x192xf32>
    %c0_20 = arith.constant 0 : index
    %c0_21 = arith.constant 0 : index
    %c0_22 = arith.constant 0 : index
    %c1_23 = arith.constant 1 : index
    %c48_24 = arith.constant 48 : index
    %10 = vector.load %arg1[%c0_20, %c0_21, %c0_22, %c1_23, %c48_24] : memref<1x1x1x6x288xf32, #tpu.memory_space<vmem>>, vector<1x1x1x4x192xf32>
    %11 = vector.shape_cast %10 : vector<1x1x1x4x192xf32> to vector<4x192xf32>
    %12 = tpu.concatenate %5, %7, %9, %11 in 1 : vector<4x192xf32>, vector<4x192xf32>, vector<4x192xf32>, vector<4x192xf32> -> vector<4x768xf32>
    %13 = arith.truncf %12 : vector<4x768xf32> to vector<4x768xbf16>
    %cst_25 = arith.constant dense<0.000000e+00> : vector<4x96xf32>
    %14 = tpu.matmul %13, %3, %cst_25 {dimension_numbers = #tpu.dot_dimension_numbers<[1], [0], [0], [1], [0, 0, 1, 1], [], []>} : vector<4x768xbf16>, vector<768x96xbf16>, vector<4x96xf32> -> vector<4x96xf32>
    %c0_26 = arith.constant 0 : index
    %c0_27 = arith.constant 0 : index
    %15 = vector.load %arg3[%c0_26, %c0_27] : memref<1x96xf32, #tpu.memory_space<vmem>>, vector<1x96xf32>
    %16 = vector.broadcast %15 : vector<1x96xf32> to vector<4x96xf32>
    %17 = arith.addf %14, %16 : vector<4x96xf32>
    %cst_28 = arith.constant 0.000000e+00 : f32
    %18 = vector.broadcast %cst_28 : f32 to vector<4x96xf32>
    %19 = arith.maximumf %17, %18 : vector<4x96xf32>
    %c0_29 = arith.constant 0 : index
    %c0_30 = arith.constant 0 : index
    %c1_31 = arith.constant 1 : index
    %c24 = arith.constant 24 : index
    %20 = vector.load %arg9[%c0_29, %c0_30, %c1_31, %c24] : memref<2x2x6x144xf32, #tpu.memory_space<vmem>>, vector<1x1x4x96xf32>
    %21 = vector.shape_cast %20 : vector<1x1x4x96xf32> to vector<4x96xf32>
    %22 = vector.shape_cast %19 : vector<4x96xf32> to vector<1x1x4x96xf32>
    tpu.vector_store %arg9[%c0_29, %c0_30, %c1_31, %c24], %22 {strides = array<i32>} : memref<2x2x6x144xf32, #tpu.memory_space<vmem>>, vector<1x1x4x96xf32>,
    %c0_32 = arith.constant 0 : index
    %c1_33 = arith.constant 1 : index
    %c0_34 = arith.constant 0 : index
    %c0_35 = arith.constant 0 : index
    %23 = vector.load %arg2[%c0_32, %c1_33, %c0_34, %c0_35] : memref<2x2x768x96xbf16, #tpu.memory_space<vmem>>, vector<1x1x768x96xbf16>
    %24 = vector.shape_cast %23 : vector<1x1x768x96xbf16> to vector<768x96xbf16>
    %c0_36 = arith.constant 0 : index
    %c0_37 = arith.constant 0 : index
    %c0_38 = arith.constant 0 : index
    %c0_39 = arith.constant 0 : index
    %c48_40 = arith.constant 48 : index
    %25 = vector.load %arg1[%c0_36, %c0_37, %c0_38, %c0_39, %c48_40] : memref<1x1x1x6x288xf32, #tpu.memory_space<vmem>>, vector<1x1x1x4x192xf32>
    %26 = vector.shape_cast %25 : vector<1x1x1x4x192xf32> to vector<4x192xf32>
    %c0_41 = arith.constant 0 : index
    %c0_42 = arith.constant 0 : index
    %c0_43 = arith.constant 0 : index
    %c0_44 = arith.constant 0 : index
    %c96 = arith.constant 96 : index
    %27 = vector.load %arg1[%c0_41, %c0_42, %c0_43, %c0_44, %c96] : memref<1x1x1x6x288xf32, #tpu.memory_space<vmem>>, vector<1x1x1x4x192xf32>
    %28 = vector.shape_cast %27 : vector<1x1x1x4x192xf32> to vector<4x192xf32>
    %c0_45 = arith.constant 0 : index
    %c0_46 = arith.constant 0 : index
    %c0_47 = arith.constant 0 : index
    %c1_48 = arith.constant 1 : index
    %c48_49 = arith.constant 48 : index
    %29 = vector.load %arg1[%c0_45, %c0_46, %c0_47, %c1_48, %c48_49] : memref<1x1x1x6x288xf32, #tpu.memory_space<vmem>>, vector<1x1x1x4x192xf32>
    %30 = vector.shape_cast %29 : vector<1x1x1x4x192xf32> to vector<4x192xf32>
    %c0_50 = arith.constant 0 : index
    %c0_51 = arith.constant 0 : index
    %c0_52 = arith.constant 0 : index
    %c1_53 = arith.constant 1 : index
    %c96_54 = arith.constant 96 : index
    %31 = vector.load %arg1[%c0_50, %c0_51, %c0_52, %c1_53, %c96_54] : memref<1x1x1x6x288xf32, #tpu.memory_space<vmem>>, vector<1x1x1x4x192xf32>
    %32 = vector.shape_cast %31 : vector<1x1x1x4x192xf32> to vector<4x192xf32>
    %33 = tpu.concatenate %26, %28, %30, %32 in 1 : vector<4x192xf32>, vector<4x192xf32>, vector<4x192xf32>, vector<4x192xf32> -> vector<4x768xf32>
    %34 = arith.truncf %33 : vector<4x768xf32> to vector<4x768xbf16>
    %cst_55 = arith.constant dense<0.000000e+00> : vector<4x96xf32>
    %35 = tpu.matmul %34, %24, %cst_55 {dimension_numbers = #tpu.dot_dimension_numbers<[1], [0], [0], [1], [0, 0, 1, 1], [], []>} : vector<4x768xbf16>, vector<768x96xbf16>, vector<4x96xf32> -> vector<4x96xf32>
    %c0_56 = arith.constant 0 : index
    %c0_57 = arith.constant 0 : index
    %36 = vector.load %arg3[%c0_56, %c0_57] : memref<1x96xf32, #tpu.memory_space<vmem>>, vector<1x96xf32>
    %37 = vector.broadcast %36 : vector<1x96xf32> to vector<4x96xf32>
    %38 = arith.addf %35, %37 : vector<4x96xf32>
    %cst_58 = arith.constant 0.000000e+00 : f32
    %39 = vector.broadcast %cst_58 : f32 to vector<4x96xf32>
    %40 = arith.maximumf %38, %39 : vector<4x96xf32>
    %c0_59 = arith.constant 0 : index
    %c1_60 = arith.constant 1 : index
    %c1_61 = arith.constant 1 : index
    %c24_62 = arith.constant 24 : index
    %41 = vector.load %arg9[%c0_59, %c1_60, %c1_61, %c24_62] : memref<2x2x6x144xf32, #tpu.memory_space<vmem>>, vector<1x1x4x96xf32>
    %42 = vector.shape_cast %41 : vector<1x1x4x96xf32> to vector<4x96xf32>
    %43 = vector.shape_cast %40 : vector<4x96xf32> to vector<1x1x4x96xf32>
    tpu.vector_store %arg9[%c0_59, %c1_60, %c1_61, %c24_62], %43 {strides = array<i32>} : memref<2x2x6x144xf32, #tpu.memory_space<vmem>>, vector<1x1x4x96xf32>,
    %c1_63 = arith.constant 1 : index
    %c0_64 = arith.constant 0 : index
    %c0_65 = arith.constant 0 : index
    %c0_66 = arith.constant 0 : index
    %44 = vector.load %arg2[%c1_63, %c0_64, %c0_65, %c0_66] : memref<2x2x768x96xbf16, #tpu.memory_space<vmem>>, vector<1x1x768x96xbf16>
    %45 = vector.shape_cast %44 : vector<1x1x768x96xbf16> to vector<768x96xbf16>
    %c0_67 = arith.constant 0 : index
    %c0_68 = arith.constant 0 : index
    %c0_69 = arith.constant 0 : index
    %c1_70 = arith.constant 1 : index
    %c0_71 = arith.constant 0 : index
    %46 = vector.load %arg1[%c0_67, %c0_68, %c0_69, %c1_70, %c0_71] : memref<1x1x1x6x288xf32, #tpu.memory_space<vmem>>, vector<1x1x1x4x192xf32>
    %47 = vector.shape_cast %46 : vector<1x1x1x4x192xf32> to vector<4x192xf32>
    %c0_72 = arith.constant 0 : index
    %c0_73 = arith.constant 0 : index
    %c0_74 = arith.constant 0 : index
    %c1_75 = arith.constant 1 : index
    %c48_76 = arith.constant 48 : index
    %48 = vector.load %arg1[%c0_72, %c0_73, %c0_74, %c1_75, %c48_76] : memref<1x1x1x6x288xf32, #tpu.memory_space<vmem>>, vector<1x1x1x4x192xf32>
    %49 = vector.shape_cast %48 : vector<1x1x1x4x192xf32> to vector<4x192xf32>
    %c0_77 = arith.constant 0 : index
    %c0_78 = arith.constant 0 : index
    %c0_79 = arith.constant 0 : index
    %c2 = arith.constant 2 : index
    %c0_80 = arith.constant 0 : index
    %50 = vector.load %arg1[%c0_77, %c0_78, %c0_79, %c2, %c0_80] : memref<1x1x1x6x288xf32, #tpu.memory_space<vmem>>, vector<1x1x1x4x192xf32>
    %51 = vector.shape_cast %50 : vector<1x1x1x4x192xf32> to vector<4x192xf32>
    %c0_81 = arith.constant 0 : index
    %c0_82 = arith.constant 0 : index
    %c0_83 = arith.constant 0 : index
    %c2_84 = arith.constant 2 : index
    %c48_85 = arith.constant 48 : index
    %52 = vector.load %arg1[%c0_81, %c0_82, %c0_83, %c2_84, %c48_85] : memref<1x1x1x6x288xf32, #tpu.memory_space<vmem>>, vector<1x1x1x4x192xf32>
    %53 = vector.shape_cast %52 : vector<1x1x1x4x192xf32> to vector<4x192xf32>
    %54 = tpu.concatenate %47, %49, %51, %53 in 1 : vector<4x192xf32>, vector<4x192xf32>, vector<4x192xf32>, vector<4x192xf32> -> vector<4x768xf32>
    %55 = arith.truncf %54 : vector<4x768xf32> to vector<4x768xbf16>
    %cst_86 = arith.constant dense<0.000000e+00> : vector<4x96xf32>
    %56 = tpu.matmul %55, %45, %cst_86 {dimension_numbers = #tpu.dot_dimension_numbers<[1], [0], [0], [1], [0, 0, 1, 1], [], []>} : vector<4x768xbf16>, vector<768x96xbf16>, vector<4x96xf32> -> vector<4x96xf32>
    %c0_87 = arith.constant 0 : index
    %c0_88 = arith.constant 0 : index
    %57 = vector.load %arg3[%c0_87, %c0_88] : memref<1x96xf32, #tpu.memory_space<vmem>>, vector<1x96xf32>
    %58 = vector.broadcast %57 : vector<1x96xf32> to vector<4x96xf32>
    %59 = arith.addf %56, %58 : vector<4x96xf32>
    %cst_89 = arith.constant 0.000000e+00 : f32
    %60 = vector.broadcast %cst_89 : f32 to vector<4x96xf32>
    %61 = arith.maximumf %59, %60 : vector<4x96xf32>
    %c1_90 = arith.constant 1 : index
    %c0_91 = arith.constant 0 : index
    %c1_92 = arith.constant 1 : index
    %c24_93 = arith.constant 24 : index
    %62 = vector.load %arg9[%c1_90, %c0_91, %c1_92, %c24_93] : memref<2x2x6x144xf32, #tpu.memory_space<vmem>>, vector<1x1x4x96xf32>
    %63 = vector.shape_cast %62 : vector<1x1x4x96xf32> to vector<4x96xf32>
    %64 = vector.shape_cast %61 : vector<4x96xf32> to vector<1x1x4x96xf32>
    tpu.vector_store %arg9[%c1_90, %c0_91, %c1_92, %c24_93], %64 {strides = array<i32>} : memref<2x2x6x144xf32, #tpu.memory_space<vmem>>, vector<1x1x4x96xf32>,
    %c1_94 = arith.constant 1 : index
    %c1_95 = arith.constant 1 : index
    %c0_96 = arith.constant 0 : index
    %c0_97 = arith.constant 0 : index
    %65 = vector.load %arg2[%c1_94, %c1_95, %c0_96, %c0_97] : memref<2x2x768x96xbf16, #tpu.memory_space<vmem>>, vector<1x1x768x96xbf16>
    %66 = vector.shape_cast %65 : vector<1x1x768x96xbf16> to vector<768x96xbf16>
    %c0_98 = arith.constant 0 : index
    %c0_99 = arith.constant 0 : index
    %c0_100 = arith.constant 0 : index
    %c1_101 = arith.constant 1 : index
    %c48_102 = arith.constant 48 : index
    %67 = vector.load %arg1[%c0_98, %c0_99, %c0_100, %c1_101, %c48_102] : memref<1x1x1x6x288xf32, #tpu.memory_space<vmem>>, vector<1x1x1x4x192xf32>
    %68 = vector.shape_cast %67 : vector<1x1x1x4x192xf32> to vector<4x192xf32>
    %c0_103 = arith.constant 0 : index
    %c0_104 = arith.constant 0 : index
    %c0_105 = arith.constant 0 : index
    %c1_106 = arith.constant 1 : index
    %c96_107 = arith.constant 96 : index
    %69 = vector.load %arg1[%c0_103, %c0_104, %c0_105, %c1_106, %c96_107] : memref<1x1x1x6x288xf32, #tpu.memory_space<vmem>>, vector<1x1x1x4x192xf32>
    %70 = vector.shape_cast %69 : vector<1x1x1x4x192xf32> to vector<4x192xf32>
    %c0_108 = arith.constant 0 : index
    %c0_109 = arith.constant 0 : index
    %c0_110 = arith.constant 0 : index
    %c2_111 = arith.constant 2 : index
    %c48_112 = arith.constant 48 : index
    %71 = vector.load %arg1[%c0_108, %c0_109, %c0_110, %c2_111, %c48_112] : memref<1x1x1x6x288xf32, #tpu.memory_space<vmem>>, vector<1x1x1x4x192xf32>
    %72 = vector.shape_cast %71 : vector<1x1x1x4x192xf32> to vector<4x192xf32>
    %c0_113 = arith.constant 0 : index
    %c0_114 = arith.constant 0 : index
    %c0_115 = arith.constant 0 : index
    %c2_116 = arith.constant 2 : index
    %c96_117 = arith.constant 96 : index
    %73 = vector.load %arg1[%c0_113, %c0_114, %c0_115, %c2_116, %c96_117] : memref<1x1x1x6x288xf32, #tpu.memory_space<vmem>>, vector<1x1x1x4x192xf32>
    %74 = vector.shape_cast %73 : vector<1x1x1x4x192xf32> to vector<4x192xf32>
    %75 = tpu.concatenate %68, %70, %72, %74 in 1 : vector<4x192xf32>, vector<4x192xf32>, vector<4x192xf32>, vector<4x192xf32> -> vector<4x768xf32>
    %76 = arith.truncf %75 : vector<4x768xf32> to vector<4x768xbf16>
    %cst_118 = arith.constant dense<0.000000e+00> : vector<4x96xf32>
    %77 = tpu.matmul %76, %66, %cst_118 {dimension_numbers = #tpu.dot_dimension_numbers<[1], [0], [0], [1], [0, 0, 1, 1], [], []>} : vector<4x768xbf16>, vector<768x96xbf16>, vector<4x96xf32> -> vector<4x96xf32>
    %c0_119 = arith.constant 0 : index
    %c0_120 = arith.constant 0 : index
    %78 = vector.load %arg3[%c0_119, %c0_120] : memref<1x96xf32, #tpu.memory_space<vmem>>, vector<1x96xf32>
    %79 = vector.broadcast %78 : vector<1x96xf32> to vector<4x96xf32>
    %80 = arith.addf %77, %79 : vector<4x96xf32>
    %cst_121 = arith.constant 0.000000e+00 : f32
    %81 = vector.broadcast %cst_121 : f32 to vector<4x96xf32>
    %82 = arith.maximumf %80, %81 : vector<4x96xf32>
    %c1_122 = arith.constant 1 : index
    %c1_123 = arith.constant 1 : index
    %c1_124 = arith.constant 1 : index
    %c24_125 = arith.constant 24 : index
    %83 = vector.load %arg9[%c1_122, %c1_123, %c1_124, %c24_125] : memref<2x2x6x144xf32, #tpu.memory_space<vmem>>, vector<1x1x4x96xf32>
    %84 = vector.shape_cast %83 : vector<1x1x4x96xf32> to vector<4x96xf32>
    %85 = vector.shape_cast %82 : vector<4x96xf32> to vector<1x1x4x96xf32>
    tpu.vector_store %arg9[%c1_122, %c1_123, %c1_124, %c24_125], %85 {strides = array<i32>} : memref<2x2x6x144xf32, #tpu.memory_space<vmem>>, vector<1x1x4x96xf32>,
    %cst_126 = arith.constant 0.000000e+00 : f32
    %86 = vector.broadcast %cst_126 : f32 to vector<4x4x6x72xf32>
    %c0_127 = arith.constant 0 : index
    %c0_128 = arith.constant 0 : index
    %c0_129 = arith.constant 0 : index
    %c0_130 = arith.constant 0 : index
    %87 = vector.load %arg10[%c0_127, %c0_128, %c0_129, %c0_130] : memref<4x4x6x72xf32, #tpu.memory_space<vmem>>, vector<4x4x6x72xf32>
    tpu.vector_store %arg10[%c0_127, %c0_128, %c0_129, %c0_130], %86 {strides = array<i32>} : memref<4x4x6x72xf32, #tpu.memory_space<vmem>>, vector<4x4x6x72xf32>,
    %c0_131 = arith.constant 0 : index
    %c0_132 = arith.constant 0 : index
    %c0_133 = arith.constant 0 : index
    %c0_134 = arith.constant 0 : index
    %88 = vector.load %arg4[%c0_131, %c0_132, %c0_133, %c0_134] : memref<2x2x384x48xbf16, #tpu.memory_space<vmem>>, vector<1x1x384x48xbf16>
    %89 = vector.shape_cast %88 : vector<1x1x384x48xbf16> to vector<384x48xbf16>
    %c1_135 = arith.constant 1 : index
    %c1_136 = arith.constant 1 : index
    %c0_137 = arith.constant 0 : index
    %c0_138 = arith.constant 0 : index
    %90 = vector.load %arg9[%c1_135, %c1_136, %c0_137, %c0_138] : memref<2x2x6x144xf32, #tpu.memory_space<vmem>>, vector<1x1x4x96xf32>
    %91 = vector.shape_cast %90 : vector<1x1x4x96xf32> to vector<4x96xf32>
    %c1_139 = arith.constant 1 : index
    %c0_140 = arith.constant 0 : index
    %c0_141 = arith.constant 0 : index
    %c24_142 = arith.constant 24 : index
    %92 = vector.load %arg9[%c1_139, %c0_140, %c0_141, %c24_142] : memref<2x2x6x144xf32, #tpu.memory_space<vmem>>, vector<1x1x4x96xf32>
    %93 = vector.shape_cast %92 : vector<1x1x4x96xf32> to vector<4x96xf32>
    %c0_143 = arith.constant 0 : index
    %c1_144 = arith.constant 1 : index
    %c1_145 = arith.constant 1 : index
    %c0_146 = arith.constant 0 : index
    %94 = vector.load %arg9[%c0_143, %c1_144, %c1_145, %c0_146] : memref<2x2x6x144xf32, #tpu.memory_space<vmem>>, vector<1x1x4x96xf32>
    %95 = vector.shape_cast %94 : vector<1x1x4x96xf32> to vector<4x96xf32>
    %c0_147 = arith.constant 0 : index
    %c0_148 = arith.constant 0 : index
    %c1_149 = arith.constant 1 : index
    %c24_150 = arith.constant 24 : index
    %96 = vector.load %arg9[%c0_147, %c0_148, %c1_149, %c24_150] : memref<2x2x6x144xf32, #tpu.memory_space<vmem>>, vector<1x1x4x96xf32>
    %97 = vector.shape_cast %96 : vector<1x1x4x96xf32> to vector<4x96xf32>
    %98 = tpu.concatenate %91, %93, %95, %97 in 1 : vector<4x96xf32>, vector<4x96xf32>, vector<4x96xf32>, vector<4x96xf32> -> vector<4x384xf32>
    %c1_151 = arith.constant 1 : index
    %c0_152 = arith.constant 0 : index
    %c0_153 = arith.constant 0 : index
    %c24_154 = arith.constant 24 : index
    %99 = vector.load %arg9[%c1_151, %c0_152, %c0_153, %c24_154] : memref<2x2x6x144xf32, #tpu.memory_space<vmem>>, vector<1x1x4x96xf32>
    %100 = vector.shape_cast %99 : vector<1x1x4x96xf32> to vector<4x96xf32>
    %c1_155 = arith.constant 1 : index
    %c1_156 = arith.constant 1 : index
    %c0_157 = arith.constant 0 : index
    %c24_158 = arith.constant 24 : index
    %101 = vector.load %arg9[%c1_155, %c1_156, %c0_157, %c24_158] : memref<2x2x6x144xf32, #tpu.memory_space<vmem>>, vector<1x1x4x96xf32>
    %102 = vector.shape_cast %101 : vector<1x1x4x96xf32> to vector<4x96xf32>
    %c0_159 = arith.constant 0 : index
    %c0_160 = arith.constant 0 : index
    %c1_161 = arith.constant 1 : index
    %c24_162 = arith.constant 24 : index
    %103 = vector.load %arg9[%c0_159, %c0_160, %c1_161, %c24_162] : memref<2x2x6x144xf32, #tpu.memory_space<vmem>>, vector<1x1x4x96xf32>
    %104 = vector.shape_cast %103 : vector<1x1x4x96xf32> to vector<4x96xf32>
    %c0_163 = arith.constant 0 : index
    %c1_164 = arith.constant 1 : index
    %c1_165 = arith.constant 1 : index
    %c24_166 = arith.constant 24 : index
    %105 = vector.load %arg9[%c0_163, %c1_164, %c1_165, %c24_166] : memref<2x2x6x144xf32, #tpu.memory_space<vmem>>, vector<1x1x4x96xf32>
    %106 = vector.shape_cast %105 : vector<1x1x4x96xf32> to vector<4x96xf32>
    %107 = tpu.concatenate %100, %102, %104, %106 in 1 : vector<4x96xf32>, vector<4x96xf32>, vector<4x96xf32>, vector<4x96xf32> -> vector<4x384xf32>
    %c0_167 = arith.constant 0 : index
    %c1_168 = arith.constant 1 : index
    %c1_169 = arith.constant 1 : index
    %c0_170 = arith.constant 0 : index
    %108 = vector.load %arg9[%c0_167, %c1_168, %c1_169, %c0_170] : memref<2x2x6x144xf32, #tpu.memory_space<vmem>>, vector<1x1x4x96xf32>
    %109 = vector.shape_cast %108 : vector<1x1x4x96xf32> to vector<4x96xf32>
    %c0_171 = arith.constant 0 : index
    %c0_172 = arith.constant 0 : index
    %c1_173 = arith.constant 1 : index
    %c24_174 = arith.constant 24 : index
    %110 = vector.load %arg9[%c0_171, %c0_172, %c1_173, %c24_174] : memref<2x2x6x144xf32, #tpu.memory_space<vmem>>, vector<1x1x4x96xf32>
    %111 = vector.shape_cast %110 : vector<1x1x4x96xf32> to vector<4x96xf32>
    %c1_175 = arith.constant 1 : index
    %c1_176 = arith.constant 1 : index
    %c1_177 = arith.constant 1 : index
    %c0_178 = arith.constant 0 : index
    %112 = vector.load %arg9[%c1_175, %c1_176, %c1_177, %c0_178] : memref<2x2x6x144xf32, #tpu.memory_space<vmem>>, vector<1x1x4x96xf32>
    %113 = vector.shape_cast %112 : vector<1x1x4x96xf32> to vector<4x96xf32>
    %c1_179 = arith.constant 1 : index
    %c0_180 = arith.constant 0 : index
    %c1_181 = arith.constant 1 : index
    %c24_182 = arith.constant 24 : index
    %114 = vector.load %arg9[%c1_179, %c0_180, %c1_181, %c24_182] : memref<2x2x6x144xf32, #tpu.memory_space<vmem>>, vector<1x1x4x96xf32>
    %115 = vector.shape_cast %114 : vector<1x1x4x96xf32> to vector<4x96xf32>
    %116 = tpu.concatenate %109, %111, %113, %115 in 1 : vector<4x96xf32>, vector<4x96xf32>, vector<4x96xf32>, vector<4x96xf32> -> vector<4x384xf32>
    %c0_183 = arith.constant 0 : index
    %c0_184 = arith.constant 0 : index
    %c1_185 = arith.constant 1 : index
    %c24_186 = arith.constant 24 : index
    %117 = vector.load %arg9[%c0_183, %c0_184, %c1_185, %c24_186] : memref<2x2x6x144xf32, #tpu.memory_space<vmem>>, vector<1x1x4x96xf32>
    %118 = vector.shape_cast %117 : vector<1x1x4x96xf32> to vector<4x96xf32>
    %c0_187 = arith.constant 0 : index
    %c1_188 = arith.constant 1 : index
    %c1_189 = arith.constant 1 : index
    %c24_190 = arith.constant 24 : index
    %119 = vector.load %arg9[%c0_187, %c1_188, %c1_189, %c24_190] : memref<2x2x6x144xf32, #tpu.memory_space<vmem>>, vector<1x1x4x96xf32>
    %120 = vector.shape_cast %119 : vector<1x1x4x96xf32> to vector<4x96xf32>
    %c1_191 = arith.constant 1 : index
    %c0_192 = arith.constant 0 : index
    %c1_193 = arith.constant 1 : index
    %c24_194 = arith.constant 24 : index
    %121 = vector.load %arg9[%c1_191, %c0_192, %c1_193, %c24_194] : memref<2x2x6x144xf32, #tpu.memory_space<vmem>>, vector<1x1x4x96xf32>
    %122 = vector.shape_cast %121 : vector<1x1x4x96xf32> to vector<4x96xf32>
    %c1_195 = arith.constant 1 : index
    %c1_196 = arith.constant 1 : index
    %c1_197 = arith.constant 1 : index
    %c24_198 = arith.constant 24 : index
    %123 = vector.load %arg9[%c1_195, %c1_196, %c1_197, %c24_198] : memref<2x2x6x144xf32, #tpu.memory_space<vmem>>, vector<1x1x4x96xf32>
    %124 = vector.shape_cast %123 : vector<1x1x4x96xf32> to vector<4x96xf32>
    %125 = tpu.concatenate %118, %120, %122, %124 in 1 : vector<4x96xf32>, vector<4x96xf32>, vector<4x96xf32>, vector<4x96xf32> -> vector<4x384xf32>
    %126 = tpu.concatenate %98, %107, %116, %125 in 0 : vector<4x384xf32>, vector<4x384xf32>, vector<4x384xf32>, vector<4x384xf32> -> vector<16x384xf32>
    %127 = arith.truncf %126 : vector<16x384xf32> to vector<16x384xbf16>
    %cst_199 = arith.constant dense<0.000000e+00> : vector<16x48xf32>
    %128 = tpu.matmul %127, %89, %cst_199 {dimension_numbers = #tpu.dot_dimension_numbers<[1], [0], [0], [1], [0, 0, 1, 1], [], []>} : vector<16x384xbf16>, vector<384x48xbf16>, vector<16x48xf32> -> vector<16x48xf32>
    %c0_200 = arith.constant 0 : index
    %c0_201 = arith.constant 0 : index
    %129 = vector.load %arg5[%c0_200, %c0_201] : memref<1x48xf32, #tpu.memory_space<vmem>>, vector<1x48xf32>
    %130 = vector.broadcast %129 : vector<1x48xf32> to vector<16x48xf32>
    %131 = arith.addf %128, %130 : vector<16x48xf32>
    %cst_202 = arith.constant 0.000000e+00 : f32
    %132 = vector.broadcast %cst_202 : f32 to vector<16x48xf32>
    %133 = arith.maximumf %131, %132 : vector<16x48xf32>
    %134 = vector.extract_strided_slice %133 {offsets = [0, 0], sizes = [4, 48], strides = [1, 1]} : vector<16x48xf32> to vector<4x48xf32>
    %c0_203 = arith.constant 0 : index
    %c0_204 = arith.constant 0 : index
    %c1_205 = arith.constant 1 : index
    %c12 = arith.constant 12 : index
    %135 = vector.load %arg10[%c0_203, %c0_204, %c1_205, %c12] : memref<4x4x6x72xf32, #tpu.memory_space<vmem>>, vector<1x1x4x48xf32>
    %136 = vector.shape_cast %135 : vector<1x1x4x48xf32> to vector<4x48xf32>
    %137 = vector.shape_cast %134 : vector<4x48xf32> to vector<1x1x4x48xf32>
    tpu.vector_store %arg10[%c0_203, %c0_204, %c1_205, %c12], %137 {strides = array<i32>} : memref<4x4x6x72xf32, #tpu.memory_space<vmem>>, vector<1x1x4x48xf32>,
    %138 = vector.extract_strided_slice %133 {offsets = [4, 0], sizes = [4, 48], strides = [1, 1]} : vector<16x48xf32> to vector<4x48xf32>
    %c0_206 = arith.constant 0 : index
    %c2_207 = arith.constant 2 : index
    %c1_208 = arith.constant 1 : index
    %c12_209 = arith.constant 12 : index
    %139 = vector.load %arg10[%c0_206, %c2_207, %c1_208, %c12_209] : memref<4x4x6x72xf32, #tpu.memory_space<vmem>>, vector<1x1x4x48xf32>
    %140 = vector.shape_cast %139 : vector<1x1x4x48xf32> to vector<4x48xf32>
    %141 = vector.shape_cast %138 : vector<4x48xf32> to vector<1x1x4x48xf32>
    tpu.vector_store %arg10[%c0_206, %c2_207, %c1_208, %c12_209], %141 {strides = array<i32>} : memref<4x4x6x72xf32, #tpu.memory_space<vmem>>, vector<1x1x4x48xf32>,
    %142 = vector.extract_strided_slice %133 {offsets = [8, 0], sizes = [4, 48], strides = [1, 1]} : vector<16x48xf32> to vector<4x48xf32>
    %c2_210 = arith.constant 2 : index
    %c0_211 = arith.constant 0 : index
    %c1_212 = arith.constant 1 : index
    %c12_213 = arith.constant 12 : index
    %143 = vector.load %arg10[%c2_210, %c0_211, %c1_212, %c12_213] : memref<4x4x6x72xf32, #tpu.memory_space<vmem>>, vector<1x1x4x48xf32>
    %144 = vector.shape_cast %143 : vector<1x1x4x48xf32> to vector<4x48xf32>
    %145 = vector.shape_cast %142 : vector<4x48xf32> to vector<1x1x4x48xf32>
    tpu.vector_store %arg10[%c2_210, %c0_211, %c1_212, %c12_213], %145 {strides = array<i32>} : memref<4x4x6x72xf32, #tpu.memory_space<vmem>>, vector<1x1x4x48xf32>,
    %146 = vector.extract_strided_slice %133 {offsets = [12, 0], sizes = [4, 48], strides = [1, 1]} : vector<16x48xf32> to vector<4x48xf32>
    %c2_214 = arith.constant 2 : index
    %c2_215 = arith.constant 2 : index
    %c1_216 = arith.constant 1 : index
    %c12_217 = arith.constant 12 : index
    %147 = vector.load %arg10[%c2_214, %c2_215, %c1_216, %c12_217] : memref<4x4x6x72xf32, #tpu.memory_space<vmem>>, vector<1x1x4x48xf32>
    %148 = vector.shape_cast %147 : vector<1x1x4x48xf32> to vector<4x48xf32>
    %149 = vector.shape_cast %146 : vector<4x48xf32> to vector<1x1x4x48xf32>
    tpu.vector_store %arg10[%c2_214, %c2_215, %c1_216, %c12_217], %149 {strides = array<i32>} : memref<4x4x6x72xf32, #tpu.memory_space<vmem>>, vector<1x1x4x48xf32>,
    %c0_218 = arith.constant 0 : index
    %c1_219 = arith.constant 1 : index
    %c0_220 = arith.constant 0 : index
    %c0_221 = arith.constant 0 : index
    %150 = vector.load %arg4[%c0_218, %c1_219, %c0_220, %c0_221] : memref<2x2x384x48xbf16, #tpu.memory_space<vmem>>, vector<1x1x384x48xbf16>
    %151 = vector.shape_cast %150 : vector<1x1x384x48xbf16> to vector<384x48xbf16>
    %c1_222 = arith.constant 1 : index
    %c0_223 = arith.constant 0 : index
    %c0_224 = arith.constant 0 : index
    %c24_225 = arith.constant 24 : index
    %152 = vector.load %arg9[%c1_222, %c0_223, %c0_224, %c24_225] : memref<2x2x6x144xf32, #tpu.memory_space<vmem>>, vector<1x1x4x96xf32>
    %153 = vector.shape_cast %152 : vector<1x1x4x96xf32> to vector<4x96xf32>
    %c1_226 = arith.constant 1 : index
    %c1_227 = arith.constant 1 : index
    %c0_228 = arith.constant 0 : index
    %c24_229 = arith.constant 24 : index
    %154 = vector.load %arg9[%c1_226, %c1_227, %c0_228, %c24_229] : memref<2x2x6x144xf32, #tpu.memory_space<vmem>>, vector<1x1x4x96xf32>
    %155 = vector.shape_cast %154 : vector<1x1x4x96xf32> to vector<4x96xf32>
    %c0_230 = arith.constant 0 : index
    %c0_231 = arith.constant 0 : index
    %c1_232 = arith.constant 1 : index
    %c24_233 = arith.constant 24 : index
    %156 = vector.load %arg9[%c0_230, %c0_231, %c1_232, %c24_233] : memref<2x2x6x144xf32, #tpu.memory_space<vmem>>, vector<1x1x4x96xf32>
    %157 = vector.shape_cast %156 : vector<1x1x4x96xf32> to vector<4x96xf32>
    %c0_234 = arith.constant 0 : index
    %c1_235 = arith.constant 1 : index
    %c1_236 = arith.constant 1 : index
    %c24_237 = arith.constant 24 : index
    %158 = vector.load %arg9[%c0_234, %c1_235, %c1_236, %c24_237] : memref<2x2x6x144xf32, #tpu.memory_space<vmem>>, vector<1x1x4x96xf32>
    %159 = vector.shape_cast %158 : vector<1x1x4x96xf32> to vector<4x96xf32>
    %160 = tpu.concatenate %153, %155, %157, %159 in 1 : vector<4x96xf32>, vector<4x96xf32>, vector<4x96xf32>, vector<4x96xf32> -> vector<4x384xf32>
    %c1_238 = arith.constant 1 : index
    %c1_239 = arith.constant 1 : index
    %c0_240 = arith.constant 0 : index
    %c24_241 = arith.constant 24 : index
    %161 = vector.load %arg9[%c1_238, %c1_239, %c0_240, %c24_241] : memref<2x2x6x144xf32, #tpu.memory_space<vmem>>, vector<1x1x4x96xf32>
    %162 = vector.shape_cast %161 : vector<1x1x4x96xf32> to vector<4x96xf32>
    %c1_242 = arith.constant 1 : index
    %c0_243 = arith.constant 0 : index
    %c0_244 = arith.constant 0 : index
    %c48_245 = arith.constant 48 : index
    %163 = vector.load %arg9[%c1_242, %c0_243, %c0_244, %c48_245] : memref<2x2x6x144xf32, #tpu.memory_space<vmem>>, vector<1x1x4x96xf32>
    %164 = vector.shape_cast %163 : vector<1x1x4x96xf32> to vector<4x96xf32>
    %c0_246 = arith.constant 0 : index
    %c1_247 = arith.constant 1 : index
    %c1_248 = arith.constant 1 : index
    %c24_249 = arith.constant 24 : index
    %165 = vector.load %arg9[%c0_246, %c1_247, %c1_248, %c24_249] : memref<2x2x6x144xf32, #tpu.memory_space<vmem>>, vector<1x1x4x96xf32>
    %166 = vector.shape_cast %165 : vector<1x1x4x96xf32> to vector<4x96xf32>
    %c0_250 = arith.constant 0 : index
    %c0_251 = arith.constant 0 : index
    %c1_252 = arith.constant 1 : index
    %c48_253 = arith.constant 48 : index
    %167 = vector.load %arg9[%c0_250, %c0_251, %c1_252, %c48_253] : memref<2x2x6x144xf32, #tpu.memory_space<vmem>>, vector<1x1x4x96xf32>
    %168 = vector.shape_cast %167 : vector<1x1x4x96xf32> to vector<4x96xf32>
    %169 = tpu.concatenate %162, %164, %166, %168 in 1 : vector<4x96xf32>, vector<4x96xf32>, vector<4x96xf32>, vector<4x96xf32> -> vector<4x384xf32>
    %c0_254 = arith.constant 0 : index
    %c0_255 = arith.constant 0 : index
    %c1_256 = arith.constant 1 : index
    %c24_257 = arith.constant 24 : index
    %170 = vector.load %arg9[%c0_254, %c0_255, %c1_256, %c24_257] : memref<2x2x6x144xf32, #tpu.memory_space<vmem>>, vector<1x1x4x96xf32>
    %171 = vector.shape_cast %170 : vector<1x1x4x96xf32> to vector<4x96xf32>
    %c0_258 = arith.constant 0 : index
    %c1_259 = arith.constant 1 : index
    %c1_260 = arith.constant 1 : index
    %c24_261 = arith.constant 24 : index
    %172 = vector.load %arg9[%c0_258, %c1_259, %c1_260, %c24_261] : memref<2x2x6x144xf32, #tpu.memory_space<vmem>>, vector<1x1x4x96xf32>
    %173 = vector.shape_cast %172 : vector<1x1x4x96xf32> to vector<4x96xf32>
    %c1_262 = arith.constant 1 : index
    %c0_263 = arith.constant 0 : index
    %c1_264 = arith.constant 1 : index
    %c24_265 = arith.constant 24 : index
    %174 = vector.load %arg9[%c1_262, %c0_263, %c1_264, %c24_265] : memref<2x2x6x144xf32, #tpu.memory_space<vmem>>, vector<1x1x4x96xf32>
    %175 = vector.shape_cast %174 : vector<1x1x4x96xf32> to vector<4x96xf32>
    %c1_266 = arith.constant 1 : index
    %c1_267 = arith.constant 1 : index
    %c1_268 = arith.constant 1 : index
    %c24_269 = arith.constant 24 : index
    %176 = vector.load %arg9[%c1_266, %c1_267, %c1_268, %c24_269] : memref<2x2x6x144xf32, #tpu.memory_space<vmem>>, vector<1x1x4x96xf32>
    %177 = vector.shape_cast %176 : vector<1x1x4x96xf32> to vector<4x96xf32>
    %178 = tpu.concatenate %171, %173, %175, %177 in 1 : vector<4x96xf32>, vector<4x96xf32>, vector<4x96xf32>, vector<4x96xf32> -> vector<4x384xf32>
    %c0_270 = arith.constant 0 : index
    %c1_271 = arith.constant 1 : index
    %c1_272 = arith.constant 1 : index
    %c24_273 = arith.constant 24 : index
    %179 = vector.load %arg9[%c0_270, %c1_271, %c1_272, %c24_273] : memref<2x2x6x144xf32, #tpu.memory_space<vmem>>, vector<1x1x4x96xf32>
    %180 = vector.shape_cast %179 : vector<1x1x4x96xf32> to vector<4x96xf32>
    %c0_274 = arith.constant 0 : index
    %c0_275 = arith.constant 0 : index
    %c1_276 = arith.constant 1 : index
    %c48_277 = arith.constant 48 : index
    %181 = vector.load %arg9[%c0_274, %c0_275, %c1_276, %c48_277] : memref<2x2x6x144xf32, #tpu.memory_space<vmem>>, vector<1x1x4x96xf32>
    %182 = vector.shape_cast %181 : vector<1x1x4x96xf32> to vector<4x96xf32>
    %c1_278 = arith.constant 1 : index
    %c1_279 = arith.constant 1 : index
    %c1_280 = arith.constant 1 : index
    %c24_281 = arith.constant 24 : index
    %183 = vector.load %arg9[%c1_278, %c1_279, %c1_280, %c24_281] : memref<2x2x6x144xf32, #tpu.memory_space<vmem>>, vector<1x1x4x96xf32>
    %184 = vector.shape_cast %183 : vector<1x1x4x96xf32> to vector<4x96xf32>
    %c1_282 = arith.constant 1 : index
    %c0_283 = arith.constant 0 : index
    %c1_284 = arith.constant 1 : index
    %c48_285 = arith.constant 48 : index
    %185 = vector.load %arg9[%c1_282, %c0_283, %c1_284, %c48_285] : memref<2x2x6x144xf32, #tpu.memory_space<vmem>>, vector<1x1x4x96xf32>
    %186 = vector.shape_cast %185 : vector<1x1x4x96xf32> to vector<4x96xf32>
    %187 = tpu.concatenate %180, %182, %184, %186 in 1 : vector<4x96xf32>, vector<4x96xf32>, vector<4x96xf32>, vector<4x96xf32> -> vector<4x384xf32>
    %188 = tpu.concatenate %160, %169, %178, %187 in 0 : vector<4x384xf32>, vector<4x384xf32>, vector<4x384xf32>, vector<4x384xf32> -> vector<16x384xf32>
    %189 = arith.truncf %188 : vector<16x384xf32> to vector<16x384xbf16>
    %cst_286 = arith.constant dense<0.000000e+00> : vector<16x48xf32>
    %190 = tpu.matmul %189, %151, %cst_286 {dimension_numbers = #tpu.dot_dimension_numbers<[1], [0], [0], [1], [0, 0, 1, 1], [], []>} : vector<16x384xbf16>, vector<384x48xbf16>, vector<16x48xf32> -> vector<16x48xf32>
    %c0_287 = arith.constant 0 : index
    %c0_288 = arith.constant 0 : index
    %191 = vector.load %arg5[%c0_287, %c0_288] : memref<1x48xf32, #tpu.memory_space<vmem>>, vector<1x48xf32>
    %192 = vector.broadcast %191 : vector<1x48xf32> to vector<16x48xf32>
    %193 = arith.addf %190, %192 : vector<16x48xf32>
    %cst_289 = arith.constant 0.000000e+00 : f32
    %194 = vector.broadcast %cst_289 : f32 to vector<16x48xf32>
    %195 = arith.maximumf %193, %194 : vector<16x48xf32>
    %196 = vector.extract_strided_slice %195 {offsets = [0, 0], sizes = [4, 48], strides = [1, 1]} : vector<16x48xf32> to vector<4x48xf32>
    %c0_290 = arith.constant 0 : index
    %c1_291 = arith.constant 1 : index
    %c1_292 = arith.constant 1 : index
    %c12_293 = arith.constant 12 : index
    %197 = vector.load %arg10[%c0_290, %c1_291, %c1_292, %c12_293] : memref<4x4x6x72xf32, #tpu.memory_space<vmem>>, vector<1x1x4x48xf32>
    %198 = vector.shape_cast %197 : vector<1x1x4x48xf32> to vector<4x48xf32>
    %199 = vector.shape_cast %196 : vector<4x48xf32> to vector<1x1x4x48xf32>
    tpu.vector_store %arg10[%c0_290, %c1_291, %c1_292, %c12_293], %199 {strides = array<i32>} : memref<4x4x6x72xf32, #tpu.memory_space<vmem>>, vector<1x1x4x48xf32>,
    %200 = vector.extract_strided_slice %195 {offsets = [4, 0], sizes = [4, 48], strides = [1, 1]} : vector<16x48xf32> to vector<4x48xf32>
    %c0_294 = arith.constant 0 : index
    %c3 = arith.constant 3 : index
    %c1_295 = arith.constant 1 : index
    %c12_296 = arith.constant 12 : index
    %201 = vector.load %arg10[%c0_294, %c3, %c1_295, %c12_296] : memref<4x4x6x72xf32, #tpu.memory_space<vmem>>, vector<1x1x4x48xf32>
    %202 = vector.shape_cast %201 : vector<1x1x4x48xf32> to vector<4x48xf32>
    %203 = vector.shape_cast %200 : vector<4x48xf32> to vector<1x1x4x48xf32>
    tpu.vector_store %arg10[%c0_294, %c3, %c1_295, %c12_296], %203 {strides = array<i32>} : memref<4x4x6x72xf32, #tpu.memory_space<vmem>>, vector<1x1x4x48xf32>,
    %204 = vector.extract_strided_slice %195 {offsets = [8, 0], sizes = [4, 48], strides = [1, 1]} : vector<16x48xf32> to vector<4x48xf32>
    %c2_297 = arith.constant 2 : index
    %c1_298 = arith.constant 1 : index
    %c1_299 = arith.constant 1 : index
    %c12_300 = arith.constant 12 : index
    %205 = vector.load %arg10[%c2_297, %c1_298, %c1_299, %c12_300] : memref<4x4x6x72xf32, #tpu.memory_space<vmem>>, vector<1x1x4x48xf32>
    %206 = vector.shape_cast %205 : vector<1x1x4x48xf32> to vector<4x48xf32>
    %207 = vector.shape_cast %204 : vector<4x48xf32> to vector<1x1x4x48xf32>
    tpu.vector_store %arg10[%c2_297, %c1_298, %c1_299, %c12_300], %207 {strides = array<i32>} : memref<4x4x6x72xf32, #tpu.memory_space<vmem>>, vector<1x1x4x48xf32>,
    %208 = vector.extract_strided_slice %195 {offsets = [12, 0], sizes = [4, 48], strides = [1, 1]} : vector<16x48xf32> to vector<4x48xf32>
    %c2_301 = arith.constant 2 : index
    %c3_302 = arith.constant 3 : index
    %c1_303 = arith.constant 1 : index
    %c12_304 = arith.constant 12 : index
    %209 = vector.load %arg10[%c2_301, %c3_302, %c1_303, %c12_304] : memref<4x4x6x72xf32, #tpu.memory_space<vmem>>, vector<1x1x4x48xf32>
    %210 = vector.shape_cast %209 : vector<1x1x4x48xf32> to vector<4x48xf32>
    %211 = vector.shape_cast %208 : vector<4x48xf32> to vector<1x1x4x48xf32>
    tpu.vector_store %arg10[%c2_301, %c3_302, %c1_303, %c12_304], %211 {strides = array<i32>} : memref<4x4x6x72xf32, #tpu.memory_space<vmem>>, vector<1x1x4x48xf32>,
    %c1_305 = arith.constant 1 : index
    %c0_306 = arith.constant 0 : index
    %c0_307 = arith.constant 0 : index
    %c0_308 = arith.constant 0 : index
    %212 = vector.load %arg4[%c1_305, %c0_306, %c0_307, %c0_308] : memref<2x2x384x48xbf16, #tpu.memory_space<vmem>>, vector<1x1x384x48xbf16>
    %213 = vector.shape_cast %212 : vector<1x1x384x48xbf16> to vector<384x48xbf16>
    %c0_309 = arith.constant 0 : index
    %c1_310 = arith.constant 1 : index
    %c1_311 = arith.constant 1 : index
    %c0_312 = arith.constant 0 : index
    %214 = vector.load %arg9[%c0_309, %c1_310, %c1_311, %c0_312] : memref<2x2x6x144xf32, #tpu.memory_space<vmem>>, vector<1x1x4x96xf32>
    %215 = vector.shape_cast %214 : vector<1x1x4x96xf32> to vector<4x96xf32>
    %c0_313 = arith.constant 0 : index
    %c0_314 = arith.constant 0 : index
    %c1_315 = arith.constant 1 : index
    %c24_316 = arith.constant 24 : index
    %216 = vector.load %arg9[%c0_313, %c0_314, %c1_315, %c24_316] : memref<2x2x6x144xf32, #tpu.memory_space<vmem>>, vector<1x1x4x96xf32>
    %217 = vector.shape_cast %216 : vector<1x1x4x96xf32> to vector<4x96xf32>
    %c1_317 = arith.constant 1 : index
    %c1_318 = arith.constant 1 : index
    %c1_319 = arith.constant 1 : index
    %c0_320 = arith.constant 0 : index
    %218 = vector.load %arg9[%c1_317, %c1_318, %c1_319, %c0_320] : memref<2x2x6x144xf32, #tpu.memory_space<vmem>>, vector<1x1x4x96xf32>
    %219 = vector.shape_cast %218 : vector<1x1x4x96xf32> to vector<4x96xf32>
    %c1_321 = arith.constant 1 : index
    %c0_322 = arith.constant 0 : index
    %c1_323 = arith.constant 1 : index
    %c24_324 = arith.constant 24 : index
    %220 = vector.load %arg9[%c1_321, %c0_322, %c1_323, %c24_324] : memref<2x2x6x144xf32, #tpu.memory_space<vmem>>, vector<1x1x4x96xf32>
    %221 = vector.shape_cast %220 : vector<1x1x4x96xf32> to vector<4x96xf32>
    %222 = tpu.concatenate %215, %217, %219, %221 in 1 : vector<4x96xf32>, vector<4x96xf32>, vector<4x96xf32>, vector<4x96xf32> -> vector<4x384xf32>
    %c0_325 = arith.constant 0 : index
    %c0_326 = arith.constant 0 : index
    %c1_327 = arith.constant 1 : index
    %c24_328 = arith.constant 24 : index
    %223 = vector.load %arg9[%c0_325, %c0_326, %c1_327, %c24_328] : memref<2x2x6x144xf32, #tpu.memory_space<vmem>>, vector<1x1x4x96xf32>
    %224 = vector.shape_cast %223 : vector<1x1x4x96xf32> to vector<4x96xf32>
    %c0_329 = arith.constant 0 : index
    %c1_330 = arith.constant 1 : index
    %c1_331 = arith.constant 1 : index
    %c24_332 = arith.constant 24 : index
    %225 = vector.load %arg9[%c0_329, %c1_330, %c1_331, %c24_332] : memref<2x2x6x144xf32, #tpu.memory_space<vmem>>, vector<1x1x4x96xf32>
    %226 = vector.shape_cast %225 : vector<1x1x4x96xf32> to vector<4x96xf32>
    %c1_333 = arith.constant 1 : index
    %c0_334 = arith.constant 0 : index
    %c1_335 = arith.constant 1 : index
    %c24_336 = arith.constant 24 : index
    %227 = vector.load %arg9[%c1_333, %c0_334, %c1_335, %c24_336] : memref<2x2x6x144xf32, #tpu.memory_space<vmem>>, vector<1x1x4x96xf32>
    %228 = vector.shape_cast %227 : vector<1x1x4x96xf32> to vector<4x96xf32>
    %c1_337 = arith.constant 1 : index
    %c1_338 = arith.constant 1 : index
    %c1_339 = arith.constant 1 : index
    %c24_340 = arith.constant 24 : index
    %229 = vector.load %arg9[%c1_337, %c1_338, %c1_339, %c24_340] : memref<2x2x6x144xf32, #tpu.memory_space<vmem>>, vector<1x1x4x96xf32>
    %230 = vector.shape_cast %229 : vector<1x1x4x96xf32> to vector<4x96xf32>
    %231 = tpu.concatenate %224, %226, %228, %230 in 1 : vector<4x96xf32>, vector<4x96xf32>, vector<4x96xf32>, vector<4x96xf32> -> vector<4x384xf32>
    %c1_341 = arith.constant 1 : index
    %c1_342 = arith.constant 1 : index
    %c1_343 = arith.constant 1 : index
    %c0_344 = arith.constant 0 : index
    %232 = vector.load %arg9[%c1_341, %c1_342, %c1_343, %c0_344] : memref<2x2x6x144xf32, #tpu.memory_space<vmem>>, vector<1x1x4x96xf32>
    %233 = vector.shape_cast %232 : vector<1x1x4x96xf32> to vector<4x96xf32>
    %c1_345 = arith.constant 1 : index
    %c0_346 = arith.constant 0 : index
    %c1_347 = arith.constant 1 : index
    %c24_348 = arith.constant 24 : index
    %234 = vector.load %arg9[%c1_345, %c0_346, %c1_347, %c24_348] : memref<2x2x6x144xf32, #tpu.memory_space<vmem>>, vector<1x1x4x96xf32>
    %235 = vector.shape_cast %234 : vector<1x1x4x96xf32> to vector<4x96xf32>
    %c0_349 = arith.constant 0 : index
    %c1_350 = arith.constant 1 : index
    %c2_351 = arith.constant 2 : index
    %c0_352 = arith.constant 0 : index
    %236 = vector.load %arg9[%c0_349, %c1_350, %c2_351, %c0_352] : memref<2x2x6x144xf32, #tpu.memory_space<vmem>>, vector<1x1x4x96xf32>
    %237 = vector.shape_cast %236 : vector<1x1x4x96xf32> to vector<4x96xf32>
    %c0_353 = arith.constant 0 : index
    %c0_354 = arith.constant 0 : index
    %c2_355 = arith.constant 2 : index
    %c24_356 = arith.constant 24 : index
    %238 = vector.load %arg9[%c0_353, %c0_354, %c2_355, %c24_356] : memref<2x2x6x144xf32, #tpu.memory_space<vmem>>, vector<1x1x4x96xf32>
    %239 = vector.shape_cast %238 : vector<1x1x4x96xf32> to vector<4x96xf32>
    %240 = tpu.concatenate %233, %235, %237, %239 in 1 : vector<4x96xf32>, vector<4x96xf32>, vector<4x96xf32>, vector<4x96xf32> -> vector<4x384xf32>
    %c1_357 = arith.constant 1 : index
    %c0_358 = arith.constant 0 : index
    %c1_359 = arith.constant 1 : index
    %c24_360 = arith.constant 24 : index
    %241 = vector.load %arg9[%c1_357, %c0_358, %c1_359, %c24_360] : memref<2x2x6x144xf32, #tpu.memory_space<vmem>>, vector<1x1x4x96xf32>
    %242 = vector.shape_cast %241 : vector<1x1x4x96xf32> to vector<4x96xf32>
    %c1_361 = arith.constant 1 : index
    %c1_362 = arith.constant 1 : index
    %c1_363 = arith.constant 1 : index
    %c24_364 = arith.constant 24 : index
    %243 = vector.load %arg9[%c1_361, %c1_362, %c1_363, %c24_364] : memref<2x2x6x144xf32, #tpu.memory_space<vmem>>, vector<1x1x4x96xf32>
    %244 = vector.shape_cast %243 : vector<1x1x4x96xf32> to vector<4x96xf32>
    %c0_365 = arith.constant 0 : index
    %c0_366 = arith.constant 0 : index
    %c2_367 = arith.constant 2 : index
    %c24_368 = arith.constant 24 : index
    %245 = vector.load %arg9[%c0_365, %c0_366, %c2_367, %c24_368] : memref<2x2x6x144xf32, #tpu.memory_space<vmem>>, vector<1x1x4x96xf32>
    %246 = vector.shape_cast %245 : vector<1x1x4x96xf32> to vector<4x96xf32>
    %c0_369 = arith.constant 0 : index
    %c1_370 = arith.constant 1 : index
    %c2_371 = arith.constant 2 : index
    %c24_372 = arith.constant 24 : index
    %247 = vector.load %arg9[%c0_369, %c1_370, %c2_371, %c24_372] : memref<2x2x6x144xf32, #tpu.memory_space<vmem>>, vector<1x1x4x96xf32>
    %248 = vector.shape_cast %247 : vector<1x1x4x96xf32> to vector<4x96xf32>
    %249 = tpu.concatenate %242, %244, %246, %248 in 1 : vector<4x96xf32>, vector<4x96xf32>, vector<4x96xf32>, vector<4x96xf32> -> vector<4x384xf32>
    %250 = tpu.concatenate %222, %231, %240, %249 in 0 : vector<4x384xf32>, vector<4x384xf32>, vector<4x384xf32>, vector<4x384xf32> -> vector<16x384xf32>
    %251 = arith.truncf %250 : vector<16x384xf32> to vector<16x384xbf16>
    %cst_373 = arith.constant dense<0.000000e+00> : vector<16x48xf32>
    %252 = tpu.matmul %251, %213, %cst_373 {dimension_numbers = #tpu.dot_dimension_numbers<[1], [0], [0], [1], [0, 0, 1, 1], [], []>} : vector<16x384xbf16>, vector<384x48xbf16>, vector<16x48xf32> -> vector<16x48xf32>
    %c0_374 = arith.constant 0 : index
    %c0_375 = arith.constant 0 : index
    %253 = vector.load %arg5[%c0_374, %c0_375] : memref<1x48xf32, #tpu.memory_space<vmem>>, vector<1x48xf32>
    %254 = vector.broadcast %253 : vector<1x48xf32> to vector<16x48xf32>
    %255 = arith.addf %252, %254 : vector<16x48xf32>
    %cst_376 = arith.constant 0.000000e+00 : f32
    %256 = vector.broadcast %cst_376 : f32 to vector<16x48xf32>
    %257 = arith.maximumf %255, %256 : vector<16x48xf32>
    %258 = vector.extract_strided_slice %257 {offsets = [0, 0], sizes = [4, 48], strides = [1, 1]} : vector<16x48xf32> to vector<4x48xf32>
    %c1_377 = arith.constant 1 : index
    %c0_378 = arith.constant 0 : index
    %c1_379 = arith.constant 1 : index
    %c12_380 = arith.constant 12 : index
    %259 = vector.load %arg10[%c1_377, %c0_378, %c1_379, %c12_380] : memref<4x4x6x72xf32, #tpu.memory_space<vmem>>, vector<1x1x4x48xf32>
    %260 = vector.shape_cast %259 : vector<1x1x4x48xf32> to vector<4x48xf32>
    %261 = vector.shape_cast %258 : vector<4x48xf32> to vector<1x1x4x48xf32>
    tpu.vector_store %arg10[%c1_377, %c0_378, %c1_379, %c12_380], %261 {strides = array<i32>} : memref<4x4x6x72xf32, #tpu.memory_space<vmem>>, vector<1x1x4x48xf32>,
    %262 = vector.extract_strided_slice %257 {offsets = [4, 0], sizes = [4, 48], strides = [1, 1]} : vector<16x48xf32> to vector<4x48xf32>
    %c1_381 = arith.constant 1 : index
    %c2_382 = arith.constant 2 : index
    %c1_383 = arith.constant 1 : index
    %c12_384 = arith.constant 12 : index
    %263 = vector.load %arg10[%c1_381, %c2_382, %c1_383, %c12_384] : memref<4x4x6x72xf32, #tpu.memory_space<vmem>>, vector<1x1x4x48xf32>
    %264 = vector.shape_cast %263 : vector<1x1x4x48xf32> to vector<4x48xf32>
    %265 = vector.shape_cast %262 : vector<4x48xf32> to vector<1x1x4x48xf32>
    tpu.vector_store %arg10[%c1_381, %c2_382, %c1_383, %c12_384], %265 {strides = array<i32>} : memref<4x4x6x72xf32, #tpu.memory_space<vmem>>, vector<1x1x4x48xf32>,
    %266 = vector.extract_strided_slice %257 {offsets = [8, 0], sizes = [4, 48], strides = [1, 1]} : vector<16x48xf32> to vector<4x48xf32>
    %c3_385 = arith.constant 3 : index
    %c0_386 = arith.constant 0 : index
    %c1_387 = arith.constant 1 : index
    %c12_388 = arith.constant 12 : index
    %267 = vector.load %arg10[%c3_385, %c0_386, %c1_387, %c12_388] : memref<4x4x6x72xf32, #tpu.memory_space<vmem>>, vector<1x1x4x48xf32>
    %268 = vector.shape_cast %267 : vector<1x1x4x48xf32> to vector<4x48xf32>
    %269 = vector.shape_cast %266 : vector<4x48xf32> to vector<1x1x4x48xf32>
    tpu.vector_store %arg10[%c3_385, %c0_386, %c1_387, %c12_388], %269 {strides = array<i32>} : memref<4x4x6x72xf32, #tpu.memory_space<vmem>>, vector<1x1x4x48xf32>,
    %270 = vector.extract_strided_slice %257 {offsets = [12, 0], sizes = [4, 48], strides = [1, 1]} : vector<16x48xf32> to vector<4x48xf32>
    %c3_389 = arith.constant 3 : index
    %c2_390 = arith.constant 2 : index
    %c1_391 = arith.constant 1 : index
    %c12_392 = arith.constant 12 : index
    %271 = vector.load %arg10[%c3_389, %c2_390, %c1_391, %c12_392] : memref<4x4x6x72xf32, #tpu.memory_space<vmem>>, vector<1x1x4x48xf32>
    %272 = vector.shape_cast %271 : vector<1x1x4x48xf32> to vector<4x48xf32>
    %273 = vector.shape_cast %270 : vector<4x48xf32> to vector<1x1x4x48xf32>
    tpu.vector_store %arg10[%c3_389, %c2_390, %c1_391, %c12_392], %273 {strides = array<i32>} : memref<4x4x6x72xf32, #tpu.memory_space<vmem>>, vector<1x1x4x48xf32>,
    %c1_393 = arith.constant 1 : index
    %c1_394 = arith.constant 1 : index
    %c0_395 = arith.constant 0 : index
    %c0_396 = arith.constant 0 : index
    %274 = vector.load %arg4[%c1_393, %c1_394, %c0_395, %c0_396] : memref<2x2x384x48xbf16, #tpu.memory_space<vmem>>, vector<1x1x384x48xbf16>
    %275 = vector.shape_cast %274 : vector<1x1x384x48xbf16> to vector<384x48xbf16>
    %c0_397 = arith.constant 0 : index
    %c0_398 = arith.constant 0 : index
    %c1_399 = arith.constant 1 : index
    %c24_400 = arith.constant 24 : index
    %276 = vector.load %arg9[%c0_397, %c0_398, %c1_399, %c24_400] : memref<2x2x6x144xf32, #tpu.memory_space<vmem>>, vector<1x1x4x96xf32>
    %277 = vector.shape_cast %276 : vector<1x1x4x96xf32> to vector<4x96xf32>
    %c0_401 = arith.constant 0 : index
    %c1_402 = arith.constant 1 : index
    %c1_403 = arith.constant 1 : index
    %c24_404 = arith.constant 24 : index
    %278 = vector.load %arg9[%c0_401, %c1_402, %c1_403, %c24_404] : memref<2x2x6x144xf32, #tpu.memory_space<vmem>>, vector<1x1x4x96xf32>
    %279 = vector.shape_cast %278 : vector<1x1x4x96xf32> to vector<4x96xf32>
    %c1_405 = arith.constant 1 : index
    %c0_406 = arith.constant 0 : index
    %c1_407 = arith.constant 1 : index
    %c24_408 = arith.constant 24 : index
    %280 = vector.load %arg9[%c1_405, %c0_406, %c1_407, %c24_408] : memref<2x2x6x144xf32, #tpu.memory_space<vmem>>, vector<1x1x4x96xf32>
    %281 = vector.shape_cast %280 : vector<1x1x4x96xf32> to vector<4x96xf32>
    %c1_409 = arith.constant 1 : index
    %c1_410 = arith.constant 1 : index
    %c1_411 = arith.constant 1 : index
    %c24_412 = arith.constant 24 : index
    %282 = vector.load %arg9[%c1_409, %c1_410, %c1_411, %c24_412] : memref<2x2x6x144xf32, #tpu.memory_space<vmem>>, vector<1x1x4x96xf32>
    %283 = vector.shape_cast %282 : vector<1x1x4x96xf32> to vector<4x96xf32>
    %284 = tpu.concatenate %277, %279, %281, %283 in 1 : vector<4x96xf32>, vector<4x96xf32>, vector<4x96xf32>, vector<4x96xf32> -> vector<4x384xf32>
    %c0_413 = arith.constant 0 : index
    %c1_414 = arith.constant 1 : index
    %c1_415 = arith.constant 1 : index
    %c24_416 = arith.constant 24 : index
    %285 = vector.load %arg9[%c0_413, %c1_414, %c1_415, %c24_416] : memref<2x2x6x144xf32, #tpu.memory_space<vmem>>, vector<1x1x4x96xf32>
    %286 = vector.shape_cast %285 : vector<1x1x4x96xf32> to vector<4x96xf32>
    %c0_417 = arith.constant 0 : index
    %c0_418 = arith.constant 0 : index
    %c1_419 = arith.constant 1 : index
    %c48_420 = arith.constant 48 : index
    %287 = vector.load %arg9[%c0_417, %c0_418, %c1_419, %c48_420] : memref<2x2x6x144xf32, #tpu.memory_space<vmem>>, vector<1x1x4x96xf32>
    %288 = vector.shape_cast %287 : vector<1x1x4x96xf32> to vector<4x96xf32>
    %c1_421 = arith.constant 1 : index
    %c1_422 = arith.constant 1 : index
    %c1_423 = arith.constant 1 : index
    %c24_424 = arith.constant 24 : index
    %289 = vector.load %arg9[%c1_421, %c1_422, %c1_423, %c24_424] : memref<2x2x6x144xf32, #tpu.memory_space<vmem>>, vector<1x1x4x96xf32>
    %290 = vector.shape_cast %289 : vector<1x1x4x96xf32> to vector<4x96xf32>
    %c1_425 = arith.constant 1 : index
    %c0_426 = arith.constant 0 : index
    %c1_427 = arith.constant 1 : index
    %c48_428 = arith.constant 48 : index
    %291 = vector.load %arg9[%c1_425, %c0_426, %c1_427, %c48_428] : memref<2x2x6x144xf32, #tpu.memory_space<vmem>>, vector<1x1x4x96xf32>
    %292 = vector.shape_cast %291 : vector<1x1x4x96xf32> to vector<4x96xf32>
    %293 = tpu.concatenate %286, %288, %290, %292 in 1 : vector<4x96xf32>, vector<4x96xf32>, vector<4x96xf32>, vector<4x96xf32> -> vector<4x384xf32>
    %c1_429 = arith.constant 1 : index
    %c0_430 = arith.constant 0 : index
    %c1_431 = arith.constant 1 : index
    %c24_432 = arith.constant 24 : index
    %294 = vector.load %arg9[%c1_429, %c0_430, %c1_431, %c24_432] : memref<2x2x6x144xf32, #tpu.memory_space<vmem>>, vector<1x1x4x96xf32>
    %295 = vector.shape_cast %294 : vector<1x1x4x96xf32> to vector<4x96xf32>
    %c1_433 = arith.constant 1 : index
    %c1_434 = arith.constant 1 : index
    %c1_435 = arith.constant 1 : index
    %c24_436 = arith.constant 24 : index
    %296 = vector.load %arg9[%c1_433, %c1_434, %c1_435, %c24_436] : memref<2x2x6x144xf32, #tpu.memory_space<vmem>>, vector<1x1x4x96xf32>
    %297 = vector.shape_cast %296 : vector<1x1x4x96xf32> to vector<4x96xf32>
    %c0_437 = arith.constant 0 : index
    %c0_438 = arith.constant 0 : index
    %c2_439 = arith.constant 2 : index
    %c24_440 = arith.constant 24 : index
    %298 = vector.load %arg9[%c0_437, %c0_438, %c2_439, %c24_440] : memref<2x2x6x144xf32, #tpu.memory_space<vmem>>, vector<1x1x4x96xf32>
    %299 = vector.shape_cast %298 : vector<1x1x4x96xf32> to vector<4x96xf32>
    %c0_441 = arith.constant 0 : index
    %c1_442 = arith.constant 1 : index
    %c2_443 = arith.constant 2 : index
    %c24_444 = arith.constant 24 : index
    %300 = vector.load %arg9[%c0_441, %c1_442, %c2_443, %c24_444] : memref<2x2x6x144xf32, #tpu.memory_space<vmem>>, vector<1x1x4x96xf32>
    %301 = vector.shape_cast %300 : vector<1x1x4x96xf32> to vector<4x96xf32>
    %302 = tpu.concatenate %295, %297, %299, %301 in 1 : vector<4x96xf32>, vector<4x96xf32>, vector<4x96xf32>, vector<4x96xf32> -> vector<4x384xf32>
    %c1_445 = arith.constant 1 : index
    %c1_446 = arith.constant 1 : index
    %c1_447 = arith.constant 1 : index
    %c24_448 = arith.constant 24 : index
    %303 = vector.load %arg9[%c1_445, %c1_446, %c1_447, %c24_448] : memref<2x2x6x144xf32, #tpu.memory_space<vmem>>, vector<1x1x4x96xf32>
    %304 = vector.shape_cast %303 : vector<1x1x4x96xf32> to vector<4x96xf32>
    %c1_449 = arith.constant 1 : index
    %c0_450 = arith.constant 0 : index
    %c1_451 = arith.constant 1 : index
    %c48_452 = arith.constant 48 : index
    %305 = vector.load %arg9[%c1_449, %c0_450, %c1_451, %c48_452] : memref<2x2x6x144xf32, #tpu.memory_space<vmem>>, vector<1x1x4x96xf32>
    %306 = vector.shape_cast %305 : vector<1x1x4x96xf32> to vector<4x96xf32>
    %c0_453 = arith.constant 0 : index
    %c1_454 = arith.constant 1 : index
    %c2_455 = arith.constant 2 : index
    %c24_456 = arith.constant 24 : index
    %307 = vector.load %arg9[%c0_453, %c1_454, %c2_455, %c24_456] : memref<2x2x6x144xf32, #tpu.memory_space<vmem>>, vector<1x1x4x96xf32>
    %308 = vector.shape_cast %307 : vector<1x1x4x96xf32> to vector<4x96xf32>
    %c0_457 = arith.constant 0 : index
    %c0_458 = arith.constant 0 : index
    %c2_459 = arith.constant 2 : index
    %c48_460 = arith.constant 48 : index
    %309 = vector.load %arg9[%c0_457, %c0_458, %c2_459, %c48_460] : memref<2x2x6x144xf32, #tpu.memory_space<vmem>>, vector<1x1x4x96xf32>
    %310 = vector.shape_cast %309 : vector<1x1x4x96xf32> to vector<4x96xf32>
    %311 = tpu.concatenate %304, %306, %308, %310 in 1 : vector<4x96xf32>, vector<4x96xf32>, vector<4x96xf32>, vector<4x96xf32> -> vector<4x384xf32>
    %312 = tpu.concatenate %284, %293, %302, %311 in 0 : vector<4x384xf32>, vector<4x384xf32>, vector<4x384xf32>, vector<4x384xf32> -> vector<16x384xf32>
    %313 = arith.truncf %312 : vector<16x384xf32> to vector<16x384xbf16>
    %cst_461 = arith.constant dense<0.000000e+00> : vector<16x48xf32>
    %314 = tpu.matmul %313, %275, %cst_461 {dimension_numbers = #tpu.dot_dimension_numbers<[1], [0], [0], [1], [0, 0, 1, 1], [], []>} : vector<16x384xbf16>, vector<384x48xbf16>, vector<16x48xf32> -> vector<16x48xf32>
    %c0_462 = arith.constant 0 : index
    %c0_463 = arith.constant 0 : index
    %315 = vector.load %arg5[%c0_462, %c0_463] : memref<1x48xf32, #tpu.memory_space<vmem>>, vector<1x48xf32>
    %316 = vector.broadcast %315 : vector<1x48xf32> to vector<16x48xf32>
    %317 = arith.addf %314, %316 : vector<16x48xf32>
    %cst_464 = arith.constant 0.000000e+00 : f32
    %318 = vector.broadcast %cst_464 : f32 to vector<16x48xf32>
    %319 = arith.maximumf %317, %318 : vector<16x48xf32>
    %320 = vector.extract_strided_slice %319 {offsets = [0, 0], sizes = [4, 48], strides = [1, 1]} : vector<16x48xf32> to vector<4x48xf32>
    %c1_465 = arith.constant 1 : index
    %c1_466 = arith.constant 1 : index
    %c1_467 = arith.constant 1 : index
    %c12_468 = arith.constant 12 : index
    %321 = vector.load %arg10[%c1_465, %c1_466, %c1_467, %c12_468] : memref<4x4x6x72xf32, #tpu.memory_space<vmem>>, vector<1x1x4x48xf32>
    %322 = vector.shape_cast %321 : vector<1x1x4x48xf32> to vector<4x48xf32>
    %323 = vector.shape_cast %320 : vector<4x48xf32> to vector<1x1x4x48xf32>
    tpu.vector_store %arg10[%c1_465, %c1_466, %c1_467, %c12_468], %323 {strides = array<i32>} : memref<4x4x6x72xf32, #tpu.memory_space<vmem>>, vector<1x1x4x48xf32>,
    %324 = vector.extract_strided_slice %319 {offsets = [4, 0], sizes = [4, 48], strides = [1, 1]} : vector<16x48xf32> to vector<4x48xf32>
    %c1_469 = arith.constant 1 : index
    %c3_470 = arith.constant 3 : index
    %c1_471 = arith.constant 1 : index
    %c12_472 = arith.constant 12 : index
    %325 = vector.load %arg10[%c1_469, %c3_470, %c1_471, %c12_472] : memref<4x4x6x72xf32, #tpu.memory_space<vmem>>, vector<1x1x4x48xf32>
    %326 = vector.shape_cast %325 : vector<1x1x4x48xf32> to vector<4x48xf32>
    %327 = vector.shape_cast %324 : vector<4x48xf32> to vector<1x1x4x48xf32>
    tpu.vector_store %arg10[%c1_469, %c3_470, %c1_471, %c12_472], %327 {strides = array<i32>} : memref<4x4x6x72xf32, #tpu.memory_space<vmem>>, vector<1x1x4x48xf32>,
    %328 = vector.extract_strided_slice %319 {offsets = [8, 0], sizes = [4, 48], strides = [1, 1]} : vector<16x48xf32> to vector<4x48xf32>
    %c3_473 = arith.constant 3 : index
    %c1_474 = arith.constant 1 : index
    %c1_475 = arith.constant 1 : index
    %c12_476 = arith.constant 12 : index
    %329 = vector.load %arg10[%c3_473, %c1_474, %c1_475, %c12_476] : memref<4x4x6x72xf32, #tpu.memory_space<vmem>>, vector<1x1x4x48xf32>
    %330 = vector.shape_cast %329 : vector<1x1x4x48xf32> to vector<4x48xf32>
    %331 = vector.shape_cast %328 : vector<4x48xf32> to vector<1x1x4x48xf32>
    tpu.vector_store %arg10[%c3_473, %c1_474, %c1_475, %c12_476], %331 {strides = array<i32>} : memref<4x4x6x72xf32, #tpu.memory_space<vmem>>, vector<1x1x4x48xf32>,
    %332 = vector.extract_strided_slice %319 {offsets = [12, 0], sizes = [4, 48], strides = [1, 1]} : vector<16x48xf32> to vector<4x48xf32>
    %c3_477 = arith.constant 3 : index
    %c3_478 = arith.constant 3 : index
    %c1_479 = arith.constant 1 : index
    %c12_480 = arith.constant 12 : index
    %333 = vector.load %arg10[%c3_477, %c3_478, %c1_479, %c12_480] : memref<4x4x6x72xf32, #tpu.memory_space<vmem>>, vector<1x1x4x48xf32>
    %334 = vector.shape_cast %333 : vector<1x1x4x48xf32> to vector<4x48xf32>
    %335 = vector.shape_cast %332 : vector<4x48xf32> to vector<1x1x4x48xf32>
    tpu.vector_store %arg10[%c3_477, %c3_478, %c1_479, %c12_480], %335 {strides = array<i32>} : memref<4x4x6x72xf32, #tpu.memory_space<vmem>>, vector<1x1x4x48xf32>,
    %c0_481 = arith.constant 0 : index
    %c0_482 = arith.constant 0 : index
    %c0_483 = arith.constant 0 : index
    %c0_484 = arith.constant 0 : index
    %336 = vector.load %arg6[%c0_481, %c0_482, %c0_483, %c0_484] : memref<2x2x192x12xbf16, #tpu.memory_space<vmem>>, vector<1x1x192x12xbf16>
    %337 = vector.shape_cast %336 : vector<1x1x192x12xbf16> to vector<192x12xbf16>
    %c3_485 = arith.constant 3 : index
    %c3_486 = arith.constant 3 : index
    %c0_487 = arith.constant 0 : index
    %c0_488 = arith.constant 0 : index
    %338 = vector.load %arg10[%c3_485, %c3_486, %c0_487, %c0_488] : memref<4x4x6x72xf32, #tpu.memory_space<vmem>>, vector<1x1x4x48xf32>
    %339 = vector.shape_cast %338 : vector<1x1x4x48xf32> to vector<4x48xf32>
    %c3_489 = arith.constant 3 : index
    %c0_490 = arith.constant 0 : index
    %c0_491 = arith.constant 0 : index
    %c12_492 = arith.constant 12 : index
    %340 = vector.load %arg10[%c3_489, %c0_490, %c0_491, %c12_492] : memref<4x4x6x72xf32, #tpu.memory_space<vmem>>, vector<1x1x4x48xf32>
    %341 = vector.shape_cast %340 : vector<1x1x4x48xf32> to vector<4x48xf32>
    %c0_493 = arith.constant 0 : index
    %c3_494 = arith.constant 3 : index
    %c1_495 = arith.constant 1 : index
    %c0_496 = arith.constant 0 : index
    %342 = vector.load %arg10[%c0_493, %c3_494, %c1_495, %c0_496] : memref<4x4x6x72xf32, #tpu.memory_space<vmem>>, vector<1x1x4x48xf32>
    %343 = vector.shape_cast %342 : vector<1x1x4x48xf32> to vector<4x48xf32>
    %c0_497 = arith.constant 0 : index
    %c0_498 = arith.constant 0 : index
    %c1_499 = arith.constant 1 : index
    %c12_500 = arith.constant 12 : index
    %344 = vector.load %arg10[%c0_497, %c0_498, %c1_499, %c12_500] : memref<4x4x6x72xf32, #tpu.memory_space<vmem>>, vector<1x1x4x48xf32>
    %345 = vector.shape_cast %344 : vector<1x1x4x48xf32> to vector<4x48xf32>
    %346 = tpu.concatenate %339, %341, %343, %345 in 1 : vector<4x48xf32>, vector<4x48xf32>, vector<4x48xf32>, vector<4x48xf32> -> vector<4x192xf32>
    %c3_501 = arith.constant 3 : index
    %c0_502 = arith.constant 0 : index
    %c0_503 = arith.constant 0 : index
    %c12_504 = arith.constant 12 : index
    %347 = vector.load %arg10[%c3_501, %c0_502, %c0_503, %c12_504] : memref<4x4x6x72xf32, #tpu.memory_space<vmem>>, vector<1x1x4x48xf32>
    %348 = vector.shape_cast %347 : vector<1x1x4x48xf32> to vector<4x48xf32>
    %c3_505 = arith.constant 3 : index
    %c1_506 = arith.constant 1 : index
    %c0_507 = arith.constant 0 : index
    %c12_508 = arith.constant 12 : index
    %349 = vector.load %arg10[%c3_505, %c1_506, %c0_507, %c12_508] : memref<4x4x6x72xf32, #tpu.memory_space<vmem>>, vector<1x1x4x48xf32>
    %350 = vector.shape_cast %349 : vector<1x1x4x48xf32> to vector<4x48xf32>
    %c0_509 = arith.constant 0 : index
    %c0_510 = arith.constant 0 : index
    %c1_511 = arith.constant 1 : index
    %c12_512 = arith.constant 12 : index
    %351 = vector.load %arg10[%c0_509, %c0_510, %c1_511, %c12_512] : memref<4x4x6x72xf32, #tpu.memory_space<vmem>>, vector<1x1x4x48xf32>
    %352 = vector.shape_cast %351 : vector<1x1x4x48xf32> to vector<4x48xf32>
    %c0_513 = arith.constant 0 : index
    %c1_514 = arith.constant 1 : index
    %c1_515 = arith.constant 1 : index
    %c12_516 = arith.constant 12 : index
    %353 = vector.load %arg10[%c0_513, %c1_514, %c1_515, %c12_516] : memref<4x4x6x72xf32, #tpu.memory_space<vmem>>, vector<1x1x4x48xf32>
    %354 = vector.shape_cast %353 : vector<1x1x4x48xf32> to vector<4x48xf32>
    %355 = tpu.concatenate %348, %350, %352, %354 in 1 : vector<4x48xf32>, vector<4x48xf32>, vector<4x48xf32>, vector<4x48xf32> -> vector<4x192xf32>
    %c3_517 = arith.constant 3 : index
    %c1_518 = arith.constant 1 : index
    %c0_519 = arith.constant 0 : index
    %c12_520 = arith.constant 12 : index
    %356 = vector.load %arg10[%c3_517, %c1_518, %c0_519, %c12_520] : memref<4x4x6x72xf32, #tpu.memory_space<vmem>>, vector<1x1x4x48xf32>
    %357 = vector.shape_cast %356 : vector<1x1x4x48xf32> to vector<4x48xf32>
    %c3_521 = arith.constant 3 : index
    %c2_522 = arith.constant 2 : index
    %c0_523 = arith.constant 0 : index
    %c12_524 = arith.constant 12 : index
    %358 = vector.load %arg10[%c3_521, %c2_522, %c0_523, %c12_524] : memref<4x4x6x72xf32, #tpu.memory_space<vmem>>, vector<1x1x4x48xf32>
    %359 = vector.shape_cast %358 : vector<1x1x4x48xf32> to vector<4x48xf32>
    %c0_525 = arith.constant 0 : index
    %c1_526 = arith.constant 1 : index
    %c1_527 = arith.constant 1 : index
    %c12_528 = arith.constant 12 : index
    %360 = vector.load %arg10[%c0_525, %c1_526, %c1_527, %c12_528] : memref<4x4x6x72xf32, #tpu.memory_space<vmem>>, vector<1x1x4x48xf32>
    %361 = vector.shape_cast %360 : vector<1x1x4x48xf32> to vector<4x48xf32>
    %c0_529 = arith.constant 0 : index
    %c2_530 = arith.constant 2 : index
    %c1_531 = arith.constant 1 : index
    %c12_532 = arith.constant 12 : index
    %362 = vector.load %arg10[%c0_529, %c2_530, %c1_531, %c12_532] : memref<4x4x6x72xf32, #tpu.memory_space<vmem>>, vector<1x1x4x48xf32>
    %363 = vector.shape_cast %362 : vector<1x1x4x48xf32> to vector<4x48xf32>
    %364 = tpu.concatenate %357, %359, %361, %363 in 1 : vector<4x48xf32>, vector<4x48xf32>, vector<4x48xf32>, vector<4x48xf32> -> vector<4x192xf32>
    %c3_533 = arith.constant 3 : index
    %c2_534 = arith.constant 2 : index
    %c0_535 = arith.constant 0 : index
    %c12_536 = arith.constant 12 : index
    %365 = vector.load %arg10[%c3_533, %c2_534, %c0_535, %c12_536] : memref<4x4x6x72xf32, #tpu.memory_space<vmem>>, vector<1x1x4x48xf32>
    %366 = vector.shape_cast %365 : vector<1x1x4x48xf32> to vector<4x48xf32>
    %c3_537 = arith.constant 3 : index
    %c3_538 = arith.constant 3 : index
    %c0_539 = arith.constant 0 : index
    %c12_540 = arith.constant 12 : index
    %367 = vector.load %arg10[%c3_537, %c3_538, %c0_539, %c12_540] : memref<4x4x6x72xf32, #tpu.memory_space<vmem>>, vector<1x1x4x48xf32>
    %368 = vector.shape_cast %367 : vector<1x1x4x48xf32> to vector<4x48xf32>
    %c0_541 = arith.constant 0 : index
    %c2_542 = arith.constant 2 : index
    %c1_543 = arith.constant 1 : index
    %c12_544 = arith.constant 12 : index
    %369 = vector.load %arg10[%c0_541, %c2_542, %c1_543, %c12_544] : memref<4x4x6x72xf32, #tpu.memory_space<vmem>>, vector<1x1x4x48xf32>
    %370 = vector.shape_cast %369 : vector<1x1x4x48xf32> to vector<4x48xf32>
    %c0_545 = arith.constant 0 : index
    %c3_546 = arith.constant 3 : index
    %c1_547 = arith.constant 1 : index
    %c12_548 = arith.constant 12 : index
    %371 = vector.load %arg10[%c0_545, %c3_546, %c1_547, %c12_548] : memref<4x4x6x72xf32, #tpu.memory_space<vmem>>, vector<1x1x4x48xf32>
    %372 = vector.shape_cast %371 : vector<1x1x4x48xf32> to vector<4x48xf32>
    %373 = tpu.concatenate %366, %368, %370, %372 in 1 : vector<4x48xf32>, vector<4x48xf32>, vector<4x48xf32>, vector<4x48xf32> -> vector<4x192xf32>
    %c0_549 = arith.constant 0 : index
    %c3_550 = arith.constant 3 : index
    %c1_551 = arith.constant 1 : index
    %c0_552 = arith.constant 0 : index
    %374 = vector.load %arg10[%c0_549, %c3_550, %c1_551, %c0_552] : memref<4x4x6x72xf32, #tpu.memory_space<vmem>>, vector<1x1x4x48xf32>
    %375 = vector.shape_cast %374 : vector<1x1x4x48xf32> to vector<4x48xf32>
    %c0_553 = arith.constant 0 : index
    %c0_554 = arith.constant 0 : index
    %c1_555 = arith.constant 1 : index
    %c12_556 = arith.constant 12 : index
    %376 = vector.load %arg10[%c0_553, %c0_554, %c1_555, %c12_556] : memref<4x4x6x72xf32, #tpu.memory_space<vmem>>, vector<1x1x4x48xf32>
    %377 = vector.shape_cast %376 : vector<1x1x4x48xf32> to vector<4x48xf32>
    %c1_557 = arith.constant 1 : index
    %c3_558 = arith.constant 3 : index
    %c1_559 = arith.constant 1 : index
    %c0_560 = arith.constant 0 : index
    %378 = vector.load %arg10[%c1_557, %c3_558, %c1_559, %c0_560] : memref<4x4x6x72xf32, #tpu.memory_space<vmem>>, vector<1x1x4x48xf32>
    %379 = vector.shape_cast %378 : vector<1x1x4x48xf32> to vector<4x48xf32>
    %c1_561 = arith.constant 1 : index
    %c0_562 = arith.constant 0 : index
    %c1_563 = arith.constant 1 : index
    %c12_564 = arith.constant 12 : index
    %380 = vector.load %arg10[%c1_561, %c0_562, %c1_563, %c12_564] : memref<4x4x6x72xf32, #tpu.memory_space<vmem>>, vector<1x1x4x48xf32>
    %381 = vector.shape_cast %380 : vector<1x1x4x48xf32> to vector<4x48xf32>
    %382 = tpu.concatenate %375, %377, %379, %381 in 1 : vector<4x48xf32>, vector<4x48xf32>, vector<4x48xf32>, vector<4x48xf32> -> vector<4x192xf32>
    %c0_565 = arith.constant 0 : index
    %c0_566 = arith.constant 0 : index
    %c1_567 = arith.constant 1 : index
    %c12_568 = arith.constant 12 : index
    %383 = vector.load %arg10[%c0_565, %c0_566, %c1_567, %c12_568] : memref<4x4x6x72xf32, #tpu.memory_space<vmem>>, vector<1x1x4x48xf32>
    %384 = vector.shape_cast %383 : vector<1x1x4x48xf32> to vector<4x48xf32>
    %c0_569 = arith.constant 0 : index
    %c1_570 = arith.constant 1 : index
    %c1_571 = arith.constant 1 : index
    %c12_572 = arith.constant 12 : index
    %385 = vector.load %arg10[%c0_569, %c1_570, %c1_571, %c12_572] : memref<4x4x6x72xf32, #tpu.memory_space<vmem>>, vector<1x1x4x48xf32>
    %386 = vector.shape_cast %385 : vector<1x1x4x48xf32> to vector<4x48xf32>
    %c1_573 = arith.constant 1 : index
    %c0_574 = arith.constant 0 : index
    %c1_575 = arith.constant 1 : index
    %c12_576 = arith.constant 12 : index
    %387 = vector.load %arg10[%c1_573, %c0_574, %c1_575, %c12_576] : memref<4x4x6x72xf32, #tpu.memory_space<vmem>>, vector<1x1x4x48xf32>
    %388 = vector.shape_cast %387 : vector<1x1x4x48xf32> to vector<4x48xf32>
    %c1_577 = arith.constant 1 : index
    %c1_578 = arith.constant 1 : index
    %c1_579 = arith.constant 1 : index
    %c12_580 = arith.constant 12 : index
    %389 = vector.load %arg10[%c1_577, %c1_578, %c1_579, %c12_580] : memref<4x4x6x72xf32, #tpu.memory_space<vmem>>, vector<1x1x4x48xf32>
    %390 = vector.shape_cast %389 : vector<1x1x4x48xf32> to vector<4x48xf32>
    %391 = tpu.concatenate %384, %386, %388, %390 in 1 : vector<4x48xf32>, vector<4x48xf32>, vector<4x48xf32>, vector<4x48xf32> -> vector<4x192xf32>
    %c0_581 = arith.constant 0 : index
    %c1_582 = arith.constant 1 : index
    %c1_583 = arith.constant 1 : index
    %c12_584 = arith.constant 12 : index
    %392 = vector.load %arg10[%c0_581, %c1_582, %c1_583, %c12_584] : memref<4x4x6x72xf32, #tpu.memory_space<vmem>>, vector<1x1x4x48xf32>
    %393 = vector.shape_cast %392 : vector<1x1x4x48xf32> to vector<4x48xf32>
    %c0_585 = arith.constant 0 : index
    %c2_586 = arith.constant 2 : index
    %c1_587 = arith.constant 1 : index
    %c12_588 = arith.constant 12 : index
    %394 = vector.load %arg10[%c0_585, %c2_586, %c1_587, %c12_588] : memref<4x4x6x72xf32, #tpu.memory_space<vmem>>, vector<1x1x4x48xf32>
    %395 = vector.shape_cast %394 : vector<1x1x4x48xf32> to vector<4x48xf32>
    %c1_589 = arith.constant 1 : index
    %c1_590 = arith.constant 1 : index
    %c1_591 = arith.constant 1 : index
    %c12_592 = arith.constant 12 : index
    %396 = vector.load %arg10[%c1_589, %c1_590, %c1_591, %c12_592] : memref<4x4x6x72xf32, #tpu.memory_space<vmem>>, vector<1x1x4x48xf32>
    %397 = vector.shape_cast %396 : vector<1x1x4x48xf32> to vector<4x48xf32>
    %c1_593 = arith.constant 1 : index
    %c2_594 = arith.constant 2 : index
    %c1_595 = arith.constant 1 : index
    %c12_596 = arith.constant 12 : index
    %398 = vector.load %arg10[%c1_593, %c2_594, %c1_595, %c12_596] : memref<4x4x6x72xf32, #tpu.memory_space<vmem>>, vector<1x1x4x48xf32>
    %399 = vector.shape_cast %398 : vector<1x1x4x48xf32> to vector<4x48xf32>
    %400 = tpu.concatenate %393, %395, %397, %399 in 1 : vector<4x48xf32>, vector<4x48xf32>, vector<4x48xf32>, vector<4x48xf32> -> vector<4x192xf32>
    %c0_597 = arith.constant 0 : index
    %c2_598 = arith.constant 2 : index
    %c1_599 = arith.constant 1 : index
    %c12_600 = arith.constant 12 : index
    %401 = vector.load %arg10[%c0_597, %c2_598, %c1_599, %c12_600] : memref<4x4x6x72xf32, #tpu.memory_space<vmem>>, vector<1x1x4x48xf32>
    %402 = vector.shape_cast %401 : vector<1x1x4x48xf32> to vector<4x48xf32>
    %c0_601 = arith.constant 0 : index
    %c3_602 = arith.constant 3 : index
    %c1_603 = arith.constant 1 : index
    %c12_604 = arith.constant 12 : index
    %403 = vector.load %arg10[%c0_601, %c3_602, %c1_603, %c12_604] : memref<4x4x6x72xf32, #tpu.memory_space<vmem>>, vector<1x1x4x48xf32>
    %404 = vector.shape_cast %403 : vector<1x1x4x48xf32> to vector<4x48xf32>
    %c1_605 = arith.constant 1 : index
    %c2_606 = arith.constant 2 : index
    %c1_607 = arith.constant 1 : index
    %c12_608 = arith.constant 12 : index
    %405 = vector.load %arg10[%c1_605, %c2_606, %c1_607, %c12_608] : memref<4x4x6x72xf32, #tpu.memory_space<vmem>>, vector<1x1x4x48xf32>
    %406 = vector.shape_cast %405 : vector<1x1x4x48xf32> to vector<4x48xf32>
    %c1_609 = arith.constant 1 : index
    %c3_610 = arith.constant 3 : index
    %c1_611 = arith.constant 1 : index
    %c12_612 = arith.constant 12 : index
    %407 = vector.load %arg10[%c1_609, %c3_610, %c1_611, %c12_612] : memref<4x4x6x72xf32, #tpu.memory_space<vmem>>, vector<1x1x4x48xf32>
    %408 = vector.shape_cast %407 : vector<1x1x4x48xf32> to vector<4x48xf32>
    %409 = tpu.concatenate %402, %404, %406, %408 in 1 : vector<4x48xf32>, vector<4x48xf32>, vector<4x48xf32>, vector<4x48xf32> -> vector<4x192xf32>
    %c1_613 = arith.constant 1 : index
    %c3_614 = arith.constant 3 : index
    %c1_615 = arith.constant 1 : index
    %c0_616 = arith.constant 0 : index
    %410 = vector.load %arg10[%c1_613, %c3_614, %c1_615, %c0_616] : memref<4x4x6x72xf32, #tpu.memory_space<vmem>>, vector<1x1x4x48xf32>
    %411 = vector.shape_cast %410 : vector<1x1x4x48xf32> to vector<4x48xf32>
    %c1_617 = arith.constant 1 : index
    %c0_618 = arith.constant 0 : index
    %c1_619 = arith.constant 1 : index
    %c12_620 = arith.constant 12 : index
    %412 = vector.load %arg10[%c1_617, %c0_618, %c1_619, %c12_620] : memref<4x4x6x72xf32, #tpu.memory_space<vmem>>, vector<1x1x4x48xf32>
    %413 = vector.shape_cast %412 : vector<1x1x4x48xf32> to vector<4x48xf32>
    %c2_621 = arith.constant 2 : index
    %c3_622 = arith.constant 3 : index
    %c1_623 = arith.constant 1 : index
    %c0_624 = arith.constant 0 : index
    %414 = vector.load %arg10[%c2_621, %c3_622, %c1_623, %c0_624] : memref<4x4x6x72xf32, #tpu.memory_space<vmem>>, vector<1x1x4x48xf32>
    %415 = vector.shape_cast %414 : vector<1x1x4x48xf32> to vector<4x48xf32>
    %c2_625 = arith.constant 2 : index
    %c0_626 = arith.constant 0 : index
    %c1_627 = arith.constant 1 : index
    %c12_628 = arith.constant 12 : index
    %416 = vector.load %arg10[%c2_625, %c0_626, %c1_627, %c12_628] : memref<4x4x6x72xf32, #tpu.memory_space<vmem>>, vector<1x1x4x48xf32>
    %417 = vector.shape_cast %416 : vector<1x1x4x48xf32> to vector<4x48xf32>
    %418 = tpu.concatenate %411, %413, %415, %417 in 1 : vector<4x48xf32>, vector<4x48xf32>, vector<4x48xf32>, vector<4x48xf32> -> vector<4x192xf32>
    %c1_629 = arith.constant 1 : index
    %c0_630 = arith.constant 0 : index
    %c1_631 = arith.constant 1 : index
    %c12_632 = arith.constant 12 : index
    %419 = vector.load %arg10[%c1_629, %c0_630, %c1_631, %c12_632] : memref<4x4x6x72xf32, #tpu.memory_space<vmem>>, vector<1x1x4x48xf32>
    %420 = vector.shape_cast %419 : vector<1x1x4x48xf32> to vector<4x48xf32>
    %c1_633 = arith.constant 1 : index
    %c1_634 = arith.constant 1 : index
    %c1_635 = arith.constant 1 : index
    %c12_636 = arith.constant 12 : index
    %421 = vector.load %arg10[%c1_633, %c1_634, %c1_635, %c12_636] : memref<4x4x6x72xf32, #tpu.memory_space<vmem>>, vector<1x1x4x48xf32>
    %422 = vector.shape_cast %421 : vector<1x1x4x48xf32> to vector<4x48xf32>
    %c2_637 = arith.constant 2 : index
    %c0_638 = arith.constant 0 : index
    %c1_639 = arith.constant 1 : index
    %c12_640 = arith.constant 12 : index
    %423 = vector.load %arg10[%c2_637, %c0_638, %c1_639, %c12_640] : memref<4x4x6x72xf32, #tpu.memory_space<vmem>>, vector<1x1x4x48xf32>
    %424 = vector.shape_cast %423 : vector<1x1x4x48xf32> to vector<4x48xf32>
    %c2_641 = arith.constant 2 : index
    %c1_642 = arith.constant 1 : index
    %c1_643 = arith.constant 1 : index
    %c12_644 = arith.constant 12 : index
    %425 = vector.load %arg10[%c2_641, %c1_642, %c1_643, %c12_644] : memref<4x4x6x72xf32, #tpu.memory_space<vmem>>, vector<1x1x4x48xf32>
    %426 = vector.shape_cast %425 : vector<1x1x4x48xf32> to vector<4x48xf32>
    %427 = tpu.concatenate %420, %422, %424, %426 in 1 : vector<4x48xf32>, vector<4x48xf32>, vector<4x48xf32>, vector<4x48xf32> -> vector<4x192xf32>
    %c1_645 = arith.constant 1 : index
    %c1_646 = arith.constant 1 : index
    %c1_647 = arith.constant 1 : index
    %c12_648 = arith.constant 12 : index
    %428 = vector.load %arg10[%c1_645, %c1_646, %c1_647, %c12_648] : memref<4x4x6x72xf32, #tpu.memory_space<vmem>>, vector<1x1x4x48xf32>
    %429 = vector.shape_cast %428 : vector<1x1x4x48xf32> to vector<4x48xf32>
    %c1_649 = arith.constant 1 : index
    %c2_650 = arith.constant 2 : index
    %c1_651 = arith.constant 1 : index
    %c12_652 = arith.constant 12 : index
    %430 = vector.load %arg10[%c1_649, %c2_650, %c1_651, %c12_652] : memref<4x4x6x72xf32, #tpu.memory_space<vmem>>, vector<1x1x4x48xf32>
    %431 = vector.shape_cast %430 : vector<1x1x4x48xf32> to vector<4x48xf32>
    %c2_653 = arith.constant 2 : index
    %c1_654 = arith.constant 1 : index
    %c1_655 = arith.constant 1 : index
    %c12_656 = arith.constant 12 : index
    %432 = vector.load %arg10[%c2_653, %c1_654, %c1_655, %c12_656] : memref<4x4x6x72xf32, #tpu.memory_space<vmem>>, vector<1x1x4x48xf32>
    %433 = vector.shape_cast %432 : vector<1x1x4x48xf32> to vector<4x48xf32>
    %c2_657 = arith.constant 2 : index
    %c2_658 = arith.constant 2 : index
    %c1_659 = arith.constant 1 : index
    %c12_660 = arith.constant 12 : index
    %434 = vector.load %arg10[%c2_657, %c2_658, %c1_659, %c12_660] : memref<4x4x6x72xf32, #tpu.memory_space<vmem>>, vector<1x1x4x48xf32>
    %435 = vector.shape_cast %434 : vector<1x1x4x48xf32> to vector<4x48xf32>
    %436 = tpu.concatenate %429, %431, %433, %435 in 1 : vector<4x48xf32>, vector<4x48xf32>, vector<4x48xf32>, vector<4x48xf32> -> vector<4x192xf32>
    %c1_661 = arith.constant 1 : index
    %c2_662 = arith.constant 2 : index
    %c1_663 = arith.constant 1 : index
    %c12_664 = arith.constant 12 : index
    %437 = vector.load %arg10[%c1_661, %c2_662, %c1_663, %c12_664] : memref<4x4x6x72xf32, #tpu.memory_space<vmem>>, vector<1x1x4x48xf32>
    %438 = vector.shape_cast %437 : vector<1x1x4x48xf32> to vector<4x48xf32>
    %c1_665 = arith.constant 1 : index
    %c3_666 = arith.constant 3 : index
    %c1_667 = arith.constant 1 : index
    %c12_668 = arith.constant 12 : index
    %439 = vector.load %arg10[%c1_665, %c3_666, %c1_667, %c12_668] : memref<4x4x6x72xf32, #tpu.memory_space<vmem>>, vector<1x1x4x48xf32>
    %440 = vector.shape_cast %439 : vector<1x1x4x48xf32> to vector<4x48xf32>
    %c2_669 = arith.constant 2 : index
    %c2_670 = arith.constant 2 : index
    %c1_671 = arith.constant 1 : index
    %c12_672 = arith.constant 12 : index
    %441 = vector.load %arg10[%c2_669, %c2_670, %c1_671, %c12_672] : memref<4x4x6x72xf32, #tpu.memory_space<vmem>>, vector<1x1x4x48xf32>
    %442 = vector.shape_cast %441 : vector<1x1x4x48xf32> to vector<4x48xf32>
    %c2_673 = arith.constant 2 : index
    %c3_674 = arith.constant 3 : index
    %c1_675 = arith.constant 1 : index
    %c12_676 = arith.constant 12 : index
    %443 = vector.load %arg10[%c2_673, %c3_674, %c1_675, %c12_676] : memref<4x4x6x72xf32, #tpu.memory_space<vmem>>, vector<1x1x4x48xf32>
    %444 = vector.shape_cast %443 : vector<1x1x4x48xf32> to vector<4x48xf32>
    %445 = tpu.concatenate %438, %440, %442, %444 in 1 : vector<4x48xf32>, vector<4x48xf32>, vector<4x48xf32>, vector<4x48xf32> -> vector<4x192xf32>
    %c2_677 = arith.constant 2 : index
    %c3_678 = arith.constant 3 : index
    %c1_679 = arith.constant 1 : index
    %c0_680 = arith.constant 0 : index
    %446 = vector.load %arg10[%c2_677, %c3_678, %c1_679, %c0_680] : memref<4x4x6x72xf32, #tpu.memory_space<vmem>>, vector<1x1x4x48xf32>
    %447 = vector.shape_cast %446 : vector<1x1x4x48xf32> to vector<4x48xf32>
    %c2_681 = arith.constant 2 : index
    %c0_682 = arith.constant 0 : index
    %c1_683 = arith.constant 1 : index
    %c12_684 = arith.constant 12 : index
    %448 = vector.load %arg10[%c2_681, %c0_682, %c1_683, %c12_684] : memref<4x4x6x72xf32, #tpu.memory_space<vmem>>, vector<1x1x4x48xf32>
    %449 = vector.shape_cast %448 : vector<1x1x4x48xf32> to vector<4x48xf32>
    %c3_685 = arith.constant 3 : index
    %c3_686 = arith.constant 3 : index
    %c1_687 = arith.constant 1 : index
    %c0_688 = arith.constant 0 : index
    %450 = vector.load %arg10[%c3_685, %c3_686, %c1_687, %c0_688] : memref<4x4x6x72xf32, #tpu.memory_space<vmem>>, vector<1x1x4x48xf32>
    %451 = vector.shape_cast %450 : vector<1x1x4x48xf32> to vector<4x48xf32>
    %c3_689 = arith.constant 3 : index
    %c0_690 = arith.constant 0 : index
    %c1_691 = arith.constant 1 : index
    %c12_692 = arith.constant 12 : index
    %452 = vector.load %arg10[%c3_689, %c0_690, %c1_691, %c12_692] : memref<4x4x6x72xf32, #tpu.memory_space<vmem>>, vector<1x1x4x48xf32>
    %453 = vector.shape_cast %452 : vector<1x1x4x48xf32> to vector<4x48xf32>
    %454 = tpu.concatenate %447, %449, %451, %453 in 1 : vector<4x48xf32>, vector<4x48xf32>, vector<4x48xf32>, vector<4x48xf32> -> vector<4x192xf32>
    %c2_693 = arith.constant 2 : index
    %c0_694 = arith.constant 0 : index
    %c1_695 = arith.constant 1 : index
    %c12_696 = arith.constant 12 : index
    %455 = vector.load %arg10[%c2_693, %c0_694, %c1_695, %c12_696] : memref<4x4x6x72xf32, #tpu.memory_space<vmem>>, vector<1x1x4x48xf32>
    %456 = vector.shape_cast %455 : vector<1x1x4x48xf32> to vector<4x48xf32>
    %c2_697 = arith.constant 2 : index
    %c1_698 = arith.constant 1 : index
    %c1_699 = arith.constant 1 : index
    %c12_700 = arith.constant 12 : index
    %457 = vector.load %arg10[%c2_697, %c1_698, %c1_699, %c12_700] : memref<4x4x6x72xf32, #tpu.memory_space<vmem>>, vector<1x1x4x48xf32>
    %458 = vector.shape_cast %457 : vector<1x1x4x48xf32> to vector<4x48xf32>
    %c3_701 = arith.constant 3 : index
    %c0_702 = arith.constant 0 : index
    %c1_703 = arith.constant 1 : index
    %c12_704 = arith.constant 12 : index
    %459 = vector.load %arg10[%c3_701, %c0_702, %c1_703, %c12_704] : memref<4x4x6x72xf32, #tpu.memory_space<vmem>>, vector<1x1x4x48xf32>
    %460 = vector.shape_cast %459 : vector<1x1x4x48xf32> to vector<4x48xf32>
    %c3_705 = arith.constant 3 : index
    %c1_706 = arith.constant 1 : index
    %c1_707 = arith.constant 1 : index
    %c12_708 = arith.constant 12 : index
    %461 = vector.load %arg10[%c3_705, %c1_706, %c1_707, %c12_708] : memref<4x4x6x72xf32, #tpu.memory_space<vmem>>, vector<1x1x4x48xf32>
    %462 = vector.shape_cast %461 : vector<1x1x4x48xf32> to vector<4x48xf32>
    %463 = tpu.concatenate %456, %458, %460, %462 in 1 : vector<4x48xf32>, vector<4x48xf32>, vector<4x48xf32>, vector<4x48xf32> -> vector<4x192xf32>
    %c2_709 = arith.constant 2 : index
    %c1_710 = arith.constant 1 : index
    %c1_711 = arith.constant 1 : index
    %c12_712 = arith.constant 12 : index
    %464 = vector.load %arg10[%c2_709, %c1_710, %c1_711, %c12_712] : memref<4x4x6x72xf32, #tpu.memory_space<vmem>>, vector<1x1x4x48xf32>
    %465 = vector.shape_cast %464 : vector<1x1x4x48xf32> to vector<4x48xf32>
    %c2_713 = arith.constant 2 : index
    %c2_714 = arith.constant 2 : index
    %c1_715 = arith.constant 1 : index
    %c12_716 = arith.constant 12 : index
    %466 = vector.load %arg10[%c2_713, %c2_714, %c1_715, %c12_716] : memref<4x4x6x72xf32, #tpu.memory_space<vmem>>, vector<1x1x4x48xf32>
    %467 = vector.shape_cast %466 : vector<1x1x4x48xf32> to vector<4x48xf32>
    %c3_717 = arith.constant 3 : index
    %c1_718 = arith.constant 1 : index
    %c1_719 = arith.constant 1 : index
    %c12_720 = arith.constant 12 : index
    %468 = vector.load %arg10[%c3_717, %c1_718, %c1_719, %c12_720] : memref<4x4x6x72xf32, #tpu.memory_space<vmem>>, vector<1x1x4x48xf32>
    %469 = vector.shape_cast %468 : vector<1x1x4x48xf32> to vector<4x48xf32>
    %c3_721 = arith.constant 3 : index
    %c2_722 = arith.constant 2 : index
    %c1_723 = arith.constant 1 : index
    %c12_724 = arith.constant 12 : index
    %470 = vector.load %arg10[%c3_721, %c2_722, %c1_723, %c12_724] : memref<4x4x6x72xf32, #tpu.memory_space<vmem>>, vector<1x1x4x48xf32>
    %471 = vector.shape_cast %470 : vector<1x1x4x48xf32> to vector<4x48xf32>
    %472 = tpu.concatenate %465, %467, %469, %471 in 1 : vector<4x48xf32>, vector<4x48xf32>, vector<4x48xf32>, vector<4x48xf32> -> vector<4x192xf32>
    %c2_725 = arith.constant 2 : index
    %c2_726 = arith.constant 2 : index
    %c1_727 = arith.constant 1 : index
    %c12_728 = arith.constant 12 : index
    %473 = vector.load %arg10[%c2_725, %c2_726, %c1_727, %c12_728] : memref<4x4x6x72xf32, #tpu.memory_space<vmem>>, vector<1x1x4x48xf32>
    %474 = vector.shape_cast %473 : vector<1x1x4x48xf32> to vector<4x48xf32>
    %c2_729 = arith.constant 2 : index
    %c3_730 = arith.constant 3 : index
    %c1_731 = arith.constant 1 : index
    %c12_732 = arith.constant 12 : index
    %475 = vector.load %arg10[%c2_729, %c3_730, %c1_731, %c12_732] : memref<4x4x6x72xf32, #tpu.memory_space<vmem>>, vector<1x1x4x48xf32>
    %476 = vector.shape_cast %475 : vector<1x1x4x48xf32> to vector<4x48xf32>
    %c3_733 = arith.constant 3 : index
    %c2_734 = arith.constant 2 : index
    %c1_735 = arith.constant 1 : index
    %c12_736 = arith.constant 12 : index
    %477 = vector.load %arg10[%c3_733, %c2_734, %c1_735, %c12_736] : memref<4x4x6x72xf32, #tpu.memory_space<vmem>>, vector<1x1x4x48xf32>
    %478 = vector.shape_cast %477 : vector<1x1x4x48xf32> to vector<4x48xf32>
    %c3_737 = arith.constant 3 : index
    %c3_738 = arith.constant 3 : index
    %c1_739 = arith.constant 1 : index
    %c12_740 = arith.constant 12 : index
    %479 = vector.load %arg10[%c3_737, %c3_738, %c1_739, %c12_740] : memref<4x4x6x72xf32, #tpu.memory_space<vmem>>, vector<1x1x4x48xf32>
    %480 = vector.shape_cast %479 : vector<1x1x4x48xf32> to vector<4x48xf32>
    %481 = tpu.concatenate %474, %476, %478, %480 in 1 : vector<4x48xf32>, vector<4x48xf32>, vector<4x48xf32>, vector<4x48xf32> -> vector<4x192xf32>
    %482 = tpu.concatenate %346, %355, %364, %373, %382, %391, %400, %409, %418, %427, %436, %445, %454, %463, %472, %481 in 0 : vector<4x192xf32>, vector<4x192xf32>, vector<4x192xf32>, vector<4x192xf32>, vector<4x192xf32>, vector<4x192xf32>, vector<4x192xf32>, vector<4x192xf32>, vector<4x192xf32>, vector<4x192xf32>, vector<4x192xf32>, vector<4x192xf32>, vector<4x192xf32>, vector<4x192xf32>, vector<4x192xf32>, vector<4x192xf32> -> vector<64x192xf32>
    %483 = arith.truncf %482 : vector<64x192xf32> to vector<64x192xbf16>
    %cst_741 = arith.constant dense<0.000000e+00> : vector<64x12xf32>
    %484 = tpu.matmul %483, %337, %cst_741 {dimension_numbers = #tpu.dot_dimension_numbers<[1], [0], [0], [1], [0, 0, 1, 1], [], []>} : vector<64x192xbf16>, vector<192x12xbf16>, vector<64x12xf32> -> vector<64x12xf32>
    %c0_742 = arith.constant 0 : index
    %c0_743 = arith.constant 0 : index
    %485 = vector.load %arg7[%c0_742, %c0_743] : memref<1x12xf32, #tpu.memory_space<vmem>>, vector<1x12xf32>
    %486 = vector.broadcast %485 : vector<1x12xf32> to vector<64x12xf32>
    %487 = arith.addf %484, %486 : vector<64x12xf32>
    %cst_744 = arith.constant 0.000000e+00 : f32
    %488 = vector.broadcast %cst_744 : f32 to vector<64x12xf32>
    %489 = arith.subf %488, %487 : vector<64x12xf32>
    %490 = math.exp %489 : vector<64x12xf32>
    %cst_745 = arith.constant 1.000000e+00 : f32
    %491 = vector.broadcast %cst_745 : f32 to vector<64x12xf32>
    %492 = arith.addf %491, %490 : vector<64x12xf32>
    %cst_746 = arith.constant 1.000000e+00 : f32
    %493 = vector.broadcast %cst_746 : f32 to vector<64x12xf32>
    %494 = arith.divf %493, %492 : vector<64x12xf32>
    %495 = vector.extract_strided_slice %494 {offsets = [0, 0], sizes = [4, 12], strides = [1, 1]} : vector<64x12xf32> to vector<4x12xf32>
    %c0_747 = arith.constant 0 : index
    %c0_748 = arith.constant 0 : index
    %c0_749 = arith.constant 0 : index
    %c0_750 = arith.constant 0 : index
    %c0_751 = arith.constant 0 : index
    %496 = vector.load %arg8[%c0_747, %c0_748, %c0_749, %c0_750, %c0_751] : memref<1x8x8x4x12xf32, #tpu.memory_space<vmem>>, vector<1x1x1x4x12xf32>
    %497 = vector.shape_cast %496 : vector<1x1x1x4x12xf32> to vector<4x12xf32>
    %498 = vector.shape_cast %495 : vector<4x12xf32> to vector<1x1x1x4x12xf32>
    tpu.vector_store %arg8[%c0_747, %c0_748, %c0_749, %c0_750, %c0_751], %498 {strides = array<i32>} : memref<1x8x8x4x12xf32, #tpu.memory_space<vmem>>, vector<1x1x1x4x12xf32>,
    %499 = vector.extract_strided_slice %494 {offsets = [4, 0], sizes = [4, 12], strides = [1, 1]} : vector<64x12xf32> to vector<4x12xf32>
    %c0_752 = arith.constant 0 : index
    %c0_753 = arith.constant 0 : index
    %c2_754 = arith.constant 2 : index
    %c0_755 = arith.constant 0 : index
    %c0_756 = arith.constant 0 : index
    %500 = vector.load %arg8[%c0_752, %c0_753, %c2_754, %c0_755, %c0_756] : memref<1x8x8x4x12xf32, #tpu.memory_space<vmem>>, vector<1x1x1x4x12xf32>
    %501 = vector.shape_cast %500 : vector<1x1x1x4x12xf32> to vector<4x12xf32>
    %502 = vector.shape_cast %499 : vector<4x12xf32> to vector<1x1x1x4x12xf32>
    tpu.vector_store %arg8[%c0_752, %c0_753, %c2_754, %c0_755, %c0_756], %502 {strides = array<i32>} : memref<1x8x8x4x12xf32, #tpu.memory_space<vmem>>, vector<1x1x1x4x12xf32>,
    %503 = vector.extract_strided_slice %494 {offsets = [8, 0], sizes = [4, 12], strides = [1, 1]} : vector<64x12xf32> to vector<4x12xf32>
    %c0_757 = arith.constant 0 : index
    %c0_758 = arith.constant 0 : index
    %c4 = arith.constant 4 : index
    %c0_759 = arith.constant 0 : index
    %c0_760 = arith.constant 0 : index
    %504 = vector.load %arg8[%c0_757, %c0_758, %c4, %c0_759, %c0_760] : memref<1x8x8x4x12xf32, #tpu.memory_space<vmem>>, vector<1x1x1x4x12xf32>
    %505 = vector.shape_cast %504 : vector<1x1x1x4x12xf32> to vector<4x12xf32>
    %506 = vector.shape_cast %503 : vector<4x12xf32> to vector<1x1x1x4x12xf32>
    tpu.vector_store %arg8[%c0_757, %c0_758, %c4, %c0_759, %c0_760], %506 {strides = array<i32>} : memref<1x8x8x4x12xf32, #tpu.memory_space<vmem>>, vector<1x1x1x4x12xf32>,
    %507 = vector.extract_strided_slice %494 {offsets = [12, 0], sizes = [4, 12], strides = [1, 1]} : vector<64x12xf32> to vector<4x12xf32>
    %c0_761 = arith.constant 0 : index
    %c0_762 = arith.constant 0 : index
    %c6 = arith.constant 6 : index
    %c0_763 = arith.constant 0 : index
    %c0_764 = arith.constant 0 : index
    %508 = vector.load %arg8[%c0_761, %c0_762, %c6, %c0_763, %c0_764] : memref<1x8x8x4x12xf32, #tpu.memory_space<vmem>>, vector<1x1x1x4x12xf32>
    %509 = vector.shape_cast %508 : vector<1x1x1x4x12xf32> to vector<4x12xf32>
    %510 = vector.shape_cast %507 : vector<4x12xf32> to vector<1x1x1x4x12xf32>
    tpu.vector_store %arg8[%c0_761, %c0_762, %c6, %c0_763, %c0_764], %510 {strides = array<i32>} : memref<1x8x8x4x12xf32, #tpu.memory_space<vmem>>, vector<1x1x1x4x12xf32>,
    %511 = vector.extract_strided_slice %494 {offsets = [16, 0], sizes = [4, 12], strides = [1, 1]} : vector<64x12xf32> to vector<4x12xf32>
    %c0_765 = arith.constant 0 : index
    %c2_766 = arith.constant 2 : index
    %c0_767 = arith.constant 0 : index
    %c0_768 = arith.constant 0 : index
    %c0_769 = arith.constant 0 : index
    %512 = vector.load %arg8[%c0_765, %c2_766, %c0_767, %c0_768, %c0_769] : memref<1x8x8x4x12xf32, #tpu.memory_space<vmem>>, vector<1x1x1x4x12xf32>
    %513 = vector.shape_cast %512 : vector<1x1x1x4x12xf32> to vector<4x12xf32>
    %514 = vector.shape_cast %511 : vector<4x12xf32> to vector<1x1x1x4x12xf32>
    tpu.vector_store %arg8[%c0_765, %c2_766, %c0_767, %c0_768, %c0_769], %514 {strides = array<i32>} : memref<1x8x8x4x12xf32, #tpu.memory_space<vmem>>, vector<1x1x1x4x12xf32>,
    %515 = vector.extract_strided_slice %494 {offsets = [20, 0], sizes = [4, 12], strides = [1, 1]} : vector<64x12xf32> to vector<4x12xf32>
    %c0_770 = arith.constant 0 : index
    %c2_771 = arith.constant 2 : index
    %c2_772 = arith.constant 2 : index
    %c0_773 = arith.constant 0 : index
    %c0_774 = arith.constant 0 : index
    %516 = vector.load %arg8[%c0_770, %c2_771, %c2_772, %c0_773, %c0_774] : memref<1x8x8x4x12xf32, #tpu.memory_space<vmem>>, vector<1x1x1x4x12xf32>
    %517 = vector.shape_cast %516 : vector<1x1x1x4x12xf32> to vector<4x12xf32>
    %518 = vector.shape_cast %515 : vector<4x12xf32> to vector<1x1x1x4x12xf32>
    tpu.vector_store %arg8[%c0_770, %c2_771, %c2_772, %c0_773, %c0_774], %518 {strides = array<i32>} : memref<1x8x8x4x12xf32, #tpu.memory_space<vmem>>, vector<1x1x1x4x12xf32>,
    %519 = vector.extract_strided_slice %494 {offsets = [24, 0], sizes = [4, 12], strides = [1, 1]} : vector<64x12xf32> to vector<4x12xf32>
    %c0_775 = arith.constant 0 : index
    %c2_776 = arith.constant 2 : index
    %c4_777 = arith.constant 4 : index
    %c0_778 = arith.constant 0 : index
    %c0_779 = arith.constant 0 : index
    %520 = vector.load %arg8[%c0_775, %c2_776, %c4_777, %c0_778, %c0_779] : memref<1x8x8x4x12xf32, #tpu.memory_space<vmem>>, vector<1x1x1x4x12xf32>
    %521 = vector.shape_cast %520 : vector<1x1x1x4x12xf32> to vector<4x12xf32>
    %522 = vector.shape_cast %519 : vector<4x12xf32> to vector<1x1x1x4x12xf32>
    tpu.vector_store %arg8[%c0_775, %c2_776, %c4_777, %c0_778, %c0_779], %522 {strides = array<i32>} : memref<1x8x8x4x12xf32, #tpu.memory_space<vmem>>, vector<1x1x1x4x12xf32>,
    %523 = vector.extract_strided_slice %494 {offsets = [28, 0], sizes = [4, 12], strides = [1, 1]} : vector<64x12xf32> to vector<4x12xf32>
    %c0_780 = arith.constant 0 : index
    %c2_781 = arith.constant 2 : index
    %c6_782 = arith.constant 6 : index
    %c0_783 = arith.constant 0 : index
    %c0_784 = arith.constant 0 : index
    %524 = vector.load %arg8[%c0_780, %c2_781, %c6_782, %c0_783, %c0_784] : memref<1x8x8x4x12xf32, #tpu.memory_space<vmem>>, vector<1x1x1x4x12xf32>
    %525 = vector.shape_cast %524 : vector<1x1x1x4x12xf32> to vector<4x12xf32>
    %526 = vector.shape_cast %523 : vector<4x12xf32> to vector<1x1x1x4x12xf32>
    tpu.vector_store %arg8[%c0_780, %c2_781, %c6_782, %c0_783, %c0_784], %526 {strides = array<i32>} : memref<1x8x8x4x12xf32, #tpu.memory_space<vmem>>, vector<1x1x1x4x12xf32>,
    %527 = vector.extract_strided_slice %494 {offsets = [32, 0], sizes = [4, 12], strides = [1, 1]} : vector<64x12xf32> to vector<4x12xf32>
    %c0_785 = arith.constant 0 : index
    %c4_786 = arith.constant 4 : index
    %c0_787 = arith.constant 0 : index
    %c0_788 = arith.constant 0 : index
    %c0_789 = arith.constant 0 : index
    %528 = vector.load %arg8[%c0_785, %c4_786, %c0_787, %c0_788, %c0_789] : memref<1x8x8x4x12xf32, #tpu.memory_space<vmem>>, vector<1x1x1x4x12xf32>
    %529 = vector.shape_cast %528 : vector<1x1x1x4x12xf32> to vector<4x12xf32>
    %530 = vector.shape_cast %527 : vector<4x12xf32> to vector<1x1x1x4x12xf32>
    tpu.vector_store %arg8[%c0_785, %c4_786, %c0_787, %c0_788, %c0_789], %530 {strides = array<i32>} : memref<1x8x8x4x12xf32, #tpu.memory_space<vmem>>, vector<1x1x1x4x12xf32>,
    %531 = vector.extract_strided_slice %494 {offsets = [36, 0], sizes = [4, 12], strides = [1, 1]} : vector<64x12xf32> to vector<4x12xf32>
    %c0_790 = arith.constant 0 : index
    %c4_791 = arith.constant 4 : index
    %c2_792 = arith.constant 2 : index
    %c0_793 = arith.constant 0 : index
    %c0_794 = arith.constant 0 : index
    %532 = vector.load %arg8[%c0_790, %c4_791, %c2_792, %c0_793, %c0_794] : memref<1x8x8x4x12xf32, #tpu.memory_space<vmem>>, vector<1x1x1x4x12xf32>
    %533 = vector.shape_cast %532 : vector<1x1x1x4x12xf32> to vector<4x12xf32>
    %534 = vector.shape_cast %531 : vector<4x12xf32> to vector<1x1x1x4x12xf32>
    tpu.vector_store %arg8[%c0_790, %c4_791, %c2_792, %c0_793, %c0_794], %534 {strides = array<i32>} : memref<1x8x8x4x12xf32, #tpu.memory_space<vmem>>, vector<1x1x1x4x12xf32>,
    %535 = vector.extract_strided_slice %494 {offsets = [40, 0], sizes = [4, 12], strides = [1, 1]} : vector<64x12xf32> to vector<4x12xf32>
    %c0_795 = arith.constant 0 : index
    %c4_796 = arith.constant 4 : index
    %c4_797 = arith.constant 4 : index
    %c0_798 = arith.constant 0 : index
    %c0_799 = arith.constant 0 : index
    %536 = vector.load %arg8[%c0_795, %c4_796, %c4_797, %c0_798, %c0_799] : memref<1x8x8x4x12xf32, #tpu.memory_space<vmem>>, vector<1x1x1x4x12xf32>
    %537 = vector.shape_cast %536 : vector<1x1x1x4x12xf32> to vector<4x12xf32>
    %538 = vector.shape_cast %535 : vector<4x12xf32> to vector<1x1x1x4x12xf32>
    tpu.vector_store %arg8[%c0_795, %c4_796, %c4_797, %c0_798, %c0_799], %538 {strides = array<i32>} : memref<1x8x8x4x12xf32, #tpu.memory_space<vmem>>, vector<1x1x1x4x12xf32>,
    %539 = vector.extract_strided_slice %494 {offsets = [44, 0], sizes = [4, 12], strides = [1, 1]} : vector<64x12xf32> to vector<4x12xf32>
    %c0_800 = arith.constant 0 : index
    %c4_801 = arith.constant 4 : index
    %c6_802 = arith.constant 6 : index
    %c0_803 = arith.constant 0 : index
    %c0_804 = arith.constant 0 : index
    %540 = vector.load %arg8[%c0_800, %c4_801, %c6_802, %c0_803, %c0_804] : memref<1x8x8x4x12xf32, #tpu.memory_space<vmem>>, vector<1x1x1x4x12xf32>
    %541 = vector.shape_cast %540 : vector<1x1x1x4x12xf32> to vector<4x12xf32>
    %542 = vector.shape_cast %539 : vector<4x12xf32> to vector<1x1x1x4x12xf32>
    tpu.vector_store %arg8[%c0_800, %c4_801, %c6_802, %c0_803, %c0_804], %542 {strides = array<i32>} : memref<1x8x8x4x12xf32, #tpu.memory_space<vmem>>, vector<1x1x1x4x12xf32>,
    %543 = vector.extract_strided_slice %494 {offsets = [48, 0], sizes = [4, 12], strides = [1, 1]} : vector<64x12xf32> to vector<4x12xf32>
    %c0_805 = arith.constant 0 : index
    %c6_806 = arith.constant 6 : index
    %c0_807 = arith.constant 0 : index
    %c0_808 = arith.constant 0 : index
    %c0_809 = arith.constant 0 : index
    %544 = vector.load %arg8[%c0_805, %c6_806, %c0_807, %c0_808, %c0_809] : memref<1x8x8x4x12xf32, #tpu.memory_space<vmem>>, vector<1x1x1x4x12xf32>
    %545 = vector.shape_cast %544 : vector<1x1x1x4x12xf32> to vector<4x12xf32>
    %546 = vector.shape_cast %543 : vector<4x12xf32> to vector<1x1x1x4x12xf32>
    tpu.vector_store %arg8[%c0_805, %c6_806, %c0_807, %c0_808, %c0_809], %546 {strides = array<i32>} : memref<1x8x8x4x12xf32, #tpu.memory_space<vmem>>, vector<1x1x1x4x12xf32>,
    %547 = vector.extract_strided_slice %494 {offsets = [52, 0], sizes = [4, 12], strides = [1, 1]} : vector<64x12xf32> to vector<4x12xf32>
    %c0_810 = arith.constant 0 : index
    %c6_811 = arith.constant 6 : index
    %c2_812 = arith.constant 2 : index
    %c0_813 = arith.constant 0 : index
    %c0_814 = arith.constant 0 : index
    %548 = vector.load %arg8[%c0_810, %c6_811, %c2_812, %c0_813, %c0_814] : memref<1x8x8x4x12xf32, #tpu.memory_space<vmem>>, vector<1x1x1x4x12xf32>
    %549 = vector.shape_cast %548 : vector<1x1x1x4x12xf32> to vector<4x12xf32>
    %550 = vector.shape_cast %547 : vector<4x12xf32> to vector<1x1x1x4x12xf32>
    tpu.vector_store %arg8[%c0_810, %c6_811, %c2_812, %c0_813, %c0_814], %550 {strides = array<i32>} : memref<1x8x8x4x12xf32, #tpu.memory_space<vmem>>, vector<1x1x1x4x12xf32>,
    %551 = vector.extract_strided_slice %494 {offsets = [56, 0], sizes = [4, 12], strides = [1, 1]} : vector<64x12xf32> to vector<4x12xf32>
    %c0_815 = arith.constant 0 : index
    %c6_816 = arith.constant 6 : index
    %c4_817 = arith.constant 4 : index
    %c0_818 = arith.constant 0 : index
    %c0_819 = arith.constant 0 : index
    %552 = vector.load %arg8[%c0_815, %c6_816, %c4_817, %c0_818, %c0_819] : memref<1x8x8x4x12xf32, #tpu.memory_space<vmem>>, vector<1x1x1x4x12xf32>
    %553 = vector.shape_cast %552 : vector<1x1x1x4x12xf32> to vector<4x12xf32>
    %554 = vector.shape_cast %551 : vector<4x12xf32> to vector<1x1x1x4x12xf32>
    tpu.vector_store %arg8[%c0_815, %c6_816, %c4_817, %c0_818, %c0_819], %554 {strides = array<i32>} : memref<1x8x8x4x12xf32, #tpu.memory_space<vmem>>, vector<1x1x1x4x12xf32>,
    %555 = vector.extract_strided_slice %494 {offsets = [60, 0], sizes = [4, 12], strides = [1, 1]} : vector<64x12xf32> to vector<4x12xf32>
    %c0_820 = arith.constant 0 : index
    %c6_821 = arith.constant 6 : index
    %c6_822 = arith.constant 6 : index
    %c0_823 = arith.constant 0 : index
    %c0_824 = arith.constant 0 : index
    %556 = vector.load %arg8[%c0_820, %c6_821, %c6_822, %c0_823, %c0_824] : memref<1x8x8x4x12xf32, #tpu.memory_space<vmem>>, vector<1x1x1x4x12xf32>
    %557 = vector.shape_cast %556 : vector<1x1x1x4x12xf32> to vector<4x12xf32>
    %558 = vector.shape_cast %555 : vector<4x12xf32> to vector<1x1x1x4x12xf32>
    tpu.vector_store %arg8[%c0_820, %c6_821, %c6_822, %c0_823, %c0_824], %558 {strides = array<i32>} : memref<1x8x8x4x12xf32, #tpu.memory_space<vmem>>, vector<1x1x1x4x12xf32>,
    %c0_825 = arith.constant 0 : index
    %c1_826 = arith.constant 1 : index
    %c0_827 = arith.constant 0 : index
    %c0_828 = arith.constant 0 : index
    %559 = vector.load %arg6[%c0_825, %c1_826, %c0_827, %c0_828] : memref<2x2x192x12xbf16, #tpu.memory_space<vmem>>, vector<1x1x192x12xbf16>
    %560 = vector.shape_cast %559 : vector<1x1x192x12xbf16> to vector<192x12xbf16>
    %c3_829 = arith.constant 3 : index
    %c0_830 = arith.constant 0 : index
    %c0_831 = arith.constant 0 : index
    %c12_832 = arith.constant 12 : index
    %561 = vector.load %arg10[%c3_829, %c0_830, %c0_831, %c12_832] : memref<4x4x6x72xf32, #tpu.memory_space<vmem>>, vector<1x1x4x48xf32>
    %562 = vector.shape_cast %561 : vector<1x1x4x48xf32> to vector<4x48xf32>
    %c3_833 = arith.constant 3 : index
    %c1_834 = arith.constant 1 : index
    %c0_835 = arith.constant 0 : index
    %c12_836 = arith.constant 12 : index
    %563 = vector.load %arg10[%c3_833, %c1_834, %c0_835, %c12_836] : memref<4x4x6x72xf32, #tpu.memory_space<vmem>>, vector<1x1x4x48xf32>
    %564 = vector.shape_cast %563 : vector<1x1x4x48xf32> to vector<4x48xf32>
    %c0_837 = arith.constant 0 : index
    %c0_838 = arith.constant 0 : index
    %c1_839 = arith.constant 1 : index
    %c12_840 = arith.constant 12 : index
    %565 = vector.load %arg10[%c0_837, %c0_838, %c1_839, %c12_840] : memref<4x4x6x72xf32, #tpu.memory_space<vmem>>, vector<1x1x4x48xf32>
    %566 = vector.shape_cast %565 : vector<1x1x4x48xf32> to vector<4x48xf32>
    %c0_841 = arith.constant 0 : index
    %c1_842 = arith.constant 1 : index
    %c1_843 = arith.constant 1 : index
    %c12_844 = arith.constant 12 : index
    %567 = vector.load %arg10[%c0_841, %c1_842, %c1_843, %c12_844] : memref<4x4x6x72xf32, #tpu.memory_space<vmem>>, vector<1x1x4x48xf32>
    %568 = vector.shape_cast %567 : vector<1x1x4x48xf32> to vector<4x48xf32>
    %569 = tpu.concatenate %562, %564, %566, %568 in 1 : vector<4x48xf32>, vector<4x48xf32>, vector<4x48xf32>, vector<4x48xf32> -> vector<4x192xf32>
    %c3_845 = arith.constant 3 : index
    %c1_846 = arith.constant 1 : index
    %c0_847 = arith.constant 0 : index
    %c12_848 = arith.constant 12 : index
    %570 = vector.load %arg10[%c3_845, %c1_846, %c0_847, %c12_848] : memref<4x4x6x72xf32, #tpu.memory_space<vmem>>, vector<1x1x4x48xf32>
    %571 = vector.shape_cast %570 : vector<1x1x4x48xf32> to vector<4x48xf32>
    %c3_849 = arith.constant 3 : index
    %c2_850 = arith.constant 2 : index
    %c0_851 = arith.constant 0 : index
    %c12_852 = arith.constant 12 : index
    %572 = vector.load %arg10[%c3_849, %c2_850, %c0_851, %c12_852] : memref<4x4x6x72xf32, #tpu.memory_space<vmem>>, vector<1x1x4x48xf32>
    %573 = vector.shape_cast %572 : vector<1x1x4x48xf32> to vector<4x48xf32>
    %c0_853 = arith.constant 0 : index
    %c1_854 = arith.constant 1 : index
    %c1_855 = arith.constant 1 : index
    %c12_856 = arith.constant 12 : index
    %574 = vector.load %arg10[%c0_853, %c1_854, %c1_855, %c12_856] : memref<4x4x6x72xf32, #tpu.memory_space<vmem>>, vector<1x1x4x48xf32>
    %575 = vector.shape_cast %574 : vector<1x1x4x48xf32> to vector<4x48xf32>
    %c0_857 = arith.constant 0 : index
    %c2_858 = arith.constant 2 : index
    %c1_859 = arith.constant 1 : index
    %c12_860 = arith.constant 12 : index
    %576 = vector.load %arg10[%c0_857, %c2_858, %c1_859, %c12_860] : memref<4x4x6x72xf32, #tpu.memory_space<vmem>>, vector<1x1x4x48xf32>
    %577 = vector.shape_cast %576 : vector<1x1x4x48xf32> to vector<4x48xf32>
    %578 = tpu.concatenate %571, %573, %575, %577 in 1 : vector<4x48xf32>, vector<4x48xf32>, vector<4x48xf32>, vector<4x48xf32> -> vector<4x192xf32>
    %c3_861 = arith.constant 3 : index
    %c2_862 = arith.constant 2 : index
    %c0_863 = arith.constant 0 : index
    %c12_864 = arith.constant 12 : index
    %579 = vector.load %arg10[%c3_861, %c2_862, %c0_863, %c12_864] : memref<4x4x6x72xf32, #tpu.memory_space<vmem>>, vector<1x1x4x48xf32>
    %580 = vector.shape_cast %579 : vector<1x1x4x48xf32> to vector<4x48xf32>
    %c3_865 = arith.constant 3 : index
    %c3_866 = arith.constant 3 : index
    %c0_867 = arith.constant 0 : index
    %c12_868 = arith.constant 12 : index
    %581 = vector.load %arg10[%c3_865, %c3_866, %c0_867, %c12_868] : memref<4x4x6x72xf32, #tpu.memory_space<vmem>>, vector<1x1x4x48xf32>
    %582 = vector.shape_cast %581 : vector<1x1x4x48xf32> to vector<4x48xf32>
    %c0_869 = arith.constant 0 : index
    %c2_870 = arith.constant 2 : index
    %c1_871 = arith.constant 1 : index
    %c12_872 = arith.constant 12 : index
    %583 = vector.load %arg10[%c0_869, %c2_870, %c1_871, %c12_872] : memref<4x4x6x72xf32, #tpu.memory_space<vmem>>, vector<1x1x4x48xf32>
    %584 = vector.shape_cast %583 : vector<1x1x4x48xf32> to vector<4x48xf32>
    %c0_873 = arith.constant 0 : index
    %c3_874 = arith.constant 3 : index
    %c1_875 = arith.constant 1 : index
    %c12_876 = arith.constant 12 : index
    %585 = vector.load %arg10[%c0_873, %c3_874, %c1_875, %c12_876] : memref<4x4x6x72xf32, #tpu.memory_space<vmem>>, vector<1x1x4x48xf32>
    %586 = vector.shape_cast %585 : vector<1x1x4x48xf32> to vector<4x48xf32>
    %587 = tpu.concatenate %580, %582, %584, %586 in 1 : vector<4x48xf32>, vector<4x48xf32>, vector<4x48xf32>, vector<4x48xf32> -> vector<4x192xf32>
    %c3_877 = arith.constant 3 : index
    %c3_878 = arith.constant 3 : index
    %c0_879 = arith.constant 0 : index
    %c12_880 = arith.constant 12 : index
    %588 = vector.load %arg10[%c3_877, %c3_878, %c0_879, %c12_880] : memref<4x4x6x72xf32, #tpu.memory_space<vmem>>, vector<1x1x4x48xf32>
    %589 = vector.shape_cast %588 : vector<1x1x4x48xf32> to vector<4x48xf32>
    %c3_881 = arith.constant 3 : index
    %c0_882 = arith.constant 0 : index
    %c0_883 = arith.constant 0 : index
    %c24_884 = arith.constant 24 : index
    %590 = vector.load %arg10[%c3_881, %c0_882, %c0_883, %c24_884] : memref<4x4x6x72xf32, #tpu.memory_space<vmem>>, vector<1x1x4x48xf32>
    %591 = vector.shape_cast %590 : vector<1x1x4x48xf32> to vector<4x48xf32>
    %c0_885 = arith.constant 0 : index
    %c3_886 = arith.constant 3 : index
    %c1_887 = arith.constant 1 : index
    %c12_888 = arith.constant 12 : index
    %592 = vector.load %arg10[%c0_885, %c3_886, %c1_887, %c12_888] : memref<4x4x6x72xf32, #tpu.memory_space<vmem>>, vector<1x1x4x48xf32>
    %593 = vector.shape_cast %592 : vector<1x1x4x48xf32> to vector<4x48xf32>
    %c0_889 = arith.constant 0 : index
    %c0_890 = arith.constant 0 : index
    %c1_891 = arith.constant 1 : index
    %c24_892 = arith.constant 24 : index
    %594 = vector.load %arg10[%c0_889, %c0_890, %c1_891, %c24_892] : memref<4x4x6x72xf32, #tpu.memory_space<vmem>>, vector<1x1x4x48xf32>
    %595 = vector.shape_cast %594 : vector<1x1x4x48xf32> to vector<4x48xf32>
    %596 = tpu.concatenate %589, %591, %593, %595 in 1 : vector<4x48xf32>, vector<4x48xf32>, vector<4x48xf32>, vector<4x48xf32> -> vector<4x192xf32>
    %c0_893 = arith.constant 0 : index
    %c0_894 = arith.constant 0 : index
    %c1_895 = arith.constant 1 : index
    %c12_896 = arith.constant 12 : index
    %597 = vector.load %arg10[%c0_893, %c0_894, %c1_895, %c12_896] : memref<4x4x6x72xf32, #tpu.memory_space<vmem>>, vector<1x1x4x48xf32>
    %598 = vector.shape_cast %597 : vector<1x1x4x48xf32> to vector<4x48xf32>
    %c0_897 = arith.constant 0 : index
    %c1_898 = arith.constant 1 : index
    %c1_899 = arith.constant 1 : index
    %c12_900 = arith.constant 12 : index
    %599 = vector.load %arg10[%c0_897, %c1_898, %c1_899, %c12_900] : memref<4x4x6x72xf32, #tpu.memory_space<vmem>>, vector<1x1x4x48xf32>
    %600 = vector.shape_cast %599 : vector<1x1x4x48xf32> to vector<4x48xf32>
    %c1_901 = arith.constant 1 : index
    %c0_902 = arith.constant 0 : index
    %c1_903 = arith.constant 1 : index
    %c12_904 = arith.constant 12 : index
    %601 = vector.load %arg10[%c1_901, %c0_902, %c1_903, %c12_904] : memref<4x4x6x72xf32, #tpu.memory_space<vmem>>, vector<1x1x4x48xf32>
    %602 = vector.shape_cast %601 : vector<1x1x4x48xf32> to vector<4x48xf32>
    %c1_905 = arith.constant 1 : index
    %c1_906 = arith.constant 1 : index
    %c1_907 = arith.constant 1 : index
    %c12_908 = arith.constant 12 : index
    %603 = vector.load %arg10[%c1_905, %c1_906, %c1_907, %c12_908] : memref<4x4x6x72xf32, #tpu.memory_space<vmem>>, vector<1x1x4x48xf32>
    %604 = vector.shape_cast %603 : vector<1x1x4x48xf32> to vector<4x48xf32>
    %605 = tpu.concatenate %598, %600, %602, %604 in 1 : vector<4x48xf32>, vector<4x48xf32>, vector<4x48xf32>, vector<4x48xf32> -> vector<4x192xf32>
    %c0_909 = arith.constant 0 : index
    %c1_910 = arith.constant 1 : index
    %c1_911 = arith.constant 1 : index
    %c12_912 = arith.constant 12 : index
    %606 = vector.load %arg10[%c0_909, %c1_910, %c1_911, %c12_912] : memref<4x4x6x72xf32, #tpu.memory_space<vmem>>, vector<1x1x4x48xf32>
    %607 = vector.shape_cast %606 : vector<1x1x4x48xf32> to vector<4x48xf32>
    %c0_913 = arith.constant 0 : index
    %c2_914 = arith.constant 2 : index
    %c1_915 = arith.constant 1 : index
    %c12_916 = arith.constant 12 : index
    %608 = vector.load %arg10[%c0_913, %c2_914, %c1_915, %c12_916] : memref<4x4x6x72xf32, #tpu.memory_space<vmem>>, vector<1x1x4x48xf32>
    %609 = vector.shape_cast %608 : vector<1x1x4x48xf32> to vector<4x48xf32>
    %c1_917 = arith.constant 1 : index
    %c1_918 = arith.constant 1 : index
    %c1_919 = arith.constant 1 : index
    %c12_920 = arith.constant 12 : index
    %610 = vector.load %arg10[%c1_917, %c1_918, %c1_919, %c12_920] : memref<4x4x6x72xf32, #tpu.memory_space<vmem>>, vector<1x1x4x48xf32>
    %611 = vector.shape_cast %610 : vector<1x1x4x48xf32> to vector<4x48xf32>
    %c1_921 = arith.constant 1 : index
    %c2_922 = arith.constant 2 : index
    %c1_923 = arith.constant 1 : index
    %c12_924 = arith.constant 12 : index
    %612 = vector.load %arg10[%c1_921, %c2_922, %c1_923, %c12_924] : memref<4x4x6x72xf32, #tpu.memory_space<vmem>>, vector<1x1x4x48xf32>
    %613 = vector.shape_cast %612 : vector<1x1x4x48xf32> to vector<4x48xf32>
    %614 = tpu.concatenate %607, %609, %611, %613 in 1 : vector<4x48xf32>, vector<4x48xf32>, vector<4x48xf32>, vector<4x48xf32> -> vector<4x192xf32>
    %c0_925 = arith.constant 0 : index
    %c2_926 = arith.constant 2 : index
    %c1_927 = arith.constant 1 : index
    %c12_928 = arith.constant 12 : index
    %615 = vector.load %arg10[%c0_925, %c2_926, %c1_927, %c12_928] : memref<4x4x6x72xf32, #tpu.memory_space<vmem>>, vector<1x1x4x48xf32>
    %616 = vector.shape_cast %615 : vector<1x1x4x48xf32> to vector<4x48xf32>
    %c0_929 = arith.constant 0 : index
    %c3_930 = arith.constant 3 : index
    %c1_931 = arith.constant 1 : index
    %c12_932 = arith.constant 12 : index
    %617 = vector.load %arg10[%c0_929, %c3_930, %c1_931, %c12_932] : memref<4x4x6x72xf32, #tpu.memory_space<vmem>>, vector<1x1x4x48xf32>
    %618 = vector.shape_cast %617 : vector<1x1x4x48xf32> to vector<4x48xf32>
    %c1_933 = arith.constant 1 : index
    %c2_934 = arith.constant 2 : index
    %c1_935 = arith.constant 1 : index
    %c12_936 = arith.constant 12 : index
    %619 = vector.load %arg10[%c1_933, %c2_934, %c1_935, %c12_936] : memref<4x4x6x72xf32, #tpu.memory_space<vmem>>, vector<1x1x4x48xf32>
    %620 = vector.shape_cast %619 : vector<1x1x4x48xf32> to vector<4x48xf32>
    %c1_937 = arith.constant 1 : index
    %c3_938 = arith.constant 3 : index
    %c1_939 = arith.constant 1 : index
    %c12_940 = arith.constant 12 : index
    %621 = vector.load %arg10[%c1_937, %c3_938, %c1_939, %c12_940] : memref<4x4x6x72xf32, #tpu.memory_space<vmem>>, vector<1x1x4x48xf32>
    %622 = vector.shape_cast %621 : vector<1x1x4x48xf32> to vector<4x48xf32>
    %623 = tpu.concatenate %616, %618, %620, %622 in 1 : vector<4x48xf32>, vector<4x48xf32>, vector<4x48xf32>, vector<4x48xf32> -> vector<4x192xf32>
    %c0_941 = arith.constant 0 : index
    %c3_942 = arith.constant 3 : index
    %c1_943 = arith.constant 1 : index
    %c12_944 = arith.constant 12 : index
    %624 = vector.load %arg10[%c0_941, %c3_942, %c1_943, %c12_944] : memref<4x4x6x72xf32, #tpu.memory_space<vmem>>, vector<1x1x4x48xf32>
    %625 = vector.shape_cast %624 : vector<1x1x4x48xf32> to vector<4x48xf32>
    %c0_945 = arith.constant 0 : index
    %c0_946 = arith.constant 0 : index
    %c1_947 = arith.constant 1 : index
    %c24_948 = arith.constant 24 : index
    %626 = vector.load %arg10[%c0_945, %c0_946, %c1_947, %c24_948] : memref<4x4x6x72xf32, #tpu.memory_space<vmem>>, vector<1x1x4x48xf32>
    %627 = vector.shape_cast %626 : vector<1x1x4x48xf32> to vector<4x48xf32>
    %c1_949 = arith.constant 1 : index
    %c3_950 = arith.constant 3 : index
    %c1_951 = arith.constant 1 : index
    %c12_952 = arith.constant 12 : index
    %628 = vector.load %arg10[%c1_949, %c3_950, %c1_951, %c12_952] : memref<4x4x6x72xf32, #tpu.memory_space<vmem>>, vector<1x1x4x48xf32>
    %629 = vector.shape_cast %628 : vector<1x1x4x48xf32> to vector<4x48xf32>
    %c1_953 = arith.constant 1 : index
    %c0_954 = arith.constant 0 : index
    %c1_955 = arith.constant 1 : index
    %c24_956 = arith.constant 24 : index
    %630 = vector.load %arg10[%c1_953, %c0_954, %c1_955, %c24_956] : memref<4x4x6x72xf32, #tpu.memory_space<vmem>>, vector<1x1x4x48xf32>
    %631 = vector.shape_cast %630 : vector<1x1x4x48xf32> to vector<4x48xf32>
    %632 = tpu.concatenate %625, %627, %629, %631 in 1 : vector<4x48xf32>, vector<4x48xf32>, vector<4x48xf32>, vector<4x48xf32> -> vector<4x192xf32>
    %c1_957 = arith.constant 1 : index
    %c0_958 = arith.constant 0 : index
    %c1_959 = arith.constant 1 : index
    %c12_960 = arith.constant 12 : index
    %633 = vector.load %arg10[%c1_957, %c0_958, %c1_959, %c12_960] : memref<4x4x6x72xf32, #tpu.memory_space<vmem>>, vector<1x1x4x48xf32>
    %634 = vector.shape_cast %633 : vector<1x1x4x48xf32> to vector<4x48xf32>
    %c1_961 = arith.constant 1 : index
    %c1_962 = arith.constant 1 : index
    %c1_963 = arith.constant 1 : index
    %c12_964 = arith.constant 12 : index
    %635 = vector.load %arg10[%c1_961, %c1_962, %c1_963, %c12_964] : memref<4x4x6x72xf32, #tpu.memory_space<vmem>>, vector<1x1x4x48xf32>
    %636 = vector.shape_cast %635 : vector<1x1x4x48xf32> to vector<4x48xf32>
    %c2_965 = arith.constant 2 : index
    %c0_966 = arith.constant 0 : index
    %c1_967 = arith.constant 1 : index
    %c12_968 = arith.constant 12 : index
    %637 = vector.load %arg10[%c2_965, %c0_966, %c1_967, %c12_968] : memref<4x4x6x72xf32, #tpu.memory_space<vmem>>, vector<1x1x4x48xf32>
    %638 = vector.shape_cast %637 : vector<1x1x4x48xf32> to vector<4x48xf32>
    %c2_969 = arith.constant 2 : index
    %c1_970 = arith.constant 1 : index
    %c1_971 = arith.constant 1 : index
    %c12_972 = arith.constant 12 : index
    %639 = vector.load %arg10[%c2_969, %c1_970, %c1_971, %c12_972] : memref<4x4x6x72xf32, #tpu.memory_space<vmem>>, vector<1x1x4x48xf32>
    %640 = vector.shape_cast %639 : vector<1x1x4x48xf32> to vector<4x48xf32>
    %641 = tpu.concatenate %634, %636, %638, %640 in 1 : vector<4x48xf32>, vector<4x48xf32>, vector<4x48xf32>, vector<4x48xf32> -> vector<4x192xf32>
    %c1_973 = arith.constant 1 : index
    %c1_974 = arith.constant 1 : index
    %c1_975 = arith.constant 1 : index
    %c12_976 = arith.constant 12 : index
    %642 = vector.load %arg10[%c1_973, %c1_974, %c1_975, %c12_976] : memref<4x4x6x72xf32, #tpu.memory_space<vmem>>, vector<1x1x4x48xf32>
    %643 = vector.shape_cast %642 : vector<1x1x4x48xf32> to vector<4x48xf32>
    %c1_977 = arith.constant 1 : index
    %c2_978 = arith.constant 2 : index
    %c1_979 = arith.constant 1 : index
    %c12_980 = arith.constant 12 : index
    %644 = vector.load %arg10[%c1_977, %c2_978, %c1_979, %c12_980] : memref<4x4x6x72xf32, #tpu.memory_space<vmem>>, vector<1x1x4x48xf32>
    %645 = vector.shape_cast %644 : vector<1x1x4x48xf32> to vector<4x48xf32>
    %c2_981 = arith.constant 2 : index
    %c1_982 = arith.constant 1 : index
    %c1_983 = arith.constant 1 : index
    %c12_984 = arith.constant 12 : index
    %646 = vector.load %arg10[%c2_981, %c1_982, %c1_983, %c12_984] : memref<4x4x6x72xf32, #tpu.memory_space<vmem>>, vector<1x1x4x48xf32>
    %647 = vector.shape_cast %646 : vector<1x1x4x48xf32> to vector<4x48xf32>
    %c2_985 = arith.constant 2 : index
    %c2_986 = arith.constant 2 : index
    %c1_987 = arith.constant 1 : index
    %c12_988 = arith.constant 12 : index
    %648 = vector.load %arg10[%c2_985, %c2_986, %c1_987, %c12_988] : memref<4x4x6x72xf32, #tpu.memory_space<vmem>>, vector<1x1x4x48xf32>
    %649 = vector.shape_cast %648 : vector<1x1x4x48xf32> to vector<4x48xf32>
    %650 = tpu.concatenate %643, %645, %647, %649 in 1 : vector<4x48xf32>, vector<4x48xf32>, vector<4x48xf32>, vector<4x48xf32> -> vector<4x192xf32>
    %c1_989 = arith.constant 1 : index
    %c2_990 = arith.constant 2 : index
    %c1_991 = arith.constant 1 : index
    %c12_992 = arith.constant 12 : index
    %651 = vector.load %arg10[%c1_989, %c2_990, %c1_991, %c12_992] : memref<4x4x6x72xf32, #tpu.memory_space<vmem>>, vector<1x1x4x48xf32>
    %652 = vector.shape_cast %651 : vector<1x1x4x48xf32> to vector<4x48xf32>
    %c1_993 = arith.constant 1 : index
    %c3_994 = arith.constant 3 : index
    %c1_995 = arith.constant 1 : index
    %c12_996 = arith.constant 12 : index
    %653 = vector.load %arg10[%c1_993, %c3_994, %c1_995, %c12_996] : memref<4x4x6x72xf32, #tpu.memory_space<vmem>>, vector<1x1x4x48xf32>
    %654 = vector.shape_cast %653 : vector<1x1x4x48xf32> to vector<4x48xf32>
    %c2_997 = arith.constant 2 : index
    %c2_998 = arith.constant 2 : index
    %c1_999 = arith.constant 1 : index
    %c12_1000 = arith.constant 12 : index
    %655 = vector.load %arg10[%c2_997, %c2_998, %c1_999, %c12_1000] : memref<4x4x6x72xf32, #tpu.memory_space<vmem>>, vector<1x1x4x48xf32>
    %656 = vector.shape_cast %655 : vector<1x1x4x48xf32> to vector<4x48xf32>
    %c2_1001 = arith.constant 2 : index
    %c3_1002 = arith.constant 3 : index
    %c1_1003 = arith.constant 1 : index
    %c12_1004 = arith.constant 12 : index
    %657 = vector.load %arg10[%c2_1001, %c3_1002, %c1_1003, %c12_1004] : memref<4x4x6x72xf32, #tpu.memory_space<vmem>>, vector<1x1x4x48xf32>
    %658 = vector.shape_cast %657 : vector<1x1x4x48xf32> to vector<4x48xf32>
    %659 = tpu.concatenate %652, %654, %656, %658 in 1 : vector<4x48xf32>, vector<4x48xf32>, vector<4x48xf32>, vector<4x48xf32> -> vector<4x192xf32>
    %c1_1005 = arith.constant 1 : index
    %c3_1006 = arith.constant 3 : index
    %c1_1007 = arith.constant 1 : index
    %c12_1008 = arith.constant 12 : index
    %660 = vector.load %arg10[%c1_1005, %c3_1006, %c1_1007, %c12_1008] : memref<4x4x6x72xf32, #tpu.memory_space<vmem>>, vector<1x1x4x48xf32>
    %661 = vector.shape_cast %660 : vector<1x1x4x48xf32> to vector<4x48xf32>
    %c1_1009 = arith.constant 1 : index
    %c0_1010 = arith.constant 0 : index
    %c1_1011 = arith.constant 1 : index
    %c24_1012 = arith.constant 24 : index
    %662 = vector.load %arg10[%c1_1009, %c0_1010, %c1_1011, %c24_1012] : memref<4x4x6x72xf32, #tpu.memory_space<vmem>>, vector<1x1x4x48xf32>
    %663 = vector.shape_cast %662 : vector<1x1x4x48xf32> to vector<4x48xf32>
    %c2_1013 = arith.constant 2 : index
    %c3_1014 = arith.constant 3 : index
    %c1_1015 = arith.constant 1 : index
    %c12_1016 = arith.constant 12 : index
    %664 = vector.load %arg10[%c2_1013, %c3_1014, %c1_1015, %c12_1016] : memref<4x4x6x72xf32, #tpu.memory_space<vmem>>, vector<1x1x4x48xf32>
    %665 = vector.shape_cast %664 : vector<1x1x4x48xf32> to vector<4x48xf32>
    %c2_1017 = arith.constant 2 : index
    %c0_1018 = arith.constant 0 : index
    %c1_1019 = arith.constant 1 : index
    %c24_1020 = arith.constant 24 : index
    %666 = vector.load %arg10[%c2_1017, %c0_1018, %c1_1019, %c24_1020] : memref<4x4x6x72xf32, #tpu.memory_space<vmem>>, vector<1x1x4x48xf32>
    %667 = vector.shape_cast %666 : vector<1x1x4x48xf32> to vector<4x48xf32>
    %668 = tpu.concatenate %661, %663, %665, %667 in 1 : vector<4x48xf32>, vector<4x48xf32>, vector<4x48xf32>, vector<4x48xf32> -> vector<4x192xf32>
    %c2_1021 = arith.constant 2 : index
    %c0_1022 = arith.constant 0 : index
    %c1_1023 = arith.constant 1 : index
    %c12_1024 = arith.constant 12 : index
    %669 = vector.load %arg10[%c2_1021, %c0_1022, %c1_1023, %c12_1024] : memref<4x4x6x72xf32, #tpu.memory_space<vmem>>, vector<1x1x4x48xf32>
    %670 = vector.shape_cast %669 : vector<1x1x4x48xf32> to vector<4x48xf32>
    %c2_1025 = arith.constant 2 : index
    %c1_1026 = arith.constant 1 : index
    %c1_1027 = arith.constant 1 : index
    %c12_1028 = arith.constant 12 : index
    %671 = vector.load %arg10[%c2_1025, %c1_1026, %c1_1027, %c12_1028] : memref<4x4x6x72xf32, #tpu.memory_space<vmem>>, vector<1x1x4x48xf32>
    %672 = vector.shape_cast %671 : vector<1x1x4x48xf32> to vector<4x48xf32>
    %c3_1029 = arith.constant 3 : index
    %c0_1030 = arith.constant 0 : index
    %c1_1031 = arith.constant 1 : index
    %c12_1032 = arith.constant 12 : index
    %673 = vector.load %arg10[%c3_1029, %c0_1030, %c1_1031, %c12_1032] : memref<4x4x6x72xf32, #tpu.memory_space<vmem>>, vector<1x1x4x48xf32>
    %674 = vector.shape_cast %673 : vector<1x1x4x48xf32> to vector<4x48xf32>
    %c3_1033 = arith.constant 3 : index
    %c1_1034 = arith.constant 1 : index
    %c1_1035 = arith.constant 1 : index
    %c12_1036 = arith.constant 12 : index
    %675 = vector.load %arg10[%c3_1033, %c1_1034, %c1_1035, %c12_1036] : memref<4x4x6x72xf32, #tpu.memory_space<vmem>>, vector<1x1x4x48xf32>
    %676 = vector.shape_cast %675 : vector<1x1x4x48xf32> to vector<4x48xf32>
    %677 = tpu.concatenate %670, %672, %674, %676 in 1 : vector<4x48xf32>, vector<4x48xf32>, vector<4x48xf32>, vector<4x48xf32> -> vector<4x192xf32>
    %c2_1037 = arith.constant 2 : index
    %c1_1038 = arith.constant 1 : index
    %c1_1039 = arith.constant 1 : index
    %c12_1040 = arith.constant 12 : index
    %678 = vector.load %arg10[%c2_1037, %c1_1038, %c1_1039, %c12_1040] : memref<4x4x6x72xf32, #tpu.memory_space<vmem>>, vector<1x1x4x48xf32>
    %679 = vector.shape_cast %678 : vector<1x1x4x48xf32> to vector<4x48xf32>
    %c2_1041 = arith.constant 2 : index
    %c2_1042 = arith.constant 2 : index
    %c1_1043 = arith.constant 1 : index
    %c12_1044 = arith.constant 12 : index
    %680 = vector.load %arg10[%c2_1041, %c2_1042, %c1_1043, %c12_1044] : memref<4x4x6x72xf32, #tpu.memory_space<vmem>>, vector<1x1x4x48xf32>
    %681 = vector.shape_cast %680 : vector<1x1x4x48xf32> to vector<4x48xf32>
    %c3_1045 = arith.constant 3 : index
    %c1_1046 = arith.constant 1 : index
    %c1_1047 = arith.constant 1 : index
    %c12_1048 = arith.constant 12 : index
    %682 = vector.load %arg10[%c3_1045, %c1_1046, %c1_1047, %c12_1048] : memref<4x4x6x72xf32, #tpu.memory_space<vmem>>, vector<1x1x4x48xf32>
    %683 = vector.shape_cast %682 : vector<1x1x4x48xf32> to vector<4x48xf32>
    %c3_1049 = arith.constant 3 : index
    %c2_1050 = arith.constant 2 : index
    %c1_1051 = arith.constant 1 : index
    %c12_1052 = arith.constant 12 : index
    %684 = vector.load %arg10[%c3_1049, %c2_1050, %c1_1051, %c12_1052] : memref<4x4x6x72xf32, #tpu.memory_space<vmem>>, vector<1x1x4x48xf32>
    %685 = vector.shape_cast %684 : vector<1x1x4x48xf32> to vector<4x48xf32>
    %686 = tpu.concatenate %679, %681, %683, %685 in 1 : vector<4x48xf32>, vector<4x48xf32>, vector<4x48xf32>, vector<4x48xf32> -> vector<4x192xf32>
    %c2_1053 = arith.constant 2 : index
    %c2_1054 = arith.constant 2 : index
    %c1_1055 = arith.constant 1 : index
    %c12_1056 = arith.constant 12 : index
    %687 = vector.load %arg10[%c2_1053, %c2_1054, %c1_1055, %c12_1056] : memref<4x4x6x72xf32, #tpu.memory_space<vmem>>, vector<1x1x4x48xf32>
    %688 = vector.shape_cast %687 : vector<1x1x4x48xf32> to vector<4x48xf32>
    %c2_1057 = arith.constant 2 : index
    %c3_1058 = arith.constant 3 : index
    %c1_1059 = arith.constant 1 : index
    %c12_1060 = arith.constant 12 : index
    %689 = vector.load %arg10[%c2_1057, %c3_1058, %c1_1059, %c12_1060] : memref<4x4x6x72xf32, #tpu.memory_space<vmem>>, vector<1x1x4x48xf32>
    %690 = vector.shape_cast %689 : vector<1x1x4x48xf32> to vector<4x48xf32>
    %c3_1061 = arith.constant 3 : index
    %c2_1062 = arith.constant 2 : index
    %c1_1063 = arith.constant 1 : index
    %c12_1064 = arith.constant 12 : index
    %691 = vector.load %arg10[%c3_1061, %c2_1062, %c1_1063, %c12_1064] : memref<4x4x6x72xf32, #tpu.memory_space<vmem>>, vector<1x1x4x48xf32>
    %692 = vector.shape_cast %691 : vector<1x1x4x48xf32> to vector<4x48xf32>
    %c3_1065 = arith.constant 3 : index
    %c3_1066 = arith.constant 3 : index
    %c1_1067 = arith.constant 1 : index
    %c12_1068 = arith.constant 12 : index
    %693 = vector.load %arg10[%c3_1065, %c3_1066, %c1_1067, %c12_1068] : memref<4x4x6x72xf32, #tpu.memory_space<vmem>>, vector<1x1x4x48xf32>
    %694 = vector.shape_cast %693 : vector<1x1x4x48xf32> to vector<4x48xf32>
    %695 = tpu.concatenate %688, %690, %692, %694 in 1 : vector<4x48xf32>, vector<4x48xf32>, vector<4x48xf32>, vector<4x48xf32> -> vector<4x192xf32>
    %c2_1069 = arith.constant 2 : index
    %c3_1070 = arith.constant 3 : index
    %c1_1071 = arith.constant 1 : index
    %c12_1072 = arith.constant 12 : index
    %696 = vector.load %arg10[%c2_1069, %c3_1070, %c1_1071, %c12_1072] : memref<4x4x6x72xf32, #tpu.memory_space<vmem>>, vector<1x1x4x48xf32>
    %697 = vector.shape_cast %696 : vector<1x1x4x48xf32> to vector<4x48xf32>
    %c2_1073 = arith.constant 2 : index
    %c0_1074 = arith.constant 0 : index
    %c1_1075 = arith.constant 1 : index
    %c24_1076 = arith.constant 24 : index
    %698 = vector.load %arg10[%c2_1073, %c0_1074, %c1_1075, %c24_1076] : memref<4x4x6x72xf32, #tpu.memory_space<vmem>>, vector<1x1x4x48xf32>
    %699 = vector.shape_cast %698 : vector<1x1x4x48xf32> to vector<4x48xf32>
    %c3_1077 = arith.constant 3 : index
    %c3_1078 = arith.constant 3 : index
    %c1_1079 = arith.constant 1 : index
    %c12_1080 = arith.constant 12 : index
    %700 = vector.load %arg10[%c3_1077, %c3_1078, %c1_1079, %c12_1080] : memref<4x4x6x72xf32, #tpu.memory_space<vmem>>, vector<1x1x4x48xf32>
    %701 = vector.shape_cast %700 : vector<1x1x4x48xf32> to vector<4x48xf32>
    %c3_1081 = arith.constant 3 : index
    %c0_1082 = arith.constant 0 : index
    %c1_1083 = arith.constant 1 : index
    %c24_1084 = arith.constant 24 : index
    %702 = vector.load %arg10[%c3_1081, %c0_1082, %c1_1083, %c24_1084] : memref<4x4x6x72xf32, #tpu.memory_space<vmem>>, vector<1x1x4x48xf32>
    %703 = vector.shape_cast %702 : vector<1x1x4x48xf32> to vector<4x48xf32>
    %704 = tpu.concatenate %697, %699, %701, %703 in 1 : vector<4x48xf32>, vector<4x48xf32>, vector<4x48xf32>, vector<4x48xf32> -> vector<4x192xf32>
    %705 = tpu.concatenate %569, %578, %587, %596, %605, %614, %623, %632, %641, %650, %659, %668, %677, %686, %695, %704 in 0 : vector<4x192xf32>, vector<4x192xf32>, vector<4x192xf32>, vector<4x192xf32>, vector<4x192xf32>, vector<4x192xf32>, vector<4x192xf32>, vector<4x192xf32>, vector<4x192xf32>, vector<4x192xf32>, vector<4x192xf32>, vector<4x192xf32>, vector<4x192xf32>, vector<4x192xf32>, vector<4x192xf32>, vector<4x192xf32> -> vector<64x192xf32>
    %706 = arith.truncf %705 : vector<64x192xf32> to vector<64x192xbf16>
    %cst_1085 = arith.constant dense<0.000000e+00> : vector<64x12xf32>
    %707 = tpu.matmul %706, %560, %cst_1085 {dimension_numbers = #tpu.dot_dimension_numbers<[1], [0], [0], [1], [0, 0, 1, 1], [], []>} : vector<64x192xbf16>, vector<192x12xbf16>, vector<64x12xf32> -> vector<64x12xf32>
    %c0_1086 = arith.constant 0 : index
    %c0_1087 = arith.constant 0 : index
    %708 = vector.load %arg7[%c0_1086, %c0_1087] : memref<1x12xf32, #tpu.memory_space<vmem>>, vector<1x12xf32>
    %709 = vector.broadcast %708 : vector<1x12xf32> to vector<64x12xf32>
    %710 = arith.addf %707, %709 : vector<64x12xf32>
    %cst_1088 = arith.constant 0.000000e+00 : f32
    %711 = vector.broadcast %cst_1088 : f32 to vector<64x12xf32>
    %712 = arith.subf %711, %710 : vector<64x12xf32>
    %713 = math.exp %712 : vector<64x12xf32>
    %cst_1089 = arith.constant 1.000000e+00 : f32
    %714 = vector.broadcast %cst_1089 : f32 to vector<64x12xf32>
    %715 = arith.addf %714, %713 : vector<64x12xf32>
    %cst_1090 = arith.constant 1.000000e+00 : f32
    %716 = vector.broadcast %cst_1090 : f32 to vector<64x12xf32>
    %717 = arith.divf %716, %715 : vector<64x12xf32>
    %718 = vector.extract_strided_slice %717 {offsets = [0, 0], sizes = [4, 12], strides = [1, 1]} : vector<64x12xf32> to vector<4x12xf32>
    %c0_1091 = arith.constant 0 : index
    %c0_1092 = arith.constant 0 : index
    %c1_1093 = arith.constant 1 : index
    %c0_1094 = arith.constant 0 : index
    %c0_1095 = arith.constant 0 : index
    %719 = vector.load %arg8[%c0_1091, %c0_1092, %c1_1093, %c0_1094, %c0_1095] : memref<1x8x8x4x12xf32, #tpu.memory_space<vmem>>, vector<1x1x1x4x12xf32>
    %720 = vector.shape_cast %719 : vector<1x1x1x4x12xf32> to vector<4x12xf32>
    %721 = vector.shape_cast %718 : vector<4x12xf32> to vector<1x1x1x4x12xf32>
    tpu.vector_store %arg8[%c0_1091, %c0_1092, %c1_1093, %c0_1094, %c0_1095], %721 {strides = array<i32>} : memref<1x8x8x4x12xf32, #tpu.memory_space<vmem>>, vector<1x1x1x4x12xf32>,
    %722 = vector.extract_strided_slice %717 {offsets = [4, 0], sizes = [4, 12], strides = [1, 1]} : vector<64x12xf32> to vector<4x12xf32>
    %c0_1096 = arith.constant 0 : index
    %c0_1097 = arith.constant 0 : index
    %c3_1098 = arith.constant 3 : index
    %c0_1099 = arith.constant 0 : index
    %c0_1100 = arith.constant 0 : index
    %723 = vector.load %arg8[%c0_1096, %c0_1097, %c3_1098, %c0_1099, %c0_1100] : memref<1x8x8x4x12xf32, #tpu.memory_space<vmem>>, vector<1x1x1x4x12xf32>
    %724 = vector.shape_cast %723 : vector<1x1x1x4x12xf32> to vector<4x12xf32>
    %725 = vector.shape_cast %722 : vector<4x12xf32> to vector<1x1x1x4x12xf32>
    tpu.vector_store %arg8[%c0_1096, %c0_1097, %c3_1098, %c0_1099, %c0_1100], %725 {strides = array<i32>} : memref<1x8x8x4x12xf32, #tpu.memory_space<vmem>>, vector<1x1x1x4x12xf32>,
    %726 = vector.extract_strided_slice %717 {offsets = [8, 0], sizes = [4, 12], strides = [1, 1]} : vector<64x12xf32> to vector<4x12xf32>
    %c0_1101 = arith.constant 0 : index
    %c0_1102 = arith.constant 0 : index
    %c5 = arith.constant 5 : index
    %c0_1103 = arith.constant 0 : index
    %c0_1104 = arith.constant 0 : index
    %727 = vector.load %arg8[%c0_1101, %c0_1102, %c5, %c0_1103, %c0_1104] : memref<1x8x8x4x12xf32, #tpu.memory_space<vmem>>, vector<1x1x1x4x12xf32>
    %728 = vector.shape_cast %727 : vector<1x1x1x4x12xf32> to vector<4x12xf32>
    %729 = vector.shape_cast %726 : vector<4x12xf32> to vector<1x1x1x4x12xf32>
    tpu.vector_store %arg8[%c0_1101, %c0_1102, %c5, %c0_1103, %c0_1104], %729 {strides = array<i32>} : memref<1x8x8x4x12xf32, #tpu.memory_space<vmem>>, vector<1x1x1x4x12xf32>,
    %730 = vector.extract_strided_slice %717 {offsets = [12, 0], sizes = [4, 12], strides = [1, 1]} : vector<64x12xf32> to vector<4x12xf32>
    %c0_1105 = arith.constant 0 : index
    %c0_1106 = arith.constant 0 : index
    %c7 = arith.constant 7 : index
    %c0_1107 = arith.constant 0 : index
    %c0_1108 = arith.constant 0 : index
    %731 = vector.load %arg8[%c0_1105, %c0_1106, %c7, %c0_1107, %c0_1108] : memref<1x8x8x4x12xf32, #tpu.memory_space<vmem>>, vector<1x1x1x4x12xf32>
    %732 = vector.shape_cast %731 : vector<1x1x1x4x12xf32> to vector<4x12xf32>
    %733 = vector.shape_cast %730 : vector<4x12xf32> to vector<1x1x1x4x12xf32>
    tpu.vector_store %arg8[%c0_1105, %c0_1106, %c7, %c0_1107, %c0_1108], %733 {strides = array<i32>} : memref<1x8x8x4x12xf32, #tpu.memory_space<vmem>>, vector<1x1x1x4x12xf32>,
    %734 = vector.extract_strided_slice %717 {offsets = [16, 0], sizes = [4, 12], strides = [1, 1]} : vector<64x12xf32> to vector<4x12xf32>
    %c0_1109 = arith.constant 0 : index
    %c2_1110 = arith.constant 2 : index
    %c1_1111 = arith.constant 1 : index
    %c0_1112 = arith.constant 0 : index
    %c0_1113 = arith.constant 0 : index
    %735 = vector.load %arg8[%c0_1109, %c2_1110, %c1_1111, %c0_1112, %c0_1113] : memref<1x8x8x4x12xf32, #tpu.memory_space<vmem>>, vector<1x1x1x4x12xf32>
    %736 = vector.shape_cast %735 : vector<1x1x1x4x12xf32> to vector<4x12xf32>
    %737 = vector.shape_cast %734 : vector<4x12xf32> to vector<1x1x1x4x12xf32>
    tpu.vector_store %arg8[%c0_1109, %c2_1110, %c1_1111, %c0_1112, %c0_1113], %737 {strides = array<i32>} : memref<1x8x8x4x12xf32, #tpu.memory_space<vmem>>, vector<1x1x1x4x12xf32>,
    %738 = vector.extract_strided_slice %717 {offsets = [20, 0], sizes = [4, 12], strides = [1, 1]} : vector<64x12xf32> to vector<4x12xf32>
    %c0_1114 = arith.constant 0 : index
    %c2_1115 = arith.constant 2 : index
    %c3_1116 = arith.constant 3 : index
    %c0_1117 = arith.constant 0 : index
    %c0_1118 = arith.constant 0 : index
    %739 = vector.load %arg8[%c0_1114, %c2_1115, %c3_1116, %c0_1117, %c0_1118] : memref<1x8x8x4x12xf32, #tpu.memory_space<vmem>>, vector<1x1x1x4x12xf32>
    %740 = vector.shape_cast %739 : vector<1x1x1x4x12xf32> to vector<4x12xf32>
    %741 = vector.shape_cast %738 : vector<4x12xf32> to vector<1x1x1x4x12xf32>
    tpu.vector_store %arg8[%c0_1114, %c2_1115, %c3_1116, %c0_1117, %c0_1118], %741 {strides = array<i32>} : memref<1x8x8x4x12xf32, #tpu.memory_space<vmem>>, vector<1x1x1x4x12xf32>,
    %742 = vector.extract_strided_slice %717 {offsets = [24, 0], sizes = [4, 12], strides = [1, 1]} : vector<64x12xf32> to vector<4x12xf32>
    %c0_1119 = arith.constant 0 : index
    %c2_1120 = arith.constant 2 : index
    %c5_1121 = arith.constant 5 : index
    %c0_1122 = arith.constant 0 : index
    %c0_1123 = arith.constant 0 : index
    %743 = vector.load %arg8[%c0_1119, %c2_1120, %c5_1121, %c0_1122, %c0_1123] : memref<1x8x8x4x12xf32, #tpu.memory_space<vmem>>, vector<1x1x1x4x12xf32>
    %744 = vector.shape_cast %743 : vector<1x1x1x4x12xf32> to vector<4x12xf32>
    %745 = vector.shape_cast %742 : vector<4x12xf32> to vector<1x1x1x4x12xf32>
    tpu.vector_store %arg8[%c0_1119, %c2_1120, %c5_1121, %c0_1122, %c0_1123], %745 {strides = array<i32>} : memref<1x8x8x4x12xf32, #tpu.memory_space<vmem>>, vector<1x1x1x4x12xf32>,
    %746 = vector.extract_strided_slice %717 {offsets = [28, 0], sizes = [4, 12], strides = [1, 1]} : vector<64x12xf32> to vector<4x12xf32>
    %c0_1124 = arith.constant 0 : index
    %c2_1125 = arith.constant 2 : index
    %c7_1126 = arith.constant 7 : index
    %c0_1127 = arith.constant 0 : index
    %c0_1128 = arith.constant 0 : index
    %747 = vector.load %arg8[%c0_1124, %c2_1125, %c7_1126, %c0_1127, %c0_1128] : memref<1x8x8x4x12xf32, #tpu.memory_space<vmem>>, vector<1x1x1x4x12xf32>
    %748 = vector.shape_cast %747 : vector<1x1x1x4x12xf32> to vector<4x12xf32>
    %749 = vector.shape_cast %746 : vector<4x12xf32> to vector<1x1x1x4x12xf32>
    tpu.vector_store %arg8[%c0_1124, %c2_1125, %c7_1126, %c0_1127, %c0_1128], %749 {strides = array<i32>} : memref<1x8x8x4x12xf32, #tpu.memory_space<vmem>>, vector<1x1x1x4x12xf32>,
    %750 = vector.extract_strided_slice %717 {offsets = [32, 0], sizes = [4, 12], strides = [1, 1]} : vector<64x12xf32> to vector<4x12xf32>
    %c0_1129 = arith.constant 0 : index
    %c4_1130 = arith.constant 4 : index
    %c1_1131 = arith.constant 1 : index
    %c0_1132 = arith.constant 0 : index
    %c0_1133 = arith.constant 0 : index
    %751 = vector.load %arg8[%c0_1129, %c4_1130, %c1_1131, %c0_1132, %c0_1133] : memref<1x8x8x4x12xf32, #tpu.memory_space<vmem>>, vector<1x1x1x4x12xf32>
    %752 = vector.shape_cast %751 : vector<1x1x1x4x12xf32> to vector<4x12xf32>
    %753 = vector.shape_cast %750 : vector<4x12xf32> to vector<1x1x1x4x12xf32>
    tpu.vector_store %arg8[%c0_1129, %c4_1130, %c1_1131, %c0_1132, %c0_1133], %753 {strides = array<i32>} : memref<1x8x8x4x12xf32, #tpu.memory_space<vmem>>, vector<1x1x1x4x12xf32>,
    %754 = vector.extract_strided_slice %717 {offsets = [36, 0], sizes = [4, 12], strides = [1, 1]} : vector<64x12xf32> to vector<4x12xf32>
    %c0_1134 = arith.constant 0 : index
    %c4_1135 = arith.constant 4 : index
    %c3_1136 = arith.constant 3 : index
    %c0_1137 = arith.constant 0 : index
    %c0_1138 = arith.constant 0 : index
    %755 = vector.load %arg8[%c0_1134, %c4_1135, %c3_1136, %c0_1137, %c0_1138] : memref<1x8x8x4x12xf32, #tpu.memory_space<vmem>>, vector<1x1x1x4x12xf32>
    %756 = vector.shape_cast %755 : vector<1x1x1x4x12xf32> to vector<4x12xf32>
    %757 = vector.shape_cast %754 : vector<4x12xf32> to vector<1x1x1x4x12xf32>
    tpu.vector_store %arg8[%c0_1134, %c4_1135, %c3_1136, %c0_1137, %c0_1138], %757 {strides = array<i32>} : memref<1x8x8x4x12xf32, #tpu.memory_space<vmem>>, vector<1x1x1x4x12xf32>,
    %758 = vector.extract_strided_slice %717 {offsets = [40, 0], sizes = [4, 12], strides = [1, 1]} : vector<64x12xf32> to vector<4x12xf32>
    %c0_1139 = arith.constant 0 : index
    %c4_1140 = arith.constant 4 : index
    %c5_1141 = arith.constant 5 : index
    %c0_1142 = arith.constant 0 : index
    %c0_1143 = arith.constant 0 : index
    %759 = vector.load %arg8[%c0_1139, %c4_1140, %c5_1141, %c0_1142, %c0_1143] : memref<1x8x8x4x12xf32, #tpu.memory_space<vmem>>, vector<1x1x1x4x12xf32>
    %760 = vector.shape_cast %759 : vector<1x1x1x4x12xf32> to vector<4x12xf32>
    %761 = vector.shape_cast %758 : vector<4x12xf32> to vector<1x1x1x4x12xf32>
    tpu.vector_store %arg8[%c0_1139, %c4_1140, %c5_1141, %c0_1142, %c0_1143], %761 {strides = array<i32>} : memref<1x8x8x4x12xf32, #tpu.memory_space<vmem>>, vector<1x1x1x4x12xf32>,
    %762 = vector.extract_strided_slice %717 {offsets = [44, 0], sizes = [4, 12], strides = [1, 1]} : vector<64x12xf32> to vector<4x12xf32>
    %c0_1144 = arith.constant 0 : index
    %c4_1145 = arith.constant 4 : index
    %c7_1146 = arith.constant 7 : index
    %c0_1147 = arith.constant 0 : index
    %c0_1148 = arith.constant 0 : index
    %763 = vector.load %arg8[%c0_1144, %c4_1145, %c7_1146, %c0_1147, %c0_1148] : memref<1x8x8x4x12xf32, #tpu.memory_space<vmem>>, vector<1x1x1x4x12xf32>
    %764 = vector.shape_cast %763 : vector<1x1x1x4x12xf32> to vector<4x12xf32>
    %765 = vector.shape_cast %762 : vector<4x12xf32> to vector<1x1x1x4x12xf32>
    tpu.vector_store %arg8[%c0_1144, %c4_1145, %c7_1146, %c0_1147, %c0_1148], %765 {strides = array<i32>} : memref<1x8x8x4x12xf32, #tpu.memory_space<vmem>>, vector<1x1x1x4x12xf32>,
    %766 = vector.extract_strided_slice %717 {offsets = [48, 0], sizes = [4, 12], strides = [1, 1]} : vector<64x12xf32> to vector<4x12xf32>
    %c0_1149 = arith.constant 0 : index
    %c6_1150 = arith.constant 6 : index
    %c1_1151 = arith.constant 1 : index
    %c0_1152 = arith.constant 0 : index
    %c0_1153 = arith.constant 0 : index
    %767 = vector.load %arg8[%c0_1149, %c6_1150, %c1_1151, %c0_1152, %c0_1153] : memref<1x8x8x4x12xf32, #tpu.memory_space<vmem>>, vector<1x1x1x4x12xf32>
    %768 = vector.shape_cast %767 : vector<1x1x1x4x12xf32> to vector<4x12xf32>
    %769 = vector.shape_cast %766 : vector<4x12xf32> to vector<1x1x1x4x12xf32>
    tpu.vector_store %arg8[%c0_1149, %c6_1150, %c1_1151, %c0_1152, %c0_1153], %769 {strides = array<i32>} : memref<1x8x8x4x12xf32, #tpu.memory_space<vmem>>, vector<1x1x1x4x12xf32>,
    %770 = vector.extract_strided_slice %717 {offsets = [52, 0], sizes = [4, 12], strides = [1, 1]} : vector<64x12xf32> to vector<4x12xf32>
    %c0_1154 = arith.constant 0 : index
    %c6_1155 = arith.constant 6 : index
    %c3_1156 = arith.constant 3 : index
    %c0_1157 = arith.constant 0 : index
    %c0_1158 = arith.constant 0 : index
    %771 = vector.load %arg8[%c0_1154, %c6_1155, %c3_1156, %c0_1157, %c0_1158] : memref<1x8x8x4x12xf32, #tpu.memory_space<vmem>>, vector<1x1x1x4x12xf32>
    %772 = vector.shape_cast %771 : vector<1x1x1x4x12xf32> to vector<4x12xf32>
    %773 = vector.shape_cast %770 : vector<4x12xf32> to vector<1x1x1x4x12xf32>
    tpu.vector_store %arg8[%c0_1154, %c6_1155, %c3_1156, %c0_1157, %c0_1158], %773 {strides = array<i32>} : memref<1x8x8x4x12xf32, #tpu.memory_space<vmem>>, vector<1x1x1x4x12xf32>,
    %774 = vector.extract_strided_slice %717 {offsets = [56, 0], sizes = [4, 12], strides = [1, 1]} : vector<64x12xf32> to vector<4x12xf32>
    %c0_1159 = arith.constant 0 : index
    %c6_1160 = arith.constant 6 : index
    %c5_1161 = arith.constant 5 : index
    %c0_1162 = arith.constant 0 : index
    %c0_1163 = arith.constant 0 : index
    %775 = vector.load %arg8[%c0_1159, %c6_1160, %c5_1161, %c0_1162, %c0_1163] : memref<1x8x8x4x12xf32, #tpu.memory_space<vmem>>, vector<1x1x1x4x12xf32>
    %776 = vector.shape_cast %775 : vector<1x1x1x4x12xf32> to vector<4x12xf32>
    %777 = vector.shape_cast %774 : vector<4x12xf32> to vector<1x1x1x4x12xf32>
    tpu.vector_store %arg8[%c0_1159, %c6_1160, %c5_1161, %c0_1162, %c0_1163], %777 {strides = array<i32>} : memref<1x8x8x4x12xf32, #tpu.memory_space<vmem>>, vector<1x1x1x4x12xf32>,
    %778 = vector.extract_strided_slice %717 {offsets = [60, 0], sizes = [4, 12], strides = [1, 1]} : vector<64x12xf32> to vector<4x12xf32>
    %c0_1164 = arith.constant 0 : index
    %c6_1165 = arith.constant 6 : index
    %c7_1166 = arith.constant 7 : index
    %c0_1167 = arith.constant 0 : index
    %c0_1168 = arith.constant 0 : index
    %779 = vector.load %arg8[%c0_1164, %c6_1165, %c7_1166, %c0_1167, %c0_1168] : memref<1x8x8x4x12xf32, #tpu.memory_space<vmem>>, vector<1x1x1x4x12xf32>
    %780 = vector.shape_cast %779 : vector<1x1x1x4x12xf32> to vector<4x12xf32>
    %781 = vector.shape_cast %778 : vector<4x12xf32> to vector<1x1x1x4x12xf32>
    tpu.vector_store %arg8[%c0_1164, %c6_1165, %c7_1166, %c0_1167, %c0_1168], %781 {strides = array<i32>} : memref<1x8x8x4x12xf32, #tpu.memory_space<vmem>>, vector<1x1x1x4x12xf32>,
    %c1_1169 = arith.constant 1 : index
    %c0_1170 = arith.constant 0 : index
    %c0_1171 = arith.constant 0 : index
    %c0_1172 = arith.constant 0 : index
    %782 = vector.load %arg6[%c1_1169, %c0_1170, %c0_1171, %c0_1172] : memref<2x2x192x12xbf16, #tpu.memory_space<vmem>>, vector<1x1x192x12xbf16>
    %783 = vector.shape_cast %782 : vector<1x1x192x12xbf16> to vector<192x12xbf16>
    %c0_1173 = arith.constant 0 : index
    %c3_1174 = arith.constant 3 : index
    %c1_1175 = arith.constant 1 : index
    %c0_1176 = arith.constant 0 : index
    %784 = vector.load %arg10[%c0_1173, %c3_1174, %c1_1175, %c0_1176] : memref<4x4x6x72xf32, #tpu.memory_space<vmem>>, vector<1x1x4x48xf32>
    %785 = vector.shape_cast %784 : vector<1x1x4x48xf32> to vector<4x48xf32>
    %c0_1177 = arith.constant 0 : index
    %c0_1178 = arith.constant 0 : index
    %c1_1179 = arith.constant 1 : index
    %c12_1180 = arith.constant 12 : index
    %786 = vector.load %arg10[%c0_1177, %c0_1178, %c1_1179, %c12_1180] : memref<4x4x6x72xf32, #tpu.memory_space<vmem>>, vector<1x1x4x48xf32>
    %787 = vector.shape_cast %786 : vector<1x1x4x48xf32> to vector<4x48xf32>
    %c1_1181 = arith.constant 1 : index
    %c3_1182 = arith.constant 3 : index
    %c1_1183 = arith.constant 1 : index
    %c0_1184 = arith.constant 0 : index
    %788 = vector.load %arg10[%c1_1181, %c3_1182, %c1_1183, %c0_1184] : memref<4x4x6x72xf32, #tpu.memory_space<vmem>>, vector<1x1x4x48xf32>
    %789 = vector.shape_cast %788 : vector<1x1x4x48xf32> to vector<4x48xf32>
    %c1_1185 = arith.constant 1 : index
    %c0_1186 = arith.constant 0 : index
    %c1_1187 = arith.constant 1 : index
    %c12_1188 = arith.constant 12 : index
    %790 = vector.load %arg10[%c1_1185, %c0_1186, %c1_1187, %c12_1188] : memref<4x4x6x72xf32, #tpu.memory_space<vmem>>, vector<1x1x4x48xf32>
    %791 = vector.shape_cast %790 : vector<1x1x4x48xf32> to vector<4x48xf32>
    %792 = tpu.concatenate %785, %787, %789, %791 in 1 : vector<4x48xf32>, vector<4x48xf32>, vector<4x48xf32>, vector<4x48xf32> -> vector<4x192xf32>
    %c0_1189 = arith.constant 0 : index
    %c0_1190 = arith.constant 0 : index
    %c1_1191 = arith.constant 1 : index
    %c12_1192 = arith.constant 12 : index
    %793 = vector.load %arg10[%c0_1189, %c0_1190, %c1_1191, %c12_1192] : memref<4x4x6x72xf32, #tpu.memory_space<vmem>>, vector<1x1x4x48xf32>
    %794 = vector.shape_cast %793 : vector<1x1x4x48xf32> to vector<4x48xf32>
    %c0_1193 = arith.constant 0 : index
    %c1_1194 = arith.constant 1 : index
    %c1_1195 = arith.constant 1 : index
    %c12_1196 = arith.constant 12 : index
    %795 = vector.load %arg10[%c0_1193, %c1_1194, %c1_1195, %c12_1196] : memref<4x4x6x72xf32, #tpu.memory_space<vmem>>, vector<1x1x4x48xf32>
    %796 = vector.shape_cast %795 : vector<1x1x4x48xf32> to vector<4x48xf32>
    %c1_1197 = arith.constant 1 : index
    %c0_1198 = arith.constant 0 : index
    %c1_1199 = arith.constant 1 : index
    %c12_1200 = arith.constant 12 : index
    %797 = vector.load %arg10[%c1_1197, %c0_1198, %c1_1199, %c12_1200] : memref<4x4x6x72xf32, #tpu.memory_space<vmem>>, vector<1x1x4x48xf32>
    %798 = vector.shape_cast %797 : vector<1x1x4x48xf32> to vector<4x48xf32>
    %c1_1201 = arith.constant 1 : index
    %c1_1202 = arith.constant 1 : index
    %c1_1203 = arith.constant 1 : index
    %c12_1204 = arith.constant 12 : index
    %799 = vector.load %arg10[%c1_1201, %c1_1202, %c1_1203, %c12_1204] : memref<4x4x6x72xf32, #tpu.memory_space<vmem>>, vector<1x1x4x48xf32>
    %800 = vector.shape_cast %799 : vector<1x1x4x48xf32> to vector<4x48xf32>
    %801 = tpu.concatenate %794, %796, %798, %800 in 1 : vector<4x48xf32>, vector<4x48xf32>, vector<4x48xf32>, vector<4x48xf32> -> vector<4x192xf32>
    %c0_1205 = arith.constant 0 : index
    %c1_1206 = arith.constant 1 : index
    %c1_1207 = arith.constant 1 : index
    %c12_1208 = arith.constant 12 : index
    %802 = vector.load %arg10[%c0_1205, %c1_1206, %c1_1207, %c12_1208] : memref<4x4x6x72xf32, #tpu.memory_space<vmem>>, vector<1x1x4x48xf32>
    %803 = vector.shape_cast %802 : vector<1x1x4x48xf32> to vector<4x48xf32>
    %c0_1209 = arith.constant 0 : index
    %c2_1210 = arith.constant 2 : index
    %c1_1211 = arith.constant 1 : index
    %c12_1212 = arith.constant 12 : index
    %804 = vector.load %arg10[%c0_1209, %c2_1210, %c1_1211, %c12_1212] : memref<4x4x6x72xf32, #tpu.memory_space<vmem>>, vector<1x1x4x48xf32>
    %805 = vector.shape_cast %804 : vector<1x1x4x48xf32> to vector<4x48xf32>
    %c1_1213 = arith.constant 1 : index
    %c1_1214 = arith.constant 1 : index
    %c1_1215 = arith.constant 1 : index
    %c12_1216 = arith.constant 12 : index
    %806 = vector.load %arg10[%c1_1213, %c1_1214, %c1_1215, %c12_1216] : memref<4x4x6x72xf32, #tpu.memory_space<vmem>>, vector<1x1x4x48xf32>
    %807 = vector.shape_cast %806 : vector<1x1x4x48xf32> to vector<4x48xf32>
    %c1_1217 = arith.constant 1 : index
    %c2_1218 = arith.constant 2 : index
    %c1_1219 = arith.constant 1 : index
    %c12_1220 = arith.constant 12 : index
    %808 = vector.load %arg10[%c1_1217, %c2_1218, %c1_1219, %c12_1220] : memref<4x4x6x72xf32, #tpu.memory_space<vmem>>, vector<1x1x4x48xf32>
    %809 = vector.shape_cast %808 : vector<1x1x4x48xf32> to vector<4x48xf32>
    %810 = tpu.concatenate %803, %805, %807, %809 in 1 : vector<4x48xf32>, vector<4x48xf32>, vector<4x48xf32>, vector<4x48xf32> -> vector<4x192xf32>
    %c0_1221 = arith.constant 0 : index
    %c2_1222 = arith.constant 2 : index
    %c1_1223 = arith.constant 1 : index
    %c12_1224 = arith.constant 12 : index
    %811 = vector.load %arg10[%c0_1221, %c2_1222, %c1_1223, %c12_1224] : memref<4x4x6x72xf32, #tpu.memory_space<vmem>>, vector<1x1x4x48xf32>
    %812 = vector.shape_cast %811 : vector<1x1x4x48xf32> to vector<4x48xf32>
    %c0_1225 = arith.constant 0 : index
    %c3_1226 = arith.constant 3 : index
    %c1_1227 = arith.constant 1 : index
    %c12_1228 = arith.constant 12 : index
    %813 = vector.load %arg10[%c0_1225, %c3_1226, %c1_1227, %c12_1228] : memref<4x4x6x72xf32, #tpu.memory_space<vmem>>, vector<1x1x4x48xf32>
    %814 = vector.shape_cast %813 : vector<1x1x4x48xf32> to vector<4x48xf32>
    %c1_1229 = arith.constant 1 : index
    %c2_1230 = arith.constant 2 : index
    %c1_1231 = arith.constant 1 : index
    %c12_1232 = arith.constant 12 : index
    %815 = vector.load %arg10[%c1_1229, %c2_1230, %c1_1231, %c12_1232] : memref<4x4x6x72xf32, #tpu.memory_space<vmem>>, vector<1x1x4x48xf32>
    %816 = vector.shape_cast %815 : vector<1x1x4x48xf32> to vector<4x48xf32>
    %c1_1233 = arith.constant 1 : index
    %c3_1234 = arith.constant 3 : index
    %c1_1235 = arith.constant 1 : index
    %c12_1236 = arith.constant 12 : index
    %817 = vector.load %arg10[%c1_1233, %c3_1234, %c1_1235, %c12_1236] : memref<4x4x6x72xf32, #tpu.memory_space<vmem>>, vector<1x1x4x48xf32>
    %818 = vector.shape_cast %817 : vector<1x1x4x48xf32> to vector<4x48xf32>
    %819 = tpu.concatenate %812, %814, %816, %818 in 1 : vector<4x48xf32>, vector<4x48xf32>, vector<4x48xf32>, vector<4x48xf32> -> vector<4x192xf32>
    %c1_1237 = arith.constant 1 : index
    %c3_1238 = arith.constant 3 : index
    %c1_1239 = arith.constant 1 : index
    %c0_1240 = arith.constant 0 : index
    %820 = vector.load %arg10[%c1_1237, %c3_1238, %c1_1239, %c0_1240] : memref<4x4x6x72xf32, #tpu.memory_space<vmem>>, vector<1x1x4x48xf32>
    %821 = vector.shape_cast %820 : vector<1x1x4x48xf32> to vector<4x48xf32>
    %c1_1241 = arith.constant 1 : index
    %c0_1242 = arith.constant 0 : index
    %c1_1243 = arith.constant 1 : index
    %c12_1244 = arith.constant 12 : index
    %822 = vector.load %arg10[%c1_1241, %c0_1242, %c1_1243, %c12_1244] : memref<4x4x6x72xf32, #tpu.memory_space<vmem>>, vector<1x1x4x48xf32>
    %823 = vector.shape_cast %822 : vector<1x1x4x48xf32> to vector<4x48xf32>
    %c2_1245 = arith.constant 2 : index
    %c3_1246 = arith.constant 3 : index
    %c1_1247 = arith.constant 1 : index
    %c0_1248 = arith.constant 0 : index
    %824 = vector.load %arg10[%c2_1245, %c3_1246, %c1_1247, %c0_1248] : memref<4x4x6x72xf32, #tpu.memory_space<vmem>>, vector<1x1x4x48xf32>
    %825 = vector.shape_cast %824 : vector<1x1x4x48xf32> to vector<4x48xf32>
    %c2_1249 = arith.constant 2 : index
    %c0_1250 = arith.constant 0 : index
    %c1_1251 = arith.constant 1 : index
    %c12_1252 = arith.constant 12 : index
    %826 = vector.load %arg10[%c2_1249, %c0_1250, %c1_1251, %c12_1252] : memref<4x4x6x72xf32, #tpu.memory_space<vmem>>, vector<1x1x4x48xf32>
    %827 = vector.shape_cast %826 : vector<1x1x4x48xf32> to vector<4x48xf32>
    %828 = tpu.concatenate %821, %823, %825, %827 in 1 : vector<4x48xf32>, vector<4x48xf32>, vector<4x48xf32>, vector<4x48xf32> -> vector<4x192xf32>
    %c1_1253 = arith.constant 1 : index
    %c0_1254 = arith.constant 0 : index
    %c1_1255 = arith.constant 1 : index
    %c12_1256 = arith.constant 12 : index
    %829 = vector.load %arg10[%c1_1253, %c0_1254, %c1_1255, %c12_1256] : memref<4x4x6x72xf32, #tpu.memory_space<vmem>>, vector<1x1x4x48xf32>
    %830 = vector.shape_cast %829 : vector<1x1x4x48xf32> to vector<4x48xf32>
    %c1_1257 = arith.constant 1 : index
    %c1_1258 = arith.constant 1 : index
    %c1_1259 = arith.constant 1 : index
    %c12_1260 = arith.constant 12 : index
    %831 = vector.load %arg10[%c1_1257, %c1_1258, %c1_1259, %c12_1260] : memref<4x4x6x72xf32, #tpu.memory_space<vmem>>, vector<1x1x4x48xf32>
    %832 = vector.shape_cast %831 : vector<1x1x4x48xf32> to vector<4x48xf32>
    %c2_1261 = arith.constant 2 : index
    %c0_1262 = arith.constant 0 : index
    %c1_1263 = arith.constant 1 : index
    %c12_1264 = arith.constant 12 : index
    %833 = vector.load %arg10[%c2_1261, %c0_1262, %c1_1263, %c12_1264] : memref<4x4x6x72xf32, #tpu.memory_space<vmem>>, vector<1x1x4x48xf32>
    %834 = vector.shape_cast %833 : vector<1x1x4x48xf32> to vector<4x48xf32>
    %c2_1265 = arith.constant 2 : index
    %c1_1266 = arith.constant 1 : index
    %c1_1267 = arith.constant 1 : index
    %c12_1268 = arith.constant 12 : index
    %835 = vector.load %arg10[%c2_1265, %c1_1266, %c1_1267, %c12_1268] : memref<4x4x6x72xf32, #tpu.memory_space<vmem>>, vector<1x1x4x48xf32>
    %836 = vector.shape_cast %835 : vector<1x1x4x48xf32> to vector<4x48xf32>
    %837 = tpu.concatenate %830, %832, %834, %836 in 1 : vector<4x48xf32>, vector<4x48xf32>, vector<4x48xf32>, vector<4x48xf32> -> vector<4x192xf32>
    %c1_1269 = arith.constant 1 : index
    %c1_1270 = arith.constant 1 : index
    %c1_1271 = arith.constant 1 : index
    %c12_1272 = arith.constant 12 : index
    %838 = vector.load %arg10[%c1_1269, %c1_1270, %c1_1271, %c12_1272] : memref<4x4x6x72xf32, #tpu.memory_space<vmem>>, vector<1x1x4x48xf32>
    %839 = vector.shape_cast %838 : vector<1x1x4x48xf32> to vector<4x48xf32>
    %c1_1273 = arith.constant 1 : index
    %c2_1274 = arith.constant 2 : index
    %c1_1275 = arith.constant 1 : index
    %c12_1276 = arith.constant 12 : index
    %840 = vector.load %arg10[%c1_1273, %c2_1274, %c1_1275, %c12_1276] : memref<4x4x6x72xf32, #tpu.memory_space<vmem>>, vector<1x1x4x48xf32>
    %841 = vector.shape_cast %840 : vector<1x1x4x48xf32> to vector<4x48xf32>
    %c2_1277 = arith.constant 2 : index
    %c1_1278 = arith.constant 1 : index
    %c1_1279 = arith.constant 1 : index
    %c12_1280 = arith.constant 12 : index
    %842 = vector.load %arg10[%c2_1277, %c1_1278, %c1_1279, %c12_1280] : memref<4x4x6x72xf32, #tpu.memory_space<vmem>>, vector<1x1x4x48xf32>
    %843 = vector.shape_cast %842 : vector<1x1x4x48xf32> to vector<4x48xf32>
    %c2_1281 = arith.constant 2 : index
    %c2_1282 = arith.constant 2 : index
    %c1_1283 = arith.constant 1 : index
    %c12_1284 = arith.constant 12 : index
    %844 = vector.load %arg10[%c2_1281, %c2_1282, %c1_1283, %c12_1284] : memref<4x4x6x72xf32, #tpu.memory_space<vmem>>, vector<1x1x4x48xf32>
    %845 = vector.shape_cast %844 : vector<1x1x4x48xf32> to vector<4x48xf32>
    %846 = tpu.concatenate %839, %841, %843, %845 in 1 : vector<4x48xf32>, vector<4x48xf32>, vector<4x48xf32>, vector<4x48xf32> -> vector<4x192xf32>
    %c1_1285 = arith.constant 1 : index
    %c2_1286 = arith.constant 2 : index
    %c1_1287 = arith.constant 1 : index
    %c12_1288 = arith.constant 12 : index
    %847 = vector.load %arg10[%c1_1285, %c2_1286, %c1_1287, %c12_1288] : memref<4x4x6x72xf32, #tpu.memory_space<vmem>>, vector<1x1x4x48xf32>
    %848 = vector.shape_cast %847 : vector<1x1x4x48xf32> to vector<4x48xf32>
    %c1_1289 = arith.constant 1 : index
    %c3_1290 = arith.constant 3 : index
    %c1_1291 = arith.constant 1 : index
    %c12_1292 = arith.constant 12 : index
    %849 = vector.load %arg10[%c1_1289, %c3_1290, %c1_1291, %c12_1292] : memref<4x4x6x72xf32, #tpu.memory_space<vmem>>, vector<1x1x4x48xf32>
    %850 = vector.shape_cast %849 : vector<1x1x4x48xf32> to vector<4x48xf32>
    %c2_1293 = arith.constant 2 : index
    %c2_1294 = arith.constant 2 : index
    %c1_1295 = arith.constant 1 : index
    %c12_1296 = arith.constant 12 : index
    %851 = vector.load %arg10[%c2_1293, %c2_1294, %c1_1295, %c12_1296] : memref<4x4x6x72xf32, #tpu.memory_space<vmem>>, vector<1x1x4x48xf32>
    %852 = vector.shape_cast %851 : vector<1x1x4x48xf32> to vector<4x48xf32>
    %c2_1297 = arith.constant 2 : index
    %c3_1298 = arith.constant 3 : index
    %c1_1299 = arith.constant 1 : index
    %c12_1300 = arith.constant 12 : index
    %853 = vector.load %arg10[%c2_1297, %c3_1298, %c1_1299, %c12_1300] : memref<4x4x6x72xf32, #tpu.memory_space<vmem>>, vector<1x1x4x48xf32>
    %854 = vector.shape_cast %853 : vector<1x1x4x48xf32> to vector<4x48xf32>
    %855 = tpu.concatenate %848, %850, %852, %854 in 1 : vector<4x48xf32>, vector<4x48xf32>, vector<4x48xf32>, vector<4x48xf32> -> vector<4x192xf32>
    %c2_1301 = arith.constant 2 : index
    %c3_1302 = arith.constant 3 : index
    %c1_1303 = arith.constant 1 : index
    %c0_1304 = arith.constant 0 : index
    %856 = vector.load %arg10[%c2_1301, %c3_1302, %c1_1303, %c0_1304] : memref<4x4x6x72xf32, #tpu.memory_space<vmem>>, vector<1x1x4x48xf32>
    %857 = vector.shape_cast %856 : vector<1x1x4x48xf32> to vector<4x48xf32>
    %c2_1305 = arith.constant 2 : index
    %c0_1306 = arith.constant 0 : index
    %c1_1307 = arith.constant 1 : index
    %c12_1308 = arith.constant 12 : index
    %858 = vector.load %arg10[%c2_1305, %c0_1306, %c1_1307, %c12_1308] : memref<4x4x6x72xf32, #tpu.memory_space<vmem>>, vector<1x1x4x48xf32>
    %859 = vector.shape_cast %858 : vector<1x1x4x48xf32> to vector<4x48xf32>
    %c3_1309 = arith.constant 3 : index
    %c3_1310 = arith.constant 3 : index
    %c1_1311 = arith.constant 1 : index
    %c0_1312 = arith.constant 0 : index
    %860 = vector.load %arg10[%c3_1309, %c3_1310, %c1_1311, %c0_1312] : memref<4x4x6x72xf32, #tpu.memory_space<vmem>>, vector<1x1x4x48xf32>
    %861 = vector.shape_cast %860 : vector<1x1x4x48xf32> to vector<4x48xf32>
    %c3_1313 = arith.constant 3 : index
    %c0_1314 = arith.constant 0 : index
    %c1_1315 = arith.constant 1 : index
    %c12_1316 = arith.constant 12 : index
    %862 = vector.load %arg10[%c3_1313, %c0_1314, %c1_1315, %c12_1316] : memref<4x4x6x72xf32, #tpu.memory_space<vmem>>, vector<1x1x4x48xf32>
    %863 = vector.shape_cast %862 : vector<1x1x4x48xf32> to vector<4x48xf32>
    %864 = tpu.concatenate %857, %859, %861, %863 in 1 : vector<4x48xf32>, vector<4x48xf32>, vector<4x48xf32>, vector<4x48xf32> -> vector<4x192xf32>
    %c2_1317 = arith.constant 2 : index
    %c0_1318 = arith.constant 0 : index
    %c1_1319 = arith.constant 1 : index
    %c12_1320 = arith.constant 12 : index
    %865 = vector.load %arg10[%c2_1317, %c0_1318, %c1_1319, %c12_1320] : memref<4x4x6x72xf32, #tpu.memory_space<vmem>>, vector<1x1x4x48xf32>
    %866 = vector.shape_cast %865 : vector<1x1x4x48xf32> to vector<4x48xf32>
    %c2_1321 = arith.constant 2 : index
    %c1_1322 = arith.constant 1 : index
    %c1_1323 = arith.constant 1 : index
    %c12_1324 = arith.constant 12 : index
    %867 = vector.load %arg10[%c2_1321, %c1_1322, %c1_1323, %c12_1324] : memref<4x4x6x72xf32, #tpu.memory_space<vmem>>, vector<1x1x4x48xf32>
    %868 = vector.shape_cast %867 : vector<1x1x4x48xf32> to vector<4x48xf32>
    %c3_1325 = arith.constant 3 : index
    %c0_1326 = arith.constant 0 : index
    %c1_1327 = arith.constant 1 : index
    %c12_1328 = arith.constant 12 : index
    %869 = vector.load %arg10[%c3_1325, %c0_1326, %c1_1327, %c12_1328] : memref<4x4x6x72xf32, #tpu.memory_space<vmem>>, vector<1x1x4x48xf32>
    %870 = vector.shape_cast %869 : vector<1x1x4x48xf32> to vector<4x48xf32>
    %c3_1329 = arith.constant 3 : index
    %c1_1330 = arith.constant 1 : index
    %c1_1331 = arith.constant 1 : index
    %c12_1332 = arith.constant 12 : index
    %871 = vector.load %arg10[%c3_1329, %c1_1330, %c1_1331, %c12_1332] : memref<4x4x6x72xf32, #tpu.memory_space<vmem>>, vector<1x1x4x48xf32>
    %872 = vector.shape_cast %871 : vector<1x1x4x48xf32> to vector<4x48xf32>
    %873 = tpu.concatenate %866, %868, %870, %872 in 1 : vector<4x48xf32>, vector<4x48xf32>, vector<4x48xf32>, vector<4x48xf32> -> vector<4x192xf32>
    %c2_1333 = arith.constant 2 : index
    %c1_1334 = arith.constant 1 : index
    %c1_1335 = arith.constant 1 : index
    %c12_1336 = arith.constant 12 : index
    %874 = vector.load %arg10[%c2_1333, %c1_1334, %c1_1335, %c12_1336] : memref<4x4x6x72xf32, #tpu.memory_space<vmem>>, vector<1x1x4x48xf32>
    %875 = vector.shape_cast %874 : vector<1x1x4x48xf32> to vector<4x48xf32>
    %c2_1337 = arith.constant 2 : index
    %c2_1338 = arith.constant 2 : index
    %c1_1339 = arith.constant 1 : index
    %c12_1340 = arith.constant 12 : index
    %876 = vector.load %arg10[%c2_1337, %c2_1338, %c1_1339, %c12_1340] : memref<4x4x6x72xf32, #tpu.memory_space<vmem>>, vector<1x1x4x48xf32>
    %877 = vector.shape_cast %876 : vector<1x1x4x48xf32> to vector<4x48xf32>
    %c3_1341 = arith.constant 3 : index
    %c1_1342 = arith.constant 1 : index
    %c1_1343 = arith.constant 1 : index
    %c12_1344 = arith.constant 12 : index
    %878 = vector.load %arg10[%c3_1341, %c1_1342, %c1_1343, %c12_1344] : memref<4x4x6x72xf32, #tpu.memory_space<vmem>>, vector<1x1x4x48xf32>
    %879 = vector.shape_cast %878 : vector<1x1x4x48xf32> to vector<4x48xf32>
    %c3_1345 = arith.constant 3 : index
    %c2_1346 = arith.constant 2 : index
    %c1_1347 = arith.constant 1 : index
    %c12_1348 = arith.constant 12 : index
    %880 = vector.load %arg10[%c3_1345, %c2_1346, %c1_1347, %c12_1348] : memref<4x4x6x72xf32, #tpu.memory_space<vmem>>, vector<1x1x4x48xf32>
    %881 = vector.shape_cast %880 : vector<1x1x4x48xf32> to vector<4x48xf32>
    %882 = tpu.concatenate %875, %877, %879, %881 in 1 : vector<4x48xf32>, vector<4x48xf32>, vector<4x48xf32>, vector<4x48xf32> -> vector<4x192xf32>
    %c2_1349 = arith.constant 2 : index
    %c2_1350 = arith.constant 2 : index
    %c1_1351 = arith.constant 1 : index
    %c12_1352 = arith.constant 12 : index
    %883 = vector.load %arg10[%c2_1349, %c2_1350, %c1_1351, %c12_1352] : memref<4x4x6x72xf32, #tpu.memory_space<vmem>>, vector<1x1x4x48xf32>
    %884 = vector.shape_cast %883 : vector<1x1x4x48xf32> to vector<4x48xf32>
    %c2_1353 = arith.constant 2 : index
    %c3_1354 = arith.constant 3 : index
    %c1_1355 = arith.constant 1 : index
    %c12_1356 = arith.constant 12 : index
    %885 = vector.load %arg10[%c2_1353, %c3_1354, %c1_1355, %c12_1356] : memref<4x4x6x72xf32, #tpu.memory_space<vmem>>, vector<1x1x4x48xf32>
    %886 = vector.shape_cast %885 : vector<1x1x4x48xf32> to vector<4x48xf32>
    %c3_1357 = arith.constant 3 : index
    %c2_1358 = arith.constant 2 : index
    %c1_1359 = arith.constant 1 : index
    %c12_1360 = arith.constant 12 : index
    %887 = vector.load %arg10[%c3_1357, %c2_1358, %c1_1359, %c12_1360] : memref<4x4x6x72xf32, #tpu.memory_space<vmem>>, vector<1x1x4x48xf32>
    %888 = vector.shape_cast %887 : vector<1x1x4x48xf32> to vector<4x48xf32>
    %c3_1361 = arith.constant 3 : index
    %c3_1362 = arith.constant 3 : index
    %c1_1363 = arith.constant 1 : index
    %c12_1364 = arith.constant 12 : index
    %889 = vector.load %arg10[%c3_1361, %c3_1362, %c1_1363, %c12_1364] : memref<4x4x6x72xf32, #tpu.memory_space<vmem>>, vector<1x1x4x48xf32>
    %890 = vector.shape_cast %889 : vector<1x1x4x48xf32> to vector<4x48xf32>
    %891 = tpu.concatenate %884, %886, %888, %890 in 1 : vector<4x48xf32>, vector<4x48xf32>, vector<4x48xf32>, vector<4x48xf32> -> vector<4x192xf32>
    %c3_1365 = arith.constant 3 : index
    %c3_1366 = arith.constant 3 : index
    %c1_1367 = arith.constant 1 : index
    %c0_1368 = arith.constant 0 : index
    %892 = vector.load %arg10[%c3_1365, %c3_1366, %c1_1367, %c0_1368] : memref<4x4x6x72xf32, #tpu.memory_space<vmem>>, vector<1x1x4x48xf32>
    %893 = vector.shape_cast %892 : vector<1x1x4x48xf32> to vector<4x48xf32>
    %c3_1369 = arith.constant 3 : index
    %c0_1370 = arith.constant 0 : index
    %c1_1371 = arith.constant 1 : index
    %c12_1372 = arith.constant 12 : index
    %894 = vector.load %arg10[%c3_1369, %c0_1370, %c1_1371, %c12_1372] : memref<4x4x6x72xf32, #tpu.memory_space<vmem>>, vector<1x1x4x48xf32>
    %895 = vector.shape_cast %894 : vector<1x1x4x48xf32> to vector<4x48xf32>
    %c0_1373 = arith.constant 0 : index
    %c3_1374 = arith.constant 3 : index
    %c2_1375 = arith.constant 2 : index
    %c0_1376 = arith.constant 0 : index
    %896 = vector.load %arg10[%c0_1373, %c3_1374, %c2_1375, %c0_1376] : memref<4x4x6x72xf32, #tpu.memory_space<vmem>>, vector<1x1x4x48xf32>
    %897 = vector.shape_cast %896 : vector<1x1x4x48xf32> to vector<4x48xf32>
    %c0_1377 = arith.constant 0 : index
    %c0_1378 = arith.constant 0 : index
    %c2_1379 = arith.constant 2 : index
    %c12_1380 = arith.constant 12 : index
    %898 = vector.load %arg10[%c0_1377, %c0_1378, %c2_1379, %c12_1380] : memref<4x4x6x72xf32, #tpu.memory_space<vmem>>, vector<1x1x4x48xf32>
    %899 = vector.shape_cast %898 : vector<1x1x4x48xf32> to vector<4x48xf32>
    %900 = tpu.concatenate %893, %895, %897, %899 in 1 : vector<4x48xf32>, vector<4x48xf32>, vector<4x48xf32>, vector<4x48xf32> -> vector<4x192xf32>
    %c3_1381 = arith.constant 3 : index
    %c0_1382 = arith.constant 0 : index
    %c1_1383 = arith.constant 1 : index
    %c12_1384 = arith.constant 12 : index
    %901 = vector.load %arg10[%c3_1381, %c0_1382, %c1_1383, %c12_1384] : memref<4x4x6x72xf32, #tpu.memory_space<vmem>>, vector<1x1x4x48xf32>
    %902 = vector.shape_cast %901 : vector<1x1x4x48xf32> to vector<4x48xf32>
    %c3_1385 = arith.constant 3 : index
    %c1_1386 = arith.constant 1 : index
    %c1_1387 = arith.constant 1 : index
    %c12_1388 = arith.constant 12 : index
    %903 = vector.load %arg10[%c3_1385, %c1_1386, %c1_1387, %c12_1388] : memref<4x4x6x72xf32, #tpu.memory_space<vmem>>, vector<1x1x4x48xf32>
    %904 = vector.shape_cast %903 : vector<1x1x4x48xf32> to vector<4x48xf32>
    %c0_1389 = arith.constant 0 : index
    %c0_1390 = arith.constant 0 : index
    %c2_1391 = arith.constant 2 : index
    %c12_1392 = arith.constant 12 : index
    %905 = vector.load %arg10[%c0_1389, %c0_1390, %c2_1391, %c12_1392] : memref<4x4x6x72xf32, #tpu.memory_space<vmem>>, vector<1x1x4x48xf32>
    %906 = vector.shape_cast %905 : vector<1x1x4x48xf32> to vector<4x48xf32>
    %c0_1393 = arith.constant 0 : index
    %c1_1394 = arith.constant 1 : index
    %c2_1395 = arith.constant 2 : index
    %c12_1396 = arith.constant 12 : index
    %907 = vector.load %arg10[%c0_1393, %c1_1394, %c2_1395, %c12_1396] : memref<4x4x6x72xf32, #tpu.memory_space<vmem>>, vector<1x1x4x48xf32>
    %908 = vector.shape_cast %907 : vector<1x1x4x48xf32> to vector<4x48xf32>
    %909 = tpu.concatenate %902, %904, %906, %908 in 1 : vector<4x48xf32>, vector<4x48xf32>, vector<4x48xf32>, vector<4x48xf32> -> vector<4x192xf32>
    %c3_1397 = arith.constant 3 : index
    %c1_1398 = arith.constant 1 : index
    %c1_1399 = arith.constant 1 : index
    %c12_1400 = arith.constant 12 : index
    %910 = vector.load %arg10[%c3_1397, %c1_1398, %c1_1399, %c12_1400] : memref<4x4x6x72xf32, #tpu.memory_space<vmem>>, vector<1x1x4x48xf32>
    %911 = vector.shape_cast %910 : vector<1x1x4x48xf32> to vector<4x48xf32>
    %c3_1401 = arith.constant 3 : index
    %c2_1402 = arith.constant 2 : index
    %c1_1403 = arith.constant 1 : index
    %c12_1404 = arith.constant 12 : index
    %912 = vector.load %arg10[%c3_1401, %c2_1402, %c1_1403, %c12_1404] : memref<4x4x6x72xf32, #tpu.memory_space<vmem>>, vector<1x1x4x48xf32>
    %913 = vector.shape_cast %912 : vector<1x1x4x48xf32> to vector<4x48xf32>
    %c0_1405 = arith.constant 0 : index
    %c1_1406 = arith.constant 1 : index
    %c2_1407 = arith.constant 2 : index
    %c12_1408 = arith.constant 12 : index
    %914 = vector.load %arg10[%c0_1405, %c1_1406, %c2_1407, %c12_1408] : memref<4x4x6x72xf32, #tpu.memory_space<vmem>>, vector<1x1x4x48xf32>
    %915 = vector.shape_cast %914 : vector<1x1x4x48xf32> to vector<4x48xf32>
    %c0_1409 = arith.constant 0 : index
    %c2_1410 = arith.constant 2 : index
    %c2_1411 = arith.constant 2 : index
    %c12_1412 = arith.constant 12 : index
    %916 = vector.load %arg10[%c0_1409, %c2_1410, %c2_1411, %c12_1412] : memref<4x4x6x72xf32, #tpu.memory_space<vmem>>, vector<1x1x4x48xf32>
    %917 = vector.shape_cast %916 : vector<1x1x4x48xf32> to vector<4x48xf32>
    %918 = tpu.concatenate %911, %913, %915, %917 in 1 : vector<4x48xf32>, vector<4x48xf32>, vector<4x48xf32>, vector<4x48xf32> -> vector<4x192xf32>
    %c3_1413 = arith.constant 3 : index
    %c2_1414 = arith.constant 2 : index
    %c1_1415 = arith.constant 1 : index
    %c12_1416 = arith.constant 12 : index
    %919 = vector.load %arg10[%c3_1413, %c2_1414, %c1_1415, %c12_1416] : memref<4x4x6x72xf32, #tpu.memory_space<vmem>>, vector<1x1x4x48xf32>
    %920 = vector.shape_cast %919 : vector<1x1x4x48xf32> to vector<4x48xf32>
    %c3_1417 = arith.constant 3 : index
    %c3_1418 = arith.constant 3 : index
    %c1_1419 = arith.constant 1 : index
    %c12_1420 = arith.constant 12 : index
    %921 = vector.load %arg10[%c3_1417, %c3_1418, %c1_1419, %c12_1420] : memref<4x4x6x72xf32, #tpu.memory_space<vmem>>, vector<1x1x4x48xf32>
    %922 = vector.shape_cast %921 : vector<1x1x4x48xf32> to vector<4x48xf32>
    %c0_1421 = arith.constant 0 : index
    %c2_1422 = arith.constant 2 : index
    %c2_1423 = arith.constant 2 : index
    %c12_1424 = arith.constant 12 : index
    %923 = vector.load %arg10[%c0_1421, %c2_1422, %c2_1423, %c12_1424] : memref<4x4x6x72xf32, #tpu.memory_space<vmem>>, vector<1x1x4x48xf32>
    %924 = vector.shape_cast %923 : vector<1x1x4x48xf32> to vector<4x48xf32>
    %c0_1425 = arith.constant 0 : index
    %c3_1426 = arith.constant 3 : index
    %c2_1427 = arith.constant 2 : index
    %c12_1428 = arith.constant 12 : index
    %925 = vector.load %arg10[%c0_1425, %c3_1426, %c2_1427, %c12_1428] : memref<4x4x6x72xf32, #tpu.memory_space<vmem>>, vector<1x1x4x48xf32>
    %926 = vector.shape_cast %925 : vector<1x1x4x48xf32> to vector<4x48xf32>
    %927 = tpu.concatenate %920, %922, %924, %926 in 1 : vector<4x48xf32>, vector<4x48xf32>, vector<4x48xf32>, vector<4x48xf32> -> vector<4x192xf32>
    %928 = tpu.concatenate %792, %801, %810, %819, %828, %837, %846, %855, %864, %873, %882, %891, %900, %909, %918, %927 in 0 : vector<4x192xf32>, vector<4x192xf32>, vector<4x192xf32>, vector<4x192xf32>, vector<4x192xf32>, vector<4x192xf32>, vector<4x192xf32>, vector<4x192xf32>, vector<4x192xf32>, vector<4x192xf32>, vector<4x192xf32>, vector<4x192xf32>, vector<4x192xf32>, vector<4x192xf32>, vector<4x192xf32>, vector<4x192xf32> -> vector<64x192xf32>
    %929 = arith.truncf %928 : vector<64x192xf32> to vector<64x192xbf16>
    %cst_1429 = arith.constant dense<0.000000e+00> : vector<64x12xf32>
    %930 = tpu.matmul %929, %783, %cst_1429 {dimension_numbers = #tpu.dot_dimension_numbers<[1], [0], [0], [1], [0, 0, 1, 1], [], []>} : vector<64x192xbf16>, vector<192x12xbf16>, vector<64x12xf32> -> vector<64x12xf32>
    %c0_1430 = arith.constant 0 : index
    %c0_1431 = arith.constant 0 : index
    %931 = vector.load %arg7[%c0_1430, %c0_1431] : memref<1x12xf32, #tpu.memory_space<vmem>>, vector<1x12xf32>
    %932 = vector.broadcast %931 : vector<1x12xf32> to vector<64x12xf32>
    %933 = arith.addf %930, %932 : vector<64x12xf32>
    %cst_1432 = arith.constant 0.000000e+00 : f32
    %934 = vector.broadcast %cst_1432 : f32 to vector<64x12xf32>
    %935 = arith.subf %934, %933 : vector<64x12xf32>
    %936 = math.exp %935 : vector<64x12xf32>
    %cst_1433 = arith.constant 1.000000e+00 : f32
    %937 = vector.broadcast %cst_1433 : f32 to vector<64x12xf32>
    %938 = arith.addf %937, %936 : vector<64x12xf32>
    %cst_1434 = arith.constant 1.000000e+00 : f32
    %939 = vector.broadcast %cst_1434 : f32 to vector<64x12xf32>
    %940 = arith.divf %939, %938 : vector<64x12xf32>
    %941 = vector.extract_strided_slice %940 {offsets = [0, 0], sizes = [4, 12], strides = [1, 1]} : vector<64x12xf32> to vector<4x12xf32>
    %c0_1435 = arith.constant 0 : index
    %c1_1436 = arith.constant 1 : index
    %c0_1437 = arith.constant 0 : index
    %c0_1438 = arith.constant 0 : index
    %c0_1439 = arith.constant 0 : index
    %942 = vector.load %arg8[%c0_1435, %c1_1436, %c0_1437, %c0_1438, %c0_1439] : memref<1x8x8x4x12xf32, #tpu.memory_space<vmem>>, vector<1x1x1x4x12xf32>
    %943 = vector.shape_cast %942 : vector<1x1x1x4x12xf32> to vector<4x12xf32>
    %944 = vector.shape_cast %941 : vector<4x12xf32> to vector<1x1x1x4x12xf32>
    tpu.vector_store %arg8[%c0_1435, %c1_1436, %c0_1437, %c0_1438, %c0_1439], %944 {strides = array<i32>} : memref<1x8x8x4x12xf32, #tpu.memory_space<vmem>>, vector<1x1x1x4x12xf32>,
    %945 = vector.extract_strided_slice %940 {offsets = [4, 0], sizes = [4, 12], strides = [1, 1]} : vector<64x12xf32> to vector<4x12xf32>
    %c0_1440 = arith.constant 0 : index
    %c1_1441 = arith.constant 1 : index
    %c2_1442 = arith.constant 2 : index
    %c0_1443 = arith.constant 0 : index
    %c0_1444 = arith.constant 0 : index
    %946 = vector.load %arg8[%c0_1440, %c1_1441, %c2_1442, %c0_1443, %c0_1444] : memref<1x8x8x4x12xf32, #tpu.memory_space<vmem>>, vector<1x1x1x4x12xf32>
    %947 = vector.shape_cast %946 : vector<1x1x1x4x12xf32> to vector<4x12xf32>
    %948 = vector.shape_cast %945 : vector<4x12xf32> to vector<1x1x1x4x12xf32>
    tpu.vector_store %arg8[%c0_1440, %c1_1441, %c2_1442, %c0_1443, %c0_1444], %948 {strides = array<i32>} : memref<1x8x8x4x12xf32, #tpu.memory_space<vmem>>, vector<1x1x1x4x12xf32>,
    %949 = vector.extract_strided_slice %940 {offsets = [8, 0], sizes = [4, 12], strides = [1, 1]} : vector<64x12xf32> to vector<4x12xf32>
    %c0_1445 = arith.constant 0 : index
    %c1_1446 = arith.constant 1 : index
    %c4_1447 = arith.constant 4 : index
    %c0_1448 = arith.constant 0 : index
    %c0_1449 = arith.constant 0 : index
    %950 = vector.load %arg8[%c0_1445, %c1_1446, %c4_1447, %c0_1448, %c0_1449] : memref<1x8x8x4x12xf32, #tpu.memory_space<vmem>>, vector<1x1x1x4x12xf32>
    %951 = vector.shape_cast %950 : vector<1x1x1x4x12xf32> to vector<4x12xf32>
    %952 = vector.shape_cast %949 : vector<4x12xf32> to vector<1x1x1x4x12xf32>
    tpu.vector_store %arg8[%c0_1445, %c1_1446, %c4_1447, %c0_1448, %c0_1449], %952 {strides = array<i32>} : memref<1x8x8x4x12xf32, #tpu.memory_space<vmem>>, vector<1x1x1x4x12xf32>,
    %953 = vector.extract_strided_slice %940 {offsets = [12, 0], sizes = [4, 12], strides = [1, 1]} : vector<64x12xf32> to vector<4x12xf32>
    %c0_1450 = arith.constant 0 : index
    %c1_1451 = arith.constant 1 : index
    %c6_1452 = arith.constant 6 : index
    %c0_1453 = arith.constant 0 : index
    %c0_1454 = arith.constant 0 : index
    %954 = vector.load %arg8[%c0_1450, %c1_1451, %c6_1452, %c0_1453, %c0_1454] : memref<1x8x8x4x12xf32, #tpu.memory_space<vmem>>, vector<1x1x1x4x12xf32>
    %955 = vector.shape_cast %954 : vector<1x1x1x4x12xf32> to vector<4x12xf32>
    %956 = vector.shape_cast %953 : vector<4x12xf32> to vector<1x1x1x4x12xf32>
    tpu.vector_store %arg8[%c0_1450, %c1_1451, %c6_1452, %c0_1453, %c0_1454], %956 {strides = array<i32>} : memref<1x8x8x4x12xf32, #tpu.memory_space<vmem>>, vector<1x1x1x4x12xf32>,
    %957 = vector.extract_strided_slice %940 {offsets = [16, 0], sizes = [4, 12], strides = [1, 1]} : vector<64x12xf32> to vector<4x12xf32>
    %c0_1455 = arith.constant 0 : index
    %c3_1456 = arith.constant 3 : index
    %c0_1457 = arith.constant 0 : index
    %c0_1458 = arith.constant 0 : index
    %c0_1459 = arith.constant 0 : index
    %958 = vector.load %arg8[%c0_1455, %c3_1456, %c0_1457, %c0_1458, %c0_1459] : memref<1x8x8x4x12xf32, #tpu.memory_space<vmem>>, vector<1x1x1x4x12xf32>
    %959 = vector.shape_cast %958 : vector<1x1x1x4x12xf32> to vector<4x12xf32>
    %960 = vector.shape_cast %957 : vector<4x12xf32> to vector<1x1x1x4x12xf32>
    tpu.vector_store %arg8[%c0_1455, %c3_1456, %c0_1457, %c0_1458, %c0_1459], %960 {strides = array<i32>} : memref<1x8x8x4x12xf32, #tpu.memory_space<vmem>>, vector<1x1x1x4x12xf32>,
    %961 = vector.extract_strided_slice %940 {offsets = [20, 0], sizes = [4, 12], strides = [1, 1]} : vector<64x12xf32> to vector<4x12xf32>
    %c0_1460 = arith.constant 0 : index
    %c3_1461 = arith.constant 3 : index
    %c2_1462 = arith.constant 2 : index
    %c0_1463 = arith.constant 0 : index
    %c0_1464 = arith.constant 0 : index
    %962 = vector.load %arg8[%c0_1460, %c3_1461, %c2_1462, %c0_1463, %c0_1464] : memref<1x8x8x4x12xf32, #tpu.memory_space<vmem>>, vector<1x1x1x4x12xf32>
    %963 = vector.shape_cast %962 : vector<1x1x1x4x12xf32> to vector<4x12xf32>
    %964 = vector.shape_cast %961 : vector<4x12xf32> to vector<1x1x1x4x12xf32>
    tpu.vector_store %arg8[%c0_1460, %c3_1461, %c2_1462, %c0_1463, %c0_1464], %964 {strides = array<i32>} : memref<1x8x8x4x12xf32, #tpu.memory_space<vmem>>, vector<1x1x1x4x12xf32>,
    %965 = vector.extract_strided_slice %940 {offsets = [24, 0], sizes = [4, 12], strides = [1, 1]} : vector<64x12xf32> to vector<4x12xf32>
    %c0_1465 = arith.constant 0 : index
    %c3_1466 = arith.constant 3 : index
    %c4_1467 = arith.constant 4 : index
    %c0_1468 = arith.constant 0 : index
    %c0_1469 = arith.constant 0 : index
    %966 = vector.load %arg8[%c0_1465, %c3_1466, %c4_1467, %c0_1468, %c0_1469] : memref<1x8x8x4x12xf32, #tpu.memory_space<vmem>>, vector<1x1x1x4x12xf32>
    %967 = vector.shape_cast %966 : vector<1x1x1x4x12xf32> to vector<4x12xf32>
    %968 = vector.shape_cast %965 : vector<4x12xf32> to vector<1x1x1x4x12xf32>
    tpu.vector_store %arg8[%c0_1465, %c3_1466, %c4_1467, %c0_1468, %c0_1469], %968 {strides = array<i32>} : memref<1x8x8x4x12xf32, #tpu.memory_space<vmem>>, vector<1x1x1x4x12xf32>,
    %969 = vector.extract_strided_slice %940 {offsets = [28, 0], sizes = [4, 12], strides = [1, 1]} : vector<64x12xf32> to vector<4x12xf32>
    %c0_1470 = arith.constant 0 : index
    %c3_1471 = arith.constant 3 : index
    %c6_1472 = arith.constant 6 : index
    %c0_1473 = arith.constant 0 : index
    %c0_1474 = arith.constant 0 : index
    %970 = vector.load %arg8[%c0_1470, %c3_1471, %c6_1472, %c0_1473, %c0_1474] : memref<1x8x8x4x12xf32, #tpu.memory_space<vmem>>, vector<1x1x1x4x12xf32>
    %971 = vector.shape_cast %970 : vector<1x1x1x4x12xf32> to vector<4x12xf32>
    %972 = vector.shape_cast %969 : vector<4x12xf32> to vector<1x1x1x4x12xf32>
    tpu.vector_store %arg8[%c0_1470, %c3_1471, %c6_1472, %c0_1473, %c0_1474], %972 {strides = array<i32>} : memref<1x8x8x4x12xf32, #tpu.memory_space<vmem>>, vector<1x1x1x4x12xf32>,
    %973 = vector.extract_strided_slice %940 {offsets = [32, 0], sizes = [4, 12], strides = [1, 1]} : vector<64x12xf32> to vector<4x12xf32>
    %c0_1475 = arith.constant 0 : index
    %c5_1476 = arith.constant 5 : index
    %c0_1477 = arith.constant 0 : index
    %c0_1478 = arith.constant 0 : index
    %c0_1479 = arith.constant 0 : index
    %974 = vector.load %arg8[%c0_1475, %c5_1476, %c0_1477, %c0_1478, %c0_1479] : memref<1x8x8x4x12xf32, #tpu.memory_space<vmem>>, vector<1x1x1x4x12xf32>
    %975 = vector.shape_cast %974 : vector<1x1x1x4x12xf32> to vector<4x12xf32>
    %976 = vector.shape_cast %973 : vector<4x12xf32> to vector<1x1x1x4x12xf32>
    tpu.vector_store %arg8[%c0_1475, %c5_1476, %c0_1477, %c0_1478, %c0_1479], %976 {strides = array<i32>} : memref<1x8x8x4x12xf32, #tpu.memory_space<vmem>>, vector<1x1x1x4x12xf32>,
    %977 = vector.extract_strided_slice %940 {offsets = [36, 0], sizes = [4, 12], strides = [1, 1]} : vector<64x12xf32> to vector<4x12xf32>
    %c0_1480 = arith.constant 0 : index
    %c5_1481 = arith.constant 5 : index
    %c2_1482 = arith.constant 2 : index
    %c0_1483 = arith.constant 0 : index
    %c0_1484 = arith.constant 0 : index
    %978 = vector.load %arg8[%c0_1480, %c5_1481, %c2_1482, %c0_1483, %c0_1484] : memref<1x8x8x4x12xf32, #tpu.memory_space<vmem>>, vector<1x1x1x4x12xf32>
    %979 = vector.shape_cast %978 : vector<1x1x1x4x12xf32> to vector<4x12xf32>
    %980 = vector.shape_cast %977 : vector<4x12xf32> to vector<1x1x1x4x12xf32>
    tpu.vector_store %arg8[%c0_1480, %c5_1481, %c2_1482, %c0_1483, %c0_1484], %980 {strides = array<i32>} : memref<1x8x8x4x12xf32, #tpu.memory_space<vmem>>, vector<1x1x1x4x12xf32>,
    %981 = vector.extract_strided_slice %940 {offsets = [40, 0], sizes = [4, 12], strides = [1, 1]} : vector<64x12xf32> to vector<4x12xf32>
    %c0_1485 = arith.constant 0 : index
    %c5_1486 = arith.constant 5 : index
    %c4_1487 = arith.constant 4 : index
    %c0_1488 = arith.constant 0 : index
    %c0_1489 = arith.constant 0 : index
    %982 = vector.load %arg8[%c0_1485, %c5_1486, %c4_1487, %c0_1488, %c0_1489] : memref<1x8x8x4x12xf32, #tpu.memory_space<vmem>>, vector<1x1x1x4x12xf32>
    %983 = vector.shape_cast %982 : vector<1x1x1x4x12xf32> to vector<4x12xf32>
    %984 = vector.shape_cast %981 : vector<4x12xf32> to vector<1x1x1x4x12xf32>
    tpu.vector_store %arg8[%c0_1485, %c5_1486, %c4_1487, %c0_1488, %c0_1489], %984 {strides = array<i32>} : memref<1x8x8x4x12xf32, #tpu.memory_space<vmem>>, vector<1x1x1x4x12xf32>,
    %985 = vector.extract_strided_slice %940 {offsets = [44, 0], sizes = [4, 12], strides = [1, 1]} : vector<64x12xf32> to vector<4x12xf32>
    %c0_1490 = arith.constant 0 : index
    %c5_1491 = arith.constant 5 : index
    %c6_1492 = arith.constant 6 : index
    %c0_1493 = arith.constant 0 : index
    %c0_1494 = arith.constant 0 : index
    %986 = vector.load %arg8[%c0_1490, %c5_1491, %c6_1492, %c0_1493, %c0_1494] : memref<1x8x8x4x12xf32, #tpu.memory_space<vmem>>, vector<1x1x1x4x12xf32>
    %987 = vector.shape_cast %986 : vector<1x1x1x4x12xf32> to vector<4x12xf32>
    %988 = vector.shape_cast %985 : vector<4x12xf32> to vector<1x1x1x4x12xf32>
    tpu.vector_store %arg8[%c0_1490, %c5_1491, %c6_1492, %c0_1493, %c0_1494], %988 {strides = array<i32>} : memref<1x8x8x4x12xf32, #tpu.memory_space<vmem>>, vector<1x1x1x4x12xf32>,
    %989 = vector.extract_strided_slice %940 {offsets = [48, 0], sizes = [4, 12], strides = [1, 1]} : vector<64x12xf32> to vector<4x12xf32>
    %c0_1495 = arith.constant 0 : index
    %c7_1496 = arith.constant 7 : index
    %c0_1497 = arith.constant 0 : index
    %c0_1498 = arith.constant 0 : index
    %c0_1499 = arith.constant 0 : index
    %990 = vector.load %arg8[%c0_1495, %c7_1496, %c0_1497, %c0_1498, %c0_1499] : memref<1x8x8x4x12xf32, #tpu.memory_space<vmem>>, vector<1x1x1x4x12xf32>
    %991 = vector.shape_cast %990 : vector<1x1x1x4x12xf32> to vector<4x12xf32>
    %992 = vector.shape_cast %989 : vector<4x12xf32> to vector<1x1x1x4x12xf32>
    tpu.vector_store %arg8[%c0_1495, %c7_1496, %c0_1497, %c0_1498, %c0_1499], %992 {strides = array<i32>} : memref<1x8x8x4x12xf32, #tpu.memory_space<vmem>>, vector<1x1x1x4x12xf32>,
    %993 = vector.extract_strided_slice %940 {offsets = [52, 0], sizes = [4, 12], strides = [1, 1]} : vector<64x12xf32> to vector<4x12xf32>
    %c0_1500 = arith.constant 0 : index
    %c7_1501 = arith.constant 7 : index
    %c2_1502 = arith.constant 2 : index
    %c0_1503 = arith.constant 0 : index
    %c0_1504 = arith.constant 0 : index
    %994 = vector.load %arg8[%c0_1500, %c7_1501, %c2_1502, %c0_1503, %c0_1504] : memref<1x8x8x4x12xf32, #tpu.memory_space<vmem>>, vector<1x1x1x4x12xf32>
    %995 = vector.shape_cast %994 : vector<1x1x1x4x12xf32> to vector<4x12xf32>
    %996 = vector.shape_cast %993 : vector<4x12xf32> to vector<1x1x1x4x12xf32>
    tpu.vector_store %arg8[%c0_1500, %c7_1501, %c2_1502, %c0_1503, %c0_1504], %996 {strides = array<i32>} : memref<1x8x8x4x12xf32, #tpu.memory_space<vmem>>, vector<1x1x1x4x12xf32>,
    %997 = vector.extract_strided_slice %940 {offsets = [56, 0], sizes = [4, 12], strides = [1, 1]} : vector<64x12xf32> to vector<4x12xf32>
    %c0_1505 = arith.constant 0 : index
    %c7_1506 = arith.constant 7 : index
    %c4_1507 = arith.constant 4 : index
    %c0_1508 = arith.constant 0 : index
    %c0_1509 = arith.constant 0 : index
    %998 = vector.load %arg8[%c0_1505, %c7_1506, %c4_1507, %c0_1508, %c0_1509] : memref<1x8x8x4x12xf32, #tpu.memory_space<vmem>>, vector<1x1x1x4x12xf32>
    %999 = vector.shape_cast %998 : vector<1x1x1x4x12xf32> to vector<4x12xf32>
    %1000 = vector.shape_cast %997 : vector<4x12xf32> to vector<1x1x1x4x12xf32>
    tpu.vector_store %arg8[%c0_1505, %c7_1506, %c4_1507, %c0_1508, %c0_1509], %1000 {strides = array<i32>} : memref<1x8x8x4x12xf32, #tpu.memory_space<vmem>>, vector<1x1x1x4x12xf32>,
    %1001 = vector.extract_strided_slice %940 {offsets = [60, 0], sizes = [4, 12], strides = [1, 1]} : vector<64x12xf32> to vector<4x12xf32>
    %c0_1510 = arith.constant 0 : index
    %c7_1511 = arith.constant 7 : index
    %c6_1512 = arith.constant 6 : index
    %c0_1513 = arith.constant 0 : index
    %c0_1514 = arith.constant 0 : index
    %1002 = vector.load %arg8[%c0_1510, %c7_1511, %c6_1512, %c0_1513, %c0_1514] : memref<1x8x8x4x12xf32, #tpu.memory_space<vmem>>, vector<1x1x1x4x12xf32>
    %1003 = vector.shape_cast %1002 : vector<1x1x1x4x12xf32> to vector<4x12xf32>
    %1004 = vector.shape_cast %1001 : vector<4x12xf32> to vector<1x1x1x4x12xf32>
    tpu.vector_store %arg8[%c0_1510, %c7_1511, %c6_1512, %c0_1513, %c0_1514], %1004 {strides = array<i32>} : memref<1x8x8x4x12xf32, #tpu.memory_space<vmem>>, vector<1x1x1x4x12xf32>,
    %c1_1515 = arith.constant 1 : index
    %c1_1516 = arith.constant 1 : index
    %c0_1517 = arith.constant 0 : index
    %c0_1518 = arith.constant 0 : index
    %1005 = vector.load %arg6[%c1_1515, %c1_1516, %c0_1517, %c0_1518] : memref<2x2x192x12xbf16, #tpu.memory_space<vmem>>, vector<1x1x192x12xbf16>
    %1006 = vector.shape_cast %1005 : vector<1x1x192x12xbf16> to vector<192x12xbf16>
    %c0_1519 = arith.constant 0 : index
    %c0_1520 = arith.constant 0 : index
    %c1_1521 = arith.constant 1 : index
    %c12_1522 = arith.constant 12 : index
    %1007 = vector.load %arg10[%c0_1519, %c0_1520, %c1_1521, %c12_1522] : memref<4x4x6x72xf32, #tpu.memory_space<vmem>>, vector<1x1x4x48xf32>
    %1008 = vector.shape_cast %1007 : vector<1x1x4x48xf32> to vector<4x48xf32>
    %c0_1523 = arith.constant 0 : index
    %c1_1524 = arith.constant 1 : index
    %c1_1525 = arith.constant 1 : index
    %c12_1526 = arith.constant 12 : index
    %1009 = vector.load %arg10[%c0_1523, %c1_1524, %c1_1525, %c12_1526] : memref<4x4x6x72xf32, #tpu.memory_space<vmem>>, vector<1x1x4x48xf32>
    %1010 = vector.shape_cast %1009 : vector<1x1x4x48xf32> to vector<4x48xf32>
    %c1_1527 = arith.constant 1 : index
    %c0_1528 = arith.constant 0 : index
    %c1_1529 = arith.constant 1 : index
    %c12_1530 = arith.constant 12 : index
    %1011 = vector.load %arg10[%c1_1527, %c0_1528, %c1_1529, %c12_1530] : memref<4x4x6x72xf32, #tpu.memory_space<vmem>>, vector<1x1x4x48xf32>
    %1012 = vector.shape_cast %1011 : vector<1x1x4x48xf32> to vector<4x48xf32>
    %c1_1531 = arith.constant 1 : index
    %c1_1532 = arith.constant 1 : index
    %c1_1533 = arith.constant 1 : index
    %c12_1534 = arith.constant 12 : index
    %1013 = vector.load %arg10[%c1_1531, %c1_1532, %c1_1533, %c12_1534] : memref<4x4x6x72xf32, #tpu.memory_space<vmem>>, vector<1x1x4x48xf32>
    %1014 = vector.shape_cast %1013 : vector<1x1x4x48xf32> to vector<4x48xf32>
    %1015 = tpu.concatenate %1008, %1010, %1012, %1014 in 1 : vector<4x48xf32>, vector<4x48xf32>, vector<4x48xf32>, vector<4x48xf32> -> vector<4x192xf32>
    %c0_1535 = arith.constant 0 : index
    %c1_1536 = arith.constant 1 : index
    %c1_1537 = arith.constant 1 : index
    %c12_1538 = arith.constant 12 : index
    %1016 = vector.load %arg10[%c0_1535, %c1_1536, %c1_1537, %c12_1538] : memref<4x4x6x72xf32, #tpu.memory_space<vmem>>, vector<1x1x4x48xf32>
    %1017 = vector.shape_cast %1016 : vector<1x1x4x48xf32> to vector<4x48xf32>
    %c0_1539 = arith.constant 0 : index
    %c2_1540 = arith.constant 2 : index
    %c1_1541 = arith.constant 1 : index
    %c12_1542 = arith.constant 12 : index
    %1018 = vector.load %arg10[%c0_1539, %c2_1540, %c1_1541, %c12_1542] : memref<4x4x6x72xf32, #tpu.memory_space<vmem>>, vector<1x1x4x48xf32>
    %1019 = vector.shape_cast %1018 : vector<1x1x4x48xf32> to vector<4x48xf32>
    %c1_1543 = arith.constant 1 : index
    %c1_1544 = arith.constant 1 : index
    %c1_1545 = arith.constant 1 : index
    %c12_1546 = arith.constant 12 : index
    %1020 = vector.load %arg10[%c1_1543, %c1_1544, %c1_1545, %c12_1546] : memref<4x4x6x72xf32, #tpu.memory_space<vmem>>, vector<1x1x4x48xf32>
    %1021 = vector.shape_cast %1020 : vector<1x1x4x48xf32> to vector<4x48xf32>
    %c1_1547 = arith.constant 1 : index
    %c2_1548 = arith.constant 2 : index
    %c1_1549 = arith.constant 1 : index
    %c12_1550 = arith.constant 12 : index
    %1022 = vector.load %arg10[%c1_1547, %c2_1548, %c1_1549, %c12_1550] : memref<4x4x6x72xf32, #tpu.memory_space<vmem>>, vector<1x1x4x48xf32>
    %1023 = vector.shape_cast %1022 : vector<1x1x4x48xf32> to vector<4x48xf32>
    %1024 = tpu.concatenate %1017, %1019, %1021, %1023 in 1 : vector<4x48xf32>, vector<4x48xf32>, vector<4x48xf32>, vector<4x48xf32> -> vector<4x192xf32>
    %c0_1551 = arith.constant 0 : index
    %c2_1552 = arith.constant 2 : index
    %c1_1553 = arith.constant 1 : index
    %c12_1554 = arith.constant 12 : index
    %1025 = vector.load %arg10[%c0_1551, %c2_1552, %c1_1553, %c12_1554] : memref<4x4x6x72xf32, #tpu.memory_space<vmem>>, vector<1x1x4x48xf32>
    %1026 = vector.shape_cast %1025 : vector<1x1x4x48xf32> to vector<4x48xf32>
    %c0_1555 = arith.constant 0 : index
    %c3_1556 = arith.constant 3 : index
    %c1_1557 = arith.constant 1 : index
    %c12_1558 = arith.constant 12 : index
    %1027 = vector.load %arg10[%c0_1555, %c3_1556, %c1_1557, %c12_1558] : memref<4x4x6x72xf32, #tpu.memory_space<vmem>>, vector<1x1x4x48xf32>
    %1028 = vector.shape_cast %1027 : vector<1x1x4x48xf32> to vector<4x48xf32>
    %c1_1559 = arith.constant 1 : index
    %c2_1560 = arith.constant 2 : index
    %c1_1561 = arith.constant 1 : index
    %c12_1562 = arith.constant 12 : index
    %1029 = vector.load %arg10[%c1_1559, %c2_1560, %c1_1561, %c12_1562] : memref<4x4x6x72xf32, #tpu.memory_space<vmem>>, vector<1x1x4x48xf32>
    %1030 = vector.shape_cast %1029 : vector<1x1x4x48xf32> to vector<4x48xf32>
    %c1_1563 = arith.constant 1 : index
    %c3_1564 = arith.constant 3 : index
    %c1_1565 = arith.constant 1 : index
    %c12_1566 = arith.constant 12 : index
    %1031 = vector.load %arg10[%c1_1563, %c3_1564, %c1_1565, %c12_1566] : memref<4x4x6x72xf32, #tpu.memory_space<vmem>>, vector<1x1x4x48xf32>
    %1032 = vector.shape_cast %1031 : vector<1x1x4x48xf32> to vector<4x48xf32>
    %1033 = tpu.concatenate %1026, %1028, %1030, %1032 in 1 : vector<4x48xf32>, vector<4x48xf32>, vector<4x48xf32>, vector<4x48xf32> -> vector<4x192xf32>
    %c0_1567 = arith.constant 0 : index
    %c3_1568 = arith.constant 3 : index
    %c1_1569 = arith.constant 1 : index
    %c12_1570 = arith.constant 12 : index
    %1034 = vector.load %arg10[%c0_1567, %c3_1568, %c1_1569, %c12_1570] : memref<4x4x6x72xf32, #tpu.memory_space<vmem>>, vector<1x1x4x48xf32>
    %1035 = vector.shape_cast %1034 : vector<1x1x4x48xf32> to vector<4x48xf32>
    %c0_1571 = arith.constant 0 : index
    %c0_1572 = arith.constant 0 : index
    %c1_1573 = arith.constant 1 : index
    %c24_1574 = arith.constant 24 : index
    %1036 = vector.load %arg10[%c0_1571, %c0_1572, %c1_1573, %c24_1574] : memref<4x4x6x72xf32, #tpu.memory_space<vmem>>, vector<1x1x4x48xf32>
    %1037 = vector.shape_cast %1036 : vector<1x1x4x48xf32> to vector<4x48xf32>
    %c1_1575 = arith.constant 1 : index
    %c3_1576 = arith.constant 3 : index
    %c1_1577 = arith.constant 1 : index
    %c12_1578 = arith.constant 12 : index
    %1038 = vector.load %arg10[%c1_1575, %c3_1576, %c1_1577, %c12_1578] : memref<4x4x6x72xf32, #tpu.memory_space<vmem>>, vector<1x1x4x48xf32>
    %1039 = vector.shape_cast %1038 : vector<1x1x4x48xf32> to vector<4x48xf32>
    %c1_1579 = arith.constant 1 : index
    %c0_1580 = arith.constant 0 : index
    %c1_1581 = arith.constant 1 : index
    %c24_1582 = arith.constant 24 : index
    %1040 = vector.load %arg10[%c1_1579, %c0_1580, %c1_1581, %c24_1582] : memref<4x4x6x72xf32, #tpu.memory_space<vmem>>, vector<1x1x4x48xf32>
    %1041 = vector.shape_cast %1040 : vector<1x1x4x48xf32> to vector<4x48xf32>
    %1042 = tpu.concatenate %1035, %1037, %1039, %1041 in 1 : vector<4x48xf32>, vector<4x48xf32>, vector<4x48xf32>, vector<4x48xf32> -> vector<4x192xf32>
    %c1_1583 = arith.constant 1 : index
    %c0_1584 = arith.constant 0 : index
    %c1_1585 = arith.constant 1 : index
    %c12_1586 = arith.constant 12 : index
    %1043 = vector.load %arg10[%c1_1583, %c0_1584, %c1_1585, %c12_1586] : memref<4x4x6x72xf32, #tpu.memory_space<vmem>>, vector<1x1x4x48xf32>
    %1044 = vector.shape_cast %1043 : vector<1x1x4x48xf32> to vector<4x48xf32>
    %c1_1587 = arith.constant 1 : index
    %c1_1588 = arith.constant 1 : index
    %c1_1589 = arith.constant 1 : index
    %c12_1590 = arith.constant 12 : index
    %1045 = vector.load %arg10[%c1_1587, %c1_1588, %c1_1589, %c12_1590] : memref<4x4x6x72xf32, #tpu.memory_space<vmem>>, vector<1x1x4x48xf32>
    %1046 = vector.shape_cast %1045 : vector<1x1x4x48xf32> to vector<4x48xf32>
    %c2_1591 = arith.constant 2 : index
    %c0_1592 = arith.constant 0 : index
    %c1_1593 = arith.constant 1 : index
    %c12_1594 = arith.constant 12 : index
    %1047 = vector.load %arg10[%c2_1591, %c0_1592, %c1_1593, %c12_1594] : memref<4x4x6x72xf32, #tpu.memory_space<vmem>>, vector<1x1x4x48xf32>
    %1048 = vector.shape_cast %1047 : vector<1x1x4x48xf32> to vector<4x48xf32>
    %c2_1595 = arith.constant 2 : index
    %c1_1596 = arith.constant 1 : index
    %c1_1597 = arith.constant 1 : index
    %c12_1598 = arith.constant 12 : index
    %1049 = vector.load %arg10[%c2_1595, %c1_1596, %c1_1597, %c12_1598] : memref<4x4x6x72xf32, #tpu.memory_space<vmem>>, vector<1x1x4x48xf32>
    %1050 = vector.shape_cast %1049 : vector<1x1x4x48xf32> to vector<4x48xf32>
    %1051 = tpu.concatenate %1044, %1046, %1048, %1050 in 1 : vector<4x48xf32>, vector<4x48xf32>, vector<4x48xf32>, vector<4x48xf32> -> vector<4x192xf32>
    %c1_1599 = arith.constant 1 : index
    %c1_1600 = arith.constant 1 : index
    %c1_1601 = arith.constant 1 : index
    %c12_1602 = arith.constant 12 : index
    %1052 = vector.load %arg10[%c1_1599, %c1_1600, %c1_1601, %c12_1602] : memref<4x4x6x72xf32, #tpu.memory_space<vmem>>, vector<1x1x4x48xf32>
    %1053 = vector.shape_cast %1052 : vector<1x1x4x48xf32> to vector<4x48xf32>
    %c1_1603 = arith.constant 1 : index
    %c2_1604 = arith.constant 2 : index
    %c1_1605 = arith.constant 1 : index
    %c12_1606 = arith.constant 12 : index
    %1054 = vector.load %arg10[%c1_1603, %c2_1604, %c1_1605, %c12_1606] : memref<4x4x6x72xf32, #tpu.memory_space<vmem>>, vector<1x1x4x48xf32>
    %1055 = vector.shape_cast %1054 : vector<1x1x4x48xf32> to vector<4x48xf32>
    %c2_1607 = arith.constant 2 : index
    %c1_1608 = arith.constant 1 : index
    %c1_1609 = arith.constant 1 : index
    %c12_1610 = arith.constant 12 : index
    %1056 = vector.load %arg10[%c2_1607, %c1_1608, %c1_1609, %c12_1610] : memref<4x4x6x72xf32, #tpu.memory_space<vmem>>, vector<1x1x4x48xf32>
    %1057 = vector.shape_cast %1056 : vector<1x1x4x48xf32> to vector<4x48xf32>
    %c2_1611 = arith.constant 2 : index
    %c2_1612 = arith.constant 2 : index
    %c1_1613 = arith.constant 1 : index
    %c12_1614 = arith.constant 12 : index
    %1058 = vector.load %arg10[%c2_1611, %c2_1612, %c1_1613, %c12_1614] : memref<4x4x6x72xf32, #tpu.memory_space<vmem>>, vector<1x1x4x48xf32>
    %1059 = vector.shape_cast %1058 : vector<1x1x4x48xf32> to vector<4x48xf32>
    %1060 = tpu.concatenate %1053, %1055, %1057, %1059 in 1 : vector<4x48xf32>, vector<4x48xf32>, vector<4x48xf32>, vector<4x48xf32> -> vector<4x192xf32>
    %c1_1615 = arith.constant 1 : index
    %c2_1616 = arith.constant 2 : index
    %c1_1617 = arith.constant 1 : index
    %c12_1618 = arith.constant 12 : index
    %1061 = vector.load %arg10[%c1_1615, %c2_1616, %c1_1617, %c12_1618] : memref<4x4x6x72xf32, #tpu.memory_space<vmem>>, vector<1x1x4x48xf32>
    %1062 = vector.shape_cast %1061 : vector<1x1x4x48xf32> to vector<4x48xf32>
    %c1_1619 = arith.constant 1 : index
    %c3_1620 = arith.constant 3 : index
    %c1_1621 = arith.constant 1 : index
    %c12_1622 = arith.constant 12 : index
    %1063 = vector.load %arg10[%c1_1619, %c3_1620, %c1_1621, %c12_1622] : memref<4x4x6x72xf32, #tpu.memory_space<vmem>>, vector<1x1x4x48xf32>
    %1064 = vector.shape_cast %1063 : vector<1x1x4x48xf32> to vector<4x48xf32>
    %c2_1623 = arith.constant 2 : index
    %c2_1624 = arith.constant 2 : index
    %c1_1625 = arith.constant 1 : index
    %c12_1626 = arith.constant 12 : index
    %1065 = vector.load %arg10[%c2_1623, %c2_1624, %c1_1625, %c12_1626] : memref<4x4x6x72xf32, #tpu.memory_space<vmem>>, vector<1x1x4x48xf32>
    %1066 = vector.shape_cast %1065 : vector<1x1x4x48xf32> to vector<4x48xf32>
    %c2_1627 = arith.constant 2 : index
    %c3_1628 = arith.constant 3 : index
    %c1_1629 = arith.constant 1 : index
    %c12_1630 = arith.constant 12 : index
    %1067 = vector.load %arg10[%c2_1627, %c3_1628, %c1_1629, %c12_1630] : memref<4x4x6x72xf32, #tpu.memory_space<vmem>>, vector<1x1x4x48xf32>
    %1068 = vector.shape_cast %1067 : vector<1x1x4x48xf32> to vector<4x48xf32>
    %1069 = tpu.concatenate %1062, %1064, %1066, %1068 in 1 : vector<4x48xf32>, vector<4x48xf32>, vector<4x48xf32>, vector<4x48xf32> -> vector<4x192xf32>
    %c1_1631 = arith.constant 1 : index
    %c3_1632 = arith.constant 3 : index
    %c1_1633 = arith.constant 1 : index
    %c12_1634 = arith.constant 12 : index
    %1070 = vector.load %arg10[%c1_1631, %c3_1632, %c1_1633, %c12_1634] : memref<4x4x6x72xf32, #tpu.memory_space<vmem>>, vector<1x1x4x48xf32>
    %1071 = vector.shape_cast %1070 : vector<1x1x4x48xf32> to vector<4x48xf32>
    %c1_1635 = arith.constant 1 : index
    %c0_1636 = arith.constant 0 : index
    %c1_1637 = arith.constant 1 : index
    %c24_1638 = arith.constant 24 : index
    %1072 = vector.load %arg10[%c1_1635, %c0_1636, %c1_1637, %c24_1638] : memref<4x4x6x72xf32, #tpu.memory_space<vmem>>, vector<1x1x4x48xf32>
    %1073 = vector.shape_cast %1072 : vector<1x1x4x48xf32> to vector<4x48xf32>
    %c2_1639 = arith.constant 2 : index
    %c3_1640 = arith.constant 3 : index
    %c1_1641 = arith.constant 1 : index
    %c12_1642 = arith.constant 12 : index
    %1074 = vector.load %arg10[%c2_1639, %c3_1640, %c1_1641, %c12_1642] : memref<4x4x6x72xf32, #tpu.memory_space<vmem>>, vector<1x1x4x48xf32>
    %1075 = vector.shape_cast %1074 : vector<1x1x4x48xf32> to vector<4x48xf32>
    %c2_1643 = arith.constant 2 : index
    %c0_1644 = arith.constant 0 : index
    %c1_1645 = arith.constant 1 : index
    %c24_1646 = arith.constant 24 : index
    %1076 = vector.load %arg10[%c2_1643, %c0_1644, %c1_1645, %c24_1646] : memref<4x4x6x72xf32, #tpu.memory_space<vmem>>, vector<1x1x4x48xf32>
    %1077 = vector.shape_cast %1076 : vector<1x1x4x48xf32> to vector<4x48xf32>
    %1078 = tpu.concatenate %1071, %1073, %1075, %1077 in 1 : vector<4x48xf32>, vector<4x48xf32>, vector<4x48xf32>, vector<4x48xf32> -> vector<4x192xf32>
    %c2_1647 = arith.constant 2 : index
    %c0_1648 = arith.constant 0 : index
    %c1_1649 = arith.constant 1 : index
    %c12_1650 = arith.constant 12 : index
    %1079 = vector.load %arg10[%c2_1647, %c0_1648, %c1_1649, %c12_1650] : memref<4x4x6x72xf32, #tpu.memory_space<vmem>>, vector<1x1x4x48xf32>
    %1080 = vector.shape_cast %1079 : vector<1x1x4x48xf32> to vector<4x48xf32>
    %c2_1651 = arith.constant 2 : index
    %c1_1652 = arith.constant 1 : index
    %c1_1653 = arith.constant 1 : index
    %c12_1654 = arith.constant 12 : index
    %1081 = vector.load %arg10[%c2_1651, %c1_1652, %c1_1653, %c12_1654] : memref<4x4x6x72xf32, #tpu.memory_space<vmem>>, vector<1x1x4x48xf32>
    %1082 = vector.shape_cast %1081 : vector<1x1x4x48xf32> to vector<4x48xf32>
    %c3_1655 = arith.constant 3 : index
    %c0_1656 = arith.constant 0 : index
    %c1_1657 = arith.constant 1 : index
    %c12_1658 = arith.constant 12 : index
    %1083 = vector.load %arg10[%c3_1655, %c0_1656, %c1_1657, %c12_1658] : memref<4x4x6x72xf32, #tpu.memory_space<vmem>>, vector<1x1x4x48xf32>
    %1084 = vector.shape_cast %1083 : vector<1x1x4x48xf32> to vector<4x48xf32>
    %c3_1659 = arith.constant 3 : index
    %c1_1660 = arith.constant 1 : index
    %c1_1661 = arith.constant 1 : index
    %c12_1662 = arith.constant 12 : index
    %1085 = vector.load %arg10[%c3_1659, %c1_1660, %c1_1661, %c12_1662] : memref<4x4x6x72xf32, #tpu.memory_space<vmem>>, vector<1x1x4x48xf32>
    %1086 = vector.shape_cast %1085 : vector<1x1x4x48xf32> to vector<4x48xf32>
    %1087 = tpu.concatenate %1080, %1082, %1084, %1086 in 1 : vector<4x48xf32>, vector<4x48xf32>, vector<4x48xf32>, vector<4x48xf32> -> vector<4x192xf32>
    %c2_1663 = arith.constant 2 : index
    %c1_1664 = arith.constant 1 : index
    %c1_1665 = arith.constant 1 : index
    %c12_1666 = arith.constant 12 : index
    %1088 = vector.load %arg10[%c2_1663, %c1_1664, %c1_1665, %c12_1666] : memref<4x4x6x72xf32, #tpu.memory_space<vmem>>, vector<1x1x4x48xf32>
    %1089 = vector.shape_cast %1088 : vector<1x1x4x48xf32> to vector<4x48xf32>
    %c2_1667 = arith.constant 2 : index
    %c2_1668 = arith.constant 2 : index
    %c1_1669 = arith.constant 1 : index
    %c12_1670 = arith.constant 12 : index
    %1090 = vector.load %arg10[%c2_1667, %c2_1668, %c1_1669, %c12_1670] : memref<4x4x6x72xf32, #tpu.memory_space<vmem>>, vector<1x1x4x48xf32>
    %1091 = vector.shape_cast %1090 : vector<1x1x4x48xf32> to vector<4x48xf32>
    %c3_1671 = arith.constant 3 : index
    %c1_1672 = arith.constant 1 : index
    %c1_1673 = arith.constant 1 : index
    %c12_1674 = arith.constant 12 : index
    %1092 = vector.load %arg10[%c3_1671, %c1_1672, %c1_1673, %c12_1674] : memref<4x4x6x72xf32, #tpu.memory_space<vmem>>, vector<1x1x4x48xf32>
    %1093 = vector.shape_cast %1092 : vector<1x1x4x48xf32> to vector<4x48xf32>
    %c3_1675 = arith.constant 3 : index
    %c2_1676 = arith.constant 2 : index
    %c1_1677 = arith.constant 1 : index
    %c12_1678 = arith.constant 12 : index
    %1094 = vector.load %arg10[%c3_1675, %c2_1676, %c1_1677, %c12_1678] : memref<4x4x6x72xf32, #tpu.memory_space<vmem>>, vector<1x1x4x48xf32>
    %1095 = vector.shape_cast %1094 : vector<1x1x4x48xf32> to vector<4x48xf32>
    %1096 = tpu.concatenate %1089, %1091, %1093, %1095 in 1 : vector<4x48xf32>, vector<4x48xf32>, vector<4x48xf32>, vector<4x48xf32> -> vector<4x192xf32>
    %c2_1679 = arith.constant 2 : index
    %c2_1680 = arith.constant 2 : index
    %c1_1681 = arith.constant 1 : index
    %c12_1682 = arith.constant 12 : index
    %1097 = vector.load %arg10[%c2_1679, %c2_1680, %c1_1681, %c12_1682] : memref<4x4x6x72xf32, #tpu.memory_space<vmem>>, vector<1x1x4x48xf32>
    %1098 = vector.shape_cast %1097 : vector<1x1x4x48xf32> to vector<4x48xf32>
    %c2_1683 = arith.constant 2 : index
    %c3_1684 = arith.constant 3 : index
    %c1_1685 = arith.constant 1 : index
    %c12_1686 = arith.constant 12 : index
    %1099 = vector.load %arg10[%c2_1683, %c3_1684, %c1_1685, %c12_1686] : memref<4x4x6x72xf32, #tpu.memory_space<vmem>>, vector<1x1x4x48xf32>
    %1100 = vector.shape_cast %1099 : vector<1x1x4x48xf32> to vector<4x48xf32>
    %c3_1687 = arith.constant 3 : index
    %c2_1688 = arith.constant 2 : index
    %c1_1689 = arith.constant 1 : index
    %c12_1690 = arith.constant 12 : index
    %1101 = vector.load %arg10[%c3_1687, %c2_1688, %c1_1689, %c12_1690] : memref<4x4x6x72xf32, #tpu.memory_space<vmem>>, vector<1x1x4x48xf32>
    %1102 = vector.shape_cast %1101 : vector<1x1x4x48xf32> to vector<4x48xf32>
    %c3_1691 = arith.constant 3 : index
    %c3_1692 = arith.constant 3 : index
    %c1_1693 = arith.constant 1 : index
    %c12_1694 = arith.constant 12 : index
    %1103 = vector.load %arg10[%c3_1691, %c3_1692, %c1_1693, %c12_1694] : memref<4x4x6x72xf32, #tpu.memory_space<vmem>>, vector<1x1x4x48xf32>
    %1104 = vector.shape_cast %1103 : vector<1x1x4x48xf32> to vector<4x48xf32>
    %1105 = tpu.concatenate %1098, %1100, %1102, %1104 in 1 : vector<4x48xf32>, vector<4x48xf32>, vector<4x48xf32>, vector<4x48xf32> -> vector<4x192xf32>
    %c2_1695 = arith.constant 2 : index
    %c3_1696 = arith.constant 3 : index
    %c1_1697 = arith.constant 1 : index
    %c12_1698 = arith.constant 12 : index
    %1106 = vector.load %arg10[%c2_1695, %c3_1696, %c1_1697, %c12_1698] : memref<4x4x6x72xf32, #tpu.memory_space<vmem>>, vector<1x1x4x48xf32>
    %1107 = vector.shape_cast %1106 : vector<1x1x4x48xf32> to vector<4x48xf32>
    %c2_1699 = arith.constant 2 : index
    %c0_1700 = arith.constant 0 : index
    %c1_1701 = arith.constant 1 : index
    %c24_1702 = arith.constant 24 : index
    %1108 = vector.load %arg10[%c2_1699, %c0_1700, %c1_1701, %c24_1702] : memref<4x4x6x72xf32, #tpu.memory_space<vmem>>, vector<1x1x4x48xf32>
    %1109 = vector.shape_cast %1108 : vector<1x1x4x48xf32> to vector<4x48xf32>
    %c3_1703 = arith.constant 3 : index
    %c3_1704 = arith.constant 3 : index
    %c1_1705 = arith.constant 1 : index
    %c12_1706 = arith.constant 12 : index
    %1110 = vector.load %arg10[%c3_1703, %c3_1704, %c1_1705, %c12_1706] : memref<4x4x6x72xf32, #tpu.memory_space<vmem>>, vector<1x1x4x48xf32>
    %1111 = vector.shape_cast %1110 : vector<1x1x4x48xf32> to vector<4x48xf32>
    %c3_1707 = arith.constant 3 : index
    %c0_1708 = arith.constant 0 : index
    %c1_1709 = arith.constant 1 : index
    %c24_1710 = arith.constant 24 : index
    %1112 = vector.load %arg10[%c3_1707, %c0_1708, %c1_1709, %c24_1710] : memref<4x4x6x72xf32, #tpu.memory_space<vmem>>, vector<1x1x4x48xf32>
    %1113 = vector.shape_cast %1112 : vector<1x1x4x48xf32> to vector<4x48xf32>
    %1114 = tpu.concatenate %1107, %1109, %1111, %1113 in 1 : vector<4x48xf32>, vector<4x48xf32>, vector<4x48xf32>, vector<4x48xf32> -> vector<4x192xf32>
    %c3_1711 = arith.constant 3 : index
    %c0_1712 = arith.constant 0 : index
    %c1_1713 = arith.constant 1 : index
    %c12_1714 = arith.constant 12 : index
    %1115 = vector.load %arg10[%c3_1711, %c0_1712, %c1_1713, %c12_1714] : memref<4x4x6x72xf32, #tpu.memory_space<vmem>>, vector<1x1x4x48xf32>
    %1116 = vector.shape_cast %1115 : vector<1x1x4x48xf32> to vector<4x48xf32>
    %c3_1715 = arith.constant 3 : index
    %c1_1716 = arith.constant 1 : index
    %c1_1717 = arith.constant 1 : index
    %c12_1718 = arith.constant 12 : index
    %1117 = vector.load %arg10[%c3_1715, %c1_1716, %c1_1717, %c12_1718] : memref<4x4x6x72xf32, #tpu.memory_space<vmem>>, vector<1x1x4x48xf32>
    %1118 = vector.shape_cast %1117 : vector<1x1x4x48xf32> to vector<4x48xf32>
    %c0_1719 = arith.constant 0 : index
    %c0_1720 = arith.constant 0 : index
    %c2_1721 = arith.constant 2 : index
    %c12_1722 = arith.constant 12 : index
    %1119 = vector.load %arg10[%c0_1719, %c0_1720, %c2_1721, %c12_1722] : memref<4x4x6x72xf32, #tpu.memory_space<vmem>>, vector<1x1x4x48xf32>
    %1120 = vector.shape_cast %1119 : vector<1x1x4x48xf32> to vector<4x48xf32>
    %c0_1723 = arith.constant 0 : index
    %c1_1724 = arith.constant 1 : index
    %c2_1725 = arith.constant 2 : index
    %c12_1726 = arith.constant 12 : index
    %1121 = vector.load %arg10[%c0_1723, %c1_1724, %c2_1725, %c12_1726] : memref<4x4x6x72xf32, #tpu.memory_space<vmem>>, vector<1x1x4x48xf32>
    %1122 = vector.shape_cast %1121 : vector<1x1x4x48xf32> to vector<4x48xf32>
    %1123 = tpu.concatenate %1116, %1118, %1120, %1122 in 1 : vector<4x48xf32>, vector<4x48xf32>, vector<4x48xf32>, vector<4x48xf32> -> vector<4x192xf32>
    %c3_1727 = arith.constant 3 : index
    %c1_1728 = arith.constant 1 : index
    %c1_1729 = arith.constant 1 : index
    %c12_1730 = arith.constant 12 : index
    %1124 = vector.load %arg10[%c3_1727, %c1_1728, %c1_1729, %c12_1730] : memref<4x4x6x72xf32, #tpu.memory_space<vmem>>, vector<1x1x4x48xf32>
    %1125 = vector.shape_cast %1124 : vector<1x1x4x48xf32> to vector<4x48xf32>
    %c3_1731 = arith.constant 3 : index
    %c2_1732 = arith.constant 2 : index
    %c1_1733 = arith.constant 1 : index
    %c12_1734 = arith.constant 12 : index
    %1126 = vector.load %arg10[%c3_1731, %c2_1732, %c1_1733, %c12_1734] : memref<4x4x6x72xf32, #tpu.memory_space<vmem>>, vector<1x1x4x48xf32>
    %1127 = vector.shape_cast %1126 : vector<1x1x4x48xf32> to vector<4x48xf32>
    %c0_1735 = arith.constant 0 : index
    %c1_1736 = arith.constant 1 : index
    %c2_1737 = arith.constant 2 : index
    %c12_1738 = arith.constant 12 : index
    %1128 = vector.load %arg10[%c0_1735, %c1_1736, %c2_1737, %c12_1738] : memref<4x4x6x72xf32, #tpu.memory_space<vmem>>, vector<1x1x4x48xf32>
    %1129 = vector.shape_cast %1128 : vector<1x1x4x48xf32> to vector<4x48xf32>
    %c0_1739 = arith.constant 0 : index
    %c2_1740 = arith.constant 2 : index
    %c2_1741 = arith.constant 2 : index
    %c12_1742 = arith.constant 12 : index
    %1130 = vector.load %arg10[%c0_1739, %c2_1740, %c2_1741, %c12_1742] : memref<4x4x6x72xf32, #tpu.memory_space<vmem>>, vector<1x1x4x48xf32>
    %1131 = vector.shape_cast %1130 : vector<1x1x4x48xf32> to vector<4x48xf32>
    %1132 = tpu.concatenate %1125, %1127, %1129, %1131 in 1 : vector<4x48xf32>, vector<4x48xf32>, vector<4x48xf32>, vector<4x48xf32> -> vector<4x192xf32>
    %c3_1743 = arith.constant 3 : index
    %c2_1744 = arith.constant 2 : index
    %c1_1745 = arith.constant 1 : index
    %c12_1746 = arith.constant 12 : index
    %1133 = vector.load %arg10[%c3_1743, %c2_1744, %c1_1745, %c12_1746] : memref<4x4x6x72xf32, #tpu.memory_space<vmem>>, vector<1x1x4x48xf32>
    %1134 = vector.shape_cast %1133 : vector<1x1x4x48xf32> to vector<4x48xf32>
    %c3_1747 = arith.constant 3 : index
    %c3_1748 = arith.constant 3 : index
    %c1_1749 = arith.constant 1 : index
    %c12_1750 = arith.constant 12 : index
    %1135 = vector.load %arg10[%c3_1747, %c3_1748, %c1_1749, %c12_1750] : memref<4x4x6x72xf32, #tpu.memory_space<vmem>>, vector<1x1x4x48xf32>
    %1136 = vector.shape_cast %1135 : vector<1x1x4x48xf32> to vector<4x48xf32>
    %c0_1751 = arith.constant 0 : index
    %c2_1752 = arith.constant 2 : index
    %c2_1753 = arith.constant 2 : index
    %c12_1754 = arith.constant 12 : index
    %1137 = vector.load %arg10[%c0_1751, %c2_1752, %c2_1753, %c12_1754] : memref<4x4x6x72xf32, #tpu.memory_space<vmem>>, vector<1x1x4x48xf32>
    %1138 = vector.shape_cast %1137 : vector<1x1x4x48xf32> to vector<4x48xf32>
    %c0_1755 = arith.constant 0 : index
    %c3_1756 = arith.constant 3 : index
    %c2_1757 = arith.constant 2 : index
    %c12_1758 = arith.constant 12 : index
    %1139 = vector.load %arg10[%c0_1755, %c3_1756, %c2_1757, %c12_1758] : memref<4x4x6x72xf32, #tpu.memory_space<vmem>>, vector<1x1x4x48xf32>
    %1140 = vector.shape_cast %1139 : vector<1x1x4x48xf32> to vector<4x48xf32>
    %1141 = tpu.concatenate %1134, %1136, %1138, %1140 in 1 : vector<4x48xf32>, vector<4x48xf32>, vector<4x48xf32>, vector<4x48xf32> -> vector<4x192xf32>
    %c3_1759 = arith.constant 3 : index
    %c3_1760 = arith.constant 3 : index
    %c1_1761 = arith.constant 1 : index
    %c12_1762 = arith.constant 12 : index
    %1142 = vector.load %arg10[%c3_1759, %c3_1760, %c1_1761, %c12_1762] : memref<4x4x6x72xf32, #tpu.memory_space<vmem>>, vector<1x1x4x48xf32>
    %1143 = vector.shape_cast %1142 : vector<1x1x4x48xf32> to vector<4x48xf32>
    %c3_1763 = arith.constant 3 : index
    %c0_1764 = arith.constant 0 : index
    %c1_1765 = arith.constant 1 : index
    %c24_1766 = arith.constant 24 : index
    %1144 = vector.load %arg10[%c3_1763, %c0_1764, %c1_1765, %c24_1766] : memref<4x4x6x72xf32, #tpu.memory_space<vmem>>, vector<1x1x4x48xf32>
    %1145 = vector.shape_cast %1144 : vector<1x1x4x48xf32> to vector<4x48xf32>
    %c0_1767 = arith.constant 0 : index
    %c3_1768 = arith.constant 3 : index
    %c2_1769 = arith.constant 2 : index
    %c12_1770 = arith.constant 12 : index
    %1146 = vector.load %arg10[%c0_1767, %c3_1768, %c2_1769, %c12_1770] : memref<4x4x6x72xf32, #tpu.memory_space<vmem>>, vector<1x1x4x48xf32>
    %1147 = vector.shape_cast %1146 : vector<1x1x4x48xf32> to vector<4x48xf32>
    %c0_1771 = arith.constant 0 : index
    %c0_1772 = arith.constant 0 : index
    %c2_1773 = arith.constant 2 : index
    %c24_1774 = arith.constant 24 : index
    %1148 = vector.load %arg10[%c0_1771, %c0_1772, %c2_1773, %c24_1774] : memref<4x4x6x72xf32, #tpu.memory_space<vmem>>, vector<1x1x4x48xf32>
    %1149 = vector.shape_cast %1148 : vector<1x1x4x48xf32> to vector<4x48xf32>
    %1150 = tpu.concatenate %1143, %1145, %1147, %1149 in 1 : vector<4x48xf32>, vector<4x48xf32>, vector<4x48xf32>, vector<4x48xf32> -> vector<4x192xf32>
    %1151 = tpu.concatenate %1015, %1024, %1033, %1042, %1051, %1060, %1069, %1078, %1087, %1096, %1105, %1114, %1123, %1132, %1141, %1150 in 0 : vector<4x192xf32>, vector<4x192xf32>, vector<4x192xf32>, vector<4x192xf32>, vector<4x192xf32>, vector<4x192xf32>, vector<4x192xf32>, vector<4x192xf32>, vector<4x192xf32>, vector<4x192xf32>, vector<4x192xf32>, vector<4x192xf32>, vector<4x192xf32>, vector<4x192xf32>, vector<4x192xf32>, vector<4x192xf32> -> vector<64x192xf32>
    %1152 = arith.truncf %1151 : vector<64x192xf32> to vector<64x192xbf16>
    %cst_1775 = arith.constant dense<0.000000e+00> : vector<64x12xf32>
    %1153 = tpu.matmul %1152, %1006, %cst_1775 {dimension_numbers = #tpu.dot_dimension_numbers<[1], [0], [0], [1], [0, 0, 1, 1], [], []>} : vector<64x192xbf16>, vector<192x12xbf16>, vector<64x12xf32> -> vector<64x12xf32>
    %c0_1776 = arith.constant 0 : index
    %c0_1777 = arith.constant 0 : index
    %1154 = vector.load %arg7[%c0_1776, %c0_1777] : memref<1x12xf32, #tpu.memory_space<vmem>>, vector<1x12xf32>
    %1155 = vector.broadcast %1154 : vector<1x12xf32> to vector<64x12xf32>
    %1156 = arith.addf %1153, %1155 : vector<64x12xf32>
    %cst_1778 = arith.constant 0.000000e+00 : f32
    %1157 = vector.broadcast %cst_1778 : f32 to vector<64x12xf32>
    %1158 = arith.subf %1157, %1156 : vector<64x12xf32>
    %1159 = math.exp %1158 : vector<64x12xf32>
    %cst_1779 = arith.constant 1.000000e+00 : f32
    %1160 = vector.broadcast %cst_1779 : f32 to vector<64x12xf32>
    %1161 = arith.addf %1160, %1159 : vector<64x12xf32>
    %cst_1780 = arith.constant 1.000000e+00 : f32
    %1162 = vector.broadcast %cst_1780 : f32 to vector<64x12xf32>
    %1163 = arith.divf %1162, %1161 : vector<64x12xf32>
    %1164 = vector.extract_strided_slice %1163 {offsets = [0, 0], sizes = [4, 12], strides = [1, 1]} : vector<64x12xf32> to vector<4x12xf32>
    %c0_1781 = arith.constant 0 : index
    %c1_1782 = arith.constant 1 : index
    %c1_1783 = arith.constant 1 : index
    %c0_1784 = arith.constant 0 : index
    %c0_1785 = arith.constant 0 : index
    %1165 = vector.load %arg8[%c0_1781, %c1_1782, %c1_1783, %c0_1784, %c0_1785] : memref<1x8x8x4x12xf32, #tpu.memory_space<vmem>>, vector<1x1x1x4x12xf32>
    %1166 = vector.shape_cast %1165 : vector<1x1x1x4x12xf32> to vector<4x12xf32>
    %1167 = vector.shape_cast %1164 : vector<4x12xf32> to vector<1x1x1x4x12xf32>
    tpu.vector_store %arg8[%c0_1781, %c1_1782, %c1_1783, %c0_1784, %c0_1785], %1167 {strides = array<i32>} : memref<1x8x8x4x12xf32, #tpu.memory_space<vmem>>, vector<1x1x1x4x12xf32>,
    %1168 = vector.extract_strided_slice %1163 {offsets = [4, 0], sizes = [4, 12], strides = [1, 1]} : vector<64x12xf32> to vector<4x12xf32>
    %c0_1786 = arith.constant 0 : index
    %c1_1787 = arith.constant 1 : index
    %c3_1788 = arith.constant 3 : index
    %c0_1789 = arith.constant 0 : index
    %c0_1790 = arith.constant 0 : index
    %1169 = vector.load %arg8[%c0_1786, %c1_1787, %c3_1788, %c0_1789, %c0_1790] : memref<1x8x8x4x12xf32, #tpu.memory_space<vmem>>, vector<1x1x1x4x12xf32>
    %1170 = vector.shape_cast %1169 : vector<1x1x1x4x12xf32> to vector<4x12xf32>
    %1171 = vector.shape_cast %1168 : vector<4x12xf32> to vector<1x1x1x4x12xf32>
    tpu.vector_store %arg8[%c0_1786, %c1_1787, %c3_1788, %c0_1789, %c0_1790], %1171 {strides = array<i32>} : memref<1x8x8x4x12xf32, #tpu.memory_space<vmem>>, vector<1x1x1x4x12xf32>,
    %1172 = vector.extract_strided_slice %1163 {offsets = [8, 0], sizes = [4, 12], strides = [1, 1]} : vector<64x12xf32> to vector<4x12xf32>
    %c0_1791 = arith.constant 0 : index
    %c1_1792 = arith.constant 1 : index
    %c5_1793 = arith.constant 5 : index
    %c0_1794 = arith.constant 0 : index
    %c0_1795 = arith.constant 0 : index
    %1173 = vector.load %arg8[%c0_1791, %c1_1792, %c5_1793, %c0_1794, %c0_1795] : memref<1x8x8x4x12xf32, #tpu.memory_space<vmem>>, vector<1x1x1x4x12xf32>
    %1174 = vector.shape_cast %1173 : vector<1x1x1x4x12xf32> to vector<4x12xf32>
    %1175 = vector.shape_cast %1172 : vector<4x12xf32> to vector<1x1x1x4x12xf32>
    tpu.vector_store %arg8[%c0_1791, %c1_1792, %c5_1793, %c0_1794, %c0_1795], %1175 {strides = array<i32>} : memref<1x8x8x4x12xf32, #tpu.memory_space<vmem>>, vector<1x1x1x4x12xf32>,
    %1176 = vector.extract_strided_slice %1163 {offsets = [12, 0], sizes = [4, 12], strides = [1, 1]} : vector<64x12xf32> to vector<4x12xf32>
    %c0_1796 = arith.constant 0 : index
    %c1_1797 = arith.constant 1 : index
    %c7_1798 = arith.constant 7 : index
    %c0_1799 = arith.constant 0 : index
    %c0_1800 = arith.constant 0 : index
    %1177 = vector.load %arg8[%c0_1796, %c1_1797, %c7_1798, %c0_1799, %c0_1800] : memref<1x8x8x4x12xf32, #tpu.memory_space<vmem>>, vector<1x1x1x4x12xf32>
    %1178 = vector.shape_cast %1177 : vector<1x1x1x4x12xf32> to vector<4x12xf32>
    %1179 = vector.shape_cast %1176 : vector<4x12xf32> to vector<1x1x1x4x12xf32>
    tpu.vector_store %arg8[%c0_1796, %c1_1797, %c7_1798, %c0_1799, %c0_1800], %1179 {strides = array<i32>} : memref<1x8x8x4x12xf32, #tpu.memory_space<vmem>>, vector<1x1x1x4x12xf32>,
    %1180 = vector.extract_strided_slice %1163 {offsets = [16, 0], sizes = [4, 12], strides = [1, 1]} : vector<64x12xf32> to vector<4x12xf32>
    %c0_1801 = arith.constant 0 : index
    %c3_1802 = arith.constant 3 : index
    %c1_1803 = arith.constant 1 : index
    %c0_1804 = arith.constant 0 : index
    %c0_1805 = arith.constant 0 : index
    %1181 = vector.load %arg8[%c0_1801, %c3_1802, %c1_1803, %c0_1804, %c0_1805] : memref<1x8x8x4x12xf32, #tpu.memory_space<vmem>>, vector<1x1x1x4x12xf32>
    %1182 = vector.shape_cast %1181 : vector<1x1x1x4x12xf32> to vector<4x12xf32>
    %1183 = vector.shape_cast %1180 : vector<4x12xf32> to vector<1x1x1x4x12xf32>
    tpu.vector_store %arg8[%c0_1801, %c3_1802, %c1_1803, %c0_1804, %c0_1805], %1183 {strides = array<i32>} : memref<1x8x8x4x12xf32, #tpu.memory_space<vmem>>, vector<1x1x1x4x12xf32>,
    %1184 = vector.extract_strided_slice %1163 {offsets = [20, 0], sizes = [4, 12], strides = [1, 1]} : vector<64x12xf32> to vector<4x12xf32>
    %c0_1806 = arith.constant 0 : index
    %c3_1807 = arith.constant 3 : index
    %c3_1808 = arith.constant 3 : index
    %c0_1809 = arith.constant 0 : index
    %c0_1810 = arith.constant 0 : index
    %1185 = vector.load %arg8[%c0_1806, %c3_1807, %c3_1808, %c0_1809, %c0_1810] : memref<1x8x8x4x12xf32, #tpu.memory_space<vmem>>, vector<1x1x1x4x12xf32>
    %1186 = vector.shape_cast %1185 : vector<1x1x1x4x12xf32> to vector<4x12xf32>
    %1187 = vector.shape_cast %1184 : vector<4x12xf32> to vector<1x1x1x4x12xf32>
    tpu.vector_store %arg8[%c0_1806, %c3_1807, %c3_1808, %c0_1809, %c0_1810], %1187 {strides = array<i32>} : memref<1x8x8x4x12xf32, #tpu.memory_space<vmem>>, vector<1x1x1x4x12xf32>,
    %1188 = vector.extract_strided_slice %1163 {offsets = [24, 0], sizes = [4, 12], strides = [1, 1]} : vector<64x12xf32> to vector<4x12xf32>
    %c0_1811 = arith.constant 0 : index
    %c3_1812 = arith.constant 3 : index
    %c5_1813 = arith.constant 5 : index
    %c0_1814 = arith.constant 0 : index
    %c0_1815 = arith.constant 0 : index
    %1189 = vector.load %arg8[%c0_1811, %c3_1812, %c5_1813, %c0_1814, %c0_1815] : memref<1x8x8x4x12xf32, #tpu.memory_space<vmem>>, vector<1x1x1x4x12xf32>
    %1190 = vector.shape_cast %1189 : vector<1x1x1x4x12xf32> to vector<4x12xf32>
    %1191 = vector.shape_cast %1188 : vector<4x12xf32> to vector<1x1x1x4x12xf32>
    tpu.vector_store %arg8[%c0_1811, %c3_1812, %c5_1813, %c0_1814, %c0_1815], %1191 {strides = array<i32>} : memref<1x8x8x4x12xf32, #tpu.memory_space<vmem>>, vector<1x1x1x4x12xf32>,
    %1192 = vector.extract_strided_slice %1163 {offsets = [28, 0], sizes = [4, 12], strides = [1, 1]} : vector<64x12xf32> to vector<4x12xf32>
    %c0_1816 = arith.constant 0 : index
    %c3_1817 = arith.constant 3 : index
    %c7_1818 = arith.constant 7 : index
    %c0_1819 = arith.constant 0 : index
    %c0_1820 = arith.constant 0 : index
    %1193 = vector.load %arg8[%c0_1816, %c3_1817, %c7_1818, %c0_1819, %c0_1820] : memref<1x8x8x4x12xf32, #tpu.memory_space<vmem>>, vector<1x1x1x4x12xf32>
    %1194 = vector.shape_cast %1193 : vector<1x1x1x4x12xf32> to vector<4x12xf32>
    %1195 = vector.shape_cast %1192 : vector<4x12xf32> to vector<1x1x1x4x12xf32>
    tpu.vector_store %arg8[%c0_1816, %c3_1817, %c7_1818, %c0_1819, %c0_1820], %1195 {strides = array<i32>} : memref<1x8x8x4x12xf32, #tpu.memory_space<vmem>>, vector<1x1x1x4x12xf32>,
    %1196 = vector.extract_strided_slice %1163 {offsets = [32, 0], sizes = [4, 12], strides = [1, 1]} : vector<64x12xf32> to vector<4x12xf32>
    %c0_1821 = arith.constant 0 : index
    %c5_1822 = arith.constant 5 : index
    %c1_1823 = arith.constant 1 : index
    %c0_1824 = arith.constant 0 : index
    %c0_1825 = arith.constant 0 : index
    %1197 = vector.load %arg8[%c0_1821, %c5_1822, %c1_1823, %c0_1824, %c0_1825] : memref<1x8x8x4x12xf32, #tpu.memory_space<vmem>>, vector<1x1x1x4x12xf32>
    %1198 = vector.shape_cast %1197 : vector<1x1x1x4x12xf32> to vector<4x12xf32>
    %1199 = vector.shape_cast %1196 : vector<4x12xf32> to vector<1x1x1x4x12xf32>
    tpu.vector_store %arg8[%c0_1821, %c5_1822, %c1_1823, %c0_1824, %c0_1825], %1199 {strides = array<i32>} : memref<1x8x8x4x12xf32, #tpu.memory_space<vmem>>, vector<1x1x1x4x12xf32>,
    %1200 = vector.extract_strided_slice %1163 {offsets = [36, 0], sizes = [4, 12], strides = [1, 1]} : vector<64x12xf32> to vector<4x12xf32>
    %c0_1826 = arith.constant 0 : index
    %c5_1827 = arith.constant 5 : index
    %c3_1828 = arith.constant 3 : index
    %c0_1829 = arith.constant 0 : index
    %c0_1830 = arith.constant 0 : index
    %1201 = vector.load %arg8[%c0_1826, %c5_1827, %c3_1828, %c0_1829, %c0_1830] : memref<1x8x8x4x12xf32, #tpu.memory_space<vmem>>, vector<1x1x1x4x12xf32>
    %1202 = vector.shape_cast %1201 : vector<1x1x1x4x12xf32> to vector<4x12xf32>
    %1203 = vector.shape_cast %1200 : vector<4x12xf32> to vector<1x1x1x4x12xf32>
    tpu.vector_store %arg8[%c0_1826, %c5_1827, %c3_1828, %c0_1829, %c0_1830], %1203 {strides = array<i32>} : memref<1x8x8x4x12xf32, #tpu.memory_space<vmem>>, vector<1x1x1x4x12xf32>,
    %1204 = vector.extract_strided_slice %1163 {offsets = [40, 0], sizes = [4, 12], strides = [1, 1]} : vector<64x12xf32> to vector<4x12xf32>
    %c0_1831 = arith.constant 0 : index
    %c5_1832 = arith.constant 5 : index
    %c5_1833 = arith.constant 5 : index
    %c0_1834 = arith.constant 0 : index
    %c0_1835 = arith.constant 0 : index
    %1205 = vector.load %arg8[%c0_1831, %c5_1832, %c5_1833, %c0_1834, %c0_1835] : memref<1x8x8x4x12xf32, #tpu.memory_space<vmem>>, vector<1x1x1x4x12xf32>
    %1206 = vector.shape_cast %1205 : vector<1x1x1x4x12xf32> to vector<4x12xf32>
    %1207 = vector.shape_cast %1204 : vector<4x12xf32> to vector<1x1x1x4x12xf32>
    tpu.vector_store %arg8[%c0_1831, %c5_1832, %c5_1833, %c0_1834, %c0_1835], %1207 {strides = array<i32>} : memref<1x8x8x4x12xf32, #tpu.memory_space<vmem>>, vector<1x1x1x4x12xf32>,
    %1208 = vector.extract_strided_slice %1163 {offsets = [44, 0], sizes = [4, 12], strides = [1, 1]} : vector<64x12xf32> to vector<4x12xf32>
    %c0_1836 = arith.constant 0 : index
    %c5_1837 = arith.constant 5 : index
    %c7_1838 = arith.constant 7 : index
    %c0_1839 = arith.constant 0 : index
    %c0_1840 = arith.constant 0 : index
    %1209 = vector.load %arg8[%c0_1836, %c5_1837, %c7_1838, %c0_1839, %c0_1840] : memref<1x8x8x4x12xf32, #tpu.memory_space<vmem>>, vector<1x1x1x4x12xf32>
    %1210 = vector.shape_cast %1209 : vector<1x1x1x4x12xf32> to vector<4x12xf32>
    %1211 = vector.shape_cast %1208 : vector<4x12xf32> to vector<1x1x1x4x12xf32>
    tpu.vector_store %arg8[%c0_1836, %c5_1837, %c7_1838, %c0_1839, %c0_1840], %1211 {strides = array<i32>} : memref<1x8x8x4x12xf32, #tpu.memory_space<vmem>>, vector<1x1x1x4x12xf32>,
    %1212 = vector.extract_strided_slice %1163 {offsets = [48, 0], sizes = [4, 12], strides = [1, 1]} : vector<64x12xf32> to vector<4x12xf32>
    %c0_1841 = arith.constant 0 : index
    %c7_1842 = arith.constant 7 : index
    %c1_1843 = arith.constant 1 : index
    %c0_1844 = arith.constant 0 : index
    %c0_1845 = arith.constant 0 : index
    %1213 = vector.load %arg8[%c0_1841, %c7_1842, %c1_1843, %c0_1844, %c0_1845] : memref<1x8x8x4x12xf32, #tpu.memory_space<vmem>>, vector<1x1x1x4x12xf32>
    %1214 = vector.shape_cast %1213 : vector<1x1x1x4x12xf32> to vector<4x12xf32>
    %1215 = vector.shape_cast %1212 : vector<4x12xf32> to vector<1x1x1x4x12xf32>
    tpu.vector_store %arg8[%c0_1841, %c7_1842, %c1_1843, %c0_1844, %c0_1845], %1215 {strides = array<i32>} : memref<1x8x8x4x12xf32, #tpu.memory_space<vmem>>, vector<1x1x1x4x12xf32>,
    %1216 = vector.extract_strided_slice %1163 {offsets = [52, 0], sizes = [4, 12], strides = [1, 1]} : vector<64x12xf32> to vector<4x12xf32>
    %c0_1846 = arith.constant 0 : index
    %c7_1847 = arith.constant 7 : index
    %c3_1848 = arith.constant 3 : index
    %c0_1849 = arith.constant 0 : index
    %c0_1850 = arith.constant 0 : index
    %1217 = vector.load %arg8[%c0_1846, %c7_1847, %c3_1848, %c0_1849, %c0_1850] : memref<1x8x8x4x12xf32, #tpu.memory_space<vmem>>, vector<1x1x1x4x12xf32>
    %1218 = vector.shape_cast %1217 : vector<1x1x1x4x12xf32> to vector<4x12xf32>
    %1219 = vector.shape_cast %1216 : vector<4x12xf32> to vector<1x1x1x4x12xf32>
    tpu.vector_store %arg8[%c0_1846, %c7_1847, %c3_1848, %c0_1849, %c0_1850], %1219 {strides = array<i32>} : memref<1x8x8x4x12xf32, #tpu.memory_space<vmem>>, vector<1x1x1x4x12xf32>,
    %1220 = vector.extract_strided_slice %1163 {offsets = [56, 0], sizes = [4, 12], strides = [1, 1]} : vector<64x12xf32> to vector<4x12xf32>
    %c0_1851 = arith.constant 0 : index
    %c7_1852 = arith.constant 7 : index
    %c5_1853 = arith.constant 5 : index
    %c0_1854 = arith.constant 0 : index
    %c0_1855 = arith.constant 0 : index
    %1221 = vector.load %arg8[%c0_1851, %c7_1852, %c5_1853, %c0_1854, %c0_1855] : memref<1x8x8x4x12xf32, #tpu.memory_space<vmem>>, vector<1x1x1x4x12xf32>
    %1222 = vector.shape_cast %1221 : vector<1x1x1x4x12xf32> to vector<4x12xf32>
    %1223 = vector.shape_cast %1220 : vector<4x12xf32> to vector<1x1x1x4x12xf32>
    tpu.vector_store %arg8[%c0_1851, %c7_1852, %c5_1853, %c0_1854, %c0_1855], %1223 {strides = array<i32>} : memref<1x8x8x4x12xf32, #tpu.memory_space<vmem>>, vector<1x1x1x4x12xf32>,
    %1224 = vector.extract_strided_slice %1163 {offsets = [60, 0], sizes = [4, 12], strides = [1, 1]} : vector<64x12xf32> to vector<4x12xf32>
    %c0_1856 = arith.constant 0 : index
    %c7_1857 = arith.constant 7 : index
    %c7_1858 = arith.constant 7 : index
    %c0_1859 = arith.constant 0 : index
    %c0_1860 = arith.constant 0 : index
    %1225 = vector.load %arg8[%c0_1856, %c7_1857, %c7_1858, %c0_1859, %c0_1860] : memref<1x8x8x4x12xf32, #tpu.memory_space<vmem>>, vector<1x1x1x4x12xf32>
    %1226 = vector.shape_cast %1225 : vector<1x1x1x4x12xf32> to vector<4x12xf32>
    %1227 = vector.shape_cast %1224 : vector<4x12xf32> to vector<1x1x1x4x12xf32>
    tpu.vector_store %arg8[%c0_1856, %c7_1857, %c7_1858, %c0_1859, %c0_1860], %1227 {strides = array<i32>} : memref<1x8x8x4x12xf32, #tpu.memory_space<vmem>>, vector<1x1x1x4x12xf32>,
    return
  }
  func.func @transform_0(%arg0: i32) -> (i32, i32, i32, i32, i32) {
    %c0_i32 = arith.constant 0 : i32
    %c0_i32_0 = arith.constant 0 : i32
    %c0_i32_1 = arith.constant 0 : i32
    %c0_i32_2 = arith.constant 0 : i32
    %c0_i32_3 = arith.constant 0 : i32
    return %arg0, %c0_i32, %c0_i32_0, %c0_i32_1, %c0_i32_2 : i32, i32, i32, i32, i32
  }
  func.func @transform_1(%arg0: i32) -> (i32, i32, i32, i32) {
    %c0_i32 = arith.constant 0 : i32
    %c0_i32_0 = arith.constant 0 : i32
    %c0_i32_1 = arith.constant 0 : i32
    %c0_i32_2 = arith.constant 0 : i32
    %c0_i32_3 = arith.constant 0 : i32
    return %c0_i32, %c0_i32_0, %c0_i32_1, %c0_i32_2 : i32, i32, i32, i32
  }
  func.func @transform_2(%arg0: i32) -> (i32, i32) {
    %c0_i32 = arith.constant 0 : i32
    %c0_i32_0 = arith.constant 0 : i32
    %c0_i32_1 = arith.constant 0 : i32
    return %c0_i32, %c0_i32_0 : i32, i32
  }
  func.func @transform_3(%arg0: i32) -> (i32, i32, i32, i32) {
    %c0_i32 = arith.constant 0 : i32
    %c0_i32_0 = arith.constant 0 : i32
    %c0_i32_1 = arith.constant 0 : i32
    %c0_i32_2 = arith.constant 0 : i32
    %c0_i32_3 = arith.constant 0 : i32
    return %c0_i32, %c0_i32_0, %c0_i32_1, %c0_i32_2 : i32, i32, i32, i32
  }
  func.func @transform_4(%arg0: i32) -> (i32, i32) {
    %c0_i32 = arith.constant 0 : i32
    %c0_i32_0 = arith.constant 0 : i32
    %c0_i32_1 = arith.constant 0 : i32
    return %c0_i32, %c0_i32_0 : i32, i32
  }
  func.func @transform_5(%arg0: i32) -> (i32, i32, i32, i32) {
    %c0_i32 = arith.constant 0 : i32
    %c0_i32_0 = arith.constant 0 : i32
    %c0_i32_1 = arith.constant 0 : i32
    %c0_i32_2 = arith.constant 0 : i32
    %c0_i32_3 = arith.constant 0 : i32
    return %c0_i32, %c0_i32_0, %c0_i32_1, %c0_i32_2 : i32, i32, i32, i32
  }
  func.func @transform_6(%arg0: i32) -> (i32, i32) {
    %c0_i32 = arith.constant 0 : i32
    %c0_i32_0 = arith.constant 0 : i32
    %c0_i32_1 = arith.constant 0 : i32
    return %c0_i32, %c0_i32_0 : i32, i32
  }
  func.func @transform_7(%arg0: i32) -> (i32, i32, i32, i32, i32) {
    %c0_i32 = arith.constant 0 : i32
    %c0_i32_0 = arith.constant 0 : i32
    %c0_i32_1 = arith.constant 0 : i32
    %c0_i32_2 = arith.constant 0 : i32
    %c0_i32_3 = arith.constant 0 : i32
    return %arg0, %c0_i32, %c0_i32_0, %c0_i32_1, %c0_i32_2 : i32, i32, i32, i32, i32
  }
}

</mosaic_0001>

<llo_original>
// kernel: decoder_forward.1
$region0: #{decoder_forward.1}
  #allocation0 [shape = 'u32[]', space=smem, size = 0x4, offset = 0x4, fixed_abs, tag = 'smem constant byte address 0x4 - core index']
  #allocation1 [shape = 'u32[144,128]{1,0:T(1,128)}', space=vmem, size = 0x12000, scoped, tag = 'internal scratch']
  #allocation2 [shape = 'f32[2,2,6,144]{3,2,1,0:T(8,128)}', space=vmem, size = 0x8000, scoped, tag = 'scratch operand']
  #allocation3 [shape = 'f32[4,4,6,72]{3,2,1,0:T(8,128)}', space=vmem, size = 0x10000, scoped, tag = 'scratch operand']
  %s0 = inlined_call_operand.vmem [shape: f32[2,1,1,6,288], index: 0, kind: input, shape index: {}]
  %s1 = inlined_call_operand.vmem [shape: bf16[2,2,768,96], index: 1, kind: input, shape index: {}]
  %s2 = inlined_call_operand.vmem [shape: f32[1,96], index: 2, kind: input, shape index: {}]
  %s3 = inlined_call_operand.vmem [shape: bf16[2,2,384,48], index: 3, kind: input, shape index: {}]
  %s4 = inlined_call_operand.vmem [shape: f32[1,48], index: 4, kind: input, shape index: {}]
  %s5 = inlined_call_operand.vmem [shape: bf16[2,2,192,12], index: 5, kind: input, shape index: {}]
  %s6 = inlined_call_operand.vmem [shape: f32[1,12], index: 6, kind: input, shape index: {}]
  %s7 = inlined_call_operand.vmem [shape: f32[2,8,8,4,12], index: 7, kind: output, shape index: {}]
  %s8 = sld [smem:[#allocation0]]
  $region61: #{decoder_forward.1} parent=0
    _
  %s10 = ssub.s32 1, %s8
  %s11 = scalar_select 0, %s10, %s8
  loop: start=0, step=1, limit=4
  $region2: #{decoder_forward.1} parent=0 // loop_pre_header
    _
  $region3: #{decoder_forward.1} parent=0 // loop_header
    %s13 = sphi 0, %s17
    %p14 = scmp.ge.s32.totalorder %s13, 4
    %s23 = sphi 0, %s25
    %s26 = sphi 0, %s23
    %s27 = sphi 0, %s26
    %s43 = sphi 0, %s27
    %s47 = sphi 0, %s47
    %s49 = sphi 0, %s47
    %s50 = sphi 0, %s49
    %s64 = sphi 0, %s50
    %s68 = sphi 0, %s68
    %s70 = sphi 0, %s68
    %s71 = sphi 0, %s70
    %s85 = sphi 0, %s71
    %s89 = sphi 0, %s89
    %s91 = sphi 0, %s89
    %s92 = sphi 0, %s91
    %s106 = sphi 0, %s92
    %s110 = sphi 0, %s110
    %s112 = sphi 0, %s110
    %s113 = sphi 0, %s112
    %s127 = sphi 0, %s113
    %s131 = sphi 0, %s131
    %s133 = sphi 0, %s131
    %s134 = sphi 0, %s133
    %s148 = sphi 0, %s134
    %s152 = sphi 0, %s152
    %s154 = sphi 0, %s152
    %s155 = sphi 0, %s154
    %s169 = sphi 0, %s155
    %s175 = sphi 0, %s177
    %s178 = sphi 0, %s175
    %s179 = sphi 0, %s178
    %s195 = sphi 0, %s179
  $region4: #{decoder_forward.1} parent=0 // loop_header_branch
    %16 = sbr.rel (%p14) target = $region8
  $region5: #{decoder_forward.1} parent=0 // loop_body
    %s18 = ssub.s32 %s13, 1
    %s19 = ssub.s32 %s13, 2
    %s20 = sadd.s32 %s13, 1
    %s21 = ssub.s32 %s13, %s20
    %p22 = scmp.eq.s32.totalorder %s21, 0
    %s24 = sadd.s32 %s23, 1
    %s25 = scalar_select %p22, %s23, %s24
    %p28 = pneg %p22
    %p29 = scmp.eq.s32.totalorder %s13, 1
    %p30 = por %p28, %p29
    %p31 = scmp.ne.s32.totalorder %s23, %s26
    %p32 = scmp.eq.s32.totalorder %s13, 0
    %p33 = por %p31, %p32
    %p34 = scmp.ne.s32.totalorder %s23, %s26
    %p35 = scmp.eq.s32.totalorder %s18, 1
    %p36 = por %p34, %p35
    %p37 = scmp.ne.s32.totalorder %s26, %s27
    %p38 = scmp.eq.s32.totalorder %s18, 0
    %p39 = por %p37, %p38
    %p40 = scmp.ne.s32.totalorder %s26, %s27
    %p41 = scmp.eq.s32.totalorder %s19, 1
    %p42 = por %p40, %p41
    %p44 = scmp.ne.s32.totalorder %s27, %s43
    %p45 = scmp.eq.s32.totalorder %s19, 0
    %p46 = por %p44, %p45
    %s48 = sadd.s32 %s47, 1
    %p51 = scmp.eq.s32.totalorder %s13, 1
    %p52 = scmp.ne.s32.totalorder %s47, %s49
    %p53 = scmp.eq.s32.totalorder %s13, 0
    %p54 = por %p52, %p53
    %p55 = scmp.ne.s32.totalorder %s47, %s49
    %p56 = scmp.eq.s32.totalorder %s18, 1
    %p57 = por %p55, %p56
    %p58 = scmp.ne.s32.totalorder %s49, %s50
    %p59 = scmp.eq.s32.totalorder %s18, 0
    %p60 = por %p58, %p59
    %p61 = scmp.ne.s32.totalorder %s49, %s50
    %p62 = scmp.eq.s32.totalorder %s19, 1
    %p63 = por %p61, %p62
    %p65 = scmp.ne.s32.totalorder %s50, %s64
    %p66 = scmp.eq.s32.totalorder %s19, 0
    %p67 = por %p65, %p66
    %s69 = sadd.s32 %s68, 1
    %p72 = scmp.eq.s32.totalorder %s13, 1
    %p73 = scmp.ne.s32.totalorder %s68, %s70
    %p74 = scmp.eq.s32.totalorder %s13, 0
    %p75 = por %p73, %p74
    %p76 = scmp.ne.s32.totalorder %s68, %s70
    %p77 = scmp.eq.s32.totalorder %s18, 1
    %p78 = por %p76, %p77
    %p79 = scmp.ne.s32.totalorder %s70, %s71
    %p80 = scmp.eq.s32.totalorder %s18, 0
    %p81 = por %p79, %p80
    %p82 = scmp.ne.s32.totalorder %s70, %s71
    %p83 = scmp.eq.s32.totalorder %s19, 1
    %p84 = por %p82, %p83
    %p86 = scmp.ne.s32.totalorder %s71, %s85
    %p87 = scmp.eq.s32.totalorder %s19, 0
    %p88 = por %p86, %p87
    %s90 = sadd.s32 %s89, 1
    %p93 = scmp.eq.s32.totalorder %s13, 1
    %p94 = scmp.ne.s32.totalorder %s89, %s91
    %p95 = scmp.eq.s32.totalorder %s13, 0
    %p96 = por %p94, %p95
    %p97 = scmp.ne.s32.totalorder %s89, %s91
    %p98 = scmp.eq.s32.totalorder %s18, 1
    %p99 = por %p97, %p98
    %p100 = scmp.ne.s32.totalorder %s91, %s92
    %p101 = scmp.eq.s32.totalorder %s18, 0
    %p102 = por %p100, %p101
    %p103 = scmp.ne.s32.totalorder %s91, %s92
    %p104 = scmp.eq.s32.totalorder %s19, 1
    %p105 = por %p103, %p104
    %p107 = scmp.ne.s32.totalorder %s92, %s106
    %p108 = scmp.eq.s32.totalorder %s19, 0
    %p109 = por %p107, %p108
    %s111 = sadd.s32 %s110, 1
    %p114 = scmp.eq.s32.totalorder %s13, 1
    %p115 = scmp.ne.s32.totalorder %s110, %s112
    %p116 = scmp.eq.s32.totalorder %s13, 0
    %p117 = por %p115, %p116
    %p118 = scmp.ne.s32.totalorder %s110, %s112
    %p119 = scmp.eq.s32.totalorder %s18, 1
    %p120 = por %p118, %p119
    %p121 = scmp.ne.s32.totalorder %s112, %s113
    %p122 = scmp.eq.s32.totalorder %s18, 0
    %p123 = por %p121, %p122
    %p124 = scmp.ne.s32.totalorder %s112, %s113
    %p125 = scmp.eq.s32.totalorder %s19, 1
    %p126 = por %p124, %p125
    %p128 = scmp.ne.s32.totalorder %s113, %s127
    %p129 = scmp.eq.s32.totalorder %s19, 0
    %p130 = por %p128, %p129
    %s132 = sadd.s32 %s131, 1
    %p135 = scmp.eq.s32.totalorder %s13, 1
    %p136 = scmp.ne.s32.totalorder %s131, %s133
    %p137 = scmp.eq.s32.totalorder %s13, 0
    %p138 = por %p136, %p137
    %p139 = scmp.ne.s32.totalorder %s131, %s133
    %p140 = scmp.eq.s32.totalorder %s18, 1
    %p141 = por %p139, %p140
    %p142 = scmp.ne.s32.totalorder %s133, %s134
    %p143 = scmp.eq.s32.totalorder %s18, 0
    %p144 = por %p142, %p143
    %p145 = scmp.ne.s32.totalorder %s133, %s134
    %p146 = scmp.eq.s32.totalorder %s19, 1
    %p147 = por %p145, %p146
    %p149 = scmp.ne.s32.totalorder %s134, %s148
    %p150 = scmp.eq.s32.totalorder %s19, 0
    %p151 = por %p149, %p150
    %s153 = sadd.s32 %s152, 1
    %p156 = scmp.eq.s32.totalorder %s13, 1
    %p157 = scmp.ne.s32.totalorder %s152, %s154
    %p158 = scmp.eq.s32.totalorder %s13, 0
    %p159 = por %p157, %p158
    %p160 = scmp.ne.s32.totalorder %s152, %s154
    %p161 = scmp.eq.s32.totalorder %s18, 1
    %p162 = por %p160, %p161
    %p163 = scmp.ne.s32.totalorder %s154, %s155
    %p164 = scmp.eq.s32.totalorder %s18, 0
    %p165 = por %p163, %p164
    %p166 = scmp.ne.s32.totalorder %s154, %s155
    %p167 = scmp.eq.s32.totalorder %s19, 1
    %p168 = por %p166, %p167
    %p170 = scmp.ne.s32.totalorder %s155, %s169
    %p171 = scmp.eq.s32.totalorder %s19, 0
    %p172 = por %p170, %p171
    %s173 = ssub.s32 %s13, %s20
    %p174 = scmp.eq.s32.totalorder %s173, 0
    %s176 = sadd.s32 %s175, 1
    %s177 = scalar_select %p174, %s175, %s176
    %p180 = pneg %p174
    %p181 = scmp.eq.s32.totalorder %s13, 1
    %p182 = por %p180, %p181
    %p183 = scmp.ne.s32.totalorder %s175, %s178
    %p184 = scmp.eq.s32.totalorder %s13, 0
    %p185 = por %p183, %p184
    %p186 = scmp.ne.s32.totalorder %s175, %s178
    %p187 = scmp.eq.s32.totalorder %s18, 1
    %p188 = por %p186, %p187
    %p189 = scmp.ne.s32.totalorder %s178, %s179
    %p190 = scmp.eq.s32.totalorder %s18, 0
    %p191 = por %p189, %p190
    %p192 = scmp.ne.s32.totalorder %s178, %s179
    %p193 = scmp.eq.s32.totalorder %s19, 1
    %p194 = por %p192, %p193
    %p196 = scmp.ne.s32.totalorder %s179, %s195
    %p197 = scmp.eq.s32.totalorder %s19, 0
    %p198 = por %p196, %p197
    %p199 = scmp.le.s32.totalorder 1, %s13
    %p200 = scmp.lt.s32.totalorder %s13, 3
    %p201 = pnand %p199, %p200
    %p202 = pneg %p201
    // Predicated region
    $region9: #{decoder_forward.1} parent=5 // pred_check
      _
    $region10: #{decoder_forward.1} parent=5 // pred_check_branch
      %204 = sbr.rel (%p201) target = $region12
    $region11: #{decoder_forward.1} parent=5 // pred_region
      %s205 = ssub.s32 %s13, 1
      // Predicated region
      $region13: #{decoder_forward.1} parent=11 // pred_check
        %p206 = pneg %p60
      $region14: #{decoder_forward.1} parent=11 // pred_check_branch
        %208 = sbr.rel (%p206) target = $region16
      $region15: #{decoder_forward.1} parent=11 // pred_region
        _
      $region16: #{decoder_forward.1} parent=11 // pred_fallthru
        _
      // Predicated region
      $region17: #{decoder_forward.1} parent=11 // pred_check
        %p209 = pneg %p81
      $region18: #{decoder_forward.1} parent=11 // pred_check_branch
        %211 = sbr.rel (%p209) target = $region20
      $region19: #{decoder_forward.1} parent=11 // pred_region
        _
      $region20: #{decoder_forward.1} parent=11 // pred_fallthru
        _
      // Predicated region
      $region21: #{decoder_forward.1} parent=11 // pred_check
        %p212 = pneg %p102
      $region22: #{decoder_forward.1} parent=11 // pred_check_branch
        %214 = sbr.rel (%p212) target = $region24
      $region23: #{decoder_forward.1} parent=11 // pred_region
        _
      $region24: #{decoder_forward.1} parent=11 // pred_fallthru
        _
      // Predicated region
      $region25: #{decoder_forward.1} parent=11 // pred_check
        %p215 = pneg %p123
      $region26: #{decoder_forward.1} parent=11 // pred_check_branch
        %217 = sbr.rel (%p215) target = $region28
      $region27: #{decoder_forward.1} parent=11 // pred_region
        _
      $region28: #{decoder_forward.1} parent=11 // pred_fallthru
        _
      // Predicated region
      $region29: #{decoder_forward.1} parent=11 // pred_check
        %p218 = pneg %p144
      $region30: #{decoder_forward.1} parent=11 // pred_check_branch
        %220 = sbr.rel (%p218) target = $region32
      $region31: #{decoder_forward.1} parent=11 // pred_region
        _
      $region32: #{decoder_forward.1} parent=11 // pred_fallthru
        _
      // Predicated region
      $region33: #{decoder_forward.1} parent=11 // pred_check
        %p221 = pneg %p165
      $region34: #{decoder_forward.1} parent=11 // pred_check_branch
        %223 = sbr.rel (%p221) target = $region36
      $region35: #{decoder_forward.1} parent=11 // pred_region
        _
      $region36: #{decoder_forward.1} parent=11 // pred_fallthru
        _
    $region12: #{decoder_forward.1} parent=5 // pred_fallthru
      _
    %p224 = scmp.lt.s32.totalorder %s13, 2
    // Predicated region
    $region37: #{decoder_forward.1} parent=5 // pred_check
      %p225 = pneg %p224
    $region38: #{decoder_forward.1} parent=5 // pred_check_branch
      %227 = sbr.rel (%p225) target = $region40
    $region39: #{decoder_forward.1} parent=5 // pred_region
      // Predicated region
      $region41: #{decoder_forward.1} parent=39 // pred_check
        %p228 = pneg %p33
      $region42: #{decoder_forward.1} parent=39 // pred_check_branch
        %230 = sbr.rel (%p228) target = $region44
      $region43: #{decoder_forward.1} parent=39 // pred_region
        %p231 = scmp.lt.s32.totalorder %s13, 1
        %s232 = scalar_select %p231, %s13, 1
        %s233 = smul.addr %s232, 3
        %s234 = smul.addr %s233, 8
        %s235 = scalar_lea.vmem %s0, %s234
      $region44: #{decoder_forward.1} parent=39 // pred_fallthru
        _
    $region40: #{decoder_forward.1} parent=5 // pred_fallthru
      _
    %p236 = scmp.le.s32.totalorder 1, %s13
    %p237 = scmp.lt.s32.totalorder %s13, 3
    %p238 = pnand %p236, %p237
    %p239 = pneg %p238
    // Predicated region
    $region45: #{decoder_forward.1} parent=5 // pred_check
      _
    $region46: #{decoder_forward.1} parent=5 // pred_check_branch
      %241 = sbr.rel (%p238) target = $region48
    $region47: #{decoder_forward.1} parent=5 // pred_region
      %s242 = ssub.s32 %s13, 1
      %p243 = scmp.lt.s32.totalorder %s18, 1
      %s244 = scalar_select %p243, %s18, 1
      %s245 = smul.addr %s244, 3
      %s246 = smul.addr %s245, 8
      %s247 = scalar_lea.vmem %s0, %s246
      %p248 = pneg %p39
      %p249 = pneg %p36
      %p250 = pneg %p60
      %p251 = pneg %p57
      %p252 = pneg %p81
      %p253 = pneg %p78
      %p254 = pneg %p102
      %p255 = pneg %p99
      %p256 = pneg %p123
      %p257 = pneg %p120
      %p258 = pneg %p144
      %p259 = pneg %p141
      %p260 = pneg %p165
      %p261 = pneg %p162
      %p262 = pneg %p191
      %p263 = pneg %p188
      %p264 = scmp.lt.s32.totalorder %s18, 1
      %s265 = scalar_select %p264, %s18, 1
      %s266 = smul.addr %s265, 64
      %s267 = smul.addr %s266, 4
      %s268 = scalar_lea.vmem %s7, %s267
      %p269 = scmp.lt.s32.totalorder %s18, 1
      %s270 = scalar_select %p269, %s18, 1
      %s271 = smul.addr %s270, 3
      %s272 = smul.addr %s271, 8
      %s273 = scalar_lea.vmem %s0, %s272
      %p274 = scmp.lt.s32.totalorder %s18, 1
      %s275 = scalar_select %p274, %s18, 1
      %s276 = smul.addr %s275, 64
      %s277 = smul.addr %s276, 4
      %s278 = scalar_lea.vmem %s7, %s277
      %280 = vst [vmem:[#allocation2] sm:$0x3f] 0.0
      %vm281 = vcmask 128000
      %282 = vst.msk [vmem:[#allocation2 + $0x8] sm:$0x3f] %vm281, 0.0
      %283 = vst [vmem:[#allocation2 + $0x10] sm:$0x3f] 0.0
      %284 = vst.msk [vmem:[#allocation2 + $0x18] sm:$0x3f] %vm281, 0.0
      %285 = vst [vmem:[#allocation2 + $0x20] sm:$0x3f] 0.0
      %286 = vst.msk [vmem:[#allocation2 + $0x28] sm:$0x3f] %vm281, 0.0
      %287 = vst [vmem:[#allocation2 + $0x30] sm:$0x3f] 0.0
      %288 = vst.msk [vmem:[#allocation2 + $0x38] sm:$0x3f] %vm281, 0.0
      %v289 = vld [vmem:[%s1] sm:$0xf]
      %v290 = vld [vmem:[%s1 + $0x4] sm:$0xf]
      %v291 = vld [vmem:[%s1 + $0x8] sm:$0xf]
      %v292 = vld [vmem:[%s1 + $0xc] sm:$0xf]
      %v293 = vld [vmem:[%s1 + $0x10] sm:$0xf]
      %v294 = vld [vmem:[%s1 + $0x14] sm:$0xf]
      %v295 = vld [vmem:[%s1 + $0x18] sm:$0xf]
      %v296 = vld [vmem:[%s1 + $0x1c] sm:$0xf]
      %v297 = vld [vmem:[%s1 + $0x20] sm:$0xf]
      %v298 = vld [vmem:[%s1 + $0x24] sm:$0xf]
      %v299 = vld [vmem:[%s1 + $0x28] sm:$0xf]
      %v300 = vld [vmem:[%s1 + $0x2c] sm:$0xf]
      %v301 = vld [vmem:[%s1 + $0x30] sm:$0xf]
      %v302 = vld [vmem:[%s1 + $0x34] sm:$0xf]
      %v303 = vld [vmem:[%s1 + $0x38] sm:$0xf]
      %v304 = vld [vmem:[%s1 + $0x3c] sm:$0xf]
      %v305 = vld [vmem:[%s1 + $0x40] sm:$0xf]
      %v306 = vld [vmem:[%s1 + $0x44] sm:$0xf]
      %v307 = vld [vmem:[%s1 + $0x48] sm:$0xf]
      %v308 = vld [vmem:[%s1 + $0x4c] sm:$0xf]
      %v309 = vld [vmem:[%s1 + $0x50] sm:$0xf]
      %v310 = vld [vmem:[%s1 + $0x54] sm:$0xf]
      %v311 = vld [vmem:[%s1 + $0x58] sm:$0xf]
      %v312 = vld [vmem:[%s1 + $0x5c] sm:$0xf]
      %v313 = vld [vmem:[%s1 + $0x60] sm:$0xf]
      %v314 = vld [vmem:[%s1 + $0x64] sm:$0xf]
      %v315 = vld [vmem:[%s1 + $0x68] sm:$0xf]
      %v316 = vld [vmem:[%s1 + $0x6c] sm:$0xf]
      %v317 = vld [vmem:[%s1 + $0x70] sm:$0xf]
      %v318 = vld [vmem:[%s1 + $0x74] sm:$0xf]
      %v319 = vld [vmem:[%s1 + $0x78] sm:$0xf]
      %v320 = vld [vmem:[%s1 + $0x7c] sm:$0xf]
      %v321 = vld [vmem:[%s1 + $0x80] sm:$0xf]
      %v322 = vld [vmem:[%s1 + $0x84] sm:$0xf]
      %v323 = vld [vmem:[%s1 + $0x88] sm:$0xf]
      %v324 = vld [vmem:[%s1 + $0x8c] sm:$0xf]
      %v325 = vld [vmem:[%s1 + $0x90] sm:$0xf]
      %v326 = vld [vmem:[%s1 + $0x94] sm:$0xf]
      %v327 = vld [vmem:[%s1 + $0x98] sm:$0xf]
      %v328 = vld [vmem:[%s1 + $0x9c] sm:$0xf]
      %v329 = vld [vmem:[%s1 + $0xa0] sm:$0xf]
      %v330 = vld [vmem:[%s1 + $0xa4] sm:$0xf]
      %v331 = vld [vmem:[%s1 + $0xa8] sm:$0xf]
      %v332 = vld [vmem:[%s1 + $0xac] sm:$0xf]
      %v333 = vld [vmem:[%s1 + $0xb0] sm:$0xf]
      %v334 = vld [vmem:[%s1 + $0xb4] sm:$0xf]
      %v335 = vld [vmem:[%s1 + $0xb8] sm:$0xf]
      %v336 = vld [vmem:[%s1 + $0xbc] sm:$0xf]
      %v337 = vld [vmem:[%s1 + $0xc0] sm:$0xf]
      %v338 = vld [vmem:[%s1 + $0xc4] sm:$0xf]
      %v339 = vld [vmem:[%s1 + $0xc8] sm:$0xf]
      %v340 = vld [vmem:[%s1 + $0xcc] sm:$0xf]
      %v341 = vld [vmem:[%s1 + $0xd0] sm:$0xf]
      %v342 = vld [vmem:[%s1 + $0xd4] sm:$0xf]
      %v343 = vld [vmem:[%s1 + $0xd8] sm:$0xf]
      %v344 = vld [vmem:[%s1 + $0xdc] sm:$0xf]
      %v345 = vld [vmem:[%s1 + $0xe0] sm:$0xf]
      %v346 = vld [vmem:[%s1 + $0xe4] sm:$0xf]
      %v347 = vld [vmem:[%s1 + $0xe8] sm:$0xf]
      %v348 = vld [vmem:[%s1 + $0xec] sm:$0xf]
      %v349 = vld [vmem:[%s1 + $0xf0] sm:$0xf]
      %v350 = vld [vmem:[%s1 + $0xf4] sm:$0xf]
      %v351 = vld [vmem:[%s1 + $0xf8] sm:$0xf]
      %v352 = vld [vmem:[%s1 + $0xfc] sm:$0xf]
      %v353 = vld [vmem:[%s1 + $0x100] sm:$0xf]
      %v354 = vld [vmem:[%s1 + $0x104] sm:$0xf]
      %v355 = vld [vmem:[%s1 + $0x108] sm:$0xf]
      %v356 = vld [vmem:[%s1 + $0x10c] sm:$0xf]
      %v357 = vld [vmem:[%s1 + $0x110] sm:$0xf]
      %v358 = vld [vmem:[%s1 + $0x114] sm:$0xf]
      %v359 = vld [vmem:[%s1 + $0x118] sm:$0xf]
      %v360 = vld [vmem:[%s1 + $0x11c] sm:$0xf]
      %v361 = vld [vmem:[%s1 + $0x120] sm:$0xf]
      %v362 = vld [vmem:[%s1 + $0x124] sm:$0xf]
      %v363 = vld [vmem:[%s1 + $0x128] sm:$0xf]
      %v364 = vld [vmem:[%s1 + $0x12c] sm:$0xf]
      %v365 = vld [vmem:[%s1 + $0x130] sm:$0xf]
      %v366 = vld [vmem:[%s1 + $0x134] sm:$0xf]
      %v367 = vld [vmem:[%s1 + $0x138] sm:$0xf]
      %v368 = vld [vmem:[%s1 + $0x13c] sm:$0xf]
      %v369 = vld [vmem:[%s1 + $0x140] sm:$0xf]
      %v370 = vld [vmem:[%s1 + $0x144] sm:$0xf]
      %v371 = vld [vmem:[%s1 + $0x148] sm:$0xf]
      %v372 = vld [vmem:[%s1 + $0x14c] sm:$0xf]
      %v373 = vld [vmem:[%s1 + $0x150] sm:$0xf]
      %v374 = vld [vmem:[%s1 + $0x154] sm:$0xf]
      %v375 = vld [vmem:[%s1 + $0x158] sm:$0xf]
      %v376 = vld [vmem:[%s1 + $0x15c] sm:$0xf]
      %v377 = vld [vmem:[%s1 + $0x160] sm:$0xf]
      %v378 = vld [vmem:[%s1 + $0x164] sm:$0xf]
      %v379 = vld [vmem:[%s1 + $0x168] sm:$0xf]
      %v380 = vld [vmem:[%s1 + $0x16c] sm:$0xf]
      %v381 = vld [vmem:[%s1 + $0x170] sm:$0xf]
      %v382 = vld [vmem:[%s1 + $0x174] sm:$0xf]
      %v383 = vld [vmem:[%s1 + $0x178] sm:$0xf]
      %v384 = vld [vmem:[%s1 + $0x17c] sm:$0xf]
      %v385 = vld [vmem:[%s273] sm:$0xf]
      %v386 = vld [vmem:[%s273 + $0x8] sm:$0xf]
      %v387 = vld [vmem:[%s273] sm:$0x1e]
      %v388 = vld [vmem:[%s273 + $0x8] sm:$0x1e]
      %391 = vrot.lane.b32.xlu0 %v385, 16
      %v392 = vpop.permute.xlu0 %391
      %393 = vrot.lane.b32.xlu0 %v386, 16
      %v394 = vpop.permute.xlu0 %393
      %vm395 = vcmask 130048
      %v396 = vsel %vm395, %v392, %v394
      %v401 = vrot.slane %v387, 1
      %v402 = vrot.slane %v388, 1
      %405 = vrot.lane.b32.xlu0 %v401, 16
      %v406 = vpop.permute.xlu0 %405
      %407 = vrot.lane.b32.xlu0 %v402, 16
      %v408 = vpop.permute.xlu0 %407
      %v409 = vsel %vm395, %v406, %v408
      %vm412 = vcmask 523264
      %v413 = vsel %vm412, %v386, %v392
      %v414 = vsel %vm412, %v402, %v406
      %v415 = vpack.c.bf16 %v385, %v385
      %v416 = vpack.c.bf16 %v413, %v413
      %v417 = vpack.c.bf16 %v396, %v396
      %v418 = vpack.c.bf16 %v401, %v401
      %v419 = vpack.c.bf16 %v414, %v414
      %v420 = vpack.c.bf16 %v409, %v409
      %v421 = vld [vmem:[%s2] sm:$0x1]
      %v423 = vlaneseq
      %v424 = vshrl.u32 %v423, 7
      %v425 = vsub.s32 0, %v424
      %v426 = vrot.slane %v421, %v425
      %v524 = vunpack.c.l.b16 %v289
      %v525 = vunpack.c.l.b16 %v290
      %v526 = vunpack.c.l.b16 %v291
      %v527 = vunpack.c.l.b16 %v292
      %v528 = vunpack.c.l.b16 %v293
      %v529 = vunpack.c.l.b16 %v294
      %v530 = vunpack.c.l.b16 %v295
      %v531 = vunpack.c.l.b16 %v296
      %v532 = vunpack.c.l.b16 %v297
      %v533 = vunpack.c.l.b16 %v298
      %v534 = vunpack.c.l.b16 %v299
      %v535 = vunpack.c.l.b16 %v300
      %v536 = vunpack.c.l.b16 %v301
      %v537 = vunpack.c.l.b16 %v302
      %v538 = vunpack.c.l.b16 %v303
      %v539 = vunpack.c.l.b16 %v304
      %v540 = vunpack.c.l.b16 %v305
      %v541 = vunpack.c.l.b16 %v306
      %v542 = vunpack.c.l.b16 %v307
      %v543 = vunpack.c.l.b16 %v308
      %v544 = vunpack.c.l.b16 %v309
      %v545 = vunpack.c.l.b16 %v310
      %v546 = vunpack.c.l.b16 %v311
      %v547 = vunpack.c.l.b16 %v312
      %v548 = vunpack.c.l.b16 %v313
      %v549 = vunpack.c.l.b16 %v314
      %v550 = vunpack.c.l.b16 %v315
      %v551 = vunpack.c.l.b16 %v316
      %v552 = vunpack.c.l.b16 %v317
      %v553 = vunpack.c.l.b16 %v318
      %v554 = vunpack.c.l.b16 %v319
      %v555 = vunpack.c.l.b16 %v320
      %v556 = vunpack.c.l.b16 %v321
      %v557 = vunpack.c.l.b16 %v322
      %v558 = vunpack.c.l.b16 %v323
      %v559 = vunpack.c.l.b16 %v324
      %v560 = vunpack.c.l.b16 %v325
      %v561 = vunpack.c.l.b16 %v326
      %v562 = vunpack.c.l.b16 %v327
      %v563 = vunpack.c.l.b16 %v328
      %v564 = vunpack.c.l.b16 %v329
      %v565 = vunpack.c.l.b16 %v330
      %v566 = vunpack.c.l.b16 %v331
      %v567 = vunpack.c.l.b16 %v332
      %v568 = vunpack.c.l.b16 %v333
      %v569 = vunpack.c.l.b16 %v334
      %v570 = vunpack.c.l.b16 %v335
      %v571 = vunpack.c.l.b16 %v336
      %v572 = vunpack.c.l.b16 %v337
      %v573 = vunpack.c.l.b16 %v338
      %v574 = vunpack.c.l.b16 %v339
      %v575 = vunpack.c.l.b16 %v340
      %v576 = vunpack.c.l.b16 %v341
      %v577 = vunpack.c.l.b16 %v342
      %v578 = vunpack.c.l.b16 %v343
      %v579 = vunpack.c.l.b16 %v344
      %v580 = vunpack.c.l.b16 %v345
      %v581 = vunpack.c.l.b16 %v346
      %v582 = vunpack.c.l.b16 %v347
      %v583 = vunpack.c.l.b16 %v348
      %v584 = vunpack.c.l.b16 %v349
      %v585 = vunpack.c.l.b16 %v350
      %v586 = vunpack.c.l.b16 %v351
      %v587 = vunpack.c.l.b16 %v352
      %v588 = vunpack.c.l.b16 %v353
      %v589 = vunpack.c.l.b16 %v354
      %v590 = vunpack.c.l.b16 %v355
      %v591 = vunpack.c.l.b16 %v356
      %v592 = vunpack.c.l.b16 %v357
      %v593 = vunpack.c.l.b16 %v358
      %v594 = vunpack.c.l.b16 %v359
      %v595 = vunpack.c.l.b16 %v360
      %v596 = vunpack.c.l.b16 %v361
      %v597 = vunpack.c.l.b16 %v362
      %v598 = vunpack.c.l.b16 %v363
      %v599 = vunpack.c.l.b16 %v364
      %v600 = vunpack.c.l.b16 %v365
      %v601 = vunpack.c.l.b16 %v366
      %v602 = vunpack.c.l.b16 %v367
      %v603 = vunpack.c.l.b16 %v368
      %v604 = vunpack.c.l.b16 %v369
      %v605 = vunpack.c.l.b16 %v370
      %v606 = vunpack.c.l.b16 %v371
      %v607 = vunpack.c.l.b16 %v372
      %v608 = vunpack.c.l.b16 %v373
      %v609 = vunpack.c.l.b16 %v374
      %v610 = vunpack.c.l.b16 %v375
      %v611 = vunpack.c.l.b16 %v376
      %v612 = vunpack.c.l.b16 %v377
      %v613 = vunpack.c.l.b16 %v378
      %v614 = vunpack.c.l.b16 %v379
      %v615 = vunpack.c.l.b16 %v380
      %v616 = vunpack.c.l.b16 %v381
      %v617 = vunpack.c.l.b16 %v382
      %v618 = vunpack.c.l.b16 %v383
      %v619 = vunpack.c.l.b16 %v384
      %v620 = vpack.c.b16 %v525, %v524
      %v621 = vpack.c.b16 %v527, %v526
      %v622 = vpack.c.b16 %v529, %v528
      %v623 = vpack.c.b16 %v531, %v530
      %v624 = vpack.c.b16 %v533, %v532
      %v625 = vpack.c.b16 %v535, %v534
      %v626 = vpack.c.b16 %v537, %v536
      %v627 = vpack.c.b16 %v539, %v538
      %v628 = vpack.c.b16 %v541, %v540
      %v629 = vpack.c.b16 %v543, %v542
      %v630 = vpack.c.b16 %v545, %v544
      %v631 = vpack.c.b16 %v547, %v546
      %v632 = vpack.c.b16 %v549, %v548
      %v633 = vpack.c.b16 %v551, %v550
      %v634 = vpack.c.b16 %v553, %v552
      %v635 = vpack.c.b16 %v555, %v554
      %v636 = vpack.c.b16 %v557, %v556
      %v637 = vpack.c.b16 %v559, %v558
      %v638 = vpack.c.b16 %v561, %v560
      %v639 = vpack.c.b16 %v563, %v562
      %v640 = vpack.c.b16 %v565, %v564
      %v641 = vpack.c.b16 %v567, %v566
      %v642 = vpack.c.b16 %v569, %v568
      %v643 = vpack.c.b16 %v571, %v570
      %v644 = vpack.c.b16 %v573, %v572
      %v645 = vpack.c.b16 %v575, %v574
      %v646 = vpack.c.b16 %v577, %v576
      %v647 = vpack.c.b16 %v579, %v578
      %v648 = vpack.c.b16 %v581, %v580
      %v649 = vpack.c.b16 %v583, %v582
      %v650 = vpack.c.b16 %v585, %v584
      %v651 = vpack.c.b16 %v587, %v586
      %v652 = vpack.c.b16 %v589, %v588
      %v653 = vpack.c.b16 %v591, %v590
      %v654 = vpack.c.b16 %v593, %v592
      %v655 = vpack.c.b16 %v595, %v594
      %v656 = vpack.c.b16 %v597, %v596
      %v657 = vpack.c.b16 %v599, %v598
      %v658 = vpack.c.b16 %v601, %v600
      %v659 = vpack.c.b16 %v603, %v602
      %v660 = vpack.c.b16 %v605, %v604
      %v661 = vpack.c.b16 %v607, %v606
      %v662 = vpack.c.b16 %v609, %v608
      %v663 = vpack.c.b16 %v611, %v610
      %v664 = vpack.c.b16 %v613, %v612
      %v665 = vpack.c.b16 %v615, %v614
      %v666 = vpack.c.b16 %v617, %v616
      %v667 = vpack.c.b16 %v619, %v618
      %716 = vmatprep.subr.bf16.mxu0 0
      %717 = vmatpush1.bf16.msra.mxu0 %v620
      %718 = vmatprep.subr.bf16.mxu0 0
      %719 = vmatpush1.bf16.msra.mxu0 %v621
      %720 = vmatprep.subr.bf16.mxu0 0
      %721 = vmatpush1.bf16.msra.mxu0 %v622
      %722 = vmatprep.subr.bf16.mxu0 0
      %723 = vmatpush1.bf16.msra.mxu0 %v623
      %724 = vmatprep.subr.bf16.mxu0 0
      %725 = vmatpush1.bf16.msra.mxu0 %v624
      %726 = vmatprep.subr.bf16.mxu0 0
      %727 = vmatpush1.bf16.msra.mxu0 %v625
      %728 = vmatprep.subr.bf16.mxu0 0
      %729 = vmatpush1.bf16.msra.mxu0 %v626
      %730 = vmatprep.subr.bf16.mxu0 0
      %731 = vmatpush1.bf16.msra.mxu0 %v627
      %732 = vmatprep.subr.bf16.mxu0 0
      %733 = vmatpush1.bf16.msra.mxu0 %v628
      %734 = vmatprep.subr.bf16.mxu0 0
      %735 = vmatpush1.bf16.msra.mxu0 %v629
      %736 = vmatprep.subr.bf16.mxu0 0
      %737 = vmatpush1.bf16.msra.mxu0 %v630
      %738 = vmatprep.subr.bf16.mxu0 0
      %739 = vmatpush1.bf16.msra.mxu0 %v631
      %740 = vmatprep.subr.bf16.mxu0 0
      %741 = vmatpush1.bf16.msra.mxu0 %v632
      %742 = vmatprep.subr.bf16.mxu0 0
      %743 = vmatpush1.bf16.msra.mxu0 %v633
      %744 = vmatprep.subr.bf16.mxu0 0
      %745 = vmatpush1.bf16.msra.mxu0 %v634
      %746 = vmatprep.subr.bf16.mxu0 0
      %747 = vmatpush1.bf16.msra.mxu0 %v635
      %748 = vmatprep.mubr.bf16.mxu0 %v416
      %749 = vmatmul.mubr.bf16.gmra.mrb[0].mxu0 %v415
      %v750 = vpop.f32.mrb[0].mxu0
      %v751 = vadd.f32 %v426, %v750
      %v752 = vpop.f32.mrb[0].mxu0
      %v753 = vpop.f32.mrb[0].mxu0
      %v754 = vpop.f32.mrb[0].mxu0
      %755 = vdwg.mxu0
      %756 = vmatprep.subr.bf16.mxu0 0
      %757 = vmatpush1.bf16.msra.mxu0 %v636
      %758 = vmatprep.subr.bf16.mxu0 0
      %759 = vmatpush1.bf16.msra.mxu0 %v637
      %760 = vmatprep.subr.bf16.mxu0 0
      %761 = vmatpush1.bf16.msra.mxu0 %v638
      %762 = vmatprep.subr.bf16.mxu0 0
      %763 = vmatpush1.bf16.msra.mxu0 %v639
      %764 = vmatprep.subr.bf16.mxu0 0
      %765 = vmatpush1.bf16.msra.mxu0 %v640
      %766 = vmatprep.subr.bf16.mxu0 0
      %767 = vmatpush1.bf16.msra.mxu0 %v641
      %768 = vmatprep.subr.bf16.mxu0 0
      %769 = vmatpush1.bf16.msra.mxu0 %v642
      %770 = vmatprep.subr.bf16.mxu0 0
      %771 = vmatpush1.bf16.msra.mxu0 %v643
      %772 = vmatprep.subr.bf16.mxu0 0
      %773 = vmatpush1.bf16.msra.mxu0 %v644
      %774 = vmatprep.subr.bf16.mxu0 0
      %775 = vmatpush1.bf16.msra.mxu0 %v645
      %776 = vmatprep.subr.bf16.mxu0 0
      %777 = vmatpush1.bf16.msra.mxu0 %v646
      %778 = vmatprep.subr.bf16.mxu0 0
      %779 = vmatpush1.bf16.msra.mxu0 %v647
      %780 = vmatprep.subr.bf16.mxu0 0
      %781 = vmatpush1.bf16.msra.mxu0 %v648
      %782 = vmatprep.subr.bf16.mxu0 0
      %783 = vmatpush1.bf16.msra.mxu0 %v649
      %784 = vmatprep.subr.bf16.mxu0 0
      %785 = vmatpush1.bf16.msra.mxu0 %v650
      %786 = vmatprep.subr.bf16.mxu0 0
      %787 = vmatpush1.bf16.msra.mxu0 %v651
      %788 = vmatprep.mubr.bf16.mxu0 %v418
      %789 = vmatmul.mubr.bf16.gmra.mrb[0].mxu0 %v417
      %v790 = vpop.f32.mrb[0].mxu0
      %v791 = vadd.f32 %v751, %v790
      %v792 = vpop.f32.mrb[0].mxu0
      %v793 = vpop.f32.mrb[0].mxu0
      %v794 = vpop.f32.mrb[0].mxu0
      %795 = vdwg.mxu0
      %796 = vmatprep.subr.bf16.mxu0 0
      %797 = vmatpush1.bf16.msra.mxu0 %v652
      %798 = vmatprep.subr.bf16.mxu0 0
      %799 = vmatpush1.bf16.msra.mxu0 %v653
      %800 = vmatprep.subr.bf16.mxu0 0
      %801 = vmatpush1.bf16.msra.mxu0 %v654
      %802 = vmatprep.subr.bf16.mxu0 0
      %803 = vmatpush1.bf16.msra.mxu0 %v655
      %804 = vmatprep.subr.bf16.mxu0 0
      %805 = vmatpush1.bf16.msra.mxu0 %v656
      %806 = vmatprep.subr.bf16.mxu0 0
      %807 = vmatpush1.bf16.msra.mxu0 %v657
      %808 = vmatprep.subr.bf16.mxu0 0
      %809 = vmatpush1.bf16.msra.mxu0 %v658
      %810 = vmatprep.subr.bf16.mxu0 0
      %811 = vmatpush1.bf16.msra.mxu0 %v659
      %812 = vmatprep.subr.bf16.mxu0 0
      %813 = vmatpush1.bf16.msra.mxu0 %v660
      %814 = vmatprep.subr.bf16.mxu0 0
      %815 = vmatpush1.bf16.msra.mxu0 %v661
      %816 = vmatprep.subr.bf16.mxu0 0
      %817 = vmatpush1.bf16.msra.mxu0 %v662
      %818 = vmatprep.subr.bf16.mxu0 0
      %819 = vmatpush1.bf16.msra.mxu0 %v663
      %820 = vmatprep.subr.bf16.mxu0 0
      %821 = vmatpush1.bf16.msra.mxu0 %v664
      %822 = vmatprep.subr.bf16.mxu0 0
      %823 = vmatpush1.bf16.msra.mxu0 %v665
      %824 = vmatprep.subr.bf16.mxu0 0
      %825 = vmatpush1.bf16.msra.mxu0 %v666
      %826 = vmatprep.subr.bf16.mxu0 0
      %827 = vmatpush1.bf16.msra.mxu0 %v667
      %828 = vmatprep.mubr.bf16.mxu0 %v420
      %829 = vmatmul.mubr.bf16.gmra.mrb[0].mxu0 %v419
      %v830 = vpop.f32.mrb[0].mxu0
      %v831 = vadd.f32 %v791, %v830
      %v832 = vpop.f32.mrb[0].mxu0
      %v833 = vpop.f32.mrb[0].mxu0
      %v834 = vpop.f32.mrb[0].mxu0
      %835 = vdwg.mxu0
      %v836 = vmax.f32 %v831, 0.0
      %v838 = vrot.slane %v836, 7
      %839 = vrot.lane.b32.xlu0 %v838, 24
      %v840 = vpop.permute.xlu0 %839
      %vm842 = vcmask 979137
      %843 = vst.msk [vmem:[#allocation2] sm:$0x1e] %vm842, %v840
      %s844 = scalar_lea.vmem %s1, 384
      %v845 = vld [vmem:[%s844] sm:$0xf]
      %v846 = vld [vmem:[%s844 + $0x4] sm:$0xf]
      %v847 = vld [vmem:[%s844 + $0x8] sm:$0xf]
      %v848 = vld [vmem:[%s844 + $0xc] sm:$0xf]
      %v849 = vld [vmem:[%s844 + $0x10] sm:$0xf]
      %v850 = vld [vmem:[%s844 + $0x14] sm:$0xf]
      %v851 = vld [vmem:[%s844 + $0x18] sm:$0xf]
      %v852 = vld [vmem:[%s844 + $0x1c] sm:$0xf]
      %v853 = vld [vmem:[%s844 + $0x20] sm:$0xf]
      %v854 = vld [vmem:[%s844 + $0x24] sm:$0xf]
      %v855 = vld [vmem:[%s844 + $0x28] sm:$0xf]
      %v856 = vld [vmem:[%s844 + $0x2c] sm:$0xf]
      %v857 = vld [vmem:[%s844 + $0x30] sm:$0xf]
      %v858 = vld [vmem:[%s844 + $0x34] sm:$0xf]
      %v859 = vld [vmem:[%s844 + $0x38] sm:$0xf]
      %v860 = vld [vmem:[%s844 + $0x3c] sm:$0xf]
      %v861 = vld [vmem:[%s844 + $0x40] sm:$0xf]
      %v862 = vld [vmem:[%s844 + $0x44] sm:$0xf]
      %v863 = vld [vmem:[%s844 + $0x48] sm:$0xf]
      %v864 = vld [vmem:[%s844 + $0x4c] sm:$0xf]
      %v865 = vld [vmem:[%s844 + $0x50] sm:$0xf]
      %v866 = vld [vmem:[%s844 + $0x54] sm:$0xf]
      %v867 = vld [vmem:[%s844 + $0x58] sm:$0xf]
      %v868 = vld [vmem:[%s844 + $0x5c] sm:$0xf]
      %v869 = vld [vmem:[%s844 + $0x60] sm:$0xf]
      %v870 = vld [vmem:[%s844 + $0x64] sm:$0xf]
      %v871 = vld [vmem:[%s844 + $0x68] sm:$0xf]
      %v872 = vld [vmem:[%s844 + $0x6c] sm:$0xf]
      %v873 = vld [vmem:[%s844 + $0x70] sm:$0xf]
      %v874 = vld [vmem:[%s844 + $0x74] sm:$0xf]
      %v875 = vld [vmem:[%s844 + $0x78] sm:$0xf]
      %v876 = vld [vmem:[%s844 + $0x7c] sm:$0xf]
      %v877 = vld [vmem:[%s844 + $0x80] sm:$0xf]
      %v878 = vld [vmem:[%s844 + $0x84] sm:$0xf]
      %v879 = vld [vmem:[%s844 + $0x88] sm:$0xf]
      %v880 = vld [vmem:[%s844 + $0x8c] sm:$0xf]
      %v881 = vld [vmem:[%s844 + $0x90] sm:$0xf]
      %v882 = vld [vmem:[%s844 + $0x94] sm:$0xf]
      %v883 = vld [vmem:[%s844 + $0x98] sm:$0xf]
      %v884 = vld [vmem:[%s844 + $0x9c] sm:$0xf]
      %v885 = vld [vmem:[%s844 + $0xa0] sm:$0xf]
      %v886 = vld [vmem:[%s844 + $0xa4] sm:$0xf]
      %v887 = vld [vmem:[%s844 + $0xa8] sm:$0xf]
      %v888 = vld [vmem:[%s844 + $0xac] sm:$0xf]
      %v889 = vld [vmem:[%s844 + $0xb0] sm:$0xf]
      %v890 = vld [vmem:[%s844 + $0xb4] sm:$0xf]
      %v891 = vld [vmem:[%s844 + $0xb8] sm:$0xf]
      %v892 = vld [vmem:[%s844 + $0xbc] sm:$0xf]
      %v893 = vld [vmem:[%s844 + $0xc0] sm:$0xf]
      %v894 = vld [vmem:[%s844 + $0xc4] sm:$0xf]
      %v895 = vld [vmem:[%s844 + $0xc8] sm:$0xf]
      %v896 = vld [vmem:[%s844 + $0xcc] sm:$0xf]
      %v897 = vld [vmem:[%s844 + $0xd0] sm:$0xf]
      %v898 = vld [vmem:[%s844 + $0xd4] sm:$0xf]
      %v899 = vld [vmem:[%s844 + $0xd8] sm:$0xf]
      %v900 = vld [vmem:[%s844 + $0xdc] sm:$0xf]
      %v901 = vld [vmem:[%s844 + $0xe0] sm:$0xf]
      %v902 = vld [vmem:[%s844 + $0xe4] sm:$0xf]
      %v903 = vld [vmem:[%s844 + $0xe8] sm:$0xf]
      %v904 = vld [vmem:[%s844 + $0xec] sm:$0xf]
      %v905 = vld [vmem:[%s844 + $0xf0] sm:$0xf]
      %v906 = vld [vmem:[%s844 + $0xf4] sm:$0xf]
      %v907 = vld [vmem:[%s844 + $0xf8] sm:$0xf]
      %v908 = vld [vmem:[%s844 + $0xfc] sm:$0xf]
      %v909 = vld [vmem:[%s844 + $0x100] sm:$0xf]
      %v910 = vld [vmem:[%s844 + $0x104] sm:$0xf]
      %v911 = vld [vmem:[%s844 + $0x108] sm:$0xf]
      %v912 = vld [vmem:[%s844 + $0x10c] sm:$0xf]
      %v913 = vld [vmem:[%s844 + $0x110] sm:$0xf]
      %v914 = vld [vmem:[%s844 + $0x114] sm:$0xf]
      %v915 = vld [vmem:[%s844 + $0x118] sm:$0xf]
      %v916 = vld [vmem:[%s844 + $0x11c] sm:$0xf]
      %v917 = vld [vmem:[%s844 + $0x120] sm:$0xf]
      %v918 = vld [vmem:[%s844 + $0x124] sm:$0xf]
      %v919 = vld [vmem:[%s844 + $0x128] sm:$0xf]
      %v920 = vld [vmem:[%s844 + $0x12c] sm:$0xf]
      %v921 = vld [vmem:[%s844 + $0x130] sm:$0xf]
      %v922 = vld [vmem:[%s844 + $0x134] sm:$0xf]
      %v923 = vld [vmem:[%s844 + $0x138] sm:$0xf]
      %v924 = vld [vmem:[%s844 + $0x13c] sm:$0xf]
      %v925 = vld [vmem:[%s844 + $0x140] sm:$0xf]
      %v926 = vld [vmem:[%s844 + $0x144] sm:$0xf]
      %v927 = vld [vmem:[%s844 + $0x148] sm:$0xf]
      %v928 = vld [vmem:[%s844 + $0x14c] sm:$0xf]
      %v929 = vld [vmem:[%s844 + $0x150] sm:$0xf]
      %v930 = vld [vmem:[%s844 + $0x154] sm:$0xf]
      %v931 = vld [vmem:[%s844 + $0x158] sm:$0xf]
      %v932 = vld [vmem:[%s844 + $0x15c] sm:$0xf]
      %v933 = vld [vmem:[%s844 + $0x160] sm:$0xf]
      %v934 = vld [vmem:[%s844 + $0x164] sm:$0xf]
      %v935 = vld [vmem:[%s844 + $0x168] sm:$0xf]
      %v936 = vld [vmem:[%s844 + $0x16c] sm:$0xf]
      %v937 = vld [vmem:[%s844 + $0x170] sm:$0xf]
      %v938 = vld [vmem:[%s844 + $0x174] sm:$0xf]
      %v939 = vld [vmem:[%s844 + $0x178] sm:$0xf]
      %v940 = vld [vmem:[%s844 + $0x17c] sm:$0xf]
      %v941 = vld [vmem:[%s273] sm:$0xf]
      %v942 = vld [vmem:[%s273 + $0x8] sm:$0xf]
      %v943 = vld [vmem:[%s273 + $0x10] sm:$0xf]
      %v944 = vld [vmem:[%s273] sm:$0x1e]
      %v945 = vld [vmem:[%s273 + $0x8] sm:$0x1e]
      %v946 = vld [vmem:[%s273 + $0x10] sm:$0x1e]
      %949 = vrot.lane.b32.xlu0 %v941, 80
      %v950 = vpop.permute.xlu0 %949
      %951 = vrot.lane.b32.xlu0 %v942, 80
      %v952 = vpop.permute.xlu0 %951
      %vm953 = vcmask 654336
      %v954 = vsel %vm953, %v950, %v952
      %958 = vrot.lane.b32.xlu0 %v941, 96
      %v959 = vpop.permute.xlu0 %958
      %960 = vrot.lane.b32.xlu0 %v942, 96
      %v961 = vpop.permute.xlu0 %960
      %962 = vrot.lane.b32.xlu0 %v943, 96
      %v963 = vpop.permute.xlu0 %962
      %vm964 = vcmask 785408
      %v965 = vsel %vm964, %v959, %v961
      %v966 = vsel %vm964, %v961, %v963
      %v971 = vrot.slane %v944, 1
      %v972 = vrot.slane %v945, 1
      %973 = vrot.lane.b32.xlu0 %v971, 80
      %v974 = vpop.permute.xlu0 %973
      %975 = vrot.lane.b32.xlu0 %v972, 80
      %v976 = vpop.permute.xlu0 %975
      %v977 = vsel %vm953, %v974, %v976
      %v981 = vrot.slane %v946, 1
      %982 = vrot.lane.b32.xlu0 %v971, 96
      %v983 = vpop.permute.xlu0 %982
      %984 = vrot.lane.b32.xlu0 %v972, 96
      %v985 = vpop.permute.xlu0 %984
      %986 = vrot.lane.b32.xlu0 %v981, 96
      %v987 = vpop.permute.xlu0 %986
      %v988 = vsel %vm964, %v983, %v985
      %v989 = vsel %vm964, %v985, %v987
      %v992 = vsel %vm412, %v952, %v965
      %v993 = vsel %vm412, %v976, %v988
      %v994 = vpack.c.bf16 %v954, %v954
      %v995 = vpack.c.bf16 %v992, %v992
      %v996 = vpack.c.bf16 %v966, %v966
      %v997 = vpack.c.bf16 %v977, %v977
      %v998 = vpack.c.bf16 %v993, %v993
      %v999 = vpack.c.bf16 %v989, %v989
      %v1000 = vld [vmem:[%s2] sm:$0x1]
      %v1002 = vlaneseq
      %v1003 = vshrl.u32 %v1002, 7
      %v1004 = vsub.s32 0, %v1003
      %v1005 = vrot.slane %v1000, %v1004
      %v1103 = vunpack.c.l.b16 %v845
      %v1104 = vunpack.c.l.b16 %v846
      %v1105 = vunpack.c.l.b16 %v847
      %v1106 = vunpack.c.l.b16 %v848
      %v1107 = vunpack.c.l.b16 %v849
      %v1108 = vunpack.c.l.b16 %v850
      %v1109 = vunpack.c.l.b16 %v851
      %v1110 = vunpack.c.l.b16 %v852
      %v1111 = vunpack.c.l.b16 %v853
      %v1112 = vunpack.c.l.b16 %v854
      %v1113 = vunpack.c.l.b16 %v855
      %v1114 = vunpack.c.l.b16 %v856
      %v1115 = vunpack.c.l.b16 %v857
      %v1116 = vunpack.c.l.b16 %v858
      %v1117 = vunpack.c.l.b16 %v859
      %v1118 = vunpack.c.l.b16 %v860
      %v1119 = vunpack.c.l.b16 %v861
      %v1120 = vunpack.c.l.b16 %v862
      %v1121 = vunpack.c.l.b16 %v863
      %v1122 = vunpack.c.l.b16 %v864
      %v1123 = vunpack.c.l.b16 %v865
      %v1124 = vunpack.c.l.b16 %v866
      %v1125 = vunpack.c.l.b16 %v867
      %v1126 = vunpack.c.l.b16 %v868
      %v1127 = vunpack.c.l.b16 %v869
      %v1128 = vunpack.c.l.b16 %v870
      %v1129 = vunpack.c.l.b16 %v871
      %v1130 = vunpack.c.l.b16 %v872
      %v1131 = vunpack.c.l.b16 %v873
      %v1132 = vunpack.c.l.b16 %v874
      %v1133 = vunpack.c.l.b16 %v875
      %v1134 = vunpack.c.l.b16 %v876
      %v1135 = vunpack.c.l.b16 %v877
      %v1136 = vunpack.c.l.b16 %v878
      %v1137 = vunpack.c.l.b16 %v879
      %v1138 = vunpack.c.l.b16 %v880
      %v1139 = vunpack.c.l.b16 %v881
      %v1140 = vunpack.c.l.b16 %v882
      %v1141 = vunpack.c.l.b16 %v883
      %v1142 = vunpack.c.l.b16 %v884
      %v1143 = vunpack.c.l.b16 %v885
      %v1144 = vunpack.c.l.b16 %v886
      %v1145 = vunpack.c.l.b16 %v887
      %v1146 = vunpack.c.l.b16 %v888
      %v1147 = vunpack.c.l.b16 %v889
      %v1148 = vunpack.c.l.b16 %v890
      %v1149 = vunpack.c.l.b16 %v891
      %v1150 = vunpack.c.l.b16 %v892
      %v1151 = vunpack.c.l.b16 %v893
      %v1152 = vunpack.c.l.b16 %v894
      %v1153 = vunpack.c.l.b16 %v895
      %v1154 = vunpack.c.l.b16 %v896
      %v1155 = vunpack.c.l.b16 %v897
      %v1156 = vunpack.c.l.b16 %v898
      %v1157 = vunpack.c.l.b16 %v899
      %v1158 = vunpack.c.l.b16 %v900
      %v1159 = vunpack.c.l.b16 %v901
      %v1160 = vunpack.c.l.b16 %v902
      %v1161 = vunpack.c.l.b16 %v903
      %v1162 = vunpack.c.l.b16 %v904
      %v1163 = vunpack.c.l.b16 %v905
      %v1164 = vunpack.c.l.b16 %v906
      %v1165 = vunpack.c.l.b16 %v907
      %v1166 = vunpack.c.l.b16 %v908
      %v1167 = vunpack.c.l.b16 %v909
      %v1168 = vunpack.c.l.b16 %v910
      %v1169 = vunpack.c.l.b16 %v911
      %v1170 = vunpack.c.l.b16 %v912
      %v1171 = vunpack.c.l.b16 %v913
      %v1172 = vunpack.c.l.b16 %v914
      %v1173 = vunpack.c.l.b16 %v915
      %v1174 = vunpack.c.l.b16 %v916
      %v1175 = vunpack.c.l.b16 %v917
      %v1176 = vunpack.c.l.b16 %v918
      %v1177 = vunpack.c.l.b16 %v919
      %v1178 = vunpack.c.l.b16 %v920
      %v1179 = vunpack.c.l.b16 %v921
      %v1180 = vunpack.c.l.b16 %v922
      %v1181 = vunpack.c.l.b16 %v923
      %v1182 = vunpack.c.l.b16 %v924
      %v1183 = vunpack.c.l.b16 %v925
      %v1184 = vunpack.c.l.b16 %v926
      %v1185 = vunpack.c.l.b16 %v927
      %v1186 = vunpack.c.l.b16 %v928
      %v1187 = vunpack.c.l.b16 %v929
      %v1188 = vunpack.c.l.b16 %v930
      %v1189 = vunpack.c.l.b16 %v931
      %v1190 = vunpack.c.l.b16 %v932
      %v1191 = vunpack.c.l.b16 %v933
      %v1192 = vunpack.c.l.b16 %v934
      %v1193 = vunpack.c.l.b16 %v935
      %v1194 = vunpack.c.l.b16 %v936
      %v1195 = vunpack.c.l.b16 %v937
      %v1196 = vunpack.c.l.b16 %v938
      %v1197 = vunpack.c.l.b16 %v939
      %v1198 = vunpack.c.l.b16 %v940
      %v1199 = vpack.c.b16 %v1104, %v1103
      %v1200 = vpack.c.b16 %v1106, %v1105
      %v1201 = vpack.c.b16 %v1108, %v1107
      %v1202 = vpack.c.b16 %v1110, %v1109
      %v1203 = vpack.c.b16 %v1112, %v1111
      %v1204 = vpack.c.b16 %v1114, %v1113
      %v1205 = vpack.c.b16 %v1116, %v1115
      %v1206 = vpack.c.b16 %v1118, %v1117
      %v1207 = vpack.c.b16 %v1120, %v1119
      %v1208 = vpack.c.b16 %v1122, %v1121
      %v1209 = vpack.c.b16 %v1124, %v1123
      %v1210 = vpack.c.b16 %v1126, %v1125
      %v1211 = vpack.c.b16 %v1128, %v1127
      %v1212 = vpack.c.b16 %v1130, %v1129
      %v1213 = vpack.c.b16 %v1132, %v1131
      %v1214 = vpack.c.b16 %v1134, %v1133
      %v1215 = vpack.c.b16 %v1136, %v1135
      %v1216 = vpack.c.b16 %v1138, %v1137
      %v1217 = vpack.c.b16 %v1140, %v1139
      %v1218 = vpack.c.b16 %v1142, %v1141
      %v1219 = vpack.c.b16 %v1144, %v1143
      %v1220 = vpack.c.b16 %v1146, %v1145
      %v1221 = vpack.c.b16 %v1148, %v1147
      %v1222 = vpack.c.b16 %v1150, %v1149
      %v1223 = vpack.c.b16 %v1152, %v1151
      %v1224 = vpack.c.b16 %v1154, %v1153
      %v1225 = vpack.c.b16 %v1156, %v1155
      %v1226 = vpack.c.b16 %v1158, %v1157
      %v1227 = vpack.c.b16 %v1160, %v1159
      %v1228 = vpack.c.b16 %v1162, %v1161
      %v1229 = vpack.c.b16 %v1164, %v1163
      %v1230 = vpack.c.b16 %v1166, %v1165
      %v1231 = vpack.c.b16 %v1168, %v1167
      %v1232 = vpack.c.b16 %v1170, %v1169
      %v1233 = vpack.c.b16 %v1172, %v1171
      %v1234 = vpack.c.b16 %v1174, %v1173
      %v1235 = vpack.c.b16 %v1176, %v1175
      %v1236 = vpack.c.b16 %v1178, %v1177
      %v1237 = vpack.c.b16 %v1180, %v1179
      %v1238 = vpack.c.b16 %v1182, %v1181
      %v1239 = vpack.c.b16 %v1184, %v1183
      %v1240 = vpack.c.b16 %v1186, %v1185
      %v1241 = vpack.c.b16 %v1188, %v1187
      %v1242 = vpack.c.b16 %v1190, %v1189
      %v1243 = vpack.c.b16 %v1192, %v1191
      %v1244 = vpack.c.b16 %v1194, %v1193
      %v1245 = vpack.c.b16 %v1196, %v1195
      %v1246 = vpack.c.b16 %v1198, %v1197
      %1295 = vmatprep.subr.bf16.mxu0 0
      %1296 = vmatpush1.bf16.msra.mxu0 %v1199
      %1297 = vmatprep.subr.bf16.mxu0 0
      %1298 = vmatpush1.bf16.msra.mxu0 %v1200
      %1299 = vmatprep.subr.bf16.mxu0 0
      %1300 = vmatpush1.bf16.msra.mxu0 %v1201
      %1301 = vmatprep.subr.bf16.mxu0 0
      %1302 = vmatpush1.bf16.msra.mxu0 %v1202
      %1303 = vmatprep.subr.bf16.mxu0 0
      %1304 = vmatpush1.bf16.msra.mxu0 %v1203
      %1305 = vmatprep.subr.bf16.mxu0 0
      %1306 = vmatpush1.bf16.msra.mxu0 %v1204
      %1307 = vmatprep.subr.bf16.mxu0 0
      %1308 = vmatpush1.bf16.msra.mxu0 %v1205
      %1309 = vmatprep.subr.bf16.mxu0 0
      %1310 = vmatpush1.bf16.msra.mxu0 %v1206
      %1311 = vmatprep.subr.bf16.mxu0 0
      %1312 = vmatpush1.bf16.msra.mxu0 %v1207
      %1313 = vmatprep.subr.bf16.mxu0 0
      %1314 = vmatpush1.bf16.msra.mxu0 %v1208
      %1315 = vmatprep.subr.bf16.mxu0 0
      %1316 = vmatpush1.bf16.msra.mxu0 %v1209
      %1317 = vmatprep.subr.bf16.mxu0 0
      %1318 = vmatpush1.bf16.msra.mxu0 %v1210
      %1319 = vmatprep.subr.bf16.mxu0 0
      %1320 = vmatpush1.bf16.msra.mxu0 %v1211
      %1321 = vmatprep.subr.bf16.mxu0 0
      %1322 = vmatpush1.bf16.msra.mxu0 %v1212
      %1323 = vmatprep.subr.bf16.mxu0 0
      %1324 = vmatpush1.bf16.msra.mxu0 %v1213
      %1325 = vmatprep.subr.bf16.mxu0 0
      %1326 = vmatpush1.bf16.msra.mxu0 %v1214
      %1327 = vmatprep.mubr.bf16.mxu0 %v995
      %1328 = vmatmul.mubr.bf16.gmra.mrb[0].mxu0 %v994
      %v1329 = vpop.f32.mrb[0].mxu0
      %v1330 = vadd.f32 %v1005, %v1329
      %v1331 = vpop.f32.mrb[0].mxu0
      %v1332 = vpop.f32.mrb[0].mxu0
      %v1333 = vpop.f32.mrb[0].mxu0
      %1334 = vdwg.mxu0
      %1335 = vmatprep.subr.bf16.mxu0 0
      %1336 = vmatpush1.bf16.msra.mxu0 %v1215
      %1337 = vmatprep.subr.bf16.mxu0 0
      %1338 = vmatpush1.bf16.msra.mxu0 %v1216
      %1339 = vmatprep.subr.bf16.mxu0 0
      %1340 = vmatpush1.bf16.msra.mxu0 %v1217
      %1341 = vmatprep.subr.bf16.mxu0 0
      %1342 = vmatpush1.bf16.msra.mxu0 %v1218
      %1343 = vmatprep.subr.bf16.mxu0 0
      %1344 = vmatpush1.bf16.msra.mxu0 %v1219
      %1345 = vmatprep.subr.bf16.mxu0 0
      %1346 = vmatpush1.bf16.msra.mxu0 %v1220
      %1347 = vmatprep.subr.bf16.mxu0 0
      %1348 = vmatpush1.bf16.msra.mxu0 %v1221
      %1349 = vmatprep.subr.bf16.mxu0 0
      %1350 = vmatpush1.bf16.msra.mxu0 %v1222
      %1351 = vmatprep.subr.bf16.mxu0 0
      %1352 = vmatpush1.bf16.msra.mxu0 %v1223
      %1353 = vmatprep.subr.bf16.mxu0 0
      %1354 = vmatpush1.bf16.msra.mxu0 %v1224
      %1355 = vmatprep.subr.bf16.mxu0 0
      %1356 = vmatpush1.bf16.msra.mxu0 %v1225
      %1357 = vmatprep.subr.bf16.mxu0 0
      %1358 = vmatpush1.bf16.msra.mxu0 %v1226
      %1359 = vmatprep.subr.bf16.mxu0 0
      %1360 = vmatpush1.bf16.msra.mxu0 %v1227
      %1361 = vmatprep.subr.bf16.mxu0 0
      %1362 = vmatpush1.bf16.msra.mxu0 %v1228
      %1363 = vmatprep.subr.bf16.mxu0 0
      %1364 = vmatpush1.bf16.msra.mxu0 %v1229
      %1365 = vmatprep.subr.bf16.mxu0 0
      %1366 = vmatpush1.bf16.msra.mxu0 %v1230
      %1367 = vmatprep.mubr.bf16.mxu0 %v997
      %1368 = vmatmul.mubr.bf16.gmra.mrb[0].mxu0 %v996
      %v1369 = vpop.f32.mrb[0].mxu0
      %v1370 = vadd.f32 %v1330, %v1369
      %v1371 = vpop.f32.mrb[0].mxu0
      %v1372 = vpop.f32.mrb[0].mxu0
      %v1373 = vpop.f32.mrb[0].mxu0
      %1374 = vdwg.mxu0
      %1375 = vmatprep.subr.bf16.mxu0 0
      %1376 = vmatpush1.bf16.msra.mxu0 %v1231
      %1377 = vmatprep.subr.bf16.mxu0 0
      %1378 = vmatpush1.bf16.msra.mxu0 %v1232
      %1379 = vmatprep.subr.bf16.mxu0 0
      %1380 = vmatpush1.bf16.msra.mxu0 %v1233
      %1381 = vmatprep.subr.bf16.mxu0 0
      %1382 = vmatpush1.bf16.msra.mxu0 %v1234
      %1383 = vmatprep.subr.bf16.mxu0 0
      %1384 = vmatpush1.bf16.msra.mxu0 %v1235
      %1385 = vmatprep.subr.bf16.mxu0 0
      %1386 = vmatpush1.bf16.msra.mxu0 %v1236
      %1387 = vmatprep.subr.bf16.mxu0 0
      %1388 = vmatpush1.bf16.msra.mxu0 %v1237
      %1389 = vmatprep.subr.bf16.mxu0 0
      %1390 = vmatpush1.bf16.msra.mxu0 %v1238
      %1391 = vmatprep.subr.bf16.mxu0 0
      %1392 = vmatpush1.bf16.msra.mxu0 %v1239
      %1393 = vmatprep.subr.bf16.mxu0 0
      %1394 = vmatpush1.bf16.msra.mxu0 %v1240
      %1395 = vmatprep.subr.bf16.mxu0 0
      %1396 = vmatpush1.bf16.msra.mxu0 %v1241
      %1397 = vmatprep.subr.bf16.mxu0 0
      %1398 = vmatpush1.bf16.msra.mxu0 %v1242
      %1399 = vmatprep.subr.bf16.mxu0 0
      %1400 = vmatpush1.bf16.msra.mxu0 %v1243
      %1401 = vmatprep.subr.bf16.mxu0 0
      %1402 = vmatpush1.bf16.msra.mxu0 %v1244
      %1403 = vmatprep.subr.bf16.mxu0 0
      %1404 = vmatpush1.bf16.msra.mxu0 %v1245
      %1405 = vmatprep.subr.bf16.mxu0 0
      %1406 = vmatpush1.bf16.msra.mxu0 %v1246
      %1407 = vmatprep.mubr.bf16.mxu0 %v999
      %1408 = vmatmul.mubr.bf16.gmra.mrb[0].mxu0 %v998
      %v1409 = vpop.f32.mrb[0].mxu0
      %v1410 = vadd.f32 %v1370, %v1409
      %v1411 = vpop.f32.mrb[0].mxu0
      %v1412 = vpop.f32.mrb[0].mxu0
      %v1413 = vpop.f32.mrb[0].mxu0
      %1414 = vdwg.mxu0
      %v1415 = vmax.f32 %v1410, 0.0
      %v1417 = vrot.slane %v1415, 7
      %1418 = vrot.lane.b32.xlu0 %v1417, 24
      %v1419 = vpop.permute.xlu0 %1418
      %s1421 = scalar_lea.vmem [#allocation2], 16
      %1422 = vst.msk [vmem:[%s1421] sm:$0x1e] %vm842, %v1419
      %s1423 = scalar_lea.vmem %s1, 768
      %v1424 = vld [vmem:[%s1423] sm:$0xf]
      %v1425 = vld [vmem:[%s1423 + $0x4] sm:$0xf]
      %v1426 = vld [vmem:[%s1423 + $0x8] sm:$0xf]
      %v1427 = vld [vmem:[%s1423 + $0xc] sm:$0xf]
      %v1428 = vld [vmem:[%s1423 + $0x10] sm:$0xf]
      %v1429 = vld [vmem:[%s1423 + $0x14] sm:$0xf]
      %v1430 = vld [vmem:[%s1423 + $0x18] sm:$0xf]
      %v1431 = vld [vmem:[%s1423 + $0x1c] sm:$0xf]
      %v1432 = vld [vmem:[%s1423 + $0x20] sm:$0xf]
      %v1433 = vld [vmem:[%s1423 + $0x24] sm:$0xf]
      %v1434 = vld [vmem:[%s1423 + $0x28] sm:$0xf]
      %v1435 = vld [vmem:[%s1423 + $0x2c] sm:$0xf]
      %v1436 = vld [vmem:[%s1423 + $0x30] sm:$0xf]
      %v1437 = vld [vmem:[%s1423 + $0x34] sm:$0xf]
      %v1438 = vld [vmem:[%s1423 + $0x38] sm:$0xf]
      %v1439 = vld [vmem:[%s1423 + $0x3c] sm:$0xf]
      %v1440 = vld [vmem:[%s1423 + $0x40] sm:$0xf]
      %v1441 = vld [vmem:[%s1423 + $0x44] sm:$0xf]
      %v1442 = vld [vmem:[%s1423 + $0x48] sm:$0xf]
      %v1443 = vld [vmem:[%s1423 + $0x4c] sm:$0xf]
      %v1444 = vld [vmem:[%s1423 + $0x50] sm:$0xf]
      %v1445 = vld [vmem:[%s1423 + $0x54] sm:$0xf]
      %v1446 = vld [vmem:[%s1423 + $0x58] sm:$0xf]
      %v1447 = vld [vmem:[%s1423 + $0x5c] sm:$0xf]
      %v1448 = vld [vmem:[%s1423 + $0x60] sm:$0xf]
      %v1449 = vld [vmem:[%s1423 + $0x64] sm:$0xf]
      %v1450 = vld [vmem:[%s1423 + $0x68] sm:$0xf]
      %v1451 = vld [vmem:[%s1423 + $0x6c] sm:$0xf]
      %v1452 = vld [vmem:[%s1423 + $0x70] sm:$0xf]
      %v1453 = vld [vmem:[%s1423 + $0x74] sm:$0xf]
      %v1454 = vld [vmem:[%s1423 + $0x78] sm:$0xf]
      %v1455 = vld [vmem:[%s1423 + $0x7c] sm:$0xf]
      %v1456 = vld [vmem:[%s1423 + $0x80] sm:$0xf]
      %v1457 = vld [vmem:[%s1423 + $0x84] sm:$0xf]
      %v1458 = vld [vmem:[%s1423 + $0x88] sm:$0xf]
      %v1459 = vld [vmem:[%s1423 + $0x8c] sm:$0xf]
      %v1460 = vld [vmem:[%s1423 + $0x90] sm:$0xf]
      %v1461 = vld [vmem:[%s1423 + $0x94] sm:$0xf]
      %v1462 = vld [vmem:[%s1423 + $0x98] sm:$0xf]
      %v1463 = vld [vmem:[%s1423 + $0x9c] sm:$0xf]
      %v1464 = vld [vmem:[%s1423 + $0xa0] sm:$0xf]
      %v1465 = vld [vmem:[%s1423 + $0xa4] sm:$0xf]
      %v1466 = vld [vmem:[%s1423 + $0xa8] sm:$0xf]
      %v1467 = vld [vmem:[%s1423 + $0xac] sm:$0xf]
      %v1468 = vld [vmem:[%s1423 + $0xb0] sm:$0xf]
      %v1469 = vld [vmem:[%s1423 + $0xb4] sm:$0xf]
      %v1470 = vld [vmem:[%s1423 + $0xb8] sm:$0xf]
      %v1471 = vld [vmem:[%s1423 + $0xbc] sm:$0xf]
      %v1472 = vld [vmem:[%s1423 + $0xc0] sm:$0xf]
      %v1473 = vld [vmem:[%s1423 + $0xc4] sm:$0xf]
      %v1474 = vld [vmem:[%s1423 + $0xc8] sm:$0xf]
      %v1475 = vld [vmem:[%s1423 + $0xcc] sm:$0xf]
      %v1476 = vld [vmem:[%s1423 + $0xd0] sm:$0xf]
      %v1477 = vld [vmem:[%s1423 + $0xd4] sm:$0xf]
      %v1478 = vld [vmem:[%s1423 + $0xd8] sm:$0xf]
      %v1479 = vld [vmem:[%s1423 + $0xdc] sm:$0xf]
      %v1480 = vld [vmem:[%s1423 + $0xe0] sm:$0xf]
      %v1481 = vld [vmem:[%s1423 + $0xe4] sm:$0xf]
      %v1482 = vld [vmem:[%s1423 + $0xe8] sm:$0xf]
      %v1483 = vld [vmem:[%s1423 + $0xec] sm:$0xf]
      %v1484 = vld [vmem:[%s1423 + $0xf0] sm:$0xf]
      %v1485 = vld [vmem:[%s1423 + $0xf4] sm:$0xf]
      %v1486 = vld [vmem:[%s1423 + $0xf8] sm:$0xf]
      %v1487 = vld [vmem:[%s1423 + $0xfc] sm:$0xf]
      %v1488 = vld [vmem:[%s1423 + $0x100] sm:$0xf]
      %v1489 = vld [vmem:[%s1423 + $0x104] sm:$0xf]
      %v1490 = vld [vmem:[%s1423 + $0x108] sm:$0xf]
      %v1491 = vld [vmem:[%s1423 + $0x10c] sm:$0xf]
      %v1492 = vld [vmem:[%s1423 + $0x110] sm:$0xf]
      %v1493 = vld [vmem:[%s1423 + $0x114] sm:$0xf]
      %v1494 = vld [vmem:[%s1423 + $0x118] sm:$0xf]
      %v1495 = vld [vmem:[%s1423 + $0x11c] sm:$0xf]
      %v1496 = vld [vmem:[%s1423 + $0x120] sm:$0xf]
      %v1497 = vld [vmem:[%s1423 + $0x124] sm:$0xf]
      %v1498 = vld [vmem:[%s1423 + $0x128] sm:$0xf]
      %v1499 = vld [vmem:[%s1423 + $0x12c] sm:$0xf]
      %v1500 = vld [vmem:[%s1423 + $0x130] sm:$0xf]
      %v1501 = vld [vmem:[%s1423 + $0x134] sm:$0xf]
      %v1502 = vld [vmem:[%s1423 + $0x138] sm:$0xf]
      %v1503 = vld [vmem:[%s1423 + $0x13c] sm:$0xf]
      %v1504 = vld [vmem:[%s1423 + $0x140] sm:$0xf]
      %v1505 = vld [vmem:[%s1423 + $0x144] sm:$0xf]
      %v1506 = vld [vmem:[%s1423 + $0x148] sm:$0xf]
      %v1507 = vld [vmem:[%s1423 + $0x14c] sm:$0xf]
      %v1508 = vld [vmem:[%s1423 + $0x150] sm:$0xf]
      %v1509 = vld [vmem:[%s1423 + $0x154] sm:$0xf]
      %v1510 = vld [vmem:[%s1423 + $0x158] sm:$0xf]
      %v1511 = vld [vmem:[%s1423 + $0x15c] sm:$0xf]
      %v1512 = vld [vmem:[%s1423 + $0x160] sm:$0xf]
      %v1513 = vld [vmem:[%s1423 + $0x164] sm:$0xf]
      %v1514 = vld [vmem:[%s1423 + $0x168] sm:$0xf]
      %v1515 = vld [vmem:[%s1423 + $0x16c] sm:$0xf]
      %v1516 = vld [vmem:[%s1423 + $0x170] sm:$0xf]
      %v1517 = vld [vmem:[%s1423 + $0x174] sm:$0xf]
      %v1518 = vld [vmem:[%s1423 + $0x178] sm:$0xf]
      %v1519 = vld [vmem:[%s1423 + $0x17c] sm:$0xf]
      %v1520 = vld [vmem:[%s273] sm:$0x1e]
      %v1521 = vld [vmem:[%s273 + $0x8] sm:$0x1e]
      %v1522 = vld [vmem:[%s273] sm:$0x3c]
      %v1523 = vld [vmem:[%s273 + $0x8] sm:$0x3c]
      %1526 = vrot.lane.b32.xlu0 %v1520, 16
      %v1527 = vpop.permute.xlu0 %1526
      %1528 = vrot.lane.b32.xlu0 %v1521, 16
      %v1529 = vpop.permute.xlu0 %1528
      %v1530 = vsel %vm395, %v1527, %v1529
      %v1535 = vrot.slane %v1522, 1
      %v1536 = vrot.slane %v1523, 1
      %1539 = vrot.lane.b32.xlu0 %v1535, 16
      %v1540 = vpop.permute.xlu0 %1539
      %1541 = vrot.lane.b32.xlu0 %v1536, 16
      %v1542 = vpop.permute.xlu0 %1541
      %v1543 = vsel %vm395, %v1540, %v1542
      %v1546 = vsel %vm412, %v1521, %v1527
      %v1547 = vsel %vm412, %v1536, %v1540
      %v1548 = vpack.c.bf16 %v1520, %v1520
      %v1549 = vpack.c.bf16 %v1546, %v1546
      %v1550 = vpack.c.bf16 %v1530, %v1530
      %v1551 = vpack.c.bf16 %v1535, %v1535
      %v1552 = vpack.c.bf16 %v1547, %v1547
      %v1553 = vpack.c.bf16 %v1543, %v1543
      %v1554 = vld [vmem:[%s2] sm:$0x1]
      %v1556 = vlaneseq
      %v1557 = vshrl.u32 %v1556, 7
      %v1558 = vsub.s32 0, %v1557
      %v1559 = vrot.slane %v1554, %v1558
      %v1562 = vshrl.u32 %v1548, 16
      %v1564 = vshll.u32 %v1548, 16
      %v1566 = vrot.slane %v1564, 1
      %v1567 = vor.u32 %v1562, %v1566
      %v1569 = vshrl.u32 %v1549, 16
      %v1571 = vshll.u32 %v1549, 16
      %v1573 = vrot.slane %v1571, 1
      %v1574 = vor.u32 %v1569, %v1573
      %v1576 = vshrl.u32 %v1550, 16
      %v1578 = vshll.u32 %v1550, 16
      %v1580 = vrot.slane %v1578, 1
      %v1581 = vor.u32 %v1576, %v1580
      %v1583 = vshrl.u32 %v1551, 16
      %v1585 = vshll.u32 %v1551, 16
      %v1587 = vrot.slane %v1585, 1
      %v1588 = vor.u32 %v1583, %v1587
      %v1590 = vshrl.u32 %v1552, 16
      %v1592 = vshll.u32 %v1552, 16
      %v1594 = vrot.slane %v1592, 1
      %v1595 = vor.u32 %v1590, %v1594
      %v1597 = vshrl.u32 %v1553, 16
      %v1599 = vshll.u32 %v1553, 16
      %v1601 = vrot.slane %v1599, 1
      %v1602 = vor.u32 %v1597, %v1601
      %v1705 = vunpack.c.l.b16 %v1424
      %v1706 = vunpack.c.l.b16 %v1425
      %v1707 = vunpack.c.l.b16 %v1426
      %v1708 = vunpack.c.l.b16 %v1427
      %v1709 = vunpack.c.l.b16 %v1428
      %v1710 = vunpack.c.l.b16 %v1429
      %v1711 = vunpack.c.l.b16 %v1430
      %v1712 = vunpack.c.l.b16 %v1431
      %v1713 = vunpack.c.l.b16 %v1432
      %v1714 = vunpack.c.l.b16 %v1433
      %v1715 = vunpack.c.l.b16 %v1434
      %v1716 = vunpack.c.l.b16 %v1435
      %v1717 = vunpack.c.l.b16 %v1436
      %v1718 = vunpack.c.l.b16 %v1437
      %v1719 = vunpack.c.l.b16 %v1438
      %v1720 = vunpack.c.l.b16 %v1439
      %v1721 = vunpack.c.l.b16 %v1440
      %v1722 = vunpack.c.l.b16 %v1441
      %v1723 = vunpack.c.l.b16 %v1442
      %v1724 = vunpack.c.l.b16 %v1443
      %v1725 = vunpack.c.l.b16 %v1444
      %v1726 = vunpack.c.l.b16 %v1445
      %v1727 = vunpack.c.l.b16 %v1446
      %v1728 = vunpack.c.l.b16 %v1447
      %v1729 = vunpack.c.l.b16 %v1448
      %v1730 = vunpack.c.l.b16 %v1449
      %v1731 = vunpack.c.l.b16 %v1450
      %v1732 = vunpack.c.l.b16 %v1451
      %v1733 = vunpack.c.l.b16 %v1452
      %v1734 = vunpack.c.l.b16 %v1453
      %v1735 = vunpack.c.l.b16 %v1454
      %v1736 = vunpack.c.l.b16 %v1455
      %v1737 = vunpack.c.l.b16 %v1456
      %v1738 = vunpack.c.l.b16 %v1457
      %v1739 = vunpack.c.l.b16 %v1458
      %v1740 = vunpack.c.l.b16 %v1459
      %v1741 = vunpack.c.l.b16 %v1460
      %v1742 = vunpack.c.l.b16 %v1461
      %v1743 = vunpack.c.l.b16 %v1462
      %v1744 = vunpack.c.l.b16 %v1463
      %v1745 = vunpack.c.l.b16 %v1464
      %v1746 = vunpack.c.l.b16 %v1465
      %v1747 = vunpack.c.l.b16 %v1466
      %v1748 = vunpack.c.l.b16 %v1467
      %v1749 = vunpack.c.l.b16 %v1468
      %v1750 = vunpack.c.l.b16 %v1469
      %v1751 = vunpack.c.l.b16 %v1470
      %v1752 = vunpack.c.l.b16 %v1471
      %v1753 = vunpack.c.l.b16 %v1472
      %v1754 = vunpack.c.l.b16 %v1473
      %v1755 = vunpack.c.l.b16 %v1474
      %v1756 = vunpack.c.l.b16 %v1475
      %v1757 = vunpack.c.l.b16 %v1476
      %v1758 = vunpack.c.l.b16 %v1477
      %v1759 = vunpack.c.l.b16 %v1478
      %v1760 = vunpack.c.l.b16 %v1479
      %v1761 = vunpack.c.l.b16 %v1480
      %v1762 = vunpack.c.l.b16 %v1481
      %v1763 = vunpack.c.l.b16 %v1482
      %v1764 = vunpack.c.l.b16 %v1483
      %v1765 = vunpack.c.l.b16 %v1484
      %v1766 = vunpack.c.l.b16 %v1485
      %v1767 = vunpack.c.l.b16 %v1486
      %v1768 = vunpack.c.l.b16 %v1487
      %v1769 = vunpack.c.l.b16 %v1488
      %v1770 = vunpack.c.l.b16 %v1489
      %v1771 = vunpack.c.l.b16 %v1490
      %v1772 = vunpack.c.l.b16 %v1491
      %v1773 = vunpack.c.l.b16 %v1492
      %v1774 = vunpack.c.l.b16 %v1493
      %v1775 = vunpack.c.l.b16 %v1494
      %v1776 = vunpack.c.l.b16 %v1495
      %v1777 = vunpack.c.l.b16 %v1496
      %v1778 = vunpack.c.l.b16 %v1497
      %v1779 = vunpack.c.l.b16 %v1498
      %v1780 = vunpack.c.l.b16 %v1499
      %v1781 = vunpack.c.l.b16 %v1500
      %v1782 = vunpack.c.l.b16 %v1501
      %v1783 = vunpack.c.l.b16 %v1502
      %v1784 = vunpack.c.l.b16 %v1503
      %v1785 = vunpack.c.l.b16 %v1504
      %v1786 = vunpack.c.l.b16 %v1505
      %v1787 = vunpack.c.l.b16 %v1506
      %v1788 = vunpack.c.l.b16 %v1507
      %v1789 = vunpack.c.l.b16 %v1508
      %v1790 = vunpack.c.l.b16 %v1509
      %v1791 = vunpack.c.l.b16 %v1510
      %v1792 = vunpack.c.l.b16 %v1511
      %v1793 = vunpack.c.l.b16 %v1512
      %v1794 = vunpack.c.l.b16 %v1513
      %v1795 = vunpack.c.l.b16 %v1514
      %v1796 = vunpack.c.l.b16 %v1515
      %v1797 = vunpack.c.l.b16 %v1516
      %v1798 = vunpack.c.l.b16 %v1517
      %v1799 = vunpack.c.l.b16 %v1518
      %v1800 = vunpack.c.l.b16 %v1519
      %v1801 = vpack.c.b16 %v1706, %v1705
      %v1802 = vpack.c.b16 %v1708, %v1707
      %v1803 = vpack.c.b16 %v1710, %v1709
      %v1804 = vpack.c.b16 %v1712, %v1711
      %v1805 = vpack.c.b16 %v1714, %v1713
      %v1806 = vpack.c.b16 %v1716, %v1715
      %v1807 = vpack.c.b16 %v1718, %v1717
      %v1808 = vpack.c.b16 %v1720, %v1719
      %v1809 = vpack.c.b16 %v1722, %v1721
      %v1810 = vpack.c.b16 %v1724, %v1723
      %v1811 = vpack.c.b16 %v1726, %v1725
      %v1812 = vpack.c.b16 %v1728, %v1727
      %v1813 = vpack.c.b16 %v1730, %v1729
      %v1814 = vpack.c.b16 %v1732, %v1731
      %v1815 = vpack.c.b16 %v1734, %v1733
      %v1816 = vpack.c.b16 %v1736, %v1735
      %v1817 = vpack.c.b16 %v1738, %v1737
      %v1818 = vpack.c.b16 %v1740, %v1739
      %v1819 = vpack.c.b16 %v1742, %v1741
      %v1820 = vpack.c.b16 %v1744, %v1743
      %v1821 = vpack.c.b16 %v1746, %v1745
      %v1822 = vpack.c.b16 %v1748, %v1747
      %v1823 = vpack.c.b16 %v1750, %v1749
      %v1824 = vpack.c.b16 %v1752, %v1751
      %v1825 = vpack.c.b16 %v1754, %v1753
      %v1826 = vpack.c.b16 %v1756, %v1755
      %v1827 = vpack.c.b16 %v1758, %v1757
      %v1828 = vpack.c.b16 %v1760, %v1759
      %v1829 = vpack.c.b16 %v1762, %v1761
      %v1830 = vpack.c.b16 %v1764, %v1763
      %v1831 = vpack.c.b16 %v1766, %v1765
      %v1832 = vpack.c.b16 %v1768, %v1767
      %v1833 = vpack.c.b16 %v1770, %v1769
      %v1834 = vpack.c.b16 %v1772, %v1771
      %v1835 = vpack.c.b16 %v1774, %v1773
      %v1836 = vpack.c.b16 %v1776, %v1775
      %v1837 = vpack.c.b16 %v1778, %v1777
      %v1838 = vpack.c.b16 %v1780, %v1779
      %v1839 = vpack.c.b16 %v1782, %v1781
      %v1840 = vpack.c.b16 %v1784, %v1783
      %v1841 = vpack.c.b16 %v1786, %v1785
      %v1842 = vpack.c.b16 %v1788, %v1787
      %v1843 = vpack.c.b16 %v1790, %v1789
      %v1844 = vpack.c.b16 %v1792, %v1791
      %v1845 = vpack.c.b16 %v1794, %v1793
      %v1846 = vpack.c.b16 %v1796, %v1795
      %v1847 = vpack.c.b16 %v1798, %v1797
      %v1848 = vpack.c.b16 %v1800, %v1799
      %1897 = vmatprep.subr.bf16.mxu0 0
      %1898 = vmatpush1.bf16.msra.mxu0 %v1801
      %1899 = vmatprep.subr.bf16.mxu0 0
      %1900 = vmatpush1.bf16.msra.mxu0 %v1802
      %1901 = vmatprep.subr.bf16.mxu0 0
      %1902 = vmatpush1.bf16.msra.mxu0 %v1803
      %1903 = vmatprep.subr.bf16.mxu0 0
      %1904 = vmatpush1.bf16.msra.mxu0 %v1804
      %1905 = vmatprep.subr.bf16.mxu0 0
      %1906 = vmatpush1.bf16.msra.mxu0 %v1805
      %1907 = vmatprep.subr.bf16.mxu0 0
      %1908 = vmatpush1.bf16.msra.mxu0 %v1806
      %1909 = vmatprep.subr.bf16.mxu0 0
      %1910 = vmatpush1.bf16.msra.mxu0 %v1807
      %1911 = vmatprep.subr.bf16.mxu0 0
      %1912 = vmatpush1.bf16.msra.mxu0 %v1808
      %1913 = vmatprep.subr.bf16.mxu0 0
      %1914 = vmatpush1.bf16.msra.mxu0 %v1809
      %1915 = vmatprep.subr.bf16.mxu0 0
      %1916 = vmatpush1.bf16.msra.mxu0 %v1810
      %1917 = vmatprep.subr.bf16.mxu0 0
      %1918 = vmatpush1.bf16.msra.mxu0 %v1811
      %1919 = vmatprep.subr.bf16.mxu0 0
      %1920 = vmatpush1.bf16.msra.mxu0 %v1812
      %1921 = vmatprep.subr.bf16.mxu0 0
      %1922 = vmatpush1.bf16.msra.mxu0 %v1813
      %1923 = vmatprep.subr.bf16.mxu0 0
      %1924 = vmatpush1.bf16.msra.mxu0 %v1814
      %1925 = vmatprep.subr.bf16.mxu0 0
      %1926 = vmatpush1.bf16.msra.mxu0 %v1815
      %1927 = vmatprep.subr.bf16.mxu0 0
      %1928 = vmatpush1.bf16.msra.mxu0 %v1816
      %1929 = vmatprep.mubr.bf16.mxu0 %v1574
      %1930 = vmatmul.mubr.bf16.gmra.mrb[0].mxu0 %v1567
      %v1931 = vpop.f32.mrb[0].mxu0
      %v1932 = vadd.f32 %v1559, %v1931
      %v1933 = vpop.f32.mrb[0].mxu0
      %v1934 = vpop.f32.mrb[0].mxu0
      %v1935 = vpop.f32.mrb[0].mxu0
      %1936 = vdwg.mxu0
      %1937 = vmatprep.subr.bf16.mxu0 0
      %1938 = vmatpush1.bf16.msra.mxu0 %v1817
      %1939 = vmatprep.subr.bf16.mxu0 0
      %1940 = vmatpush1.bf16.msra.mxu0 %v1818
      %1941 = vmatprep.subr.bf16.mxu0 0
      %1942 = vmatpush1.bf16.msra.mxu0 %v1819
      %1943 = vmatprep.subr.bf16.mxu0 0
      %1944 = vmatpush1.bf16.msra.mxu0 %v1820
      %1945 = vmatprep.subr.bf16.mxu0 0
      %1946 = vmatpush1.bf16.msra.mxu0 %v1821
      %1947 = vmatprep.subr.bf16.mxu0 0
      %1948 = vmatpush1.bf16.msra.mxu0 %v1822
      %1949 = vmatprep.subr.bf16.mxu0 0
      %1950 = vmatpush1.bf16.msra.mxu0 %v1823
      %1951 = vmatprep.subr.bf16.mxu0 0
      %1952 = vmatpush1.bf16.msra.mxu0 %v1824
      %1953 = vmatprep.subr.bf16.mxu0 0
      %1954 = vmatpush1.bf16.msra.mxu0 %v1825
      %1955 = vmatprep.subr.bf16.mxu0 0
      %1956 = vmatpush1.bf16.msra.mxu0 %v1826
      %1957 = vmatprep.subr.bf16.mxu0 0
      %1958 = vmatpush1.bf16.msra.mxu0 %v1827
      %1959 = vmatprep.subr.bf16.mxu0 0
      %1960 = vmatpush1.bf16.msra.mxu0 %v1828
      %1961 = vmatprep.subr.bf16.mxu0 0
      %1962 = vmatpush1.bf16.msra.mxu0 %v1829
      %1963 = vmatprep.subr.bf16.mxu0 0
      %1964 = vmatpush1.bf16.msra.mxu0 %v1830
      %1965 = vmatprep.subr.bf16.mxu0 0
      %1966 = vmatpush1.bf16.msra.mxu0 %v1831
      %1967 = vmatprep.subr.bf16.mxu0 0
      %1968 = vmatpush1.bf16.msra.mxu0 %v1832
      %1969 = vmatprep.mubr.bf16.mxu0 %v1588
      %1970 = vmatmul.mubr.bf16.gmra.mrb[0].mxu0 %v1581
      %v1971 = vpop.f32.mrb[0].mxu0
      %v1972 = vadd.f32 %v1932, %v1971
      %v1973 = vpop.f32.mrb[0].mxu0
      %v1974 = vpop.f32.mrb[0].mxu0
      %v1975 = vpop.f32.mrb[0].mxu0
      %1976 = vdwg.mxu0
      %1977 = vmatprep.subr.bf16.mxu0 0
      %1978 = vmatpush1.bf16.msra.mxu0 %v1833
      %1979 = vmatprep.subr.bf16.mxu0 0
      %1980 = vmatpush1.bf16.msra.mxu0 %v1834
      %1981 = vmatprep.subr.bf16.mxu0 0
      %1982 = vmatpush1.bf16.msra.mxu0 %v1835
      %1983 = vmatprep.subr.bf16.mxu0 0
      %1984 = vmatpush1.bf16.msra.mxu0 %v1836
      %1985 = vmatprep.subr.bf16.mxu0 0
      %1986 = vmatpush1.bf16.msra.mxu0 %v1837
      %1987 = vmatprep.subr.bf16.mxu0 0
      %1988 = vmatpush1.bf16.msra.mxu0 %v1838
      %1989 = vmatprep.subr.bf16.mxu0 0
      %1990 = vmatpush1.bf16.msra.mxu0 %v1839
      %1991 = vmatprep.subr.bf16.mxu0 0
      %1992 = vmatpush1.bf16.msra.mxu0 %v1840
      %1993 = vmatprep.subr.bf16.mxu0 0
      %1994 = vmatpush1.bf16.msra.mxu0 %v1841
      %1995 = vmatprep.subr.bf16.mxu0 0
      %1996 = vmatpush1.bf16.msra.mxu0 %v1842
      %1997 = vmatprep.subr.bf16.mxu0 0
      %1998 = vmatpush1.bf16.msra.mxu0 %v1843
      %1999 = vmatprep.subr.bf16.mxu0 0
      %2000 = vmatpush1.bf16.msra.mxu0 %v1844
      %2001 = vmatprep.subr.bf16.mxu0 0
      %2002 = vmatpush1.bf16.msra.mxu0 %v1845
      %2003 = vmatprep.subr.bf16.mxu0 0
      %2004 = vmatpush1.bf16.msra.mxu0 %v1846
      %2005 = vmatprep.subr.bf16.mxu0 0
      %2006 = vmatpush1.bf16.msra.mxu0 %v1847
      %2007 = vmatprep.subr.bf16.mxu0 0
      %2008 = vmatpush1.bf16.msra.mxu0 %v1848
      %2009 = vmatprep.mubr.bf16.mxu0 %v1602
      %2010 = vmatmul.mubr.bf16.gmra.mrb[0].mxu0 %v1595
      %v2011 = vpop.f32.mrb[0].mxu0
      %v2012 = vadd.f32 %v1972, %v2011
      %v2013 = vpop.f32.mrb[0].mxu0
      %v2014 = vpop.f32.mrb[0].mxu0
      %v2015 = vpop.f32.mrb[0].mxu0
      %2016 = vdwg.mxu0
      %v2017 = vmax.f32 %v2012, 0.0
      %v2019 = vrot.slane %v2017, 7
      %2020 = vrot.lane.b32.xlu0 %v2019, 24
      %v2021 = vpop.permute.xlu0 %2020
      %s2023 = scalar_lea.vmem [#allocation2], 32
      %2024 = vst.msk [vmem:[%s2023] sm:$0x1e] %vm842, %v2021
      %s2025 = scalar_lea.vmem %s1, 1152
      %v2026 = vld [vmem:[%s2025] sm:$0xf]
      %v2027 = vld [vmem:[%s2025 + $0x4] sm:$0xf]
      %v2028 = vld [vmem:[%s2025 + $0x8] sm:$0xf]
      %v2029 = vld [vmem:[%s2025 + $0xc] sm:$0xf]
      %v2030 = vld [vmem:[%s2025 + $0x10] sm:$0xf]
      %v2031 = vld [vmem:[%s2025 + $0x14] sm:$0xf]
      %v2032 = vld [vmem:[%s2025 + $0x18] sm:$0xf]
      %v2033 = vld [vmem:[%s2025 + $0x1c] sm:$0xf]
      %v2034 = vld [vmem:[%s2025 + $0x20] sm:$0xf]
      %v2035 = vld [vmem:[%s2025 + $0x24] sm:$0xf]
      %v2036 = vld [vmem:[%s2025 + $0x28] sm:$0xf]
      %v2037 = vld [vmem:[%s2025 + $0x2c] sm:$0xf]
      %v2038 = vld [vmem:[%s2025 + $0x30] sm:$0xf]
      %v2039 = vld [vmem:[%s2025 + $0x34] sm:$0xf]
      %v2040 = vld [vmem:[%s2025 + $0x38] sm:$0xf]
      %v2041 = vld [vmem:[%s2025 + $0x3c] sm:$0xf]
      %v2042 = vld [vmem:[%s2025 + $0x40] sm:$0xf]
      %v2043 = vld [vmem:[%s2025 + $0x44] sm:$0xf]
      %v2044 = vld [vmem:[%s2025 + $0x48] sm:$0xf]
      %v2045 = vld [vmem:[%s2025 + $0x4c] sm:$0xf]
      %v2046 = vld [vmem:[%s2025 + $0x50] sm:$0xf]
      %v2047 = vld [vmem:[%s2025 + $0x54] sm:$0xf]
      %v2048 = vld [vmem:[%s2025 + $0x58] sm:$0xf]
      %v2049 = vld [vmem:[%s2025 + $0x5c] sm:$0xf]
      %v2050 = vld [vmem:[%s2025 + $0x60] sm:$0xf]
      %v2051 = vld [vmem:[%s2025 + $0x64] sm:$0xf]
      %v2052 = vld [vmem:[%s2025 + $0x68] sm:$0xf]
      %v2053 = vld [vmem:[%s2025 + $0x6c] sm:$0xf]
      %v2054 = vld [vmem:[%s2025 + $0x70] sm:$0xf]
      %v2055 = vld [vmem:[%s2025 + $0x74] sm:$0xf]
      %v2056 = vld [vmem:[%s2025 + $0x78] sm:$0xf]
      %v2057 = vld [vmem:[%s2025 + $0x7c] sm:$0xf]
      %v2058 = vld [vmem:[%s2025 + $0x80] sm:$0xf]
      %v2059 = vld [vmem:[%s2025 + $0x84] sm:$0xf]
      %v2060 = vld [vmem:[%s2025 + $0x88] sm:$0xf]
      %v2061 = vld [vmem:[%s2025 + $0x8c] sm:$0xf]
      %v2062 = vld [vmem:[%s2025 + $0x90] sm:$0xf]
      %v2063 = vld [vmem:[%s2025 + $0x94] sm:$0xf]
      %v2064 = vld [vmem:[%s2025 + $0x98] sm:$0xf]
      %v2065 = vld [vmem:[%s2025 + $0x9c] sm:$0xf]
      %v2066 = vld [vmem:[%s2025 + $0xa0] sm:$0xf]
      %v2067 = vld [vmem:[%s2025 + $0xa4] sm:$0xf]
      %v2068 = vld [vmem:[%s2025 + $0xa8] sm:$0xf]
      %v2069 = vld [vmem:[%s2025 + $0xac] sm:$0xf]
      %v2070 = vld [vmem:[%s2025 + $0xb0] sm:$0xf]
      %v2071 = vld [vmem:[%s2025 + $0xb4] sm:$0xf]
      %v2072 = vld [vmem:[%s2025 + $0xb8] sm:$0xf]
      %v2073 = vld [vmem:[%s2025 + $0xbc] sm:$0xf]
      %v2074 = vld [vmem:[%s2025 + $0xc0] sm:$0xf]
      %v2075 = vld [vmem:[%s2025 + $0xc4] sm:$0xf]
      %v2076 = vld [vmem:[%s2025 + $0xc8] sm:$0xf]
      %v2077 = vld [vmem:[%s2025 + $0xcc] sm:$0xf]
      %v2078 = vld [vmem:[%s2025 + $0xd0] sm:$0xf]
      %v2079 = vld [vmem:[%s2025 + $0xd4] sm:$0xf]
      %v2080 = vld [vmem:[%s2025 + $0xd8] sm:$0xf]
      %v2081 = vld [vmem:[%s2025 + $0xdc] sm:$0xf]
      %v2082 = vld [vmem:[%s2025 + $0xe0] sm:$0xf]
      %v2083 = vld [vmem:[%s2025 + $0xe4] sm:$0xf]
      %v2084 = vld [vmem:[%s2025 + $0xe8] sm:$0xf]
      %v2085 = vld [vmem:[%s2025 + $0xec] sm:$0xf]
      %v2086 = vld [vmem:[%s2025 + $0xf0] sm:$0xf]
      %v2087 = vld [vmem:[%s2025 + $0xf4] sm:$0xf]
      %v2088 = vld [vmem:[%s2025 + $0xf8] sm:$0xf]
      %v2089 = vld [vmem:[%s2025 + $0xfc] sm:$0xf]
      %v2090 = vld [vmem:[%s2025 + $0x100] sm:$0xf]
      %v2091 = vld [vmem:[%s2025 + $0x104] sm:$0xf]
      %v2092 = vld [vmem:[%s2025 + $0x108] sm:$0xf]
      %v2093 = vld [vmem:[%s2025 + $0x10c] sm:$0xf]
      %v2094 = vld [vmem:[%s2025 + $0x110] sm:$0xf]
      %v2095 = vld [vmem:[%s2025 + $0x114] sm:$0xf]
      %v2096 = vld [vmem:[%s2025 + $0x118] sm:$0xf]
      %v2097 = vld [vmem:[%s2025 + $0x11c] sm:$0xf]
      %v2098 = vld [vmem:[%s2025 + $0x120] sm:$0xf]
      %v2099 = vld [vmem:[%s2025 + $0x124] sm:$0xf]
      %v2100 = vld [vmem:[%s2025 + $0x128] sm:$0xf]
      %v2101 = vld [vmem:[%s2025 + $0x12c] sm:$0xf]
      %v2102 = vld [vmem:[%s2025 + $0x130] sm:$0xf]
      %v2103 = vld [vmem:[%s2025 + $0x134] sm:$0xf]
      %v2104 = vld [vmem:[%s2025 + $0x138] sm:$0xf]
      %v2105 = vld [vmem:[%s2025 + $0x13c] sm:$0xf]
      %v2106 = vld [vmem:[%s2025 + $0x140] sm:$0xf]
      %v2107 = vld [vmem:[%s2025 + $0x144] sm:$0xf]
      %v2108 = vld [vmem:[%s2025 + $0x148] sm:$0xf]
      %v2109 = vld [vmem:[%s2025 + $0x14c] sm:$0xf]
      %v2110 = vld [vmem:[%s2025 + $0x150] sm:$0xf]
      %v2111 = vld [vmem:[%s2025 + $0x154] sm:$0xf]
      %v2112 = vld [vmem:[%s2025 + $0x158] sm:$0xf]
      %v2113 = vld [vmem:[%s2025 + $0x15c] sm:$0xf]
      %v2114 = vld [vmem:[%s2025 + $0x160] sm:$0xf]
      %v2115 = vld [vmem:[%s2025 + $0x164] sm:$0xf]
      %v2116 = vld [vmem:[%s2025 + $0x168] sm:$0xf]
      %v2117 = vld [vmem:[%s2025 + $0x16c] sm:$0xf]
      %v2118 = vld [vmem:[%s2025 + $0x170] sm:$0xf]
      %v2119 = vld [vmem:[%s2025 + $0x174] sm:$0xf]
      %v2120 = vld [vmem:[%s2025 + $0x178] sm:$0xf]
      %v2121 = vld [vmem:[%s2025 + $0x17c] sm:$0xf]
      %v2122 = vld [vmem:[%s273] sm:$0x1e]
      %v2123 = vld [vmem:[%s273 + $0x8] sm:$0x1e]
      %v2124 = vld [vmem:[%s273 + $0x10] sm:$0x1e]
      %v2125 = vld [vmem:[%s273] sm:$0x3c]
      %v2126 = vld [vmem:[%s273 + $0x8] sm:$0x3c]
      %v2127 = vld [vmem:[%s273 + $0x10] sm:$0x3c]
      %2130 = vrot.lane.b32.xlu0 %v2122, 80
      %v2131 = vpop.permute.xlu0 %2130
      %2132 = vrot.lane.b32.xlu0 %v2123, 80
      %v2133 = vpop.permute.xlu0 %2132
      %v2134 = vsel %vm953, %v2131, %v2133
      %2138 = vrot.lane.b32.xlu0 %v2122, 96
      %v2139 = vpop.permute.xlu0 %2138
      %2140 = vrot.lane.b32.xlu0 %v2123, 96
      %v2141 = vpop.permute.xlu0 %2140
      %2142 = vrot.lane.b32.xlu0 %v2124, 96
      %v2143 = vpop.permute.xlu0 %2142
      %v2144 = vsel %vm964, %v2139, %v2141
      %v2145 = vsel %vm964, %v2141, %v2143
      %v2150 = vrot.slane %v2125, 1
      %v2151 = vrot.slane %v2126, 1
      %2152 = vrot.lane.b32.xlu0 %v2150, 80
      %v2153 = vpop.permute.xlu0 %2152
      %2154 = vrot.lane.b32.xlu0 %v2151, 80
      %v2155 = vpop.permute.xlu0 %2154
      %v2156 = vsel %vm953, %v2153, %v2155
      %v2160 = vrot.slane %v2127, 1
      %2161 = vrot.lane.b32.xlu0 %v2150, 96
      %v2162 = vpop.permute.xlu0 %2161
      %2163 = vrot.lane.b32.xlu0 %v2151, 96
      %v2164 = vpop.permute.xlu0 %2163
      %2165 = vrot.lane.b32.xlu0 %v2160, 96
      %v2166 = vpop.permute.xlu0 %2165
      %v2167 = vsel %vm964, %v2162, %v2164
      %v2168 = vsel %vm964, %v2164, %v2166
      %v2171 = vsel %vm412, %v2133, %v2144
      %v2172 = vsel %vm412, %v2155, %v2167
      %v2173 = vpack.c.bf16 %v2134, %v2134
      %v2174 = vpack.c.bf16 %v2171, %v2171
      %v2175 = vpack.c.bf16 %v2145, %v2145
      %v2176 = vpack.c.bf16 %v2156, %v2156
      %v2177 = vpack.c.bf16 %v2172, %v2172
      %v2178 = vpack.c.bf16 %v2168, %v2168
      %v2179 = vld [vmem:[%s2] sm:$0x1]
      %v2181 = vlaneseq
      %v2182 = vshrl.u32 %v2181, 7
      %v2183 = vsub.s32 0, %v2182
      %v2184 = vrot.slane %v2179, %v2183
      %v2187 = vshrl.u32 %v2173, 16
      %v2189 = vshll.u32 %v2173, 16
      %v2191 = vrot.slane %v2189, 1
      %v2192 = vor.u32 %v2187, %v2191
      %v2194 = vshrl.u32 %v2174, 16
      %v2196 = vshll.u32 %v2174, 16
      %v2198 = vrot.slane %v2196, 1
      %v2199 = vor.u32 %v2194, %v2198
      %v2201 = vshrl.u32 %v2175, 16
      %v2203 = vshll.u32 %v2175, 16
      %v2205 = vrot.slane %v2203, 1
      %v2206 = vor.u32 %v2201, %v2205
      %v2208 = vshrl.u32 %v2176, 16
      %v2210 = vshll.u32 %v2176, 16
      %v2212 = vrot.slane %v2210, 1
      %v2213 = vor.u32 %v2208, %v2212
      %v2215 = vshrl.u32 %v2177, 16
      %v2217 = vshll.u32 %v2177, 16
      %v2219 = vrot.slane %v2217, 1
      %v2220 = vor.u32 %v2215, %v2219
      %v2222 = vshrl.u32 %v2178, 16
      %v2224 = vshll.u32 %v2178, 16
      %v2226 = vrot.slane %v2224, 1
      %v2227 = vor.u32 %v2222, %v2226
      %v2330 = vunpack.c.l.b16 %v2026
      %v2331 = vunpack.c.l.b16 %v2027
      %v2332 = vunpack.c.l.b16 %v2028
      %v2333 = vunpack.c.l.b16 %v2029
      %v2334 = vunpack.c.l.b16 %v2030
      %v2335 = vunpack.c.l.b16 %v2031
      %v2336 = vunpack.c.l.b16 %v2032
      %v2337 = vunpack.c.l.b16 %v2033
      %v2338 = vunpack.c.l.b16 %v2034
      %v2339 = vunpack.c.l.b16 %v2035
      %v2340 = vunpack.c.l.b16 %v2036
      %v2341 = vunpack.c.l.b16 %v2037
      %v2342 = vunpack.c.l.b16 %v2038
      %v2343 = vunpack.c.l.b16 %v2039
      %v2344 = vunpack.c.l.b16 %v2040
      %v2345 = vunpack.c.l.b16 %v2041
      %v2346 = vunpack.c.l.b16 %v2042
      %v2347 = vunpack.c.l.b16 %v2043
      %v2348 = vunpack.c.l.b16 %v2044
      %v2349 = vunpack.c.l.b16 %v2045
      %v2350 = vunpack.c.l.b16 %v2046
      %v2351 = vunpack.c.l.b16 %v2047
      %v2352 = vunpack.c.l.b16 %v2048
      %v2353 = vunpack.c.l.b16 %v2049
      %v2354 = vunpack.c.l.b16 %v2050
      %v2355 = vunpack.c.l.b16 %v2051
      %v2356 = vunpack.c.l.b16 %v2052
      %v2357 = vunpack.c.l.b16 %v2053
      %v2358 = vunpack.c.l.b16 %v2054
      %v2359 = vunpack.c.l.b16 %v2055
      %v2360 = vunpack.c.l.b16 %v2056
      %v2361 = vunpack.c.l.b16 %v2057
      %v2362 = vunpack.c.l.b16 %v2058
      %v2363 = vunpack.c.l.b16 %v2059
      %v2364 = vunpack.c.l.b16 %v2060
      %v2365 = vunpack.c.l.b16 %v2061
      %v2366 = vunpack.c.l.b16 %v2062
      %v2367 = vunpack.c.l.b16 %v2063
      %v2368 = vunpack.c.l.b16 %v2064
      %v2369 = vunpack.c.l.b16 %v2065
      %v2370 = vunpack.c.l.b16 %v2066
      %v2371 = vunpack.c.l.b16 %v2067
      %v2372 = vunpack.c.l.b16 %v2068
      %v2373 = vunpack.c.l.b16 %v2069
      %v2374 = vunpack.c.l.b16 %v2070
      %v2375 = vunpack.c.l.b16 %v2071
      %v2376 = vunpack.c.l.b16 %v2072
      %v2377 = vunpack.c.l.b16 %v2073
      %v2378 = vunpack.c.l.b16 %v2074
      %v2379 = vunpack.c.l.b16 %v2075
      %v2380 = vunpack.c.l.b16 %v2076
      %v2381 = vunpack.c.l.b16 %v2077
      %v2382 = vunpack.c.l.b16 %v2078
      %v2383 = vunpack.c.l.b16 %v2079
      %v2384 = vunpack.c.l.b16 %v2080
      %v2385 = vunpack.c.l.b16 %v2081
      %v2386 = vunpack.c.l.b16 %v2082
      %v2387 = vunpack.c.l.b16 %v2083
      %v2388 = vunpack.c.l.b16 %v2084
      %v2389 = vunpack.c.l.b16 %v2085
      %v2390 = vunpack.c.l.b16 %v2086
      %v2391 = vunpack.c.l.b16 %v2087
      %v2392 = vunpack.c.l.b16 %v2088
      %v2393 = vunpack.c.l.b16 %v2089
      %v2394 = vunpack.c.l.b16 %v2090
      %v2395 = vunpack.c.l.b16 %v2091
      %v2396 = vunpack.c.l.b16 %v2092
      %v2397 = vunpack.c.l.b16 %v2093
      %v2398 = vunpack.c.l.b16 %v2094
      %v2399 = vunpack.c.l.b16 %v2095
      %v2400 = vunpack.c.l.b16 %v2096
      %v2401 = vunpack.c.l.b16 %v2097
      %v2402 = vunpack.c.l.b16 %v2098
      %v2403 = vunpack.c.l.b16 %v2099
      %v2404 = vunpack.c.l.b16 %v2100
      %v2405 = vunpack.c.l.b16 %v2101
      %v2406 = vunpack.c.l.b16 %v2102
      %v2407 = vunpack.c.l.b16 %v2103
      %v2408 = vunpack.c.l.b16 %v2104
      %v2409 = vunpack.c.l.b16 %v2105
      %v2410 = vunpack.c.l.b16 %v2106
      %v2411 = vunpack.c.l.b16 %v2107
      %v2412 = vunpack.c.l.b16 %v2108
      %v2413 = vunpack.c.l.b16 %v2109
      %v2414 = vunpack.c.l.b16 %v2110
      %v2415 = vunpack.c.l.b16 %v2111
      %v2416 = vunpack.c.l.b16 %v2112
      %v2417 = vunpack.c.l.b16 %v2113
      %v2418 = vunpack.c.l.b16 %v2114
      %v2419 = vunpack.c.l.b16 %v2115
      %v2420 = vunpack.c.l.b16 %v2116
      %v2421 = vunpack.c.l.b16 %v2117
      %v2422 = vunpack.c.l.b16 %v2118
      %v2423 = vunpack.c.l.b16 %v2119
      %v2424 = vunpack.c.l.b16 %v2120
      %v2425 = vunpack.c.l.b16 %v2121
      %v2426 = vpack.c.b16 %v2331, %v2330
      %v2427 = vpack.c.b16 %v2333, %v2332
      %v2428 = vpack.c.b16 %v2335, %v2334
      %v2429 = vpack.c.b16 %v2337, %v2336
      %v2430 = vpack.c.b16 %v2339, %v2338
      %v2431 = vpack.c.b16 %v2341, %v2340
      %v2432 = vpack.c.b16 %v2343, %v2342
      %v2433 = vpack.c.b16 %v2345, %v2344
      %v2434 = vpack.c.b16 %v2347, %v2346
      %v2435 = vpack.c.b16 %v2349, %v2348
      %v2436 = vpack.c.b16 %v2351, %v2350
      %v2437 = vpack.c.b16 %v2353, %v2352
      %v2438 = vpack.c.b16 %v2355, %v2354
      %v2439 = vpack.c.b16 %v2357, %v2356
      %v2440 = vpack.c.b16 %v2359, %v2358
      %v2441 = vpack.c.b16 %v2361, %v2360
      %v2442 = vpack.c.b16 %v2363, %v2362
      %v2443 = vpack.c.b16 %v2365, %v2364
      %v2444 = vpack.c.b16 %v2367, %v2366
      %v2445 = vpack.c.b16 %v2369, %v2368
      %v2446 = vpack.c.b16 %v2371, %v2370
      %v2447 = vpack.c.b16 %v2373, %v2372
      %v2448 = vpack.c.b16 %v2375, %v2374
      %v2449 = vpack.c.b16 %v2377, %v2376
      %v2450 = vpack.c.b16 %v2379, %v2378
      %v2451 = vpack.c.b16 %v2381, %v2380
      %v2452 = vpack.c.b16 %v2383, %v2382
      %v2453 = vpack.c.b16 %v2385, %v2384
      %v2454 = vpack.c.b16 %v2387, %v2386
      %v2455 = vpack.c.b16 %v2389, %v2388
      %v2456 = vpack.c.b16 %v2391, %v2390
      %v2457 = vpack.c.b16 %v2393, %v2392
      %v2458 = vpack.c.b16 %v2395, %v2394
      %v2459 = vpack.c.b16 %v2397, %v2396
      %v2460 = vpack.c.b16 %v2399, %v2398
      %v2461 = vpack.c.b16 %v2401, %v2400
      %v2462 = vpack.c.b16 %v2403, %v2402
      %v2463 = vpack.c.b16 %v2405, %v2404
      %v2464 = vpack.c.b16 %v2407, %v2406
      %v2465 = vpack.c.b16 %v2409, %v2408
      %v2466 = vpack.c.b16 %v2411, %v2410
      %v2467 = vpack.c.b16 %v2413, %v2412
      %v2468 = vpack.c.b16 %v2415, %v2414
      %v2469 = vpack.c.b16 %v2417, %v2416
      %v2470 = vpack.c.b16 %v2419, %v2418
      %v2471 = vpack.c.b16 %v2421, %v2420
      %v2472 = vpack.c.b16 %v2423, %v2422
      %v2473 = vpack.c.b16 %v2425, %v2424
      %2522 = vmatprep.subr.bf16.mxu0 0
      %2523 = vmatpush1.bf16.msra.mxu0 %v2426
      %2524 = vmatprep.subr.bf16.mxu0 0
      %2525 = vmatpush1.bf16.msra.mxu0 %v2427
      %2526 = vmatprep.subr.bf16.mxu0 0
      %2527 = vmatpush1.bf16.msra.mxu0 %v2428
      %2528 = vmatprep.subr.bf16.mxu0 0
      %2529 = vmatpush1.bf16.msra.mxu0 %v2429
      %2530 = vmatprep.subr.bf16.mxu0 0
      %2531 = vmatpush1.bf16.msra.mxu0 %v2430
      %2532 = vmatprep.subr.bf16.mxu0 0
      %2533 = vmatpush1.bf16.msra.mxu0 %v2431
      %2534 = vmatprep.subr.bf16.mxu0 0
      %2535 = vmatpush1.bf16.msra.mxu0 %v2432
      %2536 = vmatprep.subr.bf16.mxu0 0
      %2537 = vmatpush1.bf16.msra.mxu0 %v2433
      %2538 = vmatprep.subr.bf16.mxu0 0
      %2539 = vmatpush1.bf16.msra.mxu0 %v2434
      %2540 = vmatprep.subr.bf16.mxu0 0
      %2541 = vmatpush1.bf16.msra.mxu0 %v2435
      %2542 = vmatprep.subr.bf16.mxu0 0
      %2543 = vmatpush1.bf16.msra.mxu0 %v2436
      %2544 = vmatprep.subr.bf16.mxu0 0
      %2545 = vmatpush1.bf16.msra.mxu0 %v2437
      %2546 = vmatprep.subr.bf16.mxu0 0
      %2547 = vmatpush1.bf16.msra.mxu0 %v2438
      %2548 = vmatprep.subr.bf16.mxu0 0
      %2549 = vmatpush1.bf16.msra.mxu0 %v2439
      %2550 = vmatprep.subr.bf16.mxu0 0
      %2551 = vmatpush1.bf16.msra.mxu0 %v2440
      %2552 = vmatprep.subr.bf16.mxu0 0
      %2553 = vmatpush1.bf16.msra.mxu0 %v2441
      %2554 = vmatprep.mubr.bf16.mxu0 %v2199
      %2555 = vmatmul.mubr.bf16.gmra.mrb[0].mxu0 %v2192
      %v2556 = vpop.f32.mrb[0].mxu0
      %v2557 = vadd.f32 %v2184, %v2556
      %v2558 = vpop.f32.mrb[0].mxu0
      %v2559 = vpop.f32.mrb[0].mxu0
      %v2560 = vpop.f32.mrb[0].mxu0
      %2561 = vdwg.mxu0
      %2562 = vmatprep.subr.bf16.mxu0 0
      %2563 = vmatpush1.bf16.msra.mxu0 %v2442
      %2564 = vmatprep.subr.bf16.mxu0 0
      %2565 = vmatpush1.bf16.msra.mxu0 %v2443
      %2566 = vmatprep.subr.bf16.mxu0 0
      %2567 = vmatpush1.bf16.msra.mxu0 %v2444
      %2568 = vmatprep.subr.bf16.mxu0 0
      %2569 = vmatpush1.bf16.msra.mxu0 %v2445
      %2570 = vmatprep.subr.bf16.mxu0 0
      %2571 = vmatpush1.bf16.msra.mxu0 %v2446
      %2572 = vmatprep.subr.bf16.mxu0 0
      %2573 = vmatpush1.bf16.msra.mxu0 %v2447
      %2574 = vmatprep.subr.bf16.mxu0 0
      %2575 = vmatpush1.bf16.msra.mxu0 %v2448
      %2576 = vmatprep.subr.bf16.mxu0 0
      %2577 = vmatpush1.bf16.msra.mxu0 %v2449
      %2578 = vmatprep.subr.bf16.mxu0 0
      %2579 = vmatpush1.bf16.msra.mxu0 %v2450
      %2580 = vmatprep.subr.bf16.mxu0 0
      %2581 = vmatpush1.bf16.msra.mxu0 %v2451
      %2582 = vmatprep.subr.bf16.mxu0 0
      %2583 = vmatpush1.bf16.msra.mxu0 %v2452
      %2584 = vmatprep.subr.bf16.mxu0 0
      %2585 = vmatpush1.bf16.msra.mxu0 %v2453
      %2586 = vmatprep.subr.bf16.mxu0 0
      %2587 = vmatpush1.bf16.msra.mxu0 %v2454
      %2588 = vmatprep.subr.bf16.mxu0 0
      %2589 = vmatpush1.bf16.msra.mxu0 %v2455
      %2590 = vmatprep.subr.bf16.mxu0 0
      %2591 = vmatpush1.bf16.msra.mxu0 %v2456
      %2592 = vmatprep.subr.bf16.mxu0 0
      %2593 = vmatpush1.bf16.msra.mxu0 %v2457
      %2594 = vmatprep.mubr.bf16.mxu0 %v2213
      %2595 = vmatmul.mubr.bf16.gmra.mrb[0].mxu0 %v2206
      %v2596 = vpop.f32.mrb[0].mxu0
      %v2597 = vadd.f32 %v2557, %v2596
      %v2598 = vpop.f32.mrb[0].mxu0
      %v2599 = vpop.f32.mrb[0].mxu0
      %v2600 = vpop.f32.mrb[0].mxu0
      %2601 = vdwg.mxu0
      %2602 = vmatprep.subr.bf16.mxu0 0
      %2603 = vmatpush1.bf16.msra.mxu0 %v2458
      %2604 = vmatprep.subr.bf16.mxu0 0
      %2605 = vmatpush1.bf16.msra.mxu0 %v2459
      %2606 = vmatprep.subr.bf16.mxu0 0
      %2607 = vmatpush1.bf16.msra.mxu0 %v2460
      %2608 = vmatprep.subr.bf16.mxu0 0
      %2609 = vmatpush1.bf16.msra.mxu0 %v2461
      %2610 = vmatprep.subr.bf16.mxu0 0
      %2611 = vmatpush1.bf16.msra.mxu0 %v2462
      %2612 = vmatprep.subr.bf16.mxu0 0
      %2613 = vmatpush1.bf16.msra.mxu0 %v2463
      %2614 = vmatprep.subr.bf16.mxu0 0
      %2615 = vmatpush1.bf16.msra.mxu0 %v2464
      %2616 = vmatprep.subr.bf16.mxu0 0
      %2617 = vmatpush1.bf16.msra.mxu0 %v2465
      %2618 = vmatprep.subr.bf16.mxu0 0
      %2619 = vmatpush1.bf16.msra.mxu0 %v2466
      %2620 = vmatprep.subr.bf16.mxu0 0
      %2621 = vmatpush1.bf16.msra.mxu0 %v2467
      %2622 = vmatprep.subr.bf16.mxu0 0
      %2623 = vmatpush1.bf16.msra.mxu0 %v2468
      %2624 = vmatprep.subr.bf16.mxu0 0
      %2625 = vmatpush1.bf16.msra.mxu0 %v2469
      %2626 = vmatprep.subr.bf16.mxu0 0
      %2627 = vmatpush1.bf16.msra.mxu0 %v2470
      %2628 = vmatprep.subr.bf16.mxu0 0
      %2629 = vmatpush1.bf16.msra.mxu0 %v2471
      %2630 = vmatprep.subr.bf16.mxu0 0
      %2631 = vmatpush1.bf16.msra.mxu0 %v2472
      %2632 = vmatprep.subr.bf16.mxu0 0
      %2633 = vmatpush1.bf16.msra.mxu0 %v2473
      %2634 = vmatprep.mubr.bf16.mxu0 %v2227
      %2635 = vmatmul.mubr.bf16.gmra.mrb[0].mxu0 %v2220
      %v2636 = vpop.f32.mrb[0].mxu0
      %v2637 = vadd.f32 %v2597, %v2636
      %v2638 = vpop.f32.mrb[0].mxu0
      %v2639 = vpop.f32.mrb[0].mxu0
      %v2640 = vpop.f32.mrb[0].mxu0
      %2641 = vdwg.mxu0
      %v2642 = vmax.f32 %v2637, 0.0
      %v2644 = vrot.slane %v2642, 7
      %2645 = vrot.lane.b32.xlu0 %v2644, 24
      %v2646 = vpop.permute.xlu0 %2645
      %s2648 = scalar_lea.vmem [#allocation2], 48
      %2649 = vst.msk [vmem:[%s2648] sm:$0x1e] %vm842, %v2646
      %vm2650 = vcmask 586752
      %2651 = vst.msk [vmem:[#allocation3] sm:$0x3f] %vm2650, 0.0
      %2652 = vst.msk [vmem:[#allocation3 + $0x8] sm:$0x3f] %vm2650, 0.0
      %2653 = vst.msk [vmem:[#allocation3 + $0x10] sm:$0x3f] %vm2650, 0.0
      %2654 = vst.msk [vmem:[#allocation3 + $0x18] sm:$0x3f] %vm2650, 0.0
      %2655 = vst.msk [vmem:[#allocation3 + $0x20] sm:$0x3f] %vm2650, 0.0
      %2656 = vst.msk [vmem:[#allocation3 + $0x28] sm:$0x3f] %vm2650, 0.0
      %2657 = vst.msk [vmem:[#allocation3 + $0x30] sm:$0x3f] %vm2650, 0.0
      %2658 = vst.msk [vmem:[#allocation3 + $0x38] sm:$0x3f] %vm2650, 0.0
      %2659 = vst.msk [vmem:[#allocation3 + $0x40] sm:$0x3f] %vm2650, 0.0
      %2660 = vst.msk [vmem:[#allocation3 + $0x48] sm:$0x3f] %vm2650, 0.0
      %2661 = vst.msk [vmem:[#allocation3 + $0x50] sm:$0x3f] %vm2650, 0.0
      %2662 = vst.msk [vmem:[#allocation3 + $0x58] sm:$0x3f] %vm2650, 0.0
      %2663 = vst.msk [vmem:[#allocation3 + $0x60] sm:$0x3f] %vm2650, 0.0
      %2664 = vst.msk [vmem:[#allocation3 + $0x68] sm:$0x3f] %vm2650, 0.0
      %2665 = vst.msk [vmem:[#allocation3 + $0x70] sm:$0x3f] %vm2650, 0.0
      %2666 = vst.msk [vmem:[#allocation3 + $0x78] sm:$0x3f] %vm2650, 0.0
      %v2667 = vld [vmem:[%s3] sm:$0xf]
      %v2668 = vld [vmem:[%s3 + $0x4] sm:$0xf]
      %v2669 = vld [vmem:[%s3 + $0x8] sm:$0xf]
      %v2670 = vld [vmem:[%s3 + $0xc] sm:$0xf]
      %v2671 = vld [vmem:[%s3 + $0x10] sm:$0xf]
      %v2672 = vld [vmem:[%s3 + $0x14] sm:$0xf]
      %v2673 = vld [vmem:[%s3 + $0x18] sm:$0xf]
      %v2674 = vld [vmem:[%s3 + $0x1c] sm:$0xf]
      %v2675 = vld [vmem:[%s3 + $0x20] sm:$0xf]
      %v2676 = vld [vmem:[%s3 + $0x24] sm:$0xf]
      %v2677 = vld [vmem:[%s3 + $0x28] sm:$0xf]
      %v2678 = vld [vmem:[%s3 + $0x2c] sm:$0xf]
      %v2679 = vld [vmem:[%s3 + $0x30] sm:$0xf]
      %v2680 = vld [vmem:[%s3 + $0x34] sm:$0xf]
      %v2681 = vld [vmem:[%s3 + $0x38] sm:$0xf]
      %v2682 = vld [vmem:[%s3 + $0x3c] sm:$0xf]
      %v2683 = vld [vmem:[%s3 + $0x40] sm:$0xf]
      %v2684 = vld [vmem:[%s3 + $0x44] sm:$0xf]
      %v2685 = vld [vmem:[%s3 + $0x48] sm:$0xf]
      %v2686 = vld [vmem:[%s3 + $0x4c] sm:$0xf]
      %v2687 = vld [vmem:[%s3 + $0x50] sm:$0xf]
      %v2688 = vld [vmem:[%s3 + $0x54] sm:$0xf]
      %v2689 = vld [vmem:[%s3 + $0x58] sm:$0xf]
      %v2690 = vld [vmem:[%s3 + $0x5c] sm:$0xf]
      %v2691 = vld [vmem:[%s3 + $0x60] sm:$0xf]
      %v2692 = vld [vmem:[%s3 + $0x64] sm:$0xf]
      %v2693 = vld [vmem:[%s3 + $0x68] sm:$0xf]
      %v2694 = vld [vmem:[%s3 + $0x6c] sm:$0xf]
      %v2695 = vld [vmem:[%s3 + $0x70] sm:$0xf]
      %v2696 = vld [vmem:[%s3 + $0x74] sm:$0xf]
      %v2697 = vld [vmem:[%s3 + $0x78] sm:$0xf]
      %v2698 = vld [vmem:[%s3 + $0x7c] sm:$0xf]
      %v2699 = vld [vmem:[%s3 + $0x80] sm:$0xf]
      %v2700 = vld [vmem:[%s3 + $0x84] sm:$0xf]
      %v2701 = vld [vmem:[%s3 + $0x88] sm:$0xf]
      %v2702 = vld [vmem:[%s3 + $0x8c] sm:$0xf]
      %v2703 = vld [vmem:[%s3 + $0x90] sm:$0xf]
      %v2704 = vld [vmem:[%s3 + $0x94] sm:$0xf]
      %v2705 = vld [vmem:[%s3 + $0x98] sm:$0xf]
      %v2706 = vld [vmem:[%s3 + $0x9c] sm:$0xf]
      %v2707 = vld [vmem:[%s3 + $0xa0] sm:$0xf]
      %v2708 = vld [vmem:[%s3 + $0xa4] sm:$0xf]
      %v2709 = vld [vmem:[%s3 + $0xa8] sm:$0xf]
      %v2710 = vld [vmem:[%s3 + $0xac] sm:$0xf]
      %v2711 = vld [vmem:[%s3 + $0xb0] sm:$0xf]
      %v2712 = vld [vmem:[%s3 + $0xb4] sm:$0xf]
      %v2713 = vld [vmem:[%s3 + $0xb8] sm:$0xf]
      %v2714 = vld [vmem:[%s3 + $0xbc] sm:$0xf]
      %v2715 = vld [vmem:[%s2648] sm:$0xf]
      %v2716 = vld [vmem:[%s2023] sm:$0xf]
      %v2717 = vld [vmem:[%s1421] sm:$0x1e]
      %v2718 = vld [vmem:[#allocation2] sm:$0x1e]
      %2720 = vrot.lane.b32.xlu0 %v2716, 72
      %v2721 = vpop.permute.xlu0 %2720
      %v2724 = vrot.slane %v2717, 1
      %2725 = vrot.lane.b32.xlu0 %v2724, 64
      %v2726 = vpop.permute.xlu0 %2725
      %v2729 = vrot.slane %v2718, 1
      %2730 = vrot.lane.b32.xlu0 %v2729, 8
      %v2731 = vpop.permute.xlu0 %2730
      %v2733 = vsel %vm964, %v2715, %v2721
      %v2734 = vsel %vm412, %v2721, %v2726
      %vm2735 = vcmask 261120
      %v2736 = vsel %vm2735, %v2726, %v2731
      %2737 = vrot.lane.b32.xlu0 %v2716, 104
      %v2738 = vpop.permute.xlu0 %2737
      %2741 = vrot.lane.b32.xlu0 %v2715, 72
      %v2742 = vpop.permute.xlu0 %2741
      %2744 = vrot.lane.b32.xlu0 %v2729, 40
      %v2745 = vpop.permute.xlu0 %2744
      %2747 = vrot.lane.b32.xlu0 %v2724, 8
      %v2748 = vpop.permute.xlu0 %2747
      %v2750 = vsel %vm964, %v2738, %v2742
      %v2751 = vsel %vm412, %v2742, %v2745
      %v2752 = vsel %vm2735, %v2745, %v2748
      %v2753 = vld [vmem:[%s2648] sm:$0x1e]
      %v2754 = vld [vmem:[%s2023] sm:$0x1e]
      %2755 = vrot.lane.b32.xlu0 %v2718, 72
      %v2756 = vpop.permute.xlu0 %2755
      %2759 = vrot.lane.b32.xlu0 %v2753, 64
      %v2760 = vpop.permute.xlu0 %2759
      %2763 = vrot.lane.b32.xlu0 %v2754, 8
      %v2764 = vpop.permute.xlu0 %2763
      %v2766 = vsel %vm964, %v2717, %v2756
      %v2767 = vsel %vm412, %v2756, %v2760
      %v2768 = vsel %vm2735, %v2760, %v2764
      %2769 = vrot.lane.b32.xlu0 %v2718, 104
      %v2770 = vpop.permute.xlu0 %2769
      %2772 = vrot.lane.b32.xlu0 %v2717, 72
      %v2773 = vpop.permute.xlu0 %2772
      %2775 = vrot.lane.b32.xlu0 %v2754, 40
      %v2776 = vpop.permute.xlu0 %2775
      %2778 = vrot.lane.b32.xlu0 %v2753, 8
      %v2779 = vpop.permute.xlu0 %2778
      %v2781 = vsel %vm964, %v2770, %v2773
      %v2782 = vsel %vm412, %v2773, %v2776
      %v2783 = vsel %vm2735, %v2776, %v2779
      %v2787 = vrot.slane %v2750, 4
      %v2788 = vrot.slane %v2751, 4
      %v2789 = vrot.slane %v2752, 4
      %v2796 = vrot.slane %v2766, 1
      %v2797 = vrot.slane %v2767, 1
      %v2798 = vrot.slane %v2768, 1
      %v2805 = vrot.slane %v2781, 5
      %v2806 = vrot.slane %v2782, 5
      %v2807 = vrot.slane %v2783, 5
      %vm2811 = vcmask 1043456
      %v2812 = vsel %vm2811, %v2733, %v2787
      %v2813 = vsel %vm2811, %v2734, %v2788
      %v2814 = vsel %vm2811, %v2736, %v2789
      %v2815 = vsel %vm2811, %v2796, %v2805
      %v2816 = vsel %vm2811, %v2797, %v2806
      %v2817 = vsel %vm2811, %v2798, %v2807
      %v2818 = vpack.c.bf16 %v2815, %v2812
      %v2819 = vpack.c.bf16 %v2816, %v2813
      %v2820 = vpack.c.bf16 %v2817, %v2814
      %v2821 = vld [vmem:[%s4] sm:$0x1]
      %v2823 = vlaneseq
      %v2824 = vshrl.u32 %v2823, 7
      %v2825 = vsub.s32 0, %v2824
      %v2826 = vrot.slane %v2821, %v2825
      %v2876 = vunpack.c.l.b16 %v2667
      %v2877 = vunpack.c.l.b16 %v2668
      %v2878 = vunpack.c.l.b16 %v2669
      %v2879 = vunpack.c.l.b16 %v2670
      %v2880 = vunpack.c.l.b16 %v2671
      %v2881 = vunpack.c.l.b16 %v2672
      %v2882 = vunpack.c.l.b16 %v2673
      %v2883 = vunpack.c.l.b16 %v2674
      %v2884 = vunpack.c.l.b16 %v2675
      %v2885 = vunpack.c.l.b16 %v2676
      %v2886 = vunpack.c.l.b16 %v2677
      %v2887 = vunpack.c.l.b16 %v2678
      %v2888 = vunpack.c.l.b16 %v2679
      %v2889 = vunpack.c.l.b16 %v2680
      %v2890 = vunpack.c.l.b16 %v2681
      %v2891 = vunpack.c.l.b16 %v2682
      %v2892 = vunpack.c.l.b16 %v2683
      %v2893 = vunpack.c.l.b16 %v2684
      %v2894 = vunpack.c.l.b16 %v2685
      %v2895 = vunpack.c.l.b16 %v2686
      %v2896 = vunpack.c.l.b16 %v2687
      %v2897 = vunpack.c.l.b16 %v2688
      %v2898 = vunpack.c.l.b16 %v2689
      %v2899 = vunpack.c.l.b16 %v2690
      %v2900 = vunpack.c.l.b16 %v2691
      %v2901 = vunpack.c.l.b16 %v2692
      %v2902 = vunpack.c.l.b16 %v2693
      %v2903 = vunpack.c.l.b16 %v2694
      %v2904 = vunpack.c.l.b16 %v2695
      %v2905 = vunpack.c.l.b16 %v2696
      %v2906 = vunpack.c.l.b16 %v2697
      %v2907 = vunpack.c.l.b16 %v2698
      %v2908 = vunpack.c.l.b16 %v2699
      %v2909 = vunpack.c.l.b16 %v2700
      %v2910 = vunpack.c.l.b16 %v2701
      %v2911 = vunpack.c.l.b16 %v2702
      %v2912 = vunpack.c.l.b16 %v2703
      %v2913 = vunpack.c.l.b16 %v2704
      %v2914 = vunpack.c.l.b16 %v2705
      %v2915 = vunpack.c.l.b16 %v2706
      %v2916 = vunpack.c.l.b16 %v2707
      %v2917 = vunpack.c.l.b16 %v2708
      %v2918 = vunpack.c.l.b16 %v2709
      %v2919 = vunpack.c.l.b16 %v2710
      %v2920 = vunpack.c.l.b16 %v2711
      %v2921 = vunpack.c.l.b16 %v2712
      %v2922 = vunpack.c.l.b16 %v2713
      %v2923 = vunpack.c.l.b16 %v2714
      %v2924 = vpack.c.b16 %v2877, %v2876
      %v2925 = vpack.c.b16 %v2879, %v2878
      %v2926 = vpack.c.b16 %v2881, %v2880
      %v2927 = vpack.c.b16 %v2883, %v2882
      %v2928 = vpack.c.b16 %v2885, %v2884
      %v2929 = vpack.c.b16 %v2887, %v2886
      %v2930 = vpack.c.b16 %v2889, %v2888
      %v2931 = vpack.c.b16 %v2891, %v2890
      %v2932 = vpack.c.b16 %v2893, %v2892
      %v2933 = vpack.c.b16 %v2895, %v2894
      %v2934 = vpack.c.b16 %v2897, %v2896
      %v2935 = vpack.c.b16 %v2899, %v2898
      %v2936 = vpack.c.b16 %v2901, %v2900
      %v2937 = vpack.c.b16 %v2903, %v2902
      %v2938 = vpack.c.b16 %v2905, %v2904
      %v2939 = vpack.c.b16 %v2907, %v2906
      %v2940 = vpack.c.b16 %v2909, %v2908
      %v2941 = vpack.c.b16 %v2911, %v2910
      %v2942 = vpack.c.b16 %v2913, %v2912
      %v2943 = vpack.c.b16 %v2915, %v2914
      %v2944 = vpack.c.b16 %v2917, %v2916
      %v2945 = vpack.c.b16 %v2919, %v2918
      %v2946 = vpack.c.b16 %v2921, %v2920
      %v2947 = vpack.c.b16 %v2923, %v2922
      %2972 = vmatprep.subr.bf16.mxu0 0
      %2973 = vmatpush1.bf16.msra.mxu0 %v2924
      %2974 = vmatprep.subr.bf16.mxu0 0
      %2975 = vmatpush1.bf16.msra.mxu0 %v2925
      %2976 = vmatprep.subr.bf16.mxu0 0
      %2977 = vmatpush1.bf16.msra.mxu0 %v2926
      %2978 = vmatprep.subr.bf16.mxu0 0
      %2979 = vmatpush1.bf16.msra.mxu0 %v2927
      %2980 = vmatprep.subr.bf16.mxu0 0
      %2981 = vmatpush1.bf16.msra.mxu0 %v2928
      %2982 = vmatprep.subr.bf16.mxu0 0
      %2983 = vmatpush1.bf16.msra.mxu0 %v2929
      %2984 = vmatprep.subr.bf16.mxu0 0
      %2985 = vmatpush1.bf16.msra.mxu0 %v2930
      %2986 = vmatprep.subr.bf16.mxu0 0
      %2987 = vmatpush1.bf16.msra.mxu0 %v2931
      %2988 = vmatprep.subr.bf16.mxu0 0
      %2989 = vmatpush1.bf16.msra.mxu0 %v2932
      %2990 = vmatprep.subr.bf16.mxu0 0
      %2991 = vmatpush1.bf16.msra.mxu0 %v2933
      %2992 = vmatprep.subr.bf16.mxu0 0
      %2993 = vmatpush1.bf16.msra.mxu0 %v2934
      %2994 = vmatprep.subr.bf16.mxu0 0
      %2995 = vmatpush1.bf16.msra.mxu0 %v2935
      %2996 = vmatprep.subr.bf16.mxu0 0
      %2997 = vmatpush1.bf16.msra.mxu0 %v2936
      %2998 = vmatprep.subr.bf16.mxu0 0
      %2999 = vmatpush1.bf16.msra.mxu0 %v2937
      %3000 = vmatprep.subr.bf16.mxu0 0
      %3001 = vmatpush1.bf16.msra.mxu0 %v2938
      %3002 = vmatprep.subr.bf16.mxu0 0
      %3003 = vmatpush1.bf16.msra.mxu0 %v2939
      %3004 = vmatprep.mubr.bf16.mxu0 %v2819
      %3005 = vmatmul.mubr.bf16.gmra.mrb[0].mxu0 %v2818
      %v3006 = vpop.f32.mrb[0].mxu0
      %v3007 = vadd.f32 %v2826, %v3006
      %v3008 = vpop.f32.mrb[0].mxu0
      %v3009 = vpop.f32.mrb[0].mxu0
      %v3010 = vadd.f32 %v2826, %v3009
      %v3011 = vpop.f32.mrb[0].mxu0
      %3012 = vdwg.mxu0
      %3013 = vmatprep.subr.bf16.mxu0 0
      %3014 = vmatpush1.bf16.msra.mxu0 %v2940
      %3015 = vmatprep.subr.bf16.mxu0 0
      %3016 = vmatpush1.bf16.msra.mxu0 %v2941
      %3017 = vmatprep.subr.bf16.mxu0 0
      %3018 = vmatpush1.bf16.msra.mxu0 %v2942
      %3019 = vmatprep.subr.bf16.mxu0 0
      %3020 = vmatpush1.bf16.msra.mxu0 %v2943
      %3021 = vmatprep.subr.bf16.mxu0 0
      %3022 = vmatpush1.bf16.msra.mxu0 %v2944
      %3023 = vmatprep.subr.bf16.mxu0 0
      %3024 = vmatpush1.bf16.msra.mxu0 %v2945
      %3025 = vmatprep.subr.bf16.mxu0 0
      %3026 = vmatpush1.bf16.msra.mxu0 %v2946
      %3027 = vmatprep.subr.bf16.mxu0 0
      %3028 = vmatpush1.bf16.msra.mxu0 %v2947
      %3029 = vmatprep.subr.bf16.mxu0 0
      %3030 = vmatpush1.bf16.msra.mxu0 0
      %3031 = vmatprep.subr.bf16.mxu0 0
      %3032 = vmatpush1.bf16.msra.mxu0 0
      %3033 = vmatprep.subr.bf16.mxu0 0
      %3034 = vmatpush1.bf16.msra.mxu0 0
      %3035 = vmatprep.subr.bf16.mxu0 0
      %3036 = vmatpush1.bf16.msra.mxu0 0
      %3037 = vmatprep.subr.bf16.mxu0 0
      %3038 = vmatpush1.bf16.msra.mxu0 0
      %3039 = vmatprep.subr.bf16.mxu0 0
      %3040 = vmatpush1.bf16.msra.mxu0 0
      %3041 = vmatprep.subr.bf16.mxu0 0
      %3042 = vmatpush1.bf16.msra.mxu0 0
      %3043 = vmatprep.subr.bf16.mxu0 0
      %3044 = vmatpush1.bf16.msra.mxu0 0
      %3045 = vmatprep.mubr.bf16.mxu0 0
      %3046 = vmatmul.mubr.bf16.gmra.mrb[0].mxu0 %v2820
      %v3047 = vpop.f32.mrb[0].mxu0
      %v3048 = vadd.f32 %v3007, %v3047
      %v3049 = vpop.f32.mrb[0].mxu0
      %v3050 = vpop.f32.mrb[0].mxu0
      %v3051 = vadd.f32 %v3010, %v3050
      %v3052 = vpop.f32.mrb[0].mxu0
      %3053 = vdwg.mxu0
      %v3054 = vmax.f32 %v3048, 0.0
      %v3055 = vmax.f32 %v3051, 0.0
      %3057 = vrot.lane.b32.xlu0 %v3054, 12
      %v3058 = vpop.permute.xlu0 %3057
      %vm3060 = vcmask 486496
      %3061 = vst.msk [vmem:[#allocation3 + $0x1] sm:$0xf] %vm3060, %v3058
      %s3062 = scalar_lea.vmem [#allocation3], 16
      %vm3063 = vcmask 490596
      %3064 = vst.msk [vmem:[%s3062 - $0x3] sm:$0xf0] %vm3063, %v3058
      %3066 = vrot.lane.b32.xlu0 %v3055, 12
      %v3067 = vpop.permute.xlu0 %3066
      %s3069 = scalar_lea.vmem [#allocation3], 64
      %3070 = vst.msk [vmem:[%s3069 + $0x1] sm:$0xf] %vm3060, %v3067
      %s3071 = scalar_lea.vmem [#allocation3], 80
      %3072 = vst.msk [vmem:[%s3071 - $0x3] sm:$0xf0] %vm3063, %v3067
      %s3073 = scalar_lea.vmem %s3, 192
      %v3074 = vld [vmem:[%s3073] sm:$0xf]
      %v3075 = vld [vmem:[%s3073 + $0x4] sm:$0xf]
      %v3076 = vld [vmem:[%s3073 + $0x8] sm:$0xf]
      %v3077 = vld [vmem:[%s3073 + $0xc] sm:$0xf]
      %v3078 = vld [vmem:[%s3073 + $0x10] sm:$0xf]
      %v3079 = vld [vmem:[%s3073 + $0x14] sm:$0xf]
      %v3080 = vld [vmem:[%s3073 + $0x18] sm:$0xf]
      %v3081 = vld [vmem:[%s3073 + $0x1c] sm:$0xf]
      %v3082 = vld [vmem:[%s3073 + $0x20] sm:$0xf]
      %v3083 = vld [vmem:[%s3073 + $0x24] sm:$0xf]
      %v3084 = vld [vmem:[%s3073 + $0x28] sm:$0xf]
      %v3085 = vld [vmem:[%s3073 + $0x2c] sm:$0xf]
      %v3086 = vld [vmem:[%s3073 + $0x30] sm:$0xf]
      %v3087 = vld [vmem:[%s3073 + $0x34] sm:$0xf]
      %v3088 = vld [vmem:[%s3073 + $0x38] sm:$0xf]
      %v3089 = vld [vmem:[%s3073 + $0x3c] sm:$0xf]
      %v3090 = vld [vmem:[%s3073 + $0x40] sm:$0xf]
      %v3091 = vld [vmem:[%s3073 + $0x44] sm:$0xf]
      %v3092 = vld [vmem:[%s3073 + $0x48] sm:$0xf]
      %v3093 = vld [vmem:[%s3073 + $0x4c] sm:$0xf]
      %v3094 = vld [vmem:[%s3073 + $0x50] sm:$0xf]
      %v3095 = vld [vmem:[%s3073 + $0x54] sm:$0xf]
      %v3096 = vld [vmem:[%s3073 + $0x58] sm:$0xf]
      %v3097 = vld [vmem:[%s3073 + $0x5c] sm:$0xf]
      %v3098 = vld [vmem:[%s3073 + $0x60] sm:$0xf]
      %v3099 = vld [vmem:[%s3073 + $0x64] sm:$0xf]
      %v3100 = vld [vmem:[%s3073 + $0x68] sm:$0xf]
      %v3101 = vld [vmem:[%s3073 + $0x6c] sm:$0xf]
      %v3102 = vld [vmem:[%s3073 + $0x70] sm:$0xf]
      %v3103 = vld [vmem:[%s3073 + $0x74] sm:$0xf]
      %v3104 = vld [vmem:[%s3073 + $0x78] sm:$0xf]
      %v3105 = vld [vmem:[%s3073 + $0x7c] sm:$0xf]
      %v3106 = vld [vmem:[%s3073 + $0x80] sm:$0xf]
      %v3107 = vld [vmem:[%s3073 + $0x84] sm:$0xf]
      %v3108 = vld [vmem:[%s3073 + $0x88] sm:$0xf]
      %v3109 = vld [vmem:[%s3073 + $0x8c] sm:$0xf]
      %v3110 = vld [vmem:[%s3073 + $0x90] sm:$0xf]
      %v3111 = vld [vmem:[%s3073 + $0x94] sm:$0xf]
      %v3112 = vld [vmem:[%s3073 + $0x98] sm:$0xf]
      %v3113 = vld [vmem:[%s3073 + $0x9c] sm:$0xf]
      %v3114 = vld [vmem:[%s3073 + $0xa0] sm:$0xf]
      %v3115 = vld [vmem:[%s3073 + $0xa4] sm:$0xf]
      %v3116 = vld [vmem:[%s3073 + $0xa8] sm:$0xf]
      %v3117 = vld [vmem:[%s3073 + $0xac] sm:$0xf]
      %v3118 = vld [vmem:[%s3073 + $0xb0] sm:$0xf]
      %v3119 = vld [vmem:[%s3073 + $0xb4] sm:$0xf]
      %v3120 = vld [vmem:[%s3073 + $0xb8] sm:$0xf]
      %v3121 = vld [vmem:[%s3073 + $0xbc] sm:$0xf]
      %v3122 = vld [vmem:[%s2023] sm:$0xf]
      %v3123 = vld [vmem:[%s2648] sm:$0xf]
      %v3124 = vld [vmem:[#allocation2] sm:$0x1e]
      %v3125 = vld [vmem:[%s1421] sm:$0x1e]
      %3127 = vrot.lane.b32.xlu0 %v3122, 104
      %v3128 = vpop.permute.xlu0 %3127
      %3131 = vrot.lane.b32.xlu0 %v3123, 72
      %v3132 = vpop.permute.xlu0 %3131
      %v3135 = vrot.slane %v3124, 1
      %3136 = vrot.lane.b32.xlu0 %v3135, 40
      %v3137 = vpop.permute.xlu0 %3136
      %v3140 = vrot.slane %v3125, 1
      %3141 = vrot.lane.b32.xlu0 %v3140, 8
      %v3142 = vpop.permute.xlu0 %3141
      %v3144 = vsel %vm964, %v3128, %v3132
      %v3145 = vsel %vm412, %v3132, %v3137
      %v3146 = vsel %vm2735, %v3137, %v3142
      %v3147 = vld [vmem:[%s2023 + $0x8] sm:$0xf]
      %v3148 = vld [vmem:[#allocation2 + $0x8] sm:$0x1e]
      %3149 = vrot.lane.b32.xlu0 %v3123, 104
      %v3150 = vpop.permute.xlu0 %3149
      %3153 = vrot.lane.b32.xlu0 %v3122, 48
      %v3154 = vpop.permute.xlu0 %3153
      %3155 = vrot.lane.b32.xlu0 %v3147, 48
      %v3156 = vpop.permute.xlu0 %3155
      %vm3157 = vcmask 392192
      %v3158 = vsel %vm3157, %v3154, %v3156
      %3161 = vrot.lane.b32.xlu0 %v3140, 40
      %v3162 = vpop.permute.xlu0 %3161
      %v3165 = vrot.slane %v3148, 1
      %3166 = vrot.lane.b32.xlu0 %v3135, 112
      %v3167 = vpop.permute.xlu0 %3166
      %3168 = vrot.lane.b32.xlu0 %v3165, 112
      %v3169 = vpop.permute.xlu0 %3168
      %vm3170 = vcmask 916480
      %v3171 = vsel %vm3170, %v3167, %v3169
      %v3173 = vsel %vm964, %v3150, %v3154
      %v3174 = vsel %vm412, %v3158, %v3162
      %v3175 = vsel %vm2735, %v3162, %v3171
      %v3176 = vld [vmem:[%s2023] sm:$0x1e]
      %v3177 = vld [vmem:[%s2648] sm:$0x1e]
      %3178 = vrot.lane.b32.xlu0 %v3124, 104
      %v3179 = vpop.permute.xlu0 %3178
      %3181 = vrot.lane.b32.xlu0 %v3125, 72
      %v3182 = vpop.permute.xlu0 %3181
      %3185 = vrot.lane.b32.xlu0 %v3176, 40
      %v3186 = vpop.permute.xlu0 %3185
      %3189 = vrot.lane.b32.xlu0 %v3177, 8
      %v3190 = vpop.permute.xlu0 %3189
      %v3192 = vsel %vm964, %v3179, %v3182
      %v3193 = vsel %vm412, %v3182, %v3186
      %v3194 = vsel %vm2735, %v3186, %v3190
      %v3195 = vld [vmem:[%s2023 + $0x8] sm:$0x1e]
      %3196 = vrot.lane.b32.xlu0 %v3125, 104
      %v3197 = vpop.permute.xlu0 %3196
      %3199 = vrot.lane.b32.xlu0 %v3124, 48
      %v3200 = vpop.permute.xlu0 %3199
      %3201 = vrot.lane.b32.xlu0 %v3148, 48
      %v3202 = vpop.permute.xlu0 %3201
      %v3203 = vsel %vm3157, %v3200, %v3202
      %3206 = vrot.lane.b32.xlu0 %v3177, 40
      %v3207 = vpop.permute.xlu0 %3206
      %3210 = vrot.lane.b32.xlu0 %v3176, 112
      %v3211 = vpop.permute.xlu0 %3210
      %3212 = vrot.lane.b32.xlu0 %v3195, 112
      %v3213 = vpop.permute.xlu0 %3212
      %v3214 = vsel %vm3170, %v3211, %v3213
      %v3216 = vsel %vm964, %v3197, %v3200
      %v3217 = vsel %vm412, %v3203, %v3207
      %v3218 = vsel %vm2735, %v3207, %v3214
      %v3222 = vrot.slane %v3173, 4
      %v3223 = vrot.slane %v3174, 4
      %v3224 = vrot.slane %v3175, 4
      %v3231 = vrot.slane %v3192, 1
      %v3232 = vrot.slane %v3193, 1
      %v3233 = vrot.slane %v3194, 1
      %v3240 = vrot.slane %v3216, 5
      %v3241 = vrot.slane %v3217, 5
      %v3242 = vrot.slane %v3218, 5
      %v3246 = vsel %vm2811, %v3144, %v3222
      %v3247 = vsel %vm2811, %v3145, %v3223
      %v3248 = vsel %vm2811, %v3146, %v3224
      %v3249 = vsel %vm2811, %v3231, %v3240
      %v3250 = vsel %vm2811, %v3232, %v3241
      %v3251 = vsel %vm2811, %v3233, %v3242
      %v3252 = vpack.c.bf16 %v3249, %v3246
      %v3253 = vpack.c.bf16 %v3250, %v3247
      %v3254 = vpack.c.bf16 %v3251, %v3248
      %v3255 = vld [vmem:[%s4] sm:$0x1]
      %v3257 = vlaneseq
      %v3258 = vshrl.u32 %v3257, 7
      %v3259 = vsub.s32 0, %v3258
      %v3260 = vrot.slane %v3255, %v3259
      %v3310 = vunpack.c.l.b16 %v3074
      %v3311 = vunpack.c.l.b16 %v3075
      %v3312 = vunpack.c.l.b16 %v3076
      %v3313 = vunpack.c.l.b16 %v3077
      %v3314 = vunpack.c.l.b16 %v3078
      %v3315 = vunpack.c.l.b16 %v3079
      %v3316 = vunpack.c.l.b16 %v3080
      %v3317 = vunpack.c.l.b16 %v3081
      %v3318 = vunpack.c.l.b16 %v3082
      %v3319 = vunpack.c.l.b16 %v3083
      %v3320 = vunpack.c.l.b16 %v3084
      %v3321 = vunpack.c.l.b16 %v3085
      %v3322 = vunpack.c.l.b16 %v3086
      %v3323 = vunpack.c.l.b16 %v3087
      %v3324 = vunpack.c.l.b16 %v3088
      %v3325 = vunpack.c.l.b16 %v3089
      %v3326 = vunpack.c.l.b16 %v3090
      %v3327 = vunpack.c.l.b16 %v3091
      %v3328 = vunpack.c.l.b16 %v3092
      %v3329 = vunpack.c.l.b16 %v3093
      %v3330 = vunpack.c.l.b16 %v3094
      %v3331 = vunpack.c.l.b16 %v3095
      %v3332 = vunpack.c.l.b16 %v3096
      %v3333 = vunpack.c.l.b16 %v3097
      %v3334 = vunpack.c.l.b16 %v3098
      %v3335 = vunpack.c.l.b16 %v3099
      %v3336 = vunpack.c.l.b16 %v3100
      %v3337 = vunpack.c.l.b16 %v3101
      %v3338 = vunpack.c.l.b16 %v3102
      %v3339 = vunpack.c.l.b16 %v3103
      %v3340 = vunpack.c.l.b16 %v3104
      %v3341 = vunpack.c.l.b16 %v3105
      %v3342 = vunpack.c.l.b16 %v3106
      %v3343 = vunpack.c.l.b16 %v3107
      %v3344 = vunpack.c.l.b16 %v3108
      %v3345 = vunpack.c.l.b16 %v3109
      %v3346 = vunpack.c.l.b16 %v3110
      %v3347 = vunpack.c.l.b16 %v3111
      %v3348 = vunpack.c.l.b16 %v3112
      %v3349 = vunpack.c.l.b16 %v3113
      %v3350 = vunpack.c.l.b16 %v3114
      %v3351 = vunpack.c.l.b16 %v3115
      %v3352 = vunpack.c.l.b16 %v3116
      %v3353 = vunpack.c.l.b16 %v3117
      %v3354 = vunpack.c.l.b16 %v3118
      %v3355 = vunpack.c.l.b16 %v3119
      %v3356 = vunpack.c.l.b16 %v3120
      %v3357 = vunpack.c.l.b16 %v3121
      %v3358 = vpack.c.b16 %v3311, %v3310
      %v3359 = vpack.c.b16 %v3313, %v3312
      %v3360 = vpack.c.b16 %v3315, %v3314
      %v3361 = vpack.c.b16 %v3317, %v3316
      %v3362 = vpack.c.b16 %v3319, %v3318
      %v3363 = vpack.c.b16 %v3321, %v3320
      %v3364 = vpack.c.b16 %v3323, %v3322
      %v3365 = vpack.c.b16 %v3325, %v3324
      %v3366 = vpack.c.b16 %v3327, %v3326
      %v3367 = vpack.c.b16 %v3329, %v3328
      %v3368 = vpack.c.b16 %v3331, %v3330
      %v3369 = vpack.c.b16 %v3333, %v3332
      %v3370 = vpack.c.b16 %v3335, %v3334
      %v3371 = vpack.c.b16 %v3337, %v3336
      %v3372 = vpack.c.b16 %v3339, %v3338
      %v3373 = vpack.c.b16 %v3341, %v3340
      %v3374 = vpack.c.b16 %v3343, %v3342
      %v3375 = vpack.c.b16 %v3345, %v3344
      %v3376 = vpack.c.b16 %v3347, %v3346
      %v3377 = vpack.c.b16 %v3349, %v3348
      %v3378 = vpack.c.b16 %v3351, %v3350
      %v3379 = vpack.c.b16 %v3353, %v3352
      %v3380 = vpack.c.b16 %v3355, %v3354
      %v3381 = vpack.c.b16 %v3357, %v3356
      %3406 = vmatprep.subr.bf16.mxu0 0
      %3407 = vmatpush1.bf16.msra.mxu0 %v3358
      %3408 = vmatprep.subr.bf16.mxu0 0
      %3409 = vmatpush1.bf16.msra.mxu0 %v3359
      %3410 = vmatprep.subr.bf16.mxu0 0
      %3411 = vmatpush1.bf16.msra.mxu0 %v3360
      %3412 = vmatprep.subr.bf16.mxu0 0
      %3413 = vmatpush1.bf16.msra.mxu0 %v3361
      %3414 = vmatprep.subr.bf16.mxu0 0
      %3415 = vmatpush1.bf16.msra.mxu0 %v3362
      %3416 = vmatprep.subr.bf16.mxu0 0
      %3417 = vmatpush1.bf16.msra.mxu0 %v3363
      %3418 = vmatprep.subr.bf16.mxu0 0
      %3419 = vmatpush1.bf16.msra.mxu0 %v3364
      %3420 = vmatprep.subr.bf16.mxu0 0
      %3421 = vmatpush1.bf16.msra.mxu0 %v3365
      %3422 = vmatprep.subr.bf16.mxu0 0
      %3423 = vmatpush1.bf16.msra.mxu0 %v3366
      %3424 = vmatprep.subr.bf16.mxu0 0
      %3425 = vmatpush1.bf16.msra.mxu0 %v3367
      %3426 = vmatprep.subr.bf16.mxu0 0
      %3427 = vmatpush1.bf16.msra.mxu0 %v3368
      %3428 = vmatprep.subr.bf16.mxu0 0
      %3429 = vmatpush1.bf16.msra.mxu0 %v3369
      %3430 = vmatprep.subr.bf16.mxu0 0
      %3431 = vmatpush1.bf16.msra.mxu0 %v3370
      %3432 = vmatprep.subr.bf16.mxu0 0
      %3433 = vmatpush1.bf16.msra.mxu0 %v3371
      %3434 = vmatprep.subr.bf16.mxu0 0
      %3435 = vmatpush1.bf16.msra.mxu0 %v3372
      %3436 = vmatprep.subr.bf16.mxu0 0
      %3437 = vmatpush1.bf16.msra.mxu0 %v3373
      %3438 = vmatprep.mubr.bf16.mxu0 %v3253
      %3439 = vmatmul.mubr.bf16.gmra.mrb[0].mxu0 %v3252
      %v3440 = vpop.f32.mrb[0].mxu0
      %v3441 = vadd.f32 %v3260, %v3440
      %v3442 = vpop.f32.mrb[0].mxu0
      %v3443 = vpop.f32.mrb[0].mxu0
      %v3444 = vadd.f32 %v3260, %v3443
      %v3445 = vpop.f32.mrb[0].mxu0
      %3446 = vdwg.mxu0
      %3447 = vmatprep.subr.bf16.mxu0 0
      %3448 = vmatpush1.bf16.msra.mxu0 %v3374
      %3449 = vmatprep.subr.bf16.mxu0 0
      %3450 = vmatpush1.bf16.msra.mxu0 %v3375
      %3451 = vmatprep.subr.bf16.mxu0 0
      %3452 = vmatpush1.bf16.msra.mxu0 %v3376
      %3453 = vmatprep.subr.bf16.mxu0 0
      %3454 = vmatpush1.bf16.msra.mxu0 %v3377
      %3455 = vmatprep.subr.bf16.mxu0 0
      %3456 = vmatpush1.bf16.msra.mxu0 %v3378
      %3457 = vmatprep.subr.bf16.mxu0 0
      %3458 = vmatpush1.bf16.msra.mxu0 %v3379
      %3459 = vmatprep.subr.bf16.mxu0 0
      %3460 = vmatpush1.bf16.msra.mxu0 %v3380
      %3461 = vmatprep.subr.bf16.mxu0 0
      %3462 = vmatpush1.bf16.msra.mxu0 %v3381
      %3463 = vmatprep.subr.bf16.mxu0 0
      %3464 = vmatpush1.bf16.msra.mxu0 0
      %3465 = vmatprep.subr.bf16.mxu0 0
      %3466 = vmatpush1.bf16.msra.mxu0 0
      %3467 = vmatprep.subr.bf16.mxu0 0
      %3468 = vmatpush1.bf16.msra.mxu0 0
      %3469 = vmatprep.subr.bf16.mxu0 0
      %3470 = vmatpush1.bf16.msra.mxu0 0
      %3471 = vmatprep.subr.bf16.mxu0 0
      %3472 = vmatpush1.bf16.msra.mxu0 0
      %3473 = vmatprep.subr.bf16.mxu0 0
      %3474 = vmatpush1.bf16.msra.mxu0 0
      %3475 = vmatprep.subr.bf16.mxu0 0
      %3476 = vmatpush1.bf16.msra.mxu0 0
      %3477 = vmatprep.subr.bf16.mxu0 0
      %3478 = vmatpush1.bf16.msra.mxu0 0
      %3479 = vmatprep.mubr.bf16.mxu0 0
      %3480 = vmatmul.mubr.bf16.gmra.mrb[0].mxu0 %v3254
      %v3481 = vpop.f32.mrb[0].mxu0
      %v3482 = vadd.f32 %v3441, %v3481
      %v3483 = vpop.f32.mrb[0].mxu0
      %v3484 = vpop.f32.mrb[0].mxu0
      %v3485 = vadd.f32 %v3444, %v3484
      %v3486 = vpop.f32.mrb[0].mxu0
      %3487 = vdwg.mxu0
      %v3488 = vmax.f32 %v3482, 0.0
      %v3489 = vmax.f32 %v3485, 0.0
      %3491 = vrot.lane.b32.xlu0 %v3488, 12
      %v3492 = vpop.permute.xlu0 %3491
      %s3494 = scalar_lea.vmem [#allocation3], 8
      %3495 = vst.msk [vmem:[%s3494 + $0x1] sm:$0xf] %vm3060, %v3492
      %s3496 = scalar_lea.vmem [#allocation3], 24
      %3497 = vst.msk [vmem:[%s3496 - $0x3] sm:$0xf0] %vm3063, %v3492
      %3499 = vrot.lane.b32.xlu0 %v3489, 12
      %v3500 = vpop.permute.xlu0 %3499
      %s3502 = scalar_lea.vmem [#allocation3], 72
      %3503 = vst.msk [vmem:[%s3502 + $0x1] sm:$0xf] %vm3060, %v3500
      %s3504 = scalar_lea.vmem [#allocation3], 88
      %3505 = vst.msk [vmem:[%s3504 - $0x3] sm:$0xf0] %vm3063, %v3500
      %s3506 = scalar_lea.vmem %s3, 384
      %v3507 = vld [vmem:[%s3506] sm:$0xf]
      %v3508 = vld [vmem:[%s3506 + $0x4] sm:$0xf]
      %v3509 = vld [vmem:[%s3506 + $0x8] sm:$0xf]
      %v3510 = vld [vmem:[%s3506 + $0xc] sm:$0xf]
      %v3511 = vld [vmem:[%s3506 + $0x10] sm:$0xf]
      %v3512 = vld [vmem:[%s3506 + $0x14] sm:$0xf]
      %v3513 = vld [vmem:[%s3506 + $0x18] sm:$0xf]
      %v3514 = vld [vmem:[%s3506 + $0x1c] sm:$0xf]
      %v3515 = vld [vmem:[%s3506 + $0x20] sm:$0xf]
      %v3516 = vld [vmem:[%s3506 + $0x24] sm:$0xf]
      %v3517 = vld [vmem:[%s3506 + $0x28] sm:$0xf]
      %v3518 = vld [vmem:[%s3506 + $0x2c] sm:$0xf]
      %v3519 = vld [vmem:[%s3506 + $0x30] sm:$0xf]
      %v3520 = vld [vmem:[%s3506 + $0x34] sm:$0xf]
      %v3521 = vld [vmem:[%s3506 + $0x38] sm:$0xf]
      %v3522 = vld [vmem:[%s3506 + $0x3c] sm:$0xf]
      %v3523 = vld [vmem:[%s3506 + $0x40] sm:$0xf]
      %v3524 = vld [vmem:[%s3506 + $0x44] sm:$0xf]
      %v3525 = vld [vmem:[%s3506 + $0x48] sm:$0xf]
      %v3526 = vld [vmem:[%s3506 + $0x4c] sm:$0xf]
      %v3527 = vld [vmem:[%s3506 + $0x50] sm:$0xf]
      %v3528 = vld [vmem:[%s3506 + $0x54] sm:$0xf]
      %v3529 = vld [vmem:[%s3506 + $0x58] sm:$0xf]
      %v3530 = vld [vmem:[%s3506 + $0x5c] sm:$0xf]
      %v3531 = vld [vmem:[%s3506 + $0x60] sm:$0xf]
      %v3532 = vld [vmem:[%s3506 + $0x64] sm:$0xf]
      %v3533 = vld [vmem:[%s3506 + $0x68] sm:$0xf]
      %v3534 = vld [vmem:[%s3506 + $0x6c] sm:$0xf]
      %v3535 = vld [vmem:[%s3506 + $0x70] sm:$0xf]
      %v3536 = vld [vmem:[%s3506 + $0x74] sm:$0xf]
      %v3537 = vld [vmem:[%s3506 + $0x78] sm:$0xf]
      %v3538 = vld [vmem:[%s3506 + $0x7c] sm:$0xf]
      %v3539 = vld [vmem:[%s3506 + $0x80] sm:$0xf]
      %v3540 = vld [vmem:[%s3506 + $0x84] sm:$0xf]
      %v3541 = vld [vmem:[%s3506 + $0x88] sm:$0xf]
      %v3542 = vld [vmem:[%s3506 + $0x8c] sm:$0xf]
      %v3543 = vld [vmem:[%s3506 + $0x90] sm:$0xf]
      %v3544 = vld [vmem:[%s3506 + $0x94] sm:$0xf]
      %v3545 = vld [vmem:[%s3506 + $0x98] sm:$0xf]
      %v3546 = vld [vmem:[%s3506 + $0x9c] sm:$0xf]
      %v3547 = vld [vmem:[%s3506 + $0xa0] sm:$0xf]
      %v3548 = vld [vmem:[%s3506 + $0xa4] sm:$0xf]
      %v3549 = vld [vmem:[%s3506 + $0xa8] sm:$0xf]
      %v3550 = vld [vmem:[%s3506 + $0xac] sm:$0xf]
      %v3551 = vld [vmem:[%s3506 + $0xb0] sm:$0xf]
      %v3552 = vld [vmem:[%s3506 + $0xb4] sm:$0xf]
      %v3553 = vld [vmem:[%s3506 + $0xb8] sm:$0xf]
      %v3554 = vld [vmem:[%s3506 + $0xbc] sm:$0xf]
      %v3555 = vld [vmem:[%s1421] sm:$0x1e]
      %v3556 = vld [vmem:[#allocation2] sm:$0x1e]
      %v3557 = vld [vmem:[%s2648] sm:$0x1e]
      %v3558 = vld [vmem:[%s2023] sm:$0x1e]
      %3560 = vrot.lane.b32.xlu0 %v3556, 72
      %v3561 = vpop.permute.xlu0 %3560
      %3564 = vrot.lane.b32.xlu0 %v3557, 64
      %v3565 = vpop.permute.xlu0 %3564
      %3568 = vrot.lane.b32.xlu0 %v3558, 8
      %v3569 = vpop.permute.xlu0 %3568
      %v3571 = vsel %vm964, %v3555, %v3561
      %v3572 = vsel %vm412, %v3561, %v3565
      %v3573 = vsel %vm2735, %v3565, %v3569
      %3574 = vrot.lane.b32.xlu0 %v3556, 104
      %v3575 = vpop.permute.xlu0 %3574
      %3578 = vrot.lane.b32.xlu0 %v3555, 72
      %v3579 = vpop.permute.xlu0 %3578
      %3581 = vrot.lane.b32.xlu0 %v3558, 40
      %v3582 = vpop.permute.xlu0 %3581
      %3584 = vrot.lane.b32.xlu0 %v3557, 8
      %v3585 = vpop.permute.xlu0 %3584
      %v3587 = vsel %vm964, %v3575, %v3579
      %v3588 = vsel %vm412, %v3579, %v3582
      %v3589 = vsel %vm2735, %v3582, %v3585
      %v3590 = vld [vmem:[%s1421] sm:$0x3c]
      %v3591 = vld [vmem:[#allocation2] sm:$0x3c]
      %3592 = vrot.lane.b32.xlu0 %v3558, 72
      %v3593 = vpop.permute.xlu0 %3592
      %v3596 = vrot.slane %v3590, 1
      %3597 = vrot.lane.b32.xlu0 %v3596, 64
      %v3598 = vpop.permute.xlu0 %3597
      %v3601 = vrot.slane %v3591, 1
      %3602 = vrot.lane.b32.xlu0 %v3601, 8
      %v3603 = vpop.permute.xlu0 %3602
      %v3605 = vsel %vm964, %v3557, %v3593
      %v3606 = vsel %vm412, %v3593, %v3598
      %v3607 = vsel %vm2735, %v3598, %v3603
      %3608 = vrot.lane.b32.xlu0 %v3558, 104
      %v3609 = vpop.permute.xlu0 %3608
      %3611 = vrot.lane.b32.xlu0 %v3557, 72
      %v3612 = vpop.permute.xlu0 %3611
      %3614 = vrot.lane.b32.xlu0 %v3601, 40
      %v3615 = vpop.permute.xlu0 %3614
      %3617 = vrot.lane.b32.xlu0 %v3596, 8
      %v3618 = vpop.permute.xlu0 %3617
      %v3620 = vsel %vm964, %v3609, %v3612
      %v3621 = vsel %vm412, %v3612, %v3615
      %v3622 = vsel %vm2735, %v3615, %v3618
      %v3626 = vrot.slane %v3571, 1
      %v3627 = vrot.slane %v3572, 1
      %v3628 = vrot.slane %v3573, 1
      %v3635 = vrot.slane %v3587, 5
      %v3636 = vrot.slane %v3588, 5
      %v3637 = vrot.slane %v3589, 5
      %v3644 = vrot.slane %v3605, 1
      %v3645 = vrot.slane %v3606, 1
      %v3646 = vrot.slane %v3607, 1
      %v3653 = vrot.slane %v3620, 5
      %v3654 = vrot.slane %v3621, 5
      %v3655 = vrot.slane %v3622, 5
      %v3659 = vsel %vm2811, %v3626, %v3635
      %v3660 = vsel %vm2811, %v3627, %v3636
      %v3661 = vsel %vm2811, %v3628, %v3637
      %v3662 = vsel %vm2811, %v3644, %v3653
      %v3663 = vsel %vm2811, %v3645, %v3654
      %v3664 = vsel %vm2811, %v3646, %v3655
      %v3665 = vpack.c.bf16 %v3662, %v3659
      %v3666 = vpack.c.bf16 %v3663, %v3660
      %v3667 = vpack.c.bf16 %v3664, %v3661
      %v3668 = vld [vmem:[%s4] sm:$0x1]
      %v3670 = vlaneseq
      %v3671 = vshrl.u32 %v3670, 7
      %v3672 = vsub.s32 0, %v3671
      %v3673 = vrot.slane %v3668, %v3672
      %v3723 = vunpack.c.l.b16 %v3507
      %v3724 = vunpack.c.l.b16 %v3508
      %v3725 = vunpack.c.l.b16 %v3509
      %v3726 = vunpack.c.l.b16 %v3510
      %v3727 = vunpack.c.l.b16 %v3511
      %v3728 = vunpack.c.l.b16 %v3512
      %v3729 = vunpack.c.l.b16 %v3513
      %v3730 = vunpack.c.l.b16 %v3514
      %v3731 = vunpack.c.l.b16 %v3515
      %v3732 = vunpack.c.l.b16 %v3516
      %v3733 = vunpack.c.l.b16 %v3517
      %v3734 = vunpack.c.l.b16 %v3518
      %v3735 = vunpack.c.l.b16 %v3519
      %v3736 = vunpack.c.l.b16 %v3520
      %v3737 = vunpack.c.l.b16 %v3521
      %v3738 = vunpack.c.l.b16 %v3522
      %v3739 = vunpack.c.l.b16 %v3523
      %v3740 = vunpack.c.l.b16 %v3524
      %v3741 = vunpack.c.l.b16 %v3525
      %v3742 = vunpack.c.l.b16 %v3526
      %v3743 = vunpack.c.l.b16 %v3527
      %v3744 = vunpack.c.l.b16 %v3528
      %v3745 = vunpack.c.l.b16 %v3529
      %v3746 = vunpack.c.l.b16 %v3530
      %v3747 = vunpack.c.l.b16 %v3531
      %v3748 = vunpack.c.l.b16 %v3532
      %v3749 = vunpack.c.l.b16 %v3533
      %v3750 = vunpack.c.l.b16 %v3534
      %v3751 = vunpack.c.l.b16 %v3535
      %v3752 = vunpack.c.l.b16 %v3536
      %v3753 = vunpack.c.l.b16 %v3537
      %v3754 = vunpack.c.l.b16 %v3538
      %v3755 = vunpack.c.l.b16 %v3539
      %v3756 = vunpack.c.l.b16 %v3540
      %v3757 = vunpack.c.l.b16 %v3541
      %v3758 = vunpack.c.l.b16 %v3542
      %v3759 = vunpack.c.l.b16 %v3543
      %v3760 = vunpack.c.l.b16 %v3544
      %v3761 = vunpack.c.l.b16 %v3545
      %v3762 = vunpack.c.l.b16 %v3546
      %v3763 = vunpack.c.l.b16 %v3547
      %v3764 = vunpack.c.l.b16 %v3548
      %v3765 = vunpack.c.l.b16 %v3549
      %v3766 = vunpack.c.l.b16 %v3550
      %v3767 = vunpack.c.l.b16 %v3551
      %v3768 = vunpack.c.l.b16 %v3552
      %v3769 = vunpack.c.l.b16 %v3553
      %v3770 = vunpack.c.l.b16 %v3554
      %v3771 = vpack.c.b16 %v3724, %v3723
      %v3772 = vpack.c.b16 %v3726, %v3725
      %v3773 = vpack.c.b16 %v3728, %v3727
      %v3774 = vpack.c.b16 %v3730, %v3729
      %v3775 = vpack.c.b16 %v3732, %v3731
      %v3776 = vpack.c.b16 %v3734, %v3733
      %v3777 = vpack.c.b16 %v3736, %v3735
      %v3778 = vpack.c.b16 %v3738, %v3737
      %v3779 = vpack.c.b16 %v3740, %v3739
      %v3780 = vpack.c.b16 %v3742, %v3741
      %v3781 = vpack.c.b16 %v3744, %v3743
      %v3782 = vpack.c.b16 %v3746, %v3745
      %v3783 = vpack.c.b16 %v3748, %v3747
      %v3784 = vpack.c.b16 %v3750, %v3749
      %v3785 = vpack.c.b16 %v3752, %v3751
      %v3786 = vpack.c.b16 %v3754, %v3753
      %v3787 = vpack.c.b16 %v3756, %v3755
      %v3788 = vpack.c.b16 %v3758, %v3757
      %v3789 = vpack.c.b16 %v3760, %v3759
      %v3790 = vpack.c.b16 %v3762, %v3761
      %v3791 = vpack.c.b16 %v3764, %v3763
      %v3792 = vpack.c.b16 %v3766, %v3765
      %v3793 = vpack.c.b16 %v3768, %v3767
      %v3794 = vpack.c.b16 %v3770, %v3769
      %3819 = vmatprep.subr.bf16.mxu0 0
      %3820 = vmatpush1.bf16.msra.mxu0 %v3771
      %3821 = vmatprep.subr.bf16.mxu0 0
      %3822 = vmatpush1.bf16.msra.mxu0 %v3772
      %3823 = vmatprep.subr.bf16.mxu0 0
      %3824 = vmatpush1.bf16.msra.mxu0 %v3773
      %3825 = vmatprep.subr.bf16.mxu0 0
      %3826 = vmatpush1.bf16.msra.mxu0 %v3774
      %3827 = vmatprep.subr.bf16.mxu0 0
      %3828 = vmatpush1.bf16.msra.mxu0 %v3775
      %3829 = vmatprep.subr.bf16.mxu0 0
      %3830 = vmatpush1.bf16.msra.mxu0 %v3776
      %3831 = vmatprep.subr.bf16.mxu0 0
      %3832 = vmatpush1.bf16.msra.mxu0 %v3777
      %3833 = vmatprep.subr.bf16.mxu0 0
      %3834 = vmatpush1.bf16.msra.mxu0 %v3778
      %3835 = vmatprep.subr.bf16.mxu0 0
      %3836 = vmatpush1.bf16.msra.mxu0 %v3779
      %3837 = vmatprep.subr.bf16.mxu0 0
      %3838 = vmatpush1.bf16.msra.mxu0 %v3780
      %3839 = vmatprep.subr.bf16.mxu0 0
      %3840 = vmatpush1.bf16.msra.mxu0 %v3781
      %3841 = vmatprep.subr.bf16.mxu0 0
      %3842 = vmatpush1.bf16.msra.mxu0 %v3782
      %3843 = vmatprep.subr.bf16.mxu0 0
      %3844 = vmatpush1.bf16.msra.mxu0 %v3783
      %3845 = vmatprep.subr.bf16.mxu0 0
      %3846 = vmatpush1.bf16.msra.mxu0 %v3784
      %3847 = vmatprep.subr.bf16.mxu0 0
      %3848 = vmatpush1.bf16.msra.mxu0 %v3785
      %3849 = vmatprep.subr.bf16.mxu0 0
      %3850 = vmatpush1.bf16.msra.mxu0 %v3786
      %3851 = vmatprep.mubr.bf16.mxu0 %v3666
      %3852 = vmatmul.mubr.bf16.gmra.mrb[0].mxu0 %v3665
      %v3853 = vpop.f32.mrb[0].mxu0
      %v3854 = vadd.f32 %v3673, %v3853
      %v3855 = vpop.f32.mrb[0].mxu0
      %v3856 = vpop.f32.mrb[0].mxu0
      %v3857 = vadd.f32 %v3673, %v3856
      %v3858 = vpop.f32.mrb[0].mxu0
      %3859 = vdwg.mxu0
      %3860 = vmatprep.subr.bf16.mxu0 0
      %3861 = vmatpush1.bf16.msra.mxu0 %v3787
      %3862 = vmatprep.subr.bf16.mxu0 0
      %3863 = vmatpush1.bf16.msra.mxu0 %v3788
      %3864 = vmatprep.subr.bf16.mxu0 0
      %3865 = vmatpush1.bf16.msra.mxu0 %v3789
      %3866 = vmatprep.subr.bf16.mxu0 0
      %3867 = vmatpush1.bf16.msra.mxu0 %v3790
      %3868 = vmatprep.subr.bf16.mxu0 0
      %3869 = vmatpush1.bf16.msra.mxu0 %v3791
      %3870 = vmatprep.subr.bf16.mxu0 0
      %3871 = vmatpush1.bf16.msra.mxu0 %v3792
      %3872 = vmatprep.subr.bf16.mxu0 0
      %3873 = vmatpush1.bf16.msra.mxu0 %v3793
      %3874 = vmatprep.subr.bf16.mxu0 0
      %3875 = vmatpush1.bf16.msra.mxu0 %v3794
      %3876 = vmatprep.subr.bf16.mxu0 0
      %3877 = vmatpush1.bf16.msra.mxu0 0
      %3878 = vmatprep.subr.bf16.mxu0 0
      %3879 = vmatpush1.bf16.msra.mxu0 0
      %3880 = vmatprep.subr.bf16.mxu0 0
      %3881 = vmatpush1.bf16.msra.mxu0 0
      %3882 = vmatprep.subr.bf16.mxu0 0
      %3883 = vmatpush1.bf16.msra.mxu0 0
      %3884 = vmatprep.subr.bf16.mxu0 0
      %3885 = vmatpush1.bf16.msra.mxu0 0
      %3886 = vmatprep.subr.bf16.mxu0 0
      %3887 = vmatpush1.bf16.msra.mxu0 0
      %3888 = vmatprep.subr.bf16.mxu0 0
      %3889 = vmatpush1.bf16.msra.mxu0 0
      %3890 = vmatprep.subr.bf16.mxu0 0
      %3891 = vmatpush1.bf16.msra.mxu0 0
      %3892 = vmatprep.mubr.bf16.mxu0 0
      %3893 = vmatmul.mubr.bf16.gmra.mrb[0].mxu0 %v3667
      %v3894 = vpop.f32.mrb[0].mxu0
      %v3895 = vadd.f32 %v3854, %v3894
      %v3896 = vpop.f32.mrb[0].mxu0
      %v3897 = vpop.f32.mrb[0].mxu0
      %v3898 = vadd.f32 %v3857, %v3897
      %v3899 = vpop.f32.mrb[0].mxu0
      %3900 = vdwg.mxu0
      %v3901 = vmax.f32 %v3895, 0.0
      %v3902 = vmax.f32 %v3898, 0.0
      %3904 = vrot.lane.b32.xlu0 %v3901, 12
      %v3905 = vpop.permute.xlu0 %3904
      %s3907 = scalar_lea.vmem [#allocation3], 32
      %3908 = vst.msk [vmem:[%s3907 + $0x1] sm:$0xf] %vm3060, %v3905
      %s3909 = scalar_lea.vmem [#allocation3], 48
      %3910 = vst.msk [vmem:[%s3909 - $0x3] sm:$0xf0] %vm3063, %v3905
      %3912 = vrot.lane.b32.xlu0 %v3902, 12
      %v3913 = vpop.permute.xlu0 %3912
      %s3915 = scalar_lea.vmem [#allocation3], 96
      %3916 = vst.msk [vmem:[%s3915 + $0x1] sm:$0xf] %vm3060, %v3913
      %s3917 = scalar_lea.vmem [#allocation3], 112
      %3918 = vst.msk [vmem:[%s3917 - $0x3] sm:$0xf0] %vm3063, %v3913
      %s3919 = scalar_lea.vmem %s3, 576
      %v3920 = vld [vmem:[%s3919] sm:$0xf]
      %v3921 = vld [vmem:[%s3919 + $0x4] sm:$0xf]
      %v3922 = vld [vmem:[%s3919 + $0x8] sm:$0xf]
      %v3923 = vld [vmem:[%s3919 + $0xc] sm:$0xf]
      %v3924 = vld [vmem:[%s3919 + $0x10] sm:$0xf]
      %v3925 = vld [vmem:[%s3919 + $0x14] sm:$0xf]
      %v3926 = vld [vmem:[%s3919 + $0x18] sm:$0xf]
      %v3927 = vld [vmem:[%s3919 + $0x1c] sm:$0xf]
      %v3928 = vld [vmem:[%s3919 + $0x20] sm:$0xf]
      %v3929 = vld [vmem:[%s3919 + $0x24] sm:$0xf]
      %v3930 = vld [vmem:[%s3919 + $0x28] sm:$0xf]
      %v3931 = vld [vmem:[%s3919 + $0x2c] sm:$0xf]
      %v3932 = vld [vmem:[%s3919 + $0x30] sm:$0xf]
      %v3933 = vld [vmem:[%s3919 + $0x34] sm:$0xf]
      %v3934 = vld [vmem:[%s3919 + $0x38] sm:$0xf]
      %v3935 = vld [vmem:[%s3919 + $0x3c] sm:$0xf]
      %v3936 = vld [vmem:[%s3919 + $0x40] sm:$0xf]
      %v3937 = vld [vmem:[%s3919 + $0x44] sm:$0xf]
      %v3938 = vld [vmem:[%s3919 + $0x48] sm:$0xf]
      %v3939 = vld [vmem:[%s3919 + $0x4c] sm:$0xf]
      %v3940 = vld [vmem:[%s3919 + $0x50] sm:$0xf]
      %v3941 = vld [vmem:[%s3919 + $0x54] sm:$0xf]
      %v3942 = vld [vmem:[%s3919 + $0x58] sm:$0xf]
      %v3943 = vld [vmem:[%s3919 + $0x5c] sm:$0xf]
      %v3944 = vld [vmem:[%s3919 + $0x60] sm:$0xf]
      %v3945 = vld [vmem:[%s3919 + $0x64] sm:$0xf]
      %v3946 = vld [vmem:[%s3919 + $0x68] sm:$0xf]
      %v3947 = vld [vmem:[%s3919 + $0x6c] sm:$0xf]
      %v3948 = vld [vmem:[%s3919 + $0x70] sm:$0xf]
      %v3949 = vld [vmem:[%s3919 + $0x74] sm:$0xf]
      %v3950 = vld [vmem:[%s3919 + $0x78] sm:$0xf]
      %v3951 = vld [vmem:[%s3919 + $0x7c] sm:$0xf]
      %v3952 = vld [vmem:[%s3919 + $0x80] sm:$0xf]
      %v3953 = vld [vmem:[%s3919 + $0x84] sm:$0xf]
      %v3954 = vld [vmem:[%s3919 + $0x88] sm:$0xf]
      %v3955 = vld [vmem:[%s3919 + $0x8c] sm:$0xf]
      %v3956 = vld [vmem:[%s3919 + $0x90] sm:$0xf]
      %v3957 = vld [vmem:[%s3919 + $0x94] sm:$0xf]
      %v3958 = vld [vmem:[%s3919 + $0x98] sm:$0xf]
      %v3959 = vld [vmem:[%s3919 + $0x9c] sm:$0xf]
      %v3960 = vld [vmem:[%s3919 + $0xa0] sm:$0xf]
      %v3961 = vld [vmem:[%s3919 + $0xa4] sm:$0xf]
      %v3962 = vld [vmem:[%s3919 + $0xa8] sm:$0xf]
      %v3963 = vld [vmem:[%s3919 + $0xac] sm:$0xf]
      %v3964 = vld [vmem:[%s3919 + $0xb0] sm:$0xf]
      %v3965 = vld [vmem:[%s3919 + $0xb4] sm:$0xf]
      %v3966 = vld [vmem:[%s3919 + $0xb8] sm:$0xf]
      %v3967 = vld [vmem:[%s3919 + $0xbc] sm:$0xf]
      %v3968 = vld [vmem:[#allocation2] sm:$0x1e]
      %v3969 = vld [vmem:[%s1421] sm:$0x1e]
      %v3970 = vld [vmem:[%s2023] sm:$0x1e]
      %v3971 = vld [vmem:[%s2648] sm:$0x1e]
      %3973 = vrot.lane.b32.xlu0 %v3968, 104
      %v3974 = vpop.permute.xlu0 %3973
      %3977 = vrot.lane.b32.xlu0 %v3969, 72
      %v3978 = vpop.permute.xlu0 %3977
      %3981 = vrot.lane.b32.xlu0 %v3970, 40
      %v3982 = vpop.permute.xlu0 %3981
      %3985 = vrot.lane.b32.xlu0 %v3971, 8
      %v3986 = vpop.permute.xlu0 %3985
      %v3988 = vsel %vm964, %v3974, %v3978
      %v3989 = vsel %vm412, %v3978, %v3982
      %v3990 = vsel %vm2735, %v3982, %v3986
      %v3991 = vld [vmem:[#allocation2 + $0x8] sm:$0x1e]
      %v3992 = vld [vmem:[%s2023 + $0x8] sm:$0x1e]
      %3993 = vrot.lane.b32.xlu0 %v3969, 104
      %v3994 = vpop.permute.xlu0 %3993
      %3997 = vrot.lane.b32.xlu0 %v3968, 48
      %v3998 = vpop.permute.xlu0 %3997
      %3999 = vrot.lane.b32.xlu0 %v3991, 48
      %v4000 = vpop.permute.xlu0 %3999
      %v4001 = vsel %vm3157, %v3998, %v4000
      %4004 = vrot.lane.b32.xlu0 %v3971, 40
      %v4005 = vpop.permute.xlu0 %4004
      %4008 = vrot.lane.b32.xlu0 %v3970, 112
      %v4009 = vpop.permute.xlu0 %4008
      %4010 = vrot.lane.b32.xlu0 %v3992, 112
      %v4011 = vpop.permute.xlu0 %4010
      %v4012 = vsel %vm3170, %v4009, %v4011
      %v4014 = vsel %vm964, %v3994, %v3998
      %v4015 = vsel %vm412, %v4001, %v4005
      %v4016 = vsel %vm2735, %v4005, %v4012
      %v4017 = vld [vmem:[#allocation2] sm:$0x3c]
      %v4018 = vld [vmem:[%s1421] sm:$0x3c]
      %4019 = vrot.lane.b32.xlu0 %v3970, 104
      %v4020 = vpop.permute.xlu0 %4019
      %4022 = vrot.lane.b32.xlu0 %v3971, 72
      %v4023 = vpop.permute.xlu0 %4022
      %v4026 = vrot.slane %v4017, 1
      %4027 = vrot.lane.b32.xlu0 %v4026, 40
      %v4028 = vpop.permute.xlu0 %4027
      %v4031 = vrot.slane %v4018, 1
      %4032 = vrot.lane.b32.xlu0 %v4031, 8
      %v4033 = vpop.permute.xlu0 %4032
      %v4035 = vsel %vm964, %v4020, %v4023
      %v4036 = vsel %vm412, %v4023, %v4028
      %v4037 = vsel %vm2735, %v4028, %v4033
      %v4038 = vld [vmem:[#allocation2 + $0x8] sm:$0x3c]
      %4039 = vrot.lane.b32.xlu0 %v3971, 104
      %v4040 = vpop.permute.xlu0 %4039
      %4042 = vrot.lane.b32.xlu0 %v3970, 48
      %v4043 = vpop.permute.xlu0 %4042
      %4044 = vrot.lane.b32.xlu0 %v3992, 48
      %v4045 = vpop.permute.xlu0 %4044
      %v4046 = vsel %vm3157, %v4043, %v4045
      %4049 = vrot.lane.b32.xlu0 %v4031, 40
      %v4050 = vpop.permute.xlu0 %4049
      %v4053 = vrot.slane %v4038, 1
      %4054 = vrot.lane.b32.xlu0 %v4026, 112
      %v4055 = vpop.permute.xlu0 %4054
      %4056 = vrot.lane.b32.xlu0 %v4053, 112
      %v4057 = vpop.permute.xlu0 %4056
      %v4058 = vsel %vm3170, %v4055, %v4057
      %v4060 = vsel %vm964, %v4040, %v4043
      %v4061 = vsel %vm412, %v4046, %v4050
      %v4062 = vsel %vm2735, %v4050, %v4058
      %v4066 = vrot.slane %v3988, 1
      %v4067 = vrot.slane %v3989, 1
      %v4068 = vrot.slane %v3990, 1
      %v4075 = vrot.slane %v4014, 5
      %v4076 = vrot.slane %v4015, 5
      %v4077 = vrot.slane %v4016, 5
      %v4084 = vrot.slane %v4035, 1
      %v4085 = vrot.slane %v4036, 1
      %v4086 = vrot.slane %v4037, 1
      %v4093 = vrot.slane %v4060, 5
      %v4094 = vrot.slane %v4061, 5
      %v4095 = vrot.slane %v4062, 5
      %v4099 = vsel %vm2811, %v4066, %v4075
      %v4100 = vsel %vm2811, %v4067, %v4076
      %v4101 = vsel %vm2811, %v4068, %v4077
      %v4102 = vsel %vm2811, %v4084, %v4093
      %v4103 = vsel %vm2811, %v4085, %v4094
      %v4104 = vsel %vm2811, %v4086, %v4095
      %v4105 = vpack.c.bf16 %v4102, %v4099
      %v4106 = vpack.c.bf16 %v4103, %v4100
      %v4107 = vpack.c.bf16 %v4104, %v4101
      %v4108 = vld [vmem:[%s4] sm:$0x1]
      %v4110 = vlaneseq
      %v4111 = vshrl.u32 %v4110, 7
      %v4112 = vsub.s32 0, %v4111
      %v4113 = vrot.slane %v4108, %v4112
      %v4163 = vunpack.c.l.b16 %v3920
      %v4164 = vunpack.c.l.b16 %v3921
      %v4165 = vunpack.c.l.b16 %v3922
      %v4166 = vunpack.c.l.b16 %v3923
      %v4167 = vunpack.c.l.b16 %v3924
      %v4168 = vunpack.c.l.b16 %v3925
      %v4169 = vunpack.c.l.b16 %v3926
      %v4170 = vunpack.c.l.b16 %v3927
      %v4171 = vunpack.c.l.b16 %v3928
      %v4172 = vunpack.c.l.b16 %v3929
      %v4173 = vunpack.c.l.b16 %v3930
      %v4174 = vunpack.c.l.b16 %v3931
      %v4175 = vunpack.c.l.b16 %v3932
      %v4176 = vunpack.c.l.b16 %v3933
      %v4177 = vunpack.c.l.b16 %v3934
      %v4178 = vunpack.c.l.b16 %v3935
      %v4179 = vunpack.c.l.b16 %v3936
      %v4180 = vunpack.c.l.b16 %v3937
      %v4181 = vunpack.c.l.b16 %v3938
      %v4182 = vunpack.c.l.b16 %v3939
      %v4183 = vunpack.c.l.b16 %v3940
      %v4184 = vunpack.c.l.b16 %v3941
      %v4185 = vunpack.c.l.b16 %v3942
      %v4186 = vunpack.c.l.b16 %v3943
      %v4187 = vunpack.c.l.b16 %v3944
      %v4188 = vunpack.c.l.b16 %v3945
      %v4189 = vunpack.c.l.b16 %v3946
      %v4190 = vunpack.c.l.b16 %v3947
      %v4191 = vunpack.c.l.b16 %v3948
      %v4192 = vunpack.c.l.b16 %v3949
      %v4193 = vunpack.c.l.b16 %v3950
      %v4194 = vunpack.c.l.b16 %v3951
      %v4195 = vunpack.c.l.b16 %v3952
      %v4196 = vunpack.c.l.b16 %v3953
      %v4197 = vunpack.c.l.b16 %v3954
      %v4198 = vunpack.c.l.b16 %v3955
      %v4199 = vunpack.c.l.b16 %v3956
      %v4200 = vunpack.c.l.b16 %v3957
      %v4201 = vunpack.c.l.b16 %v3958
      %v4202 = vunpack.c.l.b16 %v3959
      %v4203 = vunpack.c.l.b16 %v3960
      %v4204 = vunpack.c.l.b16 %v3961
      %v4205 = vunpack.c.l.b16 %v3962
      %v4206 = vunpack.c.l.b16 %v3963
      %v4207 = vunpack.c.l.b16 %v3964
      %v4208 = vunpack.c.l.b16 %v3965
      %v4209 = vunpack.c.l.b16 %v3966
      %v4210 = vunpack.c.l.b16 %v3967
      %v4211 = vpack.c.b16 %v4164, %v4163
      %v4212 = vpack.c.b16 %v4166, %v4165
      %v4213 = vpack.c.b16 %v4168, %v4167
      %v4214 = vpack.c.b16 %v4170, %v4169
      %v4215 = vpack.c.b16 %v4172, %v4171
      %v4216 = vpack.c.b16 %v4174, %v4173
      %v4217 = vpack.c.b16 %v4176, %v4175
      %v4218 = vpack.c.b16 %v4178, %v4177
      %v4219 = vpack.c.b16 %v4180, %v4179
      %v4220 = vpack.c.b16 %v4182, %v4181
      %v4221 = vpack.c.b16 %v4184, %v4183
      %v4222 = vpack.c.b16 %v4186, %v4185
      %v4223 = vpack.c.b16 %v4188, %v4187
      %v4224 = vpack.c.b16 %v4190, %v4189
      %v4225 = vpack.c.b16 %v4192, %v4191
      %v4226 = vpack.c.b16 %v4194, %v4193
      %v4227 = vpack.c.b16 %v4196, %v4195
      %v4228 = vpack.c.b16 %v4198, %v4197
      %v4229 = vpack.c.b16 %v4200, %v4199
      %v4230 = vpack.c.b16 %v4202, %v4201
      %v4231 = vpack.c.b16 %v4204, %v4203
      %v4232 = vpack.c.b16 %v4206, %v4205
      %v4233 = vpack.c.b16 %v4208, %v4207
      %v4234 = vpack.c.b16 %v4210, %v4209
      %4259 = vmatprep.subr.bf16.mxu0 0
      %4260 = vmatpush1.bf16.msra.mxu0 %v4211
      %4261 = vmatprep.subr.bf16.mxu0 0
      %4262 = vmatpush1.bf16.msra.mxu0 %v4212
      %4263 = vmatprep.subr.bf16.mxu0 0
      %4264 = vmatpush1.bf16.msra.mxu0 %v4213
      %4265 = vmatprep.subr.bf16.mxu0 0
      %4266 = vmatpush1.bf16.msra.mxu0 %v4214
      %4267 = vmatprep.subr.bf16.mxu0 0
      %4268 = vmatpush1.bf16.msra.mxu0 %v4215
      %4269 = vmatprep.subr.bf16.mxu0 0
      %4270 = vmatpush1.bf16.msra.mxu0 %v4216
      %4271 = vmatprep.subr.bf16.mxu0 0
      %4272 = vmatpush1.bf16.msra.mxu0 %v4217
      %4273 = vmatprep.subr.bf16.mxu0 0
      %4274 = vmatpush1.bf16.msra.mxu0 %v4218
      %4275 = vmatprep.subr.bf16.mxu0 0
      %4276 = vmatpush1.bf16.msra.mxu0 %v4219
      %4277 = vmatprep.subr.bf16.mxu0 0
      %4278 = vmatpush1.bf16.msra.mxu0 %v4220
      %4279 = vmatprep.subr.bf16.mxu0 0
      %4280 = vmatpush1.bf16.msra.mxu0 %v4221
      %4281 = vmatprep.subr.bf16.mxu0 0
      %4282 = vmatpush1.bf16.msra.mxu0 %v4222
      %4283 = vmatprep.subr.bf16.mxu0 0
      %4284 = vmatpush1.bf16.msra.mxu0 %v4223
      %4285 = vmatprep.subr.bf16.mxu0 0
      %4286 = vmatpush1.bf16.msra.mxu0 %v4224
      %4287 = vmatprep.subr.bf16.mxu0 0
      %4288 = vmatpush1.bf16.msra.mxu0 %v4225
      %4289 = vmatprep.subr.bf16.mxu0 0
      %4290 = vmatpush1.bf16.msra.mxu0 %v4226
      %4291 = vmatprep.mubr.bf16.mxu0 %v4106
      %4292 = vmatmul.mubr.bf16.gmra.mrb[0].mxu0 %v4105
      %v4293 = vpop.f32.mrb[0].mxu0
      %v4294 = vadd.f32 %v4113, %v4293
      %v4295 = vpop.f32.mrb[0].mxu0
      %v4296 = vpop.f32.mrb[0].mxu0
      %v4297 = vadd.f32 %v4113, %v4296
      %v4298 = vpop.f32.mrb[0].mxu0
      %4299 = vdwg.mxu0
      %4300 = vmatprep.subr.bf16.mxu0 0
      %4301 = vmatpush1.bf16.msra.mxu0 %v4227
      %4302 = vmatprep.subr.bf16.mxu0 0
      %4303 = vmatpush1.bf16.msra.mxu0 %v4228
      %4304 = vmatprep.subr.bf16.mxu0 0
      %4305 = vmatpush1.bf16.msra.mxu0 %v4229
      %4306 = vmatprep.subr.bf16.mxu0 0
      %4307 = vmatpush1.bf16.msra.mxu0 %v4230
      %4308 = vmatprep.subr.bf16.mxu0 0
      %4309 = vmatpush1.bf16.msra.mxu0 %v4231
      %4310 = vmatprep.subr.bf16.mxu0 0
      %4311 = vmatpush1.bf16.msra.mxu0 %v4232
      %4312 = vmatprep.subr.bf16.mxu0 0
      %4313 = vmatpush1.bf16.msra.mxu0 %v4233
      %4314 = vmatprep.subr.bf16.mxu0 0
      %4315 = vmatpush1.bf16.msra.mxu0 %v4234
      %4316 = vmatprep.subr.bf16.mxu0 0
      %4317 = vmatpush1.bf16.msra.mxu0 0
      %4318 = vmatprep.subr.bf16.mxu0 0
      %4319 = vmatpush1.bf16.msra.mxu0 0
      %4320 = vmatprep.subr.bf16.mxu0 0
      %4321 = vmatpush1.bf16.msra.mxu0 0
      %4322 = vmatprep.subr.bf16.mxu0 0
      %4323 = vmatpush1.bf16.msra.mxu0 0
      %4324 = vmatprep.subr.bf16.mxu0 0
      %4325 = vmatpush1.bf16.msra.mxu0 0
      %4326 = vmatprep.subr.bf16.mxu0 0
      %4327 = vmatpush1.bf16.msra.mxu0 0
      %4328 = vmatprep.subr.bf16.mxu0 0
      %4329 = vmatpush1.bf16.msra.mxu0 0
      %4330 = vmatprep.subr.bf16.mxu0 0
      %4331 = vmatpush1.bf16.msra.mxu0 0
      %4332 = vmatprep.mubr.bf16.mxu0 0
      %4333 = vmatmul.mubr.bf16.gmra.mrb[0].mxu0 %v4107
      %v4334 = vpop.f32.mrb[0].mxu0
      %v4335 = vadd.f32 %v4294, %v4334
      %v4336 = vpop.f32.mrb[0].mxu0
      %v4337 = vpop.f32.mrb[0].mxu0
      %v4338 = vadd.f32 %v4297, %v4337
      %v4339 = vpop.f32.mrb[0].mxu0
      %4340 = vdwg.mxu0
      %v4341 = vmax.f32 %v4335, 0.0
      %v4342 = vmax.f32 %v4338, 0.0
      %4344 = vrot.lane.b32.xlu0 %v4341, 12
      %v4345 = vpop.permute.xlu0 %4344
      %s4347 = scalar_lea.vmem [#allocation3], 40
      %4348 = vst.msk [vmem:[%s4347 + $0x1] sm:$0xf] %vm3060, %v4345
      %s4349 = scalar_lea.vmem [#allocation3], 56
      %4350 = vst.msk [vmem:[%s4349 - $0x3] sm:$0xf0] %vm3063, %v4345
      %4352 = vrot.lane.b32.xlu0 %v4342, 12
      %v4353 = vpop.permute.xlu0 %4352
      %s4355 = scalar_lea.vmem [#allocation3], 104
      %4356 = vst.msk [vmem:[%s4355 + $0x1] sm:$0xf] %vm3060, %v4353
      %s4357 = scalar_lea.vmem [#allocation3], 120
      %4358 = vst.msk [vmem:[%s4357 - $0x3] sm:$0xf0] %vm3063, %v4353
      %v4359 = vld [vmem:[%s5] sm:$0xf]
      %v4360 = vld [vmem:[%s5 + $0x4] sm:$0xf]
      %v4361 = vld [vmem:[%s5 + $0x8] sm:$0xf]
      %v4362 = vld [vmem:[%s5 + $0xc] sm:$0xf]
      %v4363 = vld [vmem:[%s5 + $0x10] sm:$0xf]
      %v4364 = vld [vmem:[%s5 + $0x14] sm:$0xf]
      %v4365 = vld [vmem:[%s5 + $0x18] sm:$0xf]
      %v4366 = vld [vmem:[%s5 + $0x1c] sm:$0xf]
      %v4367 = vld [vmem:[%s5 + $0x20] sm:$0xf]
      %v4368 = vld [vmem:[%s5 + $0x24] sm:$0xf]
      %v4369 = vld [vmem:[%s5 + $0x28] sm:$0xf]
      %v4370 = vld [vmem:[%s5 + $0x2c] sm:$0xf]
      %v4371 = vld [vmem:[%s5 + $0x30] sm:$0xf]
      %v4372 = vld [vmem:[%s5 + $0x34] sm:$0xf]
      %v4373 = vld [vmem:[%s5 + $0x38] sm:$0xf]
      %v4374 = vld [vmem:[%s5 + $0x3c] sm:$0xf]
      %v4375 = vld [vmem:[%s5 + $0x40] sm:$0xf]
      %v4376 = vld [vmem:[%s5 + $0x44] sm:$0xf]
      %v4377 = vld [vmem:[%s5 + $0x48] sm:$0xf]
      %v4378 = vld [vmem:[%s5 + $0x4c] sm:$0xf]
      %v4379 = vld [vmem:[%s5 + $0x50] sm:$0xf]
      %v4380 = vld [vmem:[%s5 + $0x54] sm:$0xf]
      %v4381 = vld [vmem:[%s5 + $0x58] sm:$0xf]
      %v4382 = vld [vmem:[%s5 + $0x5c] sm:$0xf]
      %v4383 = vld [vmem:[%s4357] sm:$0xf]
      %v4384 = vld [vmem:[%s3915] sm:$0xf]
      %v4385 = vld [vmem:[%s3496 + $0x1] sm:$0xf]
      %v4386 = vld [vmem:[#allocation3 + $0x1] sm:$0xf]
      %4388 = vrot.lane.b32.xlu0 %v4384, 36
      %v4389 = vpop.permute.xlu0 %4388
      %4392 = vrot.lane.b32.xlu0 %v4385, 96
      %v4393 = vpop.permute.xlu0 %4392
      %4396 = vrot.lane.b32.xlu0 %v4386, 4
      %v4397 = vpop.permute.xlu0 %4396
      %v4399 = vsel %vm3157, %v4383, %v4389
      %v4400 = vsel %vm964, %v4399, %v4393
      %v4401 = vsel %vm395, %v4393, %v4397
      %v4402 = vld [vmem:[%s4355] sm:$0xf]
      %v4403 = vld [vmem:[%s3494 + $0x1] sm:$0xf]
      %4404 = vrot.lane.b32.xlu0 %v4384, 116
      %v4405 = vpop.permute.xlu0 %4404
      %4408 = vrot.lane.b32.xlu0 %v4402, 36
      %v4409 = vpop.permute.xlu0 %4408
      %4411 = vrot.lane.b32.xlu0 %v4386, 84
      %v4412 = vpop.permute.xlu0 %4411
      %4415 = vrot.lane.b32.xlu0 %v4403, 4
      %v4416 = vpop.permute.xlu0 %4415
      %v4418 = vsel %vm3157, %v4405, %v4409
      %v4419 = vsel %vm964, %v4418, %v4412
      %v4420 = vsel %vm395, %v4412, %v4416
      %v4421 = vld [vmem:[%s3917] sm:$0xf]
      %v4422 = vld [vmem:[%s3062 + $0x1] sm:$0xf]
      %4423 = vrot.lane.b32.xlu0 %v4402, 116
      %v4424 = vpop.permute.xlu0 %4423
      %4427 = vrot.lane.b32.xlu0 %v4421, 36
      %v4428 = vpop.permute.xlu0 %4427
      %4430 = vrot.lane.b32.xlu0 %v4403, 84
      %v4431 = vpop.permute.xlu0 %4430
      %4434 = vrot.lane.b32.xlu0 %v4422, 4
      %v4435 = vpop.permute.xlu0 %4434
      %v4437 = vsel %vm3157, %v4424, %v4428
      %v4438 = vsel %vm964, %v4437, %v4431
      %v4439 = vsel %vm395, %v4431, %v4435
      %4440 = vrot.lane.b32.xlu0 %v4421, 116
      %v4441 = vpop.permute.xlu0 %4440
      %4444 = vrot.lane.b32.xlu0 %v4383, 36
      %v4445 = vpop.permute.xlu0 %4444
      %4447 = vrot.lane.b32.xlu0 %v4422, 84
      %v4448 = vpop.permute.xlu0 %4447
      %4450 = vrot.lane.b32.xlu0 %v4385, 4
      %v4451 = vpop.permute.xlu0 %4450
      %v4453 = vsel %vm3157, %v4441, %v4445
      %v4454 = vsel %vm964, %v4453, %v4448
      %v4455 = vsel %vm395, %v4448, %v4451
      %v4456 = vld [vmem:[%s4349 + $0x1] sm:$0xf]
      %v4457 = vld [vmem:[%s3907 + $0x1] sm:$0xf]
      %4458 = vrot.lane.b32.xlu0 %v4386, 36
      %v4459 = vpop.permute.xlu0 %4458
      %4462 = vrot.lane.b32.xlu0 %v4456, 96
      %v4463 = vpop.permute.xlu0 %4462
      %4466 = vrot.lane.b32.xlu0 %v4457, 4
      %v4467 = vpop.permute.xlu0 %4466
      %v4469 = vsel %vm3157, %v4385, %v4459
      %v4470 = vsel %vm964, %v4469, %v4463
      %v4471 = vsel %vm395, %v4463, %v4467
      %v4472 = vld [vmem:[%s4347 + $0x1] sm:$0xf]
      %4473 = vrot.lane.b32.xlu0 %v4386, 116
      %v4474 = vpop.permute.xlu0 %4473
      %4476 = vrot.lane.b32.xlu0 %v4403, 36
      %v4477 = vpop.permute.xlu0 %4476
      %4479 = vrot.lane.b32.xlu0 %v4457, 84
      %v4480 = vpop.permute.xlu0 %4479
      %4483 = vrot.lane.b32.xlu0 %v4472, 4
      %v4484 = vpop.permute.xlu0 %4483
      %v4486 = vsel %vm3157, %v4474, %v4477
      %v4487 = vsel %vm964, %v4486, %v4480
      %v4488 = vsel %vm395, %v4480, %v4484
      %v4489 = vld [vmem:[%s3909 + $0x1] sm:$0xf]
      %4490 = vrot.lane.b32.xlu0 %v4403, 116
      %v4491 = vpop.permute.xlu0 %4490
      %4493 = vrot.lane.b32.xlu0 %v4422, 36
      %v4494 = vpop.permute.xlu0 %4493
      %4496 = vrot.lane.b32.xlu0 %v4472, 84
      %v4497 = vpop.permute.xlu0 %4496
      %4500 = vrot.lane.b32.xlu0 %v4489, 4
      %v4501 = vpop.permute.xlu0 %4500
      %v4503 = vsel %vm3157, %v4491, %v4494
      %v4504 = vsel %vm964, %v4503, %v4497
      %v4505 = vsel %vm395, %v4497, %v4501
      %4506 = vrot.lane.b32.xlu0 %v4422, 116
      %v4507 = vpop.permute.xlu0 %4506
      %4509 = vrot.lane.b32.xlu0 %v4385, 36
      %v4510 = vpop.permute.xlu0 %4509
      %4512 = vrot.lane.b32.xlu0 %v4489, 84
      %v4513 = vpop.permute.xlu0 %4512
      %4515 = vrot.lane.b32.xlu0 %v4456, 4
      %v4516 = vpop.permute.xlu0 %4515
      %v4518 = vsel %vm3157, %v4507, %v4510
      %v4519 = vsel %vm964, %v4518, %v4513
      %v4520 = vsel %vm395, %v4513, %v4516
      %v4521 = vld [vmem:[%s3504 + $0x1] sm:$0xf]
      %v4522 = vld [vmem:[%s3069 + $0x1] sm:$0xf]
      %4523 = vrot.lane.b32.xlu0 %v4457, 36
      %v4524 = vpop.permute.xlu0 %4523
      %4527 = vrot.lane.b32.xlu0 %v4521, 96
      %v4528 = vpop.permute.xlu0 %4527
      %4531 = vrot.lane.b32.xlu0 %v4522, 4
      %v4532 = vpop.permute.xlu0 %4531
      %v4534 = vsel %vm3157, %v4456, %v4524
      %v4535 = vsel %vm964, %v4534, %v4528
      %v4536 = vsel %vm395, %v4528, %v4532
      %v4537 = vld [vmem:[%s3502 + $0x1] sm:$0xf]
      %4538 = vrot.lane.b32.xlu0 %v4457, 116
      %v4539 = vpop.permute.xlu0 %4538
      %4541 = vrot.lane.b32.xlu0 %v4472, 36
      %v4542 = vpop.permute.xlu0 %4541
      %4544 = vrot.lane.b32.xlu0 %v4522, 84
      %v4545 = vpop.permute.xlu0 %4544
      %4548 = vrot.lane.b32.xlu0 %v4537, 4
      %v4549 = vpop.permute.xlu0 %4548
      %v4551 = vsel %vm3157, %v4539, %v4542
      %v4552 = vsel %vm964, %v4551, %v4545
      %v4553 = vsel %vm395, %v4545, %v4549
      %v4554 = vld [vmem:[%s3071 + $0x1] sm:$0xf]
      %4555 = vrot.lane.b32.xlu0 %v4472, 116
      %v4556 = vpop.permute.xlu0 %4555
      %4558 = vrot.lane.b32.xlu0 %v4489, 36
      %v4559 = vpop.permute.xlu0 %4558
      %4561 = vrot.lane.b32.xlu0 %v4537, 84
      %v4562 = vpop.permute.xlu0 %4561
      %4565 = vrot.lane.b32.xlu0 %v4554, 4
      %v4566 = vpop.permute.xlu0 %4565
      %v4568 = vsel %vm3157, %v4556, %v4559
      %v4569 = vsel %vm964, %v4568, %v4562
      %v4570 = vsel %vm395, %v4562, %v4566
      %4571 = vrot.lane.b32.xlu0 %v4489, 116
      %v4572 = vpop.permute.xlu0 %4571
      %4574 = vrot.lane.b32.xlu0 %v4456, 36
      %v4575 = vpop.permute.xlu0 %4574
      %4577 = vrot.lane.b32.xlu0 %v4554, 84
      %v4578 = vpop.permute.xlu0 %4577
      %4580 = vrot.lane.b32.xlu0 %v4521, 4
      %v4581 = vpop.permute.xlu0 %4580
      %v4583 = vsel %vm3157, %v4572, %v4575
      %v4584 = vsel %vm964, %v4583, %v4578
      %v4585 = vsel %vm395, %v4578, %v4581
      %v4586 = vld [vmem:[%s4357 + $0x1] sm:$0xf]
      %v4587 = vld [vmem:[%s3915 + $0x1] sm:$0xf]
      %4588 = vrot.lane.b32.xlu0 %v4522, 36
      %v4589 = vpop.permute.xlu0 %4588
      %4592 = vrot.lane.b32.xlu0 %v4586, 96
      %v4593 = vpop.permute.xlu0 %4592
      %4596 = vrot.lane.b32.xlu0 %v4587, 4
      %v4597 = vpop.permute.xlu0 %4596
      %v4599 = vsel %vm3157, %v4521, %v4589
      %v4600 = vsel %vm964, %v4599, %v4593
      %v4601 = vsel %vm395, %v4593, %v4597
      %v4602 = vld [vmem:[%s4355 + $0x1] sm:$0xf]
      %4603 = vrot.lane.b32.xlu0 %v4522, 116
      %v4604 = vpop.permute.xlu0 %4603
      %4606 = vrot.lane.b32.xlu0 %v4537, 36
      %v4607 = vpop.permute.xlu0 %4606
      %4609 = vrot.lane.b32.xlu0 %v4587, 84
      %v4610 = vpop.permute.xlu0 %4609
      %4613 = vrot.lane.b32.xlu0 %v4602, 4
      %v4614 = vpop.permute.xlu0 %4613
      %v4616 = vsel %vm3157, %v4604, %v4607
      %v4617 = vsel %vm964, %v4616, %v4610
      %v4618 = vsel %vm395, %v4610, %v4614
      %v4619 = vld [vmem:[%s3917 + $0x1] sm:$0xf]
      %4620 = vrot.lane.b32.xlu0 %v4537, 116
      %v4621 = vpop.permute.xlu0 %4620
      %4623 = vrot.lane.b32.xlu0 %v4554, 36
      %v4624 = vpop.permute.xlu0 %4623
      %4626 = vrot.lane.b32.xlu0 %v4602, 84
      %v4627 = vpop.permute.xlu0 %4626
      %4630 = vrot.lane.b32.xlu0 %v4619, 4
      %v4631 = vpop.permute.xlu0 %4630
      %v4633 = vsel %vm3157, %v4621, %v4624
      %v4634 = vsel %vm964, %v4633, %v4627
      %v4635 = vsel %vm395, %v4627, %v4631
      %4636 = vrot.lane.b32.xlu0 %v4554, 116
      %v4637 = vpop.permute.xlu0 %4636
      %4639 = vrot.lane.b32.xlu0 %v4521, 36
      %v4640 = vpop.permute.xlu0 %4639
      %4642 = vrot.lane.b32.xlu0 %v4619, 84
      %v4643 = vpop.permute.xlu0 %4642
      %4645 = vrot.lane.b32.xlu0 %v4586, 4
      %v4646 = vpop.permute.xlu0 %4645
      %v4648 = vsel %vm3157, %v4637, %v4640
      %v4649 = vsel %vm964, %v4648, %v4643
      %v4650 = vsel %vm395, %v4643, %v4646
      %v4653 = vrot.slane %v4419, 4
      %v4654 = vrot.slane %v4420, 4
      %v4659 = vrot.slane %v4454, 4
      %v4660 = vrot.slane %v4455, 4
      %v4665 = vrot.slane %v4487, 4
      %v4666 = vrot.slane %v4488, 4
      %v4671 = vrot.slane %v4519, 4
      %v4672 = vrot.slane %v4520, 4
      %v4677 = vrot.slane %v4552, 4
      %v4678 = vrot.slane %v4553, 4
      %v4683 = vrot.slane %v4584, 4
      %v4684 = vrot.slane %v4585, 4
      %v4689 = vrot.slane %v4617, 4
      %v4690 = vrot.slane %v4618, 4
      %v4695 = vrot.slane %v4649, 4
      %v4696 = vrot.slane %v4650, 4
      %v4699 = vsel %vm2811, %v4400, %v4653
      %v4700 = vsel %vm2811, %v4401, %v4654
      %v4701 = vsel %vm2811, %v4438, %v4659
      %v4702 = vsel %vm2811, %v4439, %v4660
      %v4703 = vsel %vm2811, %v4470, %v4665
      %v4704 = vsel %vm2811, %v4471, %v4666
      %v4705 = vsel %vm2811, %v4504, %v4671
      %v4706 = vsel %vm2811, %v4505, %v4672
      %v4707 = vsel %vm2811, %v4535, %v4677
      %v4708 = vsel %vm2811, %v4536, %v4678
      %v4709 = vsel %vm2811, %v4569, %v4683
      %v4710 = vsel %vm2811, %v4570, %v4684
      %v4711 = vsel %vm2811, %v4600, %v4689
      %v4712 = vsel %vm2811, %v4601, %v4690
      %v4713 = vsel %vm2811, %v4634, %v4695
      %v4714 = vsel %vm2811, %v4635, %v4696
      %v4715 = vpack.c.bf16 %v4701, %v4699
      %v4716 = vpack.c.bf16 %v4702, %v4700
      %v4717 = vpack.c.bf16 %v4705, %v4703
      %v4718 = vpack.c.bf16 %v4706, %v4704
      %v4719 = vpack.c.bf16 %v4709, %v4707
      %v4720 = vpack.c.bf16 %v4710, %v4708
      %v4721 = vpack.c.bf16 %v4713, %v4711
      %v4722 = vpack.c.bf16 %v4714, %v4712
      %v4723 = vld [vmem:[%s6] sm:$0x1]
      %v4725 = vlaneseq
      %v4726 = vshrl.u32 %v4725, 7
      %v4727 = vsub.s32 0, %v4726
      %v4728 = vrot.slane %v4723, %v4727
      %v4754 = vunpack.c.l.b16 %v4359
      %v4755 = vunpack.c.l.b16 %v4360
      %v4756 = vunpack.c.l.b16 %v4361
      %v4757 = vunpack.c.l.b16 %v4362
      %v4758 = vunpack.c.l.b16 %v4363
      %v4759 = vunpack.c.l.b16 %v4364
      %v4760 = vunpack.c.l.b16 %v4365
      %v4761 = vunpack.c.l.b16 %v4366
      %v4762 = vunpack.c.l.b16 %v4367
      %v4763 = vunpack.c.l.b16 %v4368
      %v4764 = vunpack.c.l.b16 %v4369
      %v4765 = vunpack.c.l.b16 %v4370
      %v4766 = vunpack.c.l.b16 %v4371
      %v4767 = vunpack.c.l.b16 %v4372
      %v4768 = vunpack.c.l.b16 %v4373
      %v4769 = vunpack.c.l.b16 %v4374
      %v4770 = vunpack.c.l.b16 %v4375
      %v4771 = vunpack.c.l.b16 %v4376
      %v4772 = vunpack.c.l.b16 %v4377
      %v4773 = vunpack.c.l.b16 %v4378
      %v4774 = vunpack.c.l.b16 %v4379
      %v4775 = vunpack.c.l.b16 %v4380
      %v4776 = vunpack.c.l.b16 %v4381
      %v4777 = vunpack.c.l.b16 %v4382
      %v4778 = vpack.c.b16 %v4755, %v4754
      %v4779 = vpack.c.b16 %v4757, %v4756
      %v4780 = vpack.c.b16 %v4759, %v4758
      %v4781 = vpack.c.b16 %v4761, %v4760
      %v4782 = vpack.c.b16 %v4763, %v4762
      %v4783 = vpack.c.b16 %v4765, %v4764
      %v4784 = vpack.c.b16 %v4767, %v4766
      %v4785 = vpack.c.b16 %v4769, %v4768
      %v4786 = vpack.c.b16 %v4771, %v4770
      %v4787 = vpack.c.b16 %v4773, %v4772
      %v4788 = vpack.c.b16 %v4775, %v4774
      %v4789 = vpack.c.b16 %v4777, %v4776
      %v4803 = vsel %vm412, %v4716, 0
      %v4806 = vsel %vm412, %v4718, 0
      %v4809 = vsel %vm412, %v4720, 0
      %v4812 = vsel %vm412, %v4722, 0
      %4814 = vmatprep.subr.bf16.mxu0 0
      %4815 = vmatpush1.bf16.msra.mxu0 %v4778
      %4816 = vmatprep.subr.bf16.mxu0 0
      %4817 = vmatpush1.bf16.msra.mxu0 %v4779
      %4818 = vmatprep.subr.bf16.mxu0 0
      %4819 = vmatpush1.bf16.msra.mxu0 %v4780
      %4820 = vmatprep.subr.bf16.mxu0 0
      %4821 = vmatpush1.bf16.msra.mxu0 %v4781
      %4822 = vmatprep.subr.bf16.mxu0 0
      %4823 = vmatpush1.bf16.msra.mxu0 %v4782
      %4824 = vmatprep.subr.bf16.mxu0 0
      %4825 = vmatpush1.bf16.msra.mxu0 %v4783
      %4826 = vmatprep.subr.bf16.mxu0 0
      %4827 = vmatpush1.bf16.msra.mxu0 %v4784
      %4828 = vmatprep.subr.bf16.mxu0 0
      %4829 = vmatpush1.bf16.msra.mxu0 %v4785
      %4830 = vmatprep.subr.bf16.mxu0 0
      %4831 = vmatpush1.bf16.msra.mxu0 %v4786
      %4832 = vmatprep.subr.bf16.mxu0 0
      %4833 = vmatpush1.bf16.msra.mxu0 %v4787
      %4834 = vmatprep.subr.bf16.mxu0 0
      %4835 = vmatpush1.bf16.msra.mxu0 %v4788
      %4836 = vmatprep.subr.bf16.mxu0 0
      %4837 = vmatpush1.bf16.msra.mxu0 %v4789
      %4838 = vmatprep.subr.bf16.mxu0 0
      %4839 = vmatpush1.bf16.msra.mxu0 0
      %4840 = vmatprep.subr.bf16.mxu0 0
      %4841 = vmatpush1.bf16.msra.mxu0 0
      %4842 = vmatprep.subr.bf16.mxu0 0
      %4843 = vmatpush1.bf16.msra.mxu0 0
      %4844 = vmatprep.subr.bf16.mxu0 0
      %4845 = vmatpush1.bf16.msra.mxu0 0
      %4846 = vmatprep.mubr.bf16.mxu0 %v4803
      %4847 = vmatmul.mubr.bf16.gmra.mrb[0].mxu0 %v4715
      %v4848 = vpop.f32.mrb[0].mxu0
      %v4849 = vadd.f32 %v4728, %v4848
      %v4850 = vpop.f32.mrb[0].mxu0
      %v4851 = vpop.f32.mrb[0].mxu0
      %v4852 = vadd.f32 %v4728, %v4851
      %v4853 = vpop.f32.mrb[0].mxu0
      %4854 = vmatprep.mubr.bf16.mxu0 %v4806
      %4855 = vmatmul.mubr.bf16.gmra.mrb[0].mxu0 %v4717
      %v4856 = vpop.f32.mrb[0].mxu0
      %v4857 = vadd.f32 %v4728, %v4856
      %v4858 = vpop.f32.mrb[0].mxu0
      %v4859 = vpop.f32.mrb[0].mxu0
      %v4860 = vadd.f32 %v4728, %v4859
      %v4861 = vpop.f32.mrb[0].mxu0
      %4862 = vmatprep.mubr.bf16.mxu0 %v4809
      %4863 = vmatmul.mubr.bf16.gmra.mrb[0].mxu0 %v4719
      %v4864 = vpop.f32.mrb[0].mxu0
      %v4865 = vadd.f32 %v4728, %v4864
      %v4866 = vpop.f32.mrb[0].mxu0
      %v4867 = vpop.f32.mrb[0].mxu0
      %v4868 = vadd.f32 %v4728, %v4867
      %v4869 = vpop.f32.mrb[0].mxu0
      %4870 = vmatprep.mubr.bf16.mxu0 %v4812
      %4871 = vmatmul.mubr.bf16.gmra.mrb[0].mxu0 %v4721
      %v4872 = vpop.f32.mrb[0].mxu0
      %v4873 = vadd.f32 %v4728, %v4872
      %v4874 = vpop.f32.mrb[0].mxu0
      %v4875 = vpop.f32.mrb[0].mxu0
      %v4876 = vadd.f32 %v4728, %v4875
      %v4877 = vpop.f32.mrb[0].mxu0
      %4878 = vdwg.mxu0
      %v4879 = vsub.f32 0.0, %v4849
      %v4880 = vsub.f32 0.0, %v4852
      %v4881 = vsub.f32 0.0, %v4857
      %v4882 = vsub.f32 0.0, %v4860
      %v4883 = vsub.f32 0.0, %v4865
      %v4884 = vsub.f32 0.0, %v4868
      %v4885 = vsub.f32 0.0, %v4873
      %v4886 = vsub.f32 0.0, %v4876
      %v4887 = vmul.f32 %v4879, 1.442695
      %v4888 = vpow.pop %v4887
      %v4889 = vmul.f32 %v4880, 1.442695
      %v4890 = vpow.pop %v4889
      %v4891 = vmul.f32 %v4881, 1.442695
      %v4892 = vpow.pop %v4891
      %v4893 = vmul.f32 %v4882, 1.442695
      %v4894 = vpow.pop %v4893
      %v4895 = vmul.f32 %v4883, 1.442695
      %v4896 = vpow.pop %v4895
      %v4897 = vmul.f32 %v4884, 1.442695
      %v4898 = vpow.pop %v4897
      %v4899 = vmul.f32 %v4885, 1.442695
      %v4900 = vpow.pop %v4899
      %v4901 = vmul.f32 %v4886, 1.442695
      %v4902 = vpow.pop %v4901
      %v4903 = vadd.f32 %v4888, 1.0
      %v4904 = vadd.f32 %v4890, 1.0
      %v4905 = vadd.f32 %v4892, 1.0
      %v4906 = vadd.f32 %v4894, 1.0
      %v4907 = vadd.f32 %v4896, 1.0
      %v4908 = vadd.f32 %v4898, 1.0
      %v4909 = vadd.f32 %v4900, 1.0
      %v4910 = vadd.f32 %v4902, 1.0
      %v4911 = vrcp.pop %v4903
      %v4912 = vmul.f32 1.0, %v4911
      %v4913 = vrcp.pop %v4904
      %v4914 = vmul.f32 1.0, %v4913
      %v4915 = vrcp.pop %v4905
      %v4916 = vmul.f32 1.0, %v4915
      %v4917 = vrcp.pop %v4906
      %v4918 = vmul.f32 1.0, %v4917
      %v4919 = vrcp.pop %v4907
      %v4920 = vmul.f32 1.0, %v4919
      %v4921 = vrcp.pop %v4908
      %v4922 = vmul.f32 1.0, %v4921
      %v4923 = vrcp.pop %v4909
      %v4924 = vmul.f32 1.0, %v4923
      %v4925 = vrcp.pop %v4910
      %v4926 = vmul.f32 1.0, %v4925
      %vm4927 = vcmask 93184
      %4928 = vst.msk [vmem:[%s278] sm:$0xf] %vm4927, %v4912
      %s4929 = scalar_lea.vmem %s278, 8
      %vm4930 = vcmask 97284
      %4931 = vst.msk [vmem:[%s4929 - $0x4] sm:$0xf0] %vm4930, %v4912
      %s4932 = scalar_lea.vmem %s278, 16
      %4933 = vst.msk [vmem:[%s4932] sm:$0xf] %vm4927, %v4914
      %s4934 = scalar_lea.vmem %s278, 24
      %4935 = vst.msk [vmem:[%s4934 - $0x4] sm:$0xf0] %vm4930, %v4914
      %s4936 = scalar_lea.vmem %s278, 64
      %4937 = vst.msk [vmem:[%s4936] sm:$0xf] %vm4927, %v4916
      %s4938 = scalar_lea.vmem %s278, 72
      %4939 = vst.msk [vmem:[%s4938 - $0x4] sm:$0xf0] %vm4930, %v4916
      %s4940 = scalar_lea.vmem %s278, 80
      %4941 = vst.msk [vmem:[%s4940] sm:$0xf] %vm4927, %v4918
      %s4942 = scalar_lea.vmem %s278, 88
      %4943 = vst.msk [vmem:[%s4942 - $0x4] sm:$0xf0] %vm4930, %v4918
      %s4944 = scalar_lea.vmem %s278, 128
      %4945 = vst.msk [vmem:[%s4944] sm:$0xf] %vm4927, %v4920
      %s4946 = scalar_lea.vmem %s278, 136
      %4947 = vst.msk [vmem:[%s4946 - $0x4] sm:$0xf0] %vm4930, %v4920
      %s4948 = scalar_lea.vmem %s278, 144
      %4949 = vst.msk [vmem:[%s4948] sm:$0xf] %vm4927, %v4922
      %s4950 = scalar_lea.vmem %s278, 152
      %4951 = vst.msk [vmem:[%s4950 - $0x4] sm:$0xf0] %vm4930, %v4922
      %s4952 = scalar_lea.vmem %s278, 192
      %4953 = vst.msk [vmem:[%s4952] sm:$0xf] %vm4927, %v4924
      %s4954 = scalar_lea.vmem %s278, 200
      %4955 = vst.msk [vmem:[%s4954 - $0x4] sm:$0xf0] %vm4930, %v4924
      %s4956 = scalar_lea.vmem %s278, 208
      %4957 = vst.msk [vmem:[%s4956] sm:$0xf] %vm4927, %v4926
      %s4958 = scalar_lea.vmem %s278, 216
      %4959 = vst.msk [vmem:[%s4958 - $0x4] sm:$0xf0] %vm4930, %v4926
      %s4960 = scalar_lea.vmem %s5, 96
      %v4961 = vld [vmem:[%s4960] sm:$0xf]
      %v4962 = vld [vmem:[%s4960 + $0x4] sm:$0xf]
      %v4963 = vld [vmem:[%s4960 + $0x8] sm:$0xf]
      %v4964 = vld [vmem:[%s4960 + $0xc] sm:$0xf]
      %v4965 = vld [vmem:[%s4960 + $0x10] sm:$0xf]
      %v4966 = vld [vmem:[%s4960 + $0x14] sm:$0xf]
      %v4967 = vld [vmem:[%s4960 + $0x18] sm:$0xf]
      %v4968 = vld [vmem:[%s4960 + $0x1c] sm:$0xf]
      %v4969 = vld [vmem:[%s4960 + $0x20] sm:$0xf]
      %v4970 = vld [vmem:[%s4960 + $0x24] sm:$0xf]
      %v4971 = vld [vmem:[%s4960 + $0x28] sm:$0xf]
      %v4972 = vld [vmem:[%s4960 + $0x2c] sm:$0xf]
      %v4973 = vld [vmem:[%s4960 + $0x30] sm:$0xf]
      %v4974 = vld [vmem:[%s4960 + $0x34] sm:$0xf]
      %v4975 = vld [vmem:[%s4960 + $0x38] sm:$0xf]
      %v4976 = vld [vmem:[%s4960 + $0x3c] sm:$0xf]
      %v4977 = vld [vmem:[%s4960 + $0x40] sm:$0xf]
      %v4978 = vld [vmem:[%s4960 + $0x44] sm:$0xf]
      %v4979 = vld [vmem:[%s4960 + $0x48] sm:$0xf]
      %v4980 = vld [vmem:[%s4960 + $0x4c] sm:$0xf]
      %v4981 = vld [vmem:[%s4960 + $0x50] sm:$0xf]
      %v4982 = vld [vmem:[%s4960 + $0x54] sm:$0xf]
      %v4983 = vld [vmem:[%s4960 + $0x58] sm:$0xf]
      %v4984 = vld [vmem:[%s4960 + $0x5c] sm:$0xf]
      %v4985 = vld [vmem:[%s3915] sm:$0xf]
      %v4986 = vld [vmem:[%s4355] sm:$0xf]
      %v4987 = vld [vmem:[#allocation3 + $0x1] sm:$0xf]
      %v4988 = vld [vmem:[%s3494 + $0x1] sm:$0xf]
      %4990 = vrot.lane.b32.xlu0 %v4985, 116
      %v4991 = vpop.permute.xlu0 %4990
      %4994 = vrot.lane.b32.xlu0 %v4986, 36
      %v4995 = vpop.permute.xlu0 %4994
      %4998 = vrot.lane.b32.xlu0 %v4987, 84
      %v4999 = vpop.permute.xlu0 %4998
      %5002 = vrot.lane.b32.xlu0 %v4988, 4
      %v5003 = vpop.permute.xlu0 %5002
      %v5005 = vsel %vm3157, %v4991, %v4995
      %v5006 = vsel %vm964, %v5005, %v4999
      %v5007 = vsel %vm395, %v4999, %v5003
      %v5008 = vld [vmem:[%s3917] sm:$0xf]
      %v5009 = vld [vmem:[%s3062 + $0x1] sm:$0xf]
      %5010 = vrot.lane.b32.xlu0 %v4986, 116
      %v5011 = vpop.permute.xlu0 %5010
      %5014 = vrot.lane.b32.xlu0 %v5008, 36
      %v5015 = vpop.permute.xlu0 %5014
      %5017 = vrot.lane.b32.xlu0 %v4988, 84
      %v5018 = vpop.permute.xlu0 %5017
      %5021 = vrot.lane.b32.xlu0 %v5009, 4
      %v5022 = vpop.permute.xlu0 %5021
      %v5024 = vsel %vm3157, %v5011, %v5015
      %v5025 = vsel %vm964, %v5024, %v5018
      %v5026 = vsel %vm395, %v5018, %v5022
      %v5027 = vld [vmem:[%s4357] sm:$0xf]
      %v5028 = vld [vmem:[%s3496 + $0x1] sm:$0xf]
      %5029 = vrot.lane.b32.xlu0 %v5008, 116
      %v5030 = vpop.permute.xlu0 %5029
      %5033 = vrot.lane.b32.xlu0 %v5027, 36
      %v5034 = vpop.permute.xlu0 %5033
      %5036 = vrot.lane.b32.xlu0 %v5009, 84
      %v5037 = vpop.permute.xlu0 %5036
      %5040 = vrot.lane.b32.xlu0 %v5028, 4
      %v5041 = vpop.permute.xlu0 %5040
      %v5043 = vsel %vm3157, %v5030, %v5034
      %v5044 = vsel %vm964, %v5043, %v5037
      %v5045 = vsel %vm395, %v5037, %v5041
      %5046 = vrot.lane.b32.xlu0 %v5027, 116
      %v5047 = vpop.permute.xlu0 %5046
      %5049 = vrot.lane.b32.xlu0 %v4985, 24
      %v5050 = vpop.permute.xlu0 %5049
      %5052 = vrot.lane.b32.xlu0 %v5028, 84
      %v5053 = vpop.permute.xlu0 %5052
      %5055 = vrot.lane.b32.xlu0 %v4987, 120
      %v5056 = vpop.permute.xlu0 %5055
      %v5058 = vsel %vm3157, %v5047, %v5050
      %v5059 = vsel %vm964, %v5058, %v5053
      %v5060 = vsel %vm395, %v5053, %v5056
      %v5061 = vld [vmem:[%s3907 + $0x1] sm:$0xf]
      %v5062 = vld [vmem:[%s4347 + $0x1] sm:$0xf]
      %5063 = vrot.lane.b32.xlu0 %v4987, 116
      %v5064 = vpop.permute.xlu0 %5063
      %5066 = vrot.lane.b32.xlu0 %v4988, 36
      %v5067 = vpop.permute.xlu0 %5066
      %5070 = vrot.lane.b32.xlu0 %v5061, 84
      %v5071 = vpop.permute.xlu0 %5070
      %5074 = vrot.lane.b32.xlu0 %v5062, 4
      %v5075 = vpop.permute.xlu0 %5074
      %v5077 = vsel %vm3157, %v5064, %v5067
      %v5078 = vsel %vm964, %v5077, %v5071
      %v5079 = vsel %vm395, %v5071, %v5075
      %v5080 = vld [vmem:[%s3909 + $0x1] sm:$0xf]
      %5081 = vrot.lane.b32.xlu0 %v4988, 116
      %v5082 = vpop.permute.xlu0 %5081
      %5084 = vrot.lane.b32.xlu0 %v5009, 36
      %v5085 = vpop.permute.xlu0 %5084
      %5087 = vrot.lane.b32.xlu0 %v5062, 84
      %v5088 = vpop.permute.xlu0 %5087
      %5091 = vrot.lane.b32.xlu0 %v5080, 4
      %v5092 = vpop.permute.xlu0 %5091
      %v5094 = vsel %vm3157, %v5082, %v5085
      %v5095 = vsel %vm964, %v5094, %v5088
      %v5096 = vsel %vm395, %v5088, %v5092
      %v5097 = vld [vmem:[%s4349 + $0x1] sm:$0xf]
      %5098 = vrot.lane.b32.xlu0 %v5009, 116
      %v5099 = vpop.permute.xlu0 %5098
      %5101 = vrot.lane.b32.xlu0 %v5028, 36
      %v5102 = vpop.permute.xlu0 %5101
      %5104 = vrot.lane.b32.xlu0 %v5080, 84
      %v5105 = vpop.permute.xlu0 %5104
      %5108 = vrot.lane.b32.xlu0 %v5097, 4
      %v5109 = vpop.permute.xlu0 %5108
      %v5111 = vsel %vm3157, %v5099, %v5102
      %v5112 = vsel %vm964, %v5111, %v5105
      %v5113 = vsel %vm395, %v5105, %v5109
      %5114 = vrot.lane.b32.xlu0 %v5028, 116
      %v5115 = vpop.permute.xlu0 %5114
      %5117 = vrot.lane.b32.xlu0 %v4987, 24
      %v5118 = vpop.permute.xlu0 %5117
      %5120 = vrot.lane.b32.xlu0 %v5097, 84
      %v5121 = vpop.permute.xlu0 %5120
      %5123 = vrot.lane.b32.xlu0 %v5061, 120
      %v5124 = vpop.permute.xlu0 %5123
      %v5126 = vsel %vm3157, %v5115, %v5118
      %v5127 = vsel %vm964, %v5126, %v5121
      %v5128 = vsel %vm395, %v5121, %v5124
      %v5129 = vld [vmem:[%s3069 + $0x1] sm:$0xf]
      %v5130 = vld [vmem:[%s3502 + $0x1] sm:$0xf]
      %5131 = vrot.lane.b32.xlu0 %v5061, 116
      %v5132 = vpop.permute.xlu0 %5131
      %5134 = vrot.lane.b32.xlu0 %v5062, 36
      %v5135 = vpop.permute.xlu0 %5134
      %5138 = vrot.lane.b32.xlu0 %v5129, 84
      %v5139 = vpop.permute.xlu0 %5138
      %5142 = vrot.lane.b32.xlu0 %v5130, 4
      %v5143 = vpop.permute.xlu0 %5142
      %v5145 = vsel %vm3157, %v5132, %v5135
      %v5146 = vsel %vm964, %v5145, %v5139
      %v5147 = vsel %vm395, %v5139, %v5143
      %v5148 = vld [vmem:[%s3071 + $0x1] sm:$0xf]
      %5149 = vrot.lane.b32.xlu0 %v5062, 116
      %v5150 = vpop.permute.xlu0 %5149
      %5152 = vrot.lane.b32.xlu0 %v5080, 36
      %v5153 = vpop.permute.xlu0 %5152
      %5155 = vrot.lane.b32.xlu0 %v5130, 84
      %v5156 = vpop.permute.xlu0 %5155
      %5159 = vrot.lane.b32.xlu0 %v5148, 4
      %v5160 = vpop.permute.xlu0 %5159
      %v5162 = vsel %vm3157, %v5150, %v5153
      %v5163 = vsel %vm964, %v5162, %v5156
      %v5164 = vsel %vm395, %v5156, %v5160
      %v5165 = vld [vmem:[%s3504 + $0x1] sm:$0xf]
      %5166 = vrot.lane.b32.xlu0 %v5080, 116
      %v5167 = vpop.permute.xlu0 %5166
      %5169 = vrot.lane.b32.xlu0 %v5097, 36
      %v5170 = vpop.permute.xlu0 %5169
      %5172 = vrot.lane.b32.xlu0 %v5148, 84
      %v5173 = vpop.permute.xlu0 %5172
      %5176 = vrot.lane.b32.xlu0 %v5165, 4
      %v5177 = vpop.permute.xlu0 %5176
      %v5179 = vsel %vm3157, %v5167, %v5170
      %v5180 = vsel %vm964, %v5179, %v5173
      %v5181 = vsel %vm395, %v5173, %v5177
      %5182 = vrot.lane.b32.xlu0 %v5097, 116
      %v5183 = vpop.permute.xlu0 %5182
      %5185 = vrot.lane.b32.xlu0 %v5061, 24
      %v5186 = vpop.permute.xlu0 %5185
      %5188 = vrot.lane.b32.xlu0 %v5165, 84
      %v5189 = vpop.permute.xlu0 %5188
      %5191 = vrot.lane.b32.xlu0 %v5129, 120
      %v5192 = vpop.permute.xlu0 %5191
      %v5194 = vsel %vm3157, %v5183, %v5186
      %v5195 = vsel %vm964, %v5194, %v5189
      %v5196 = vsel %vm395, %v5189, %v5192
      %v5197 = vld [vmem:[%s3915 + $0x1] sm:$0xf]
      %v5198 = vld [vmem:[%s4355 + $0x1] sm:$0xf]
      %5199 = vrot.lane.b32.xlu0 %v5129, 116
      %v5200 = vpop.permute.xlu0 %5199
      %5202 = vrot.lane.b32.xlu0 %v5130, 36
      %v5203 = vpop.permute.xlu0 %5202
      %5206 = vrot.lane.b32.xlu0 %v5197, 84
      %v5207 = vpop.permute.xlu0 %5206
      %5210 = vrot.lane.b32.xlu0 %v5198, 4
      %v5211 = vpop.permute.xlu0 %5210
      %v5213 = vsel %vm3157, %v5200, %v5203
      %v5214 = vsel %vm964, %v5213, %v5207
      %v5215 = vsel %vm395, %v5207, %v5211
      %v5216 = vld [vmem:[%s3917 + $0x1] sm:$0xf]
      %5217 = vrot.lane.b32.xlu0 %v5130, 116
      %v5218 = vpop.permute.xlu0 %5217
      %5220 = vrot.lane.b32.xlu0 %v5148, 36
      %v5221 = vpop.permute.xlu0 %5220
      %5223 = vrot.lane.b32.xlu0 %v5198, 84
      %v5224 = vpop.permute.xlu0 %5223
      %5227 = vrot.lane.b32.xlu0 %v5216, 4
      %v5228 = vpop.permute.xlu0 %5227
      %v5230 = vsel %vm3157, %v5218, %v5221
      %v5231 = vsel %vm964, %v5230, %v5224
      %v5232 = vsel %vm395, %v5224, %v5228
      %v5233 = vld [vmem:[%s4357 + $0x1] sm:$0xf]
      %5234 = vrot.lane.b32.xlu0 %v5148, 116
      %v5235 = vpop.permute.xlu0 %5234
      %5237 = vrot.lane.b32.xlu0 %v5165, 36
      %v5238 = vpop.permute.xlu0 %5237
      %5240 = vrot.lane.b32.xlu0 %v5216, 84
      %v5241 = vpop.permute.xlu0 %5240
      %5244 = vrot.lane.b32.xlu0 %v5233, 4
      %v5245 = vpop.permute.xlu0 %5244
      %v5247 = vsel %vm3157, %v5235, %v5238
      %v5248 = vsel %vm964, %v5247, %v5241
      %v5249 = vsel %vm395, %v5241, %v5245
      %5250 = vrot.lane.b32.xlu0 %v5165, 116
      %v5251 = vpop.permute.xlu0 %5250
      %5253 = vrot.lane.b32.xlu0 %v5129, 24
      %v5254 = vpop.permute.xlu0 %5253
      %5256 = vrot.lane.b32.xlu0 %v5233, 84
      %v5257 = vpop.permute.xlu0 %5256
      %5259 = vrot.lane.b32.xlu0 %v5197, 120
      %v5260 = vpop.permute.xlu0 %5259
      %v5262 = vsel %vm3157, %v5251, %v5254
      %v5263 = vsel %vm964, %v5262, %v5257
      %v5264 = vsel %vm395, %v5257, %v5260
      %v5267 = vrot.slane %v5025, 4
      %v5268 = vrot.slane %v5026, 4
      %v5273 = vrot.slane %v5059, 4
      %v5274 = vrot.slane %v5060, 4
      %v5279 = vrot.slane %v5095, 4
      %v5280 = vrot.slane %v5096, 4
      %v5285 = vrot.slane %v5127, 4
      %v5286 = vrot.slane %v5128, 4
      %v5291 = vrot.slane %v5163, 4
      %v5292 = vrot.slane %v5164, 4
      %v5297 = vrot.slane %v5195, 4
      %v5298 = vrot.slane %v5196, 4
      %v5303 = vrot.slane %v5231, 4
      %v5304 = vrot.slane %v5232, 4
      %v5309 = vrot.slane %v5263, 4
      %v5310 = vrot.slane %v5264, 4
      %v5313 = vsel %vm2811, %v5006, %v5267
      %v5314 = vsel %vm2811, %v5007, %v5268
      %v5315 = vsel %vm2811, %v5044, %v5273
      %v5316 = vsel %vm2811, %v5045, %v5274
      %v5317 = vsel %vm2811, %v5078, %v5279
      %v5318 = vsel %vm2811, %v5079, %v5280
      %v5319 = vsel %vm2811, %v5112, %v5285
      %v5320 = vsel %vm2811, %v5113, %v5286
      %v5321 = vsel %vm2811, %v5146, %v5291
      %v5322 = vsel %vm2811, %v5147, %v5292
      %v5323 = vsel %vm2811, %v5180, %v5297
      %v5324 = vsel %vm2811, %v5181, %v5298
      %v5325 = vsel %vm2811, %v5214, %v5303
      %v5326 = vsel %vm2811, %v5215, %v5304
      %v5327 = vsel %vm2811, %v5248, %v5309
      %v5328 = vsel %vm2811, %v5249, %v5310
      %v5329 = vpack.c.bf16 %v5315, %v5313
      %v5330 = vpack.c.bf16 %v5316, %v5314
      %v5331 = vpack.c.bf16 %v5319, %v5317
      %v5332 = vpack.c.bf16 %v5320, %v5318
      %v5333 = vpack.c.bf16 %v5323, %v5321
      %v5334 = vpack.c.bf16 %v5324, %v5322
      %v5335 = vpack.c.bf16 %v5327, %v5325
      %v5336 = vpack.c.bf16 %v5328, %v5326
      %v5337 = vld [vmem:[%s6] sm:$0x1]
      %v5339 = vlaneseq
      %v5340 = vshrl.u32 %v5339, 7
      %v5341 = vsub.s32 0, %v5340
      %v5342 = vrot.slane %v5337, %v5341
      %v5368 = vunpack.c.l.b16 %v4961
      %v5369 = vunpack.c.l.b16 %v4962
      %v5370 = vunpack.c.l.b16 %v4963
      %v5371 = vunpack.c.l.b16 %v4964
      %v5372 = vunpack.c.l.b16 %v4965
      %v5373 = vunpack.c.l.b16 %v4966
      %v5374 = vunpack.c.l.b16 %v4967
      %v5375 = vunpack.c.l.b16 %v4968
      %v5376 = vunpack.c.l.b16 %v4969
      %v5377 = vunpack.c.l.b16 %v4970
      %v5378 = vunpack.c.l.b16 %v4971
      %v5379 = vunpack.c.l.b16 %v4972
      %v5380 = vunpack.c.l.b16 %v4973
      %v5381 = vunpack.c.l.b16 %v4974
      %v5382 = vunpack.c.l.b16 %v4975
      %v5383 = vunpack.c.l.b16 %v4976
      %v5384 = vunpack.c.l.b16 %v4977
      %v5385 = vunpack.c.l.b16 %v4978
      %v5386 = vunpack.c.l.b16 %v4979
      %v5387 = vunpack.c.l.b16 %v4980
      %v5388 = vunpack.c.l.b16 %v4981
      %v5389 = vunpack.c.l.b16 %v4982
      %v5390 = vunpack.c.l.b16 %v4983
      %v5391 = vunpack.c.l.b16 %v4984
      %v5392 = vpack.c.b16 %v5369, %v5368
      %v5393 = vpack.c.b16 %v5371, %v5370
      %v5394 = vpack.c.b16 %v5373, %v5372
      %v5395 = vpack.c.b16 %v5375, %v5374
      %v5396 = vpack.c.b16 %v5377, %v5376
      %v5397 = vpack.c.b16 %v5379, %v5378
      %v5398 = vpack.c.b16 %v5381, %v5380
      %v5399 = vpack.c.b16 %v5383, %v5382
      %v5400 = vpack.c.b16 %v5385, %v5384
      %v5401 = vpack.c.b16 %v5387, %v5386
      %v5402 = vpack.c.b16 %v5389, %v5388
      %v5403 = vpack.c.b16 %v5391, %v5390
      %v5417 = vsel %vm412, %v5330, 0
      %v5420 = vsel %vm412, %v5332, 0
      %v5423 = vsel %vm412, %v5334, 0
      %v5426 = vsel %vm412, %v5336, 0
      %5428 = vmatprep.subr.bf16.mxu0 0
      %5429 = vmatpush1.bf16.msra.mxu0 %v5392
      %5430 = vmatprep.subr.bf16.mxu0 0
      %5431 = vmatpush1.bf16.msra.mxu0 %v5393
      %5432 = vmatprep.subr.bf16.mxu0 0
      %5433 = vmatpush1.bf16.msra.mxu0 %v5394
      %5434 = vmatprep.subr.bf16.mxu0 0
      %5435 = vmatpush1.bf16.msra.mxu0 %v5395
      %5436 = vmatprep.subr.bf16.mxu0 0
      %5437 = vmatpush1.bf16.msra.mxu0 %v5396
      %5438 = vmatprep.subr.bf16.mxu0 0
      %5439 = vmatpush1.bf16.msra.mxu0 %v5397
      %5440 = vmatprep.subr.bf16.mxu0 0
      %5441 = vmatpush1.bf16.msra.mxu0 %v5398
      %5442 = vmatprep.subr.bf16.mxu0 0
      %5443 = vmatpush1.bf16.msra.mxu0 %v5399
      %5444 = vmatprep.subr.bf16.mxu0 0
      %5445 = vmatpush1.bf16.msra.mxu0 %v5400
      %5446 = vmatprep.subr.bf16.mxu0 0
      %5447 = vmatpush1.bf16.msra.mxu0 %v5401
      %5448 = vmatprep.subr.bf16.mxu0 0
      %5449 = vmatpush1.bf16.msra.mxu0 %v5402
      %5450 = vmatprep.subr.bf16.mxu0 0
      %5451 = vmatpush1.bf16.msra.mxu0 %v5403
      %5452 = vmatprep.subr.bf16.mxu0 0
      %5453 = vmatpush1.bf16.msra.mxu0 0
      %5454 = vmatprep.subr.bf16.mxu0 0
      %5455 = vmatpush1.bf16.msra.mxu0 0
      %5456 = vmatprep.subr.bf16.mxu0 0
      %5457 = vmatpush1.bf16.msra.mxu0 0
      %5458 = vmatprep.subr.bf16.mxu0 0
      %5459 = vmatpush1.bf16.msra.mxu0 0
      %5460 = vmatprep.mubr.bf16.mxu0 %v5417
      %5461 = vmatmul.mubr.bf16.gmra.mrb[0].mxu0 %v5329
      %v5462 = vpop.f32.mrb[0].mxu0
      %v5463 = vadd.f32 %v5342, %v5462
      %v5464 = vpop.f32.mrb[0].mxu0
      %v5465 = vpop.f32.mrb[0].mxu0
      %v5466 = vadd.f32 %v5342, %v5465
      %v5467 = vpop.f32.mrb[0].mxu0
      %5468 = vmatprep.mubr.bf16.mxu0 %v5420
      %5469 = vmatmul.mubr.bf16.gmra.mrb[0].mxu0 %v5331
      %v5470 = vpop.f32.mrb[0].mxu0
      %v5471 = vadd.f32 %v5342, %v5470
      %v5472 = vpop.f32.mrb[0].mxu0
      %v5473 = vpop.f32.mrb[0].mxu0
      %v5474 = vadd.f32 %v5342, %v5473
      %v5475 = vpop.f32.mrb[0].mxu0
      %5476 = vmatprep.mubr.bf16.mxu0 %v5423
      %5477 = vmatmul.mubr.bf16.gmra.mrb[0].mxu0 %v5333
      %v5478 = vpop.f32.mrb[0].mxu0
      %v5479 = vadd.f32 %v5342, %v5478
      %v5480 = vpop.f32.mrb[0].mxu0
      %v5481 = vpop.f32.mrb[0].mxu0
      %v5482 = vadd.f32 %v5342, %v5481
      %v5483 = vpop.f32.mrb[0].mxu0
      %5484 = vmatprep.mubr.bf16.mxu0 %v5426
      %5485 = vmatmul.mubr.bf16.gmra.mrb[0].mxu0 %v5335
      %v5486 = vpop.f32.mrb[0].mxu0
      %v5487 = vadd.f32 %v5342, %v5486
      %v5488 = vpop.f32.mrb[0].mxu0
      %v5489 = vpop.f32.mrb[0].mxu0
      %v5490 = vadd.f32 %v5342, %v5489
      %v5491 = vpop.f32.mrb[0].mxu0
      %5492 = vdwg.mxu0
      %v5493 = vsub.f32 0.0, %v5463
      %v5494 = vsub.f32 0.0, %v5466
      %v5495 = vsub.f32 0.0, %v5471
      %v5496 = vsub.f32 0.0, %v5474
      %v5497 = vsub.f32 0.0, %v5479
      %v5498 = vsub.f32 0.0, %v5482
      %v5499 = vsub.f32 0.0, %v5487
      %v5500 = vsub.f32 0.0, %v5490
      %v5501 = vmul.f32 %v5493, 1.442695
      %v5502 = vpow.pop %v5501
      %v5503 = vmul.f32 %v5494, 1.442695
      %v5504 = vpow.pop %v5503
      %v5505 = vmul.f32 %v5495, 1.442695
      %v5506 = vpow.pop %v5505
      %v5507 = vmul.f32 %v5496, 1.442695
      %v5508 = vpow.pop %v5507
      %v5509 = vmul.f32 %v5497, 1.442695
      %v5510 = vpow.pop %v5509
      %v5511 = vmul.f32 %v5498, 1.442695
      %v5512 = vpow.pop %v5511
      %v5513 = vmul.f32 %v5499, 1.442695
      %v5514 = vpow.pop %v5513
      %v5515 = vmul.f32 %v5500, 1.442695
      %v5516 = vpow.pop %v5515
      %v5517 = vadd.f32 %v5502, 1.0
      %v5518 = vadd.f32 %v5504, 1.0
      %v5519 = vadd.f32 %v5506, 1.0
      %v5520 = vadd.f32 %v5508, 1.0
      %v5521 = vadd.f32 %v5510, 1.0
      %v5522 = vadd.f32 %v5512, 1.0
      %v5523 = vadd.f32 %v5514, 1.0
      %v5524 = vadd.f32 %v5516, 1.0
      %v5525 = vrcp.pop %v5517
      %v5526 = vmul.f32 1.0, %v5525
      %v5527 = vrcp.pop %v5518
      %v5528 = vmul.f32 1.0, %v5527
      %v5529 = vrcp.pop %v5519
      %v5530 = vmul.f32 1.0, %v5529
      %v5531 = vrcp.pop %v5520
      %v5532 = vmul.f32 1.0, %v5531
      %v5533 = vrcp.pop %v5521
      %v5534 = vmul.f32 1.0, %v5533
      %v5535 = vrcp.pop %v5522
      %v5536 = vmul.f32 1.0, %v5535
      %v5537 = vrcp.pop %v5523
      %v5538 = vmul.f32 1.0, %v5537
      %v5539 = vrcp.pop %v5524
      %v5540 = vmul.f32 1.0, %v5539
      %s5541 = scalar_lea.vmem %s278, 4
      %5542 = vst.msk [vmem:[%s5541] sm:$0xf] %vm4927, %v5526
      %s5543 = scalar_lea.vmem %s278, 12
      %5544 = vst.msk [vmem:[%s5543 - $0x4] sm:$0xf0] %vm4930, %v5526
      %s5545 = scalar_lea.vmem %s278, 20
      %5546 = vst.msk [vmem:[%s5545] sm:$0xf] %vm4927, %v5528
      %s5547 = scalar_lea.vmem %s278, 28
      %5548 = vst.msk [vmem:[%s5547 - $0x4] sm:$0xf0] %vm4930, %v5528
      %s5549 = scalar_lea.vmem %s278, 68
      %5550 = vst.msk [vmem:[%s5549] sm:$0xf] %vm4927, %v5530
      %s5551 = scalar_lea.vmem %s278, 76
      %5552 = vst.msk [vmem:[%s5551 - $0x4] sm:$0xf0] %vm4930, %v5530
      %s5553 = scalar_lea.vmem %s278, 84
      %5554 = vst.msk [vmem:[%s5553] sm:$0xf] %vm4927, %v5532
      %s5555 = scalar_lea.vmem %s278, 92
      %5556 = vst.msk [vmem:[%s5555 - $0x4] sm:$0xf0] %vm4930, %v5532
      %s5557 = scalar_lea.vmem %s278, 132
      %5558 = vst.msk [vmem:[%s5557] sm:$0xf] %vm4927, %v5534
      %s5559 = scalar_lea.vmem %s278, 140
      %5560 = vst.msk [vmem:[%s5559 - $0x4] sm:$0xf0] %vm4930, %v5534
      %s5561 = scalar_lea.vmem %s278, 148
      %5562 = vst.msk [vmem:[%s5561] sm:$0xf] %vm4927, %v5536
      %s5563 = scalar_lea.vmem %s278, 156
      %5564 = vst.msk [vmem:[%s5563 - $0x4] sm:$0xf0] %vm4930, %v5536
      %s5565 = scalar_lea.vmem %s278, 196
      %5566 = vst.msk [vmem:[%s5565] sm:$0xf] %vm4927, %v5538
      %s5567 = scalar_lea.vmem %s278, 204
      %5568 = vst.msk [vmem:[%s5567 - $0x4] sm:$0xf0] %vm4930, %v5538
      %s5569 = scalar_lea.vmem %s278, 212
      %5570 = vst.msk [vmem:[%s5569] sm:$0xf] %vm4927, %v5540
      %s5571 = scalar_lea.vmem %s278, 220
      %5572 = vst.msk [vmem:[%s5571 - $0x4] sm:$0xf0] %vm4930, %v5540
      %s5573 = scalar_lea.vmem %s5, 192
      %v5574 = vld [vmem:[%s5573] sm:$0xf]
      %v5575 = vld [vmem:[%s5573 + $0x4] sm:$0xf]
      %v5576 = vld [vmem:[%s5573 + $0x8] sm:$0xf]
      %v5577 = vld [vmem:[%s5573 + $0xc] sm:$0xf]
      %v5578 = vld [vmem:[%s5573 + $0x10] sm:$0xf]
      %v5579 = vld [vmem:[%s5573 + $0x14] sm:$0xf]
      %v5580 = vld [vmem:[%s5573 + $0x18] sm:$0xf]
      %v5581 = vld [vmem:[%s5573 + $0x1c] sm:$0xf]
      %v5582 = vld [vmem:[%s5573 + $0x20] sm:$0xf]
      %v5583 = vld [vmem:[%s5573 + $0x24] sm:$0xf]
      %v5584 = vld [vmem:[%s5573 + $0x28] sm:$0xf]
      %v5585 = vld [vmem:[%s5573 + $0x2c] sm:$0xf]
      %v5586 = vld [vmem:[%s5573 + $0x30] sm:$0xf]
      %v5587 = vld [vmem:[%s5573 + $0x34] sm:$0xf]
      %v5588 = vld [vmem:[%s5573 + $0x38] sm:$0xf]
      %v5589 = vld [vmem:[%s5573 + $0x3c] sm:$0xf]
      %v5590 = vld [vmem:[%s5573 + $0x40] sm:$0xf]
      %v5591 = vld [vmem:[%s5573 + $0x44] sm:$0xf]
      %v5592 = vld [vmem:[%s5573 + $0x48] sm:$0xf]
      %v5593 = vld [vmem:[%s5573 + $0x4c] sm:$0xf]
      %v5594 = vld [vmem:[%s5573 + $0x50] sm:$0xf]
      %v5595 = vld [vmem:[%s5573 + $0x54] sm:$0xf]
      %v5596 = vld [vmem:[%s5573 + $0x58] sm:$0xf]
      %v5597 = vld [vmem:[%s5573 + $0x5c] sm:$0xf]
      %v5598 = vld [vmem:[%s3496 + $0x1] sm:$0xf]
      %v5599 = vld [vmem:[#allocation3 + $0x1] sm:$0xf]
      %v5600 = vld [vmem:[%s4349 + $0x1] sm:$0xf]
      %v5601 = vld [vmem:[%s3907 + $0x1] sm:$0xf]
      %5603 = vrot.lane.b32.xlu0 %v5599, 36
      %v5604 = vpop.permute.xlu0 %5603
      %5607 = vrot.lane.b32.xlu0 %v5600, 96
      %v5608 = vpop.permute.xlu0 %5607
      %5611 = vrot.lane.b32.xlu0 %v5601, 4
      %v5612 = vpop.permute.xlu0 %5611
      %v5614 = vsel %vm3157, %v5598, %v5604
      %v5615 = vsel %vm964, %v5614, %v5608
      %v5616 = vsel %vm395, %v5608, %v5612
      %v5617 = vld [vmem:[%s3494 + $0x1] sm:$0xf]
      %v5618 = vld [vmem:[%s4347 + $0x1] sm:$0xf]
      %5619 = vrot.lane.b32.xlu0 %v5599, 116
      %v5620 = vpop.permute.xlu0 %5619
      %5623 = vrot.lane.b32.xlu0 %v5617, 36
      %v5624 = vpop.permute.xlu0 %5623
      %5626 = vrot.lane.b32.xlu0 %v5601, 84
      %v5627 = vpop.permute.xlu0 %5626
      %5630 = vrot.lane.b32.xlu0 %v5618, 4
      %v5631 = vpop.permute.xlu0 %5630
      %v5633 = vsel %vm3157, %v5620, %v5624
      %v5634 = vsel %vm964, %v5633, %v5627
      %v5635 = vsel %vm395, %v5627, %v5631
      %v5636 = vld [vmem:[%s3062 + $0x1] sm:$0xf]
      %v5637 = vld [vmem:[%s3909 + $0x1] sm:$0xf]
      %5638 = vrot.lane.b32.xlu0 %v5617, 116
      %v5639 = vpop.permute.xlu0 %5638
      %5642 = vrot.lane.b32.xlu0 %v5636, 36
      %v5643 = vpop.permute.xlu0 %5642
      %5645 = vrot.lane.b32.xlu0 %v5618, 84
      %v5646 = vpop.permute.xlu0 %5645
      %5649 = vrot.lane.b32.xlu0 %v5637, 4
      %v5650 = vpop.permute.xlu0 %5649
      %v5652 = vsel %vm3157, %v5639, %v5643
      %v5653 = vsel %vm964, %v5652, %v5646
      %v5654 = vsel %vm395, %v5646, %v5650
      %5655 = vrot.lane.b32.xlu0 %v5636, 116
      %v5656 = vpop.permute.xlu0 %5655
      %5659 = vrot.lane.b32.xlu0 %v5598, 36
      %v5660 = vpop.permute.xlu0 %5659
      %5662 = vrot.lane.b32.xlu0 %v5637, 84
      %v5663 = vpop.permute.xlu0 %5662
      %5665 = vrot.lane.b32.xlu0 %v5600, 4
      %v5666 = vpop.permute.xlu0 %5665
      %v5668 = vsel %vm3157, %v5656, %v5660
      %v5669 = vsel %vm964, %v5668, %v5663
      %v5670 = vsel %vm395, %v5663, %v5666
      %v5671 = vld [vmem:[%s3504 + $0x1] sm:$0xf]
      %v5672 = vld [vmem:[%s3069 + $0x1] sm:$0xf]
      %5673 = vrot.lane.b32.xlu0 %v5601, 36
      %v5674 = vpop.permute.xlu0 %5673
      %5677 = vrot.lane.b32.xlu0 %v5671, 96
      %v5678 = vpop.permute.xlu0 %5677
      %5681 = vrot.lane.b32.xlu0 %v5672, 4
      %v5682 = vpop.permute.xlu0 %5681
      %v5684 = vsel %vm3157, %v5600, %v5674
      %v5685 = vsel %vm964, %v5684, %v5678
      %v5686 = vsel %vm395, %v5678, %v5682
      %v5687 = vld [vmem:[%s3502 + $0x1] sm:$0xf]
      %5688 = vrot.lane.b32.xlu0 %v5601, 116
      %v5689 = vpop.permute.xlu0 %5688
      %5691 = vrot.lane.b32.xlu0 %v5618, 36
      %v5692 = vpop.permute.xlu0 %5691
      %5694 = vrot.lane.b32.xlu0 %v5672, 84
      %v5695 = vpop.permute.xlu0 %5694
      %5698 = vrot.lane.b32.xlu0 %v5687, 4
      %v5699 = vpop.permute.xlu0 %5698
      %v5701 = vsel %vm3157, %v5689, %v5692
      %v5702 = vsel %vm964, %v5701, %v5695
      %v5703 = vsel %vm395, %v5695, %v5699
      %v5704 = vld [vmem:[%s3071 + $0x1] sm:$0xf]
      %5705 = vrot.lane.b32.xlu0 %v5618, 116
      %v5706 = vpop.permute.xlu0 %5705
      %5708 = vrot.lane.b32.xlu0 %v5637, 36
      %v5709 = vpop.permute.xlu0 %5708
      %5711 = vrot.lane.b32.xlu0 %v5687, 84
      %v5712 = vpop.permute.xlu0 %5711
      %5715 = vrot.lane.b32.xlu0 %v5704, 4
      %v5716 = vpop.permute.xlu0 %5715
      %v5718 = vsel %vm3157, %v5706, %v5709
      %v5719 = vsel %vm964, %v5718, %v5712
      %v5720 = vsel %vm395, %v5712, %v5716
      %5721 = vrot.lane.b32.xlu0 %v5637, 116
      %v5722 = vpop.permute.xlu0 %5721
      %5724 = vrot.lane.b32.xlu0 %v5600, 36
      %v5725 = vpop.permute.xlu0 %5724
      %5727 = vrot.lane.b32.xlu0 %v5704, 84
      %v5728 = vpop.permute.xlu0 %5727
      %5730 = vrot.lane.b32.xlu0 %v5671, 4
      %v5731 = vpop.permute.xlu0 %5730
      %v5733 = vsel %vm3157, %v5722, %v5725
      %v5734 = vsel %vm964, %v5733, %v5728
      %v5735 = vsel %vm395, %v5728, %v5731
      %v5736 = vld [vmem:[%s4357 + $0x1] sm:$0xf]
      %v5737 = vld [vmem:[%s3915 + $0x1] sm:$0xf]
      %5738 = vrot.lane.b32.xlu0 %v5672, 36
      %v5739 = vpop.permute.xlu0 %5738
      %5742 = vrot.lane.b32.xlu0 %v5736, 96
      %v5743 = vpop.permute.xlu0 %5742
      %5746 = vrot.lane.b32.xlu0 %v5737, 4
      %v5747 = vpop.permute.xlu0 %5746
      %v5749 = vsel %vm3157, %v5671, %v5739
      %v5750 = vsel %vm964, %v5749, %v5743
      %v5751 = vsel %vm395, %v5743, %v5747
      %v5752 = vld [vmem:[%s4355 + $0x1] sm:$0xf]
      %5753 = vrot.lane.b32.xlu0 %v5672, 116
      %v5754 = vpop.permute.xlu0 %5753
      %5756 = vrot.lane.b32.xlu0 %v5687, 36
      %v5757 = vpop.permute.xlu0 %5756
      %5759 = vrot.lane.b32.xlu0 %v5737, 84
      %v5760 = vpop.permute.xlu0 %5759
      %5763 = vrot.lane.b32.xlu0 %v5752, 4
      %v5764 = vpop.permute.xlu0 %5763
      %v5766 = vsel %vm3157, %v5754, %v5757
      %v5767 = vsel %vm964, %v5766, %v5760
      %v5768 = vsel %vm395, %v5760, %v5764
      %v5769 = vld [vmem:[%s3917 + $0x1] sm:$0xf]
      %5770 = vrot.lane.b32.xlu0 %v5687, 116
      %v5771 = vpop.permute.xlu0 %5770
      %5773 = vrot.lane.b32.xlu0 %v5704, 36
      %v5774 = vpop.permute.xlu0 %5773
      %5776 = vrot.lane.b32.xlu0 %v5752, 84
      %v5777 = vpop.permute.xlu0 %5776
      %5780 = vrot.lane.b32.xlu0 %v5769, 4
      %v5781 = vpop.permute.xlu0 %5780
      %v5783 = vsel %vm3157, %v5771, %v5774
      %v5784 = vsel %vm964, %v5783, %v5777
      %v5785 = vsel %vm395, %v5777, %v5781
      %5786 = vrot.lane.b32.xlu0 %v5704, 116
      %v5787 = vpop.permute.xlu0 %5786
      %5789 = vrot.lane.b32.xlu0 %v5671, 36
      %v5790 = vpop.permute.xlu0 %5789
      %5792 = vrot.lane.b32.xlu0 %v5769, 84
      %v5793 = vpop.permute.xlu0 %5792
      %5795 = vrot.lane.b32.xlu0 %v5736, 4
      %v5796 = vpop.permute.xlu0 %5795
      %v5798 = vsel %vm3157, %v5787, %v5790
      %v5799 = vsel %vm964, %v5798, %v5793
      %v5800 = vsel %vm395, %v5793, %v5796
      %v5801 = vld [vmem:[%s3496 + $0x2] sm:$0xf]
      %v5802 = vld [vmem:[#allocation3 + $0x2] sm:$0xf]
      %5803 = vrot.lane.b32.xlu0 %v5737, 36
      %v5804 = vpop.permute.xlu0 %5803
      %5807 = vrot.lane.b32.xlu0 %v5801, 96
      %v5808 = vpop.permute.xlu0 %5807
      %5811 = vrot.lane.b32.xlu0 %v5802, 4
      %v5812 = vpop.permute.xlu0 %5811
      %v5814 = vsel %vm3157, %v5736, %v5804
      %v5815 = vsel %vm964, %v5814, %v5808
      %v5816 = vsel %vm395, %v5808, %v5812
      %v5817 = vld [vmem:[%s3494 + $0x2] sm:$0xf]
      %5818 = vrot.lane.b32.xlu0 %v5737, 116
      %v5819 = vpop.permute.xlu0 %5818
      %5821 = vrot.lane.b32.xlu0 %v5752, 36
      %v5822 = vpop.permute.xlu0 %5821
      %5824 = vrot.lane.b32.xlu0 %v5802, 84
      %v5825 = vpop.permute.xlu0 %5824
      %5828 = vrot.lane.b32.xlu0 %v5817, 4
      %v5829 = vpop.permute.xlu0 %5828
      %v5831 = vsel %vm3157, %v5819, %v5822
      %v5832 = vsel %vm964, %v5831, %v5825
      %v5833 = vsel %vm395, %v5825, %v5829
      %v5834 = vld [vmem:[%s3062 + $0x2] sm:$0xf]
      %5835 = vrot.lane.b32.xlu0 %v5752, 116
      %v5836 = vpop.permute.xlu0 %5835
      %5838 = vrot.lane.b32.xlu0 %v5769, 36
      %v5839 = vpop.permute.xlu0 %5838
      %5841 = vrot.lane.b32.xlu0 %v5817, 84
      %v5842 = vpop.permute.xlu0 %5841
      %5845 = vrot.lane.b32.xlu0 %v5834, 4
      %v5846 = vpop.permute.xlu0 %5845
      %v5848 = vsel %vm3157, %v5836, %v5839
      %v5849 = vsel %vm964, %v5848, %v5842
      %v5850 = vsel %vm395, %v5842, %v5846
      %5851 = vrot.lane.b32.xlu0 %v5769, 116
      %v5852 = vpop.permute.xlu0 %5851
      %5854 = vrot.lane.b32.xlu0 %v5736, 36
      %v5855 = vpop.permute.xlu0 %5854
      %5857 = vrot.lane.b32.xlu0 %v5834, 84
      %v5858 = vpop.permute.xlu0 %5857
      %5860 = vrot.lane.b32.xlu0 %v5801, 4
      %v5861 = vpop.permute.xlu0 %5860
      %v5863 = vsel %vm3157, %v5852, %v5855
      %v5864 = vsel %vm964, %v5863, %v5858
      %v5865 = vsel %vm395, %v5858, %v5861
      %v5868 = vrot.slane %v5634, 4
      %v5869 = vrot.slane %v5635, 4
      %v5874 = vrot.slane %v5669, 4
      %v5875 = vrot.slane %v5670, 4
      %v5880 = vrot.slane %v5702, 4
      %v5881 = vrot.slane %v5703, 4
      %v5886 = vrot.slane %v5734, 4
      %v5887 = vrot.slane %v5735, 4
      %v5892 = vrot.slane %v5767, 4
      %v5893 = vrot.slane %v5768, 4
      %v5898 = vrot.slane %v5799, 4
      %v5899 = vrot.slane %v5800, 4
      %v5904 = vrot.slane %v5832, 4
      %v5905 = vrot.slane %v5833, 4
      %v5910 = vrot.slane %v5864, 4
      %v5911 = vrot.slane %v5865, 4
      %v5914 = vsel %vm2811, %v5615, %v5868
      %v5915 = vsel %vm2811, %v5616, %v5869
      %v5916 = vsel %vm2811, %v5653, %v5874
      %v5917 = vsel %vm2811, %v5654, %v5875
      %v5918 = vsel %vm2811, %v5685, %v5880
      %v5919 = vsel %vm2811, %v5686, %v5881
      %v5920 = vsel %vm2811, %v5719, %v5886
      %v5921 = vsel %vm2811, %v5720, %v5887
      %v5922 = vsel %vm2811, %v5750, %v5892
      %v5923 = vsel %vm2811, %v5751, %v5893
      %v5924 = vsel %vm2811, %v5784, %v5898
      %v5925 = vsel %vm2811, %v5785, %v5899
      %v5926 = vsel %vm2811, %v5815, %v5904
      %v5927 = vsel %vm2811, %v5816, %v5905
      %v5928 = vsel %vm2811, %v5849, %v5910
      %v5929 = vsel %vm2811, %v5850, %v5911
      %v5930 = vpack.c.bf16 %v5916, %v5914
      %v5931 = vpack.c.bf16 %v5917, %v5915
      %v5932 = vpack.c.bf16 %v5920, %v5918
      %v5933 = vpack.c.bf16 %v5921, %v5919
      %v5934 = vpack.c.bf16 %v5924, %v5922
      %v5935 = vpack.c.bf16 %v5925, %v5923
      %v5936 = vpack.c.bf16 %v5928, %v5926
      %v5937 = vpack.c.bf16 %v5929, %v5927
      %v5938 = vld [vmem:[%s6] sm:$0x1]
      %v5940 = vlaneseq
      %v5941 = vshrl.u32 %v5940, 7
      %v5942 = vsub.s32 0, %v5941
      %v5943 = vrot.slane %v5938, %v5942
      %v5969 = vunpack.c.l.b16 %v5574
      %v5970 = vunpack.c.l.b16 %v5575
      %v5971 = vunpack.c.l.b16 %v5576
      %v5972 = vunpack.c.l.b16 %v5577
      %v5973 = vunpack.c.l.b16 %v5578
      %v5974 = vunpack.c.l.b16 %v5579
      %v5975 = vunpack.c.l.b16 %v5580
      %v5976 = vunpack.c.l.b16 %v5581
      %v5977 = vunpack.c.l.b16 %v5582
      %v5978 = vunpack.c.l.b16 %v5583
      %v5979 = vunpack.c.l.b16 %v5584
      %v5980 = vunpack.c.l.b16 %v5585
      %v5981 = vunpack.c.l.b16 %v5586
      %v5982 = vunpack.c.l.b16 %v5587
      %v5983 = vunpack.c.l.b16 %v5588
      %v5984 = vunpack.c.l.b16 %v5589
      %v5985 = vunpack.c.l.b16 %v5590
      %v5986 = vunpack.c.l.b16 %v5591
      %v5987 = vunpack.c.l.b16 %v5592
      %v5988 = vunpack.c.l.b16 %v5593
      %v5989 = vunpack.c.l.b16 %v5594
      %v5990 = vunpack.c.l.b16 %v5595
      %v5991 = vunpack.c.l.b16 %v5596
      %v5992 = vunpack.c.l.b16 %v5597
      %v5993 = vpack.c.b16 %v5970, %v5969
      %v5994 = vpack.c.b16 %v5972, %v5971
      %v5995 = vpack.c.b16 %v5974, %v5973
      %v5996 = vpack.c.b16 %v5976, %v5975
      %v5997 = vpack.c.b16 %v5978, %v5977
      %v5998 = vpack.c.b16 %v5980, %v5979
      %v5999 = vpack.c.b16 %v5982, %v5981
      %v6000 = vpack.c.b16 %v5984, %v5983
      %v6001 = vpack.c.b16 %v5986, %v5985
      %v6002 = vpack.c.b16 %v5988, %v5987
      %v6003 = vpack.c.b16 %v5990, %v5989
      %v6004 = vpack.c.b16 %v5992, %v5991
      %v6018 = vsel %vm412, %v5931, 0
      %v6021 = vsel %vm412, %v5933, 0
      %v6024 = vsel %vm412, %v5935, 0
      %v6027 = vsel %vm412, %v5937, 0
      %6029 = vmatprep.subr.bf16.mxu0 0
      %6030 = vmatpush1.bf16.msra.mxu0 %v5993
      %6031 = vmatprep.subr.bf16.mxu0 0
      %6032 = vmatpush1.bf16.msra.mxu0 %v5994
      %6033 = vmatprep.subr.bf16.mxu0 0
      %6034 = vmatpush1.bf16.msra.mxu0 %v5995
      %6035 = vmatprep.subr.bf16.mxu0 0
      %6036 = vmatpush1.bf16.msra.mxu0 %v5996
      %6037 = vmatprep.subr.bf16.mxu0 0
      %6038 = vmatpush1.bf16.msra.mxu0 %v5997
      %6039 = vmatprep.subr.bf16.mxu0 0
      %6040 = vmatpush1.bf16.msra.mxu0 %v5998
      %6041 = vmatprep.subr.bf16.mxu0 0
      %6042 = vmatpush1.bf16.msra.mxu0 %v5999
      %6043 = vmatprep.subr.bf16.mxu0 0
      %6044 = vmatpush1.bf16.msra.mxu0 %v6000
      %6045 = vmatprep.subr.bf16.mxu0 0
      %6046 = vmatpush1.bf16.msra.mxu0 %v6001
      %6047 = vmatprep.subr.bf16.mxu0 0
      %6048 = vmatpush1.bf16.msra.mxu0 %v6002
      %6049 = vmatprep.subr.bf16.mxu0 0
      %6050 = vmatpush1.bf16.msra.mxu0 %v6003
      %6051 = vmatprep.subr.bf16.mxu0 0
      %6052 = vmatpush1.bf16.msra.mxu0 %v6004
      %6053 = vmatprep.subr.bf16.mxu0 0
      %6054 = vmatpush1.bf16.msra.mxu0 0
      %6055 = vmatprep.subr.bf16.mxu0 0
      %6056 = vmatpush1.bf16.msra.mxu0 0
      %6057 = vmatprep.subr.bf16.mxu0 0
      %6058 = vmatpush1.bf16.msra.mxu0 0
      %6059 = vmatprep.subr.bf16.mxu0 0
      %6060 = vmatpush1.bf16.msra.mxu0 0
      %6061 = vmatprep.mubr.bf16.mxu0 %v6018
      %6062 = vmatmul.mubr.bf16.gmra.mrb[0].mxu0 %v5930
      %v6063 = vpop.f32.mrb[0].mxu0
      %v6064 = vadd.f32 %v5943, %v6063
      %v6065 = vpop.f32.mrb[0].mxu0
      %v6066 = vpop.f32.mrb[0].mxu0
      %v6067 = vadd.f32 %v5943, %v6066
      %v6068 = vpop.f32.mrb[0].mxu0
      %6069 = vmatprep.mubr.bf16.mxu0 %v6021
      %6070 = vmatmul.mubr.bf16.gmra.mrb[0].mxu0 %v5932
      %v6071 = vpop.f32.mrb[0].mxu0
      %v6072 = vadd.f32 %v5943, %v6071
      %v6073 = vpop.f32.mrb[0].mxu0
      %v6074 = vpop.f32.mrb[0].mxu0
      %v6075 = vadd.f32 %v5943, %v6074
      %v6076 = vpop.f32.mrb[0].mxu0
      %6077 = vmatprep.mubr.bf16.mxu0 %v6024
      %6078 = vmatmul.mubr.bf16.gmra.mrb[0].mxu0 %v5934
      %v6079 = vpop.f32.mrb[0].mxu0
      %v6080 = vadd.f32 %v5943, %v6079
      %v6081 = vpop.f32.mrb[0].mxu0
      %v6082 = vpop.f32.mrb[0].mxu0
      %v6083 = vadd.f32 %v5943, %v6082
      %v6084 = vpop.f32.mrb[0].mxu0
      %6085 = vmatprep.mubr.bf16.mxu0 %v6027
      %6086 = vmatmul.mubr.bf16.gmra.mrb[0].mxu0 %v5936
      %v6087 = vpop.f32.mrb[0].mxu0
      %v6088 = vadd.f32 %v5943, %v6087
      %v6089 = vpop.f32.mrb[0].mxu0
      %v6090 = vpop.f32.mrb[0].mxu0
      %v6091 = vadd.f32 %v5943, %v6090
      %v6092 = vpop.f32.mrb[0].mxu0
      %6093 = vdwg.mxu0
      %v6094 = vsub.f32 0.0, %v6064
      %v6095 = vsub.f32 0.0, %v6067
      %v6096 = vsub.f32 0.0, %v6072
      %v6097 = vsub.f32 0.0, %v6075
      %v6098 = vsub.f32 0.0, %v6080
      %v6099 = vsub.f32 0.0, %v6083
      %v6100 = vsub.f32 0.0, %v6088
      %v6101 = vsub.f32 0.0, %v6091
      %v6102 = vmul.f32 %v6094, 1.442695
      %v6103 = vpow.pop %v6102
      %v6104 = vmul.f32 %v6095, 1.442695
      %v6105 = vpow.pop %v6104
      %v6106 = vmul.f32 %v6096, 1.442695
      %v6107 = vpow.pop %v6106
      %v6108 = vmul.f32 %v6097, 1.442695
      %v6109 = vpow.pop %v6108
      %v6110 = vmul.f32 %v6098, 1.442695
      %v6111 = vpow.pop %v6110
      %v6112 = vmul.f32 %v6099, 1.442695
      %v6113 = vpow.pop %v6112
      %v6114 = vmul.f32 %v6100, 1.442695
      %v6115 = vpow.pop %v6114
      %v6116 = vmul.f32 %v6101, 1.442695
      %v6117 = vpow.pop %v6116
      %v6118 = vadd.f32 %v6103, 1.0
      %v6119 = vadd.f32 %v6105, 1.0
      %v6120 = vadd.f32 %v6107, 1.0
      %v6121 = vadd.f32 %v6109, 1.0
      %v6122 = vadd.f32 %v6111, 1.0
      %v6123 = vadd.f32 %v6113, 1.0
      %v6124 = vadd.f32 %v6115, 1.0
      %v6125 = vadd.f32 %v6117, 1.0
      %v6126 = vrcp.pop %v6118
      %v6127 = vmul.f32 1.0, %v6126
      %v6128 = vrcp.pop %v6119
      %v6129 = vmul.f32 1.0, %v6128
      %v6130 = vrcp.pop %v6120
      %v6131 = vmul.f32 1.0, %v6130
      %v6132 = vrcp.pop %v6121
      %v6133 = vmul.f32 1.0, %v6132
      %v6134 = vrcp.pop %v6122
      %v6135 = vmul.f32 1.0, %v6134
      %v6136 = vrcp.pop %v6123
      %v6137 = vmul.f32 1.0, %v6136
      %v6138 = vrcp.pop %v6124
      %v6139 = vmul.f32 1.0, %v6138
      %v6140 = vrcp.pop %v6125
      %v6141 = vmul.f32 1.0, %v6140
      %s6142 = scalar_lea.vmem %s278, 32
      %6143 = vst.msk [vmem:[%s6142] sm:$0xf] %vm4927, %v6127
      %s6144 = scalar_lea.vmem %s278, 40
      %6145 = vst.msk [vmem:[%s6144 - $0x4] sm:$0xf0] %vm4930, %v6127
      %s6146 = scalar_lea.vmem %s278, 48
      %6147 = vst.msk [vmem:[%s6146] sm:$0xf] %vm4927, %v6129
      %s6148 = scalar_lea.vmem %s278, 56
      %6149 = vst.msk [vmem:[%s6148 - $0x4] sm:$0xf0] %vm4930, %v6129
      %s6150 = scalar_lea.vmem %s278, 96
      %6151 = vst.msk [vmem:[%s6150] sm:$0xf] %vm4927, %v6131
      %s6152 = scalar_lea.vmem %s278, 104
      %6153 = vst.msk [vmem:[%s6152 - $0x4] sm:$0xf0] %vm4930, %v6131
      %s6154 = scalar_lea.vmem %s278, 112
      %6155 = vst.msk [vmem:[%s6154] sm:$0xf] %vm4927, %v6133
      %s6156 = scalar_lea.vmem %s278, 120
      %6157 = vst.msk [vmem:[%s6156 - $0x4] sm:$0xf0] %vm4930, %v6133
      %s6158 = scalar_lea.vmem %s278, 160
      %6159 = vst.msk [vmem:[%s6158] sm:$0xf] %vm4927, %v6135
      %s6160 = scalar_lea.vmem %s278, 168
      %6161 = vst.msk [vmem:[%s6160 - $0x4] sm:$0xf0] %vm4930, %v6135
      %s6162 = scalar_lea.vmem %s278, 176
      %6163 = vst.msk [vmem:[%s6162] sm:$0xf] %vm4927, %v6137
      %s6164 = scalar_lea.vmem %s278, 184
      %6165 = vst.msk [vmem:[%s6164 - $0x4] sm:$0xf0] %vm4930, %v6137
      %s6166 = scalar_lea.vmem %s278, 224
      %6167 = vst.msk [vmem:[%s6166] sm:$0xf] %vm4927, %v6139
      %s6168 = scalar_lea.vmem %s278, 232
      %6169 = vst.msk [vmem:[%s6168 - $0x4] sm:$0xf0] %vm4930, %v6139
      %s6170 = scalar_lea.vmem %s278, 240
      %6171 = vst.msk [vmem:[%s6170] sm:$0xf] %vm4927, %v6141
      %s6172 = scalar_lea.vmem %s278, 248
      %6173 = vst.msk [vmem:[%s6172 - $0x4] sm:$0xf0] %vm4930, %v6141
      %s6174 = scalar_lea.vmem %s5, 288
      %v6175 = vld [vmem:[%s6174] sm:$0xf]
      %v6176 = vld [vmem:[%s6174 + $0x4] sm:$0xf]
      %v6177 = vld [vmem:[%s6174 + $0x8] sm:$0xf]
      %v6178 = vld [vmem:[%s6174 + $0xc] sm:$0xf]
      %v6179 = vld [vmem:[%s6174 + $0x10] sm:$0xf]
      %v6180 = vld [vmem:[%s6174 + $0x14] sm:$0xf]
      %v6181 = vld [vmem:[%s6174 + $0x18] sm:$0xf]
      %v6182 = vld [vmem:[%s6174 + $0x1c] sm:$0xf]
      %v6183 = vld [vmem:[%s6174 + $0x20] sm:$0xf]
      %v6184 = vld [vmem:[%s6174 + $0x24] sm:$0xf]
      %v6185 = vld [vmem:[%s6174 + $0x28] sm:$0xf]
      %v6186 = vld [vmem:[%s6174 + $0x2c] sm:$0xf]
      %v6187 = vld [vmem:[%s6174 + $0x30] sm:$0xf]
      %v6188 = vld [vmem:[%s6174 + $0x34] sm:$0xf]
      %v6189 = vld [vmem:[%s6174 + $0x38] sm:$0xf]
      %v6190 = vld [vmem:[%s6174 + $0x3c] sm:$0xf]
      %v6191 = vld [vmem:[%s6174 + $0x40] sm:$0xf]
      %v6192 = vld [vmem:[%s6174 + $0x44] sm:$0xf]
      %v6193 = vld [vmem:[%s6174 + $0x48] sm:$0xf]
      %v6194 = vld [vmem:[%s6174 + $0x4c] sm:$0xf]
      %v6195 = vld [vmem:[%s6174 + $0x50] sm:$0xf]
      %v6196 = vld [vmem:[%s6174 + $0x54] sm:$0xf]
      %v6197 = vld [vmem:[%s6174 + $0x58] sm:$0xf]
      %v6198 = vld [vmem:[%s6174 + $0x5c] sm:$0xf]
      %v6199 = vld [vmem:[#allocation3 + $0x1] sm:$0xf]
      %v6200 = vld [vmem:[%s3494 + $0x1] sm:$0xf]
      %v6201 = vld [vmem:[%s3907 + $0x1] sm:$0xf]
      %v6202 = vld [vmem:[%s4347 + $0x1] sm:$0xf]
      %6204 = vrot.lane.b32.xlu0 %v6199, 116
      %v6205 = vpop.permute.xlu0 %6204
      %6208 = vrot.lane.b32.xlu0 %v6200, 36
      %v6209 = vpop.permute.xlu0 %6208
      %6212 = vrot.lane.b32.xlu0 %v6201, 84
      %v6213 = vpop.permute.xlu0 %6212
      %6216 = vrot.lane.b32.xlu0 %v6202, 4
      %v6217 = vpop.permute.xlu0 %6216
      %v6219 = vsel %vm3157, %v6205, %v6209
      %v6220 = vsel %vm964, %v6219, %v6213
      %v6221 = vsel %vm395, %v6213, %v6217
      %v6222 = vld [vmem:[%s3062 + $0x1] sm:$0xf]
      %v6223 = vld [vmem:[%s3909 + $0x1] sm:$0xf]
      %6224 = vrot.lane.b32.xlu0 %v6200, 116
      %v6225 = vpop.permute.xlu0 %6224
      %6228 = vrot.lane.b32.xlu0 %v6222, 36
      %v6229 = vpop.permute.xlu0 %6228
      %6231 = vrot.lane.b32.xlu0 %v6202, 84
      %v6232 = vpop.permute.xlu0 %6231
      %6235 = vrot.lane.b32.xlu0 %v6223, 4
      %v6236 = vpop.permute.xlu0 %6235
      %v6238 = vsel %vm3157, %v6225, %v6229
      %v6239 = vsel %vm964, %v6238, %v6232
      %v6240 = vsel %vm395, %v6232, %v6236
      %v6241 = vld [vmem:[%s3496 + $0x1] sm:$0xf]
      %v6242 = vld [vmem:[%s4349 + $0x1] sm:$0xf]
      %6243 = vrot.lane.b32.xlu0 %v6222, 116
      %v6244 = vpop.permute.xlu0 %6243
      %6247 = vrot.lane.b32.xlu0 %v6241, 36
      %v6248 = vpop.permute.xlu0 %6247
      %6250 = vrot.lane.b32.xlu0 %v6223, 84
      %v6251 = vpop.permute.xlu0 %6250
      %6254 = vrot.lane.b32.xlu0 %v6242, 4
      %v6255 = vpop.permute.xlu0 %6254
      %v6257 = vsel %vm3157, %v6244, %v6248
      %v6258 = vsel %vm964, %v6257, %v6251
      %v6259 = vsel %vm395, %v6251, %v6255
      %6260 = vrot.lane.b32.xlu0 %v6241, 116
      %v6261 = vpop.permute.xlu0 %6260
      %6263 = vrot.lane.b32.xlu0 %v6199, 24
      %v6264 = vpop.permute.xlu0 %6263
      %6266 = vrot.lane.b32.xlu0 %v6242, 84
      %v6267 = vpop.permute.xlu0 %6266
      %6269 = vrot.lane.b32.xlu0 %v6201, 120
      %v6270 = vpop.permute.xlu0 %6269
      %v6272 = vsel %vm3157, %v6261, %v6264
      %v6273 = vsel %vm964, %v6272, %v6267
      %v6274 = vsel %vm395, %v6267, %v6270
      %v6275 = vld [vmem:[%s3069 + $0x1] sm:$0xf]
      %v6276 = vld [vmem:[%s3502 + $0x1] sm:$0xf]
      %6277 = vrot.lane.b32.xlu0 %v6201, 116
      %v6278 = vpop.permute.xlu0 %6277
      %6280 = vrot.lane.b32.xlu0 %v6202, 36
      %v6281 = vpop.permute.xlu0 %6280
      %6284 = vrot.lane.b32.xlu0 %v6275, 84
      %v6285 = vpop.permute.xlu0 %6284
      %6288 = vrot.lane.b32.xlu0 %v6276, 4
      %v6289 = vpop.permute.xlu0 %6288
      %v6291 = vsel %vm3157, %v6278, %v6281
      %v6292 = vsel %vm964, %v6291, %v6285
      %v6293 = vsel %vm395, %v6285, %v6289
      %v6294 = vld [vmem:[%s3071 + $0x1] sm:$0xf]
      %6295 = vrot.lane.b32.xlu0 %v6202, 116
      %v6296 = vpop.permute.xlu0 %6295
      %6298 = vrot.lane.b32.xlu0 %v6223, 36
      %v6299 = vpop.permute.xlu0 %6298
      %6301 = vrot.lane.b32.xlu0 %v6276, 84
      %v6302 = vpop.permute.xlu0 %6301
      %6305 = vrot.lane.b32.xlu0 %v6294, 4
      %v6306 = vpop.permute.xlu0 %6305
      %v6308 = vsel %vm3157, %v6296, %v6299
      %v6309 = vsel %vm964, %v6308, %v6302
      %v6310 = vsel %vm395, %v6302, %v6306
      %v6311 = vld [vmem:[%s3504 + $0x1] sm:$0xf]
      %6312 = vrot.lane.b32.xlu0 %v6223, 116
      %v6313 = vpop.permute.xlu0 %6312
      %6315 = vrot.lane.b32.xlu0 %v6242, 36
      %v6316 = vpop.permute.xlu0 %6315
      %6318 = vrot.lane.b32.xlu0 %v6294, 84
      %v6319 = vpop.permute.xlu0 %6318
      %6322 = vrot.lane.b32.xlu0 %v6311, 4
      %v6323 = vpop.permute.xlu0 %6322
      %v6325 = vsel %vm3157, %v6313, %v6316
      %v6326 = vsel %vm964, %v6325, %v6319
      %v6327 = vsel %vm395, %v6319, %v6323
      %6328 = vrot.lane.b32.xlu0 %v6242, 116
      %v6329 = vpop.permute.xlu0 %6328
      %6331 = vrot.lane.b32.xlu0 %v6201, 24
      %v6332 = vpop.permute.xlu0 %6331
      %6334 = vrot.lane.b32.xlu0 %v6311, 84
      %v6335 = vpop.permute.xlu0 %6334
      %6337 = vrot.lane.b32.xlu0 %v6275, 120
      %v6338 = vpop.permute.xlu0 %6337
      %v6340 = vsel %vm3157, %v6329, %v6332
      %v6341 = vsel %vm964, %v6340, %v6335
      %v6342 = vsel %vm395, %v6335, %v6338
      %v6343 = vld [vmem:[%s3915 + $0x1] sm:$0xf]
      %v6344 = vld [vmem:[%s4355 + $0x1] sm:$0xf]
      %6345 = vrot.lane.b32.xlu0 %v6275, 116
      %v6346 = vpop.permute.xlu0 %6345
      %6348 = vrot.lane.b32.xlu0 %v6276, 36
      %v6349 = vpop.permute.xlu0 %6348
      %6352 = vrot.lane.b32.xlu0 %v6343, 84
      %v6353 = vpop.permute.xlu0 %6352
      %6356 = vrot.lane.b32.xlu0 %v6344, 4
      %v6357 = vpop.permute.xlu0 %6356
      %v6359 = vsel %vm3157, %v6346, %v6349
      %v6360 = vsel %vm964, %v6359, %v6353
      %v6361 = vsel %vm395, %v6353, %v6357
      %v6362 = vld [vmem:[%s3917 + $0x1] sm:$0xf]
      %6363 = vrot.lane.b32.xlu0 %v6276, 116
      %v6364 = vpop.permute.xlu0 %6363
      %6366 = vrot.lane.b32.xlu0 %v6294, 36
      %v6367 = vpop.permute.xlu0 %6366
      %6369 = vrot.lane.b32.xlu0 %v6344, 84
      %v6370 = vpop.permute.xlu0 %6369
      %6373 = vrot.lane.b32.xlu0 %v6362, 4
      %v6374 = vpop.permute.xlu0 %6373
      %v6376 = vsel %vm3157, %v6364, %v6367
      %v6377 = vsel %vm964, %v6376, %v6370
      %v6378 = vsel %vm395, %v6370, %v6374
      %v6379 = vld [vmem:[%s4357 + $0x1] sm:$0xf]
      %6380 = vrot.lane.b32.xlu0 %v6294, 116
      %v6381 = vpop.permute.xlu0 %6380
      %6383 = vrot.lane.b32.xlu0 %v6311, 36
      %v6384 = vpop.permute.xlu0 %6383
      %6386 = vrot.lane.b32.xlu0 %v6362, 84
      %v6387 = vpop.permute.xlu0 %6386
      %6390 = vrot.lane.b32.xlu0 %v6379, 4
      %v6391 = vpop.permute.xlu0 %6390
      %v6393 = vsel %vm3157, %v6381, %v6384
      %v6394 = vsel %vm964, %v6393, %v6387
      %v6395 = vsel %vm395, %v6387, %v6391
      %6396 = vrot.lane.b32.xlu0 %v6311, 116
      %v6397 = vpop.permute.xlu0 %6396
      %6399 = vrot.lane.b32.xlu0 %v6275, 24
      %v6400 = vpop.permute.xlu0 %6399
      %6402 = vrot.lane.b32.xlu0 %v6379, 84
      %v6403 = vpop.permute.xlu0 %6402
      %6405 = vrot.lane.b32.xlu0 %v6343, 120
      %v6406 = vpop.permute.xlu0 %6405
      %v6408 = vsel %vm3157, %v6397, %v6400
      %v6409 = vsel %vm964, %v6408, %v6403
      %v6410 = vsel %vm395, %v6403, %v6406
      %v6411 = vld [vmem:[#allocation3 + $0x2] sm:$0xf]
      %v6412 = vld [vmem:[%s3494 + $0x2] sm:$0xf]
      %6413 = vrot.lane.b32.xlu0 %v6343, 116
      %v6414 = vpop.permute.xlu0 %6413
      %6416 = vrot.lane.b32.xlu0 %v6344, 36
      %v6417 = vpop.permute.xlu0 %6416
      %6420 = vrot.lane.b32.xlu0 %v6411, 84
      %v6421 = vpop.permute.xlu0 %6420
      %6424 = vrot.lane.b32.xlu0 %v6412, 4
      %v6425 = vpop.permute.xlu0 %6424
      %v6427 = vsel %vm3157, %v6414, %v6417
      %v6428 = vsel %vm964, %v6427, %v6421
      %v6429 = vsel %vm395, %v6421, %v6425
      %v6430 = vld [vmem:[%s3062 + $0x2] sm:$0xf]
      %6431 = vrot.lane.b32.xlu0 %v6344, 116
      %v6432 = vpop.permute.xlu0 %6431
      %6434 = vrot.lane.b32.xlu0 %v6362, 36
      %v6435 = vpop.permute.xlu0 %6434
      %6437 = vrot.lane.b32.xlu0 %v6412, 84
      %v6438 = vpop.permute.xlu0 %6437
      %6441 = vrot.lane.b32.xlu0 %v6430, 4
      %v6442 = vpop.permute.xlu0 %6441
      %v6444 = vsel %vm3157, %v6432, %v6435
      %v6445 = vsel %vm964, %v6444, %v6438
      %v6446 = vsel %vm395, %v6438, %v6442
      %v6447 = vld [vmem:[%s3496 + $0x2] sm:$0xf]
      %6448 = vrot.lane.b32.xlu0 %v6362, 116
      %v6449 = vpop.permute.xlu0 %6448
      %6451 = vrot.lane.b32.xlu0 %v6379, 36
      %v6452 = vpop.permute.xlu0 %6451
      %6454 = vrot.lane.b32.xlu0 %v6430, 84
      %v6455 = vpop.permute.xlu0 %6454
      %6458 = vrot.lane.b32.xlu0 %v6447, 4
      %v6459 = vpop.permute.xlu0 %6458
      %v6461 = vsel %vm3157, %v6449, %v6452
      %v6462 = vsel %vm964, %v6461, %v6455
      %v6463 = vsel %vm395, %v6455, %v6459
      %6464 = vrot.lane.b32.xlu0 %v6379, 116
      %v6465 = vpop.permute.xlu0 %6464
      %6467 = vrot.lane.b32.xlu0 %v6343, 24
      %v6468 = vpop.permute.xlu0 %6467
      %6470 = vrot.lane.b32.xlu0 %v6447, 84
      %v6471 = vpop.permute.xlu0 %6470
      %6473 = vrot.lane.b32.xlu0 %v6411, 120
      %v6474 = vpop.permute.xlu0 %6473
      %v6476 = vsel %vm3157, %v6465, %v6468
      %v6477 = vsel %vm964, %v6476, %v6471
      %v6478 = vsel %vm395, %v6471, %v6474
      %v6481 = vrot.slane %v6239, 4
      %v6482 = vrot.slane %v6240, 4
      %v6487 = vrot.slane %v6273, 4
      %v6488 = vrot.slane %v6274, 4
      %v6493 = vrot.slane %v6309, 4
      %v6494 = vrot.slane %v6310, 4
      %v6499 = vrot.slane %v6341, 4
      %v6500 = vrot.slane %v6342, 4
      %v6505 = vrot.slane %v6377, 4
      %v6506 = vrot.slane %v6378, 4
      %v6511 = vrot.slane %v6409, 4
      %v6512 = vrot.slane %v6410, 4
      %v6517 = vrot.slane %v6445, 4
      %v6518 = vrot.slane %v6446, 4
      %v6523 = vrot.slane %v6477, 4
      %v6524 = vrot.slane %v6478, 4
      %v6527 = vsel %vm2811, %v6220, %v6481
      %v6528 = vsel %vm2811, %v6221, %v6482
      %v6529 = vsel %vm2811, %v6258, %v6487
      %v6530 = vsel %vm2811, %v6259, %v6488
      %v6531 = vsel %vm2811, %v6292, %v6493
      %v6532 = vsel %vm2811, %v6293, %v6494
      %v6533 = vsel %vm2811, %v6326, %v6499
      %v6534 = vsel %vm2811, %v6327, %v6500
      %v6535 = vsel %vm2811, %v6360, %v6505
      %v6536 = vsel %vm2811, %v6361, %v6506
      %v6537 = vsel %vm2811, %v6394, %v6511
      %v6538 = vsel %vm2811, %v6395, %v6512
      %v6539 = vsel %vm2811, %v6428, %v6517
      %v6540 = vsel %vm2811, %v6429, %v6518
      %v6541 = vsel %vm2811, %v6462, %v6523
      %v6542 = vsel %vm2811, %v6463, %v6524
      %v6543 = vpack.c.bf16 %v6529, %v6527
      %v6544 = vpack.c.bf16 %v6530, %v6528
      %v6545 = vpack.c.bf16 %v6533, %v6531
      %v6546 = vpack.c.bf16 %v6534, %v6532
      %v6547 = vpack.c.bf16 %v6537, %v6535
      %v6548 = vpack.c.bf16 %v6538, %v6536
      %v6549 = vpack.c.bf16 %v6541, %v6539
      %v6550 = vpack.c.bf16 %v6542, %v6540
      %v6551 = vld [vmem:[%s6] sm:$0x1]
      %v6553 = vlaneseq
      %v6554 = vshrl.u32 %v6553, 7
      %v6555 = vsub.s32 0, %v6554
      %v6556 = vrot.slane %v6551, %v6555
      %v6582 = vunpack.c.l.b16 %v6175
      %v6583 = vunpack.c.l.b16 %v6176
      %v6584 = vunpack.c.l.b16 %v6177
      %v6585 = vunpack.c.l.b16 %v6178
      %v6586 = vunpack.c.l.b16 %v6179
      %v6587 = vunpack.c.l.b16 %v6180
      %v6588 = vunpack.c.l.b16 %v6181
      %v6589 = vunpack.c.l.b16 %v6182
      %v6590 = vunpack.c.l.b16 %v6183
      %v6591 = vunpack.c.l.b16 %v6184
      %v6592 = vunpack.c.l.b16 %v6185
      %v6593 = vunpack.c.l.b16 %v6186
      %v6594 = vunpack.c.l.b16 %v6187
      %v6595 = vunpack.c.l.b16 %v6188
      %v6596 = vunpack.c.l.b16 %v6189
      %v6597 = vunpack.c.l.b16 %v6190
      %v6598 = vunpack.c.l.b16 %v6191
      %v6599 = vunpack.c.l.b16 %v6192
      %v6600 = vunpack.c.l.b16 %v6193
      %v6601 = vunpack.c.l.b16 %v6194
      %v6602 = vunpack.c.l.b16 %v6195
      %v6603 = vunpack.c.l.b16 %v6196
      %v6604 = vunpack.c.l.b16 %v6197
      %v6605 = vunpack.c.l.b16 %v6198
      %v6606 = vpack.c.b16 %v6583, %v6582
      %v6607 = vpack.c.b16 %v6585, %v6584
      %v6608 = vpack.c.b16 %v6587, %v6586
      %v6609 = vpack.c.b16 %v6589, %v6588
      %v6610 = vpack.c.b16 %v6591, %v6590
      %v6611 = vpack.c.b16 %v6593, %v6592
      %v6612 = vpack.c.b16 %v6595, %v6594
      %v6613 = vpack.c.b16 %v6597, %v6596
      %v6614 = vpack.c.b16 %v6599, %v6598
      %v6615 = vpack.c.b16 %v6601, %v6600
      %v6616 = vpack.c.b16 %v6603, %v6602
      %v6617 = vpack.c.b16 %v6605, %v6604
      %v6631 = vsel %vm412, %v6544, 0
      %v6634 = vsel %vm412, %v6546, 0
      %v6637 = vsel %vm412, %v6548, 0
      %v6640 = vsel %vm412, %v6550, 0
      %6642 = vmatprep.subr.bf16.mxu0 0
      %6643 = vmatpush1.bf16.msra.mxu0 %v6606
      %6644 = vmatprep.subr.bf16.mxu0 0
      %6645 = vmatpush1.bf16.msra.mxu0 %v6607
      %6646 = vmatprep.subr.bf16.mxu0 0
      %6647 = vmatpush1.bf16.msra.mxu0 %v6608
      %6648 = vmatprep.subr.bf16.mxu0 0
      %6649 = vmatpush1.bf16.msra.mxu0 %v6609
      %6650 = vmatprep.subr.bf16.mxu0 0
      %6651 = vmatpush1.bf16.msra.mxu0 %v6610
      %6652 = vmatprep.subr.bf16.mxu0 0
      %6653 = vmatpush1.bf16.msra.mxu0 %v6611
      %6654 = vmatprep.subr.bf16.mxu0 0
      %6655 = vmatpush1.bf16.msra.mxu0 %v6612
      %6656 = vmatprep.subr.bf16.mxu0 0
      %6657 = vmatpush1.bf16.msra.mxu0 %v6613
      %6658 = vmatprep.subr.bf16.mxu0 0
      %6659 = vmatpush1.bf16.msra.mxu0 %v6614
      %6660 = vmatprep.subr.bf16.mxu0 0
      %6661 = vmatpush1.bf16.msra.mxu0 %v6615
      %6662 = vmatprep.subr.bf16.mxu0 0
      %6663 = vmatpush1.bf16.msra.mxu0 %v6616
      %6664 = vmatprep.subr.bf16.mxu0 0
      %6665 = vmatpush1.bf16.msra.mxu0 %v6617
      %6666 = vmatprep.subr.bf16.mxu0 0
      %6667 = vmatpush1.bf16.msra.mxu0 0
      %6668 = vmatprep.subr.bf16.mxu0 0
      %6669 = vmatpush1.bf16.msra.mxu0 0
      %6670 = vmatprep.subr.bf16.mxu0 0
      %6671 = vmatpush1.bf16.msra.mxu0 0
      %6672 = vmatprep.subr.bf16.mxu0 0
      %6673 = vmatpush1.bf16.msra.mxu0 0
      %6674 = vmatprep.mubr.bf16.mxu0 %v6631
      %6675 = vmatmul.mubr.bf16.gmra.mrb[0].mxu0 %v6543
      %v6676 = vpop.f32.mrb[0].mxu0
      %v6677 = vadd.f32 %v6556, %v6676
      %v6678 = vpop.f32.mrb[0].mxu0
      %v6679 = vpop.f32.mrb[0].mxu0
      %v6680 = vadd.f32 %v6556, %v6679
      %v6681 = vpop.f32.mrb[0].mxu0
      %6682 = vmatprep.mubr.bf16.mxu0 %v6634
      %6683 = vmatmul.mubr.bf16.gmra.mrb[0].mxu0 %v6545
      %v6684 = vpop.f32.mrb[0].mxu0
      %v6685 = vadd.f32 %v6556, %v6684
      %v6686 = vpop.f32.mrb[0].mxu0
      %v6687 = vpop.f32.mrb[0].mxu0
      %v6688 = vadd.f32 %v6556, %v6687
      %v6689 = vpop.f32.mrb[0].mxu0
      %6690 = vmatprep.mubr.bf16.mxu0 %v6637
      %6691 = vmatmul.mubr.bf16.gmra.mrb[0].mxu0 %v6547
      %v6692 = vpop.f32.mrb[0].mxu0
      %v6693 = vadd.f32 %v6556, %v6692
      %v6694 = vpop.f32.mrb[0].mxu0
      %v6695 = vpop.f32.mrb[0].mxu0
      %v6696 = vadd.f32 %v6556, %v6695
      %v6697 = vpop.f32.mrb[0].mxu0
      %6698 = vmatprep.mubr.bf16.mxu0 %v6640
      %6699 = vmatmul.mubr.bf16.gmra.mrb[0].mxu0 %v6549
      %v6700 = vpop.f32.mrb[0].mxu0
      %v6701 = vadd.f32 %v6556, %v6700
      %v6702 = vpop.f32.mrb[0].mxu0
      %v6703 = vpop.f32.mrb[0].mxu0
      %v6704 = vadd.f32 %v6556, %v6703
      %v6705 = vpop.f32.mrb[0].mxu0
      %6706 = vdwg.mxu0
      %v6707 = vsub.f32 0.0, %v6677
      %v6708 = vsub.f32 0.0, %v6680
      %v6709 = vsub.f32 0.0, %v6685
      %v6710 = vsub.f32 0.0, %v6688
      %v6711 = vsub.f32 0.0, %v6693
      %v6712 = vsub.f32 0.0, %v6696
      %v6713 = vsub.f32 0.0, %v6701
      %v6714 = vsub.f32 0.0, %v6704
      %v6715 = vmul.f32 %v6707, 1.442695
      %v6716 = vpow.pop %v6715
      %v6717 = vmul.f32 %v6708, 1.442695
      %v6718 = vpow.pop %v6717
      %v6719 = vmul.f32 %v6709, 1.442695
      %v6720 = vpow.pop %v6719
      %v6721 = vmul.f32 %v6710, 1.442695
      %v6722 = vpow.pop %v6721
      %v6723 = vmul.f32 %v6711, 1.442695
      %v6724 = vpow.pop %v6723
      %v6725 = vmul.f32 %v6712, 1.442695
      %v6726 = vpow.pop %v6725
      %v6727 = vmul.f32 %v6713, 1.442695
      %v6728 = vpow.pop %v6727
      %v6729 = vmul.f32 %v6714, 1.442695
      %v6730 = vpow.pop %v6729
      %v6731 = vadd.f32 %v6716, 1.0
      %v6732 = vadd.f32 %v6718, 1.0
      %v6733 = vadd.f32 %v6720, 1.0
      %v6734 = vadd.f32 %v6722, 1.0
      %v6735 = vadd.f32 %v6724, 1.0
      %v6736 = vadd.f32 %v6726, 1.0
      %v6737 = vadd.f32 %v6728, 1.0
      %v6738 = vadd.f32 %v6730, 1.0
      %v6739 = vrcp.pop %v6731
      %v6740 = vmul.f32 1.0, %v6739
      %v6741 = vrcp.pop %v6732
      %v6742 = vmul.f32 1.0, %v6741
      %v6743 = vrcp.pop %v6733
      %v6744 = vmul.f32 1.0, %v6743
      %v6745 = vrcp.pop %v6734
      %v6746 = vmul.f32 1.0, %v6745
      %v6747 = vrcp.pop %v6735
      %v6748 = vmul.f32 1.0, %v6747
      %v6749 = vrcp.pop %v6736
      %v6750 = vmul.f32 1.0, %v6749
      %v6751 = vrcp.pop %v6737
      %v6752 = vmul.f32 1.0, %v6751
      %v6753 = vrcp.pop %v6738
      %v6754 = vmul.f32 1.0, %v6753
      %s6755 = scalar_lea.vmem %s278, 36
      %6756 = vst.msk [vmem:[%s6755] sm:$0xf] %vm4927, %v6740
      %s6757 = scalar_lea.vmem %s278, 44
      %6758 = vst.msk [vmem:[%s6757 - $0x4] sm:$0xf0] %vm4930, %v6740
      %s6759 = scalar_lea.vmem %s278, 52
      %6760 = vst.msk [vmem:[%s6759] sm:$0xf] %vm4927, %v6742
      %s6761 = scalar_lea.vmem %s278, 60
      %6762 = vst.msk [vmem:[%s6761 - $0x4] sm:$0xf0] %vm4930, %v6742
      %s6763 = scalar_lea.vmem %s278, 100
      %6764 = vst.msk [vmem:[%s6763] sm:$0xf] %vm4927, %v6744
      %s6765 = scalar_lea.vmem %s278, 108
      %6766 = vst.msk [vmem:[%s6765 - $0x4] sm:$0xf0] %vm4930, %v6744
      %s6767 = scalar_lea.vmem %s278, 116
      %6768 = vst.msk [vmem:[%s6767] sm:$0xf] %vm4927, %v6746
      %s6769 = scalar_lea.vmem %s278, 124
      %6770 = vst.msk [vmem:[%s6769 - $0x4] sm:$0xf0] %vm4930, %v6746
      %s6771 = scalar_lea.vmem %s278, 164
      %6772 = vst.msk [vmem:[%s6771] sm:$0xf] %vm4927, %v6748
      %s6773 = scalar_lea.vmem %s278, 172
      %6774 = vst.msk [vmem:[%s6773 - $0x4] sm:$0xf0] %vm4930, %v6748
      %s6775 = scalar_lea.vmem %s278, 180
      %6776 = vst.msk [vmem:[%s6775] sm:$0xf] %vm4927, %v6750
      %s6777 = scalar_lea.vmem %s278, 188
      %6778 = vst.msk [vmem:[%s6777 - $0x4] sm:$0xf0] %vm4930, %v6750
      %s6779 = scalar_lea.vmem %s278, 228
      %6780 = vst.msk [vmem:[%s6779] sm:$0xf] %vm4927, %v6752
      %s6781 = scalar_lea.vmem %s278, 236
      %6782 = vst.msk [vmem:[%s6781 - $0x4] sm:$0xf0] %vm4930, %v6752
      %s6783 = scalar_lea.vmem %s278, 244
      %6784 = vst.msk [vmem:[%s6783] sm:$0xf] %vm4927, %v6754
      %s6785 = scalar_lea.vmem %s278, 252
      %6786 = vst.msk [vmem:[%s6785 - $0x4] sm:$0xf0] %vm4930, %v6754
      %p6787 = scmp.lt.s32.totalorder %s18, 1
      %s6788 = scalar_select %p6787, %s18, 1
      %s6789 = smul.addr %s6788, 64
      %s6790 = smul.addr %s6789, 4
      %s6791 = scalar_lea.vmem %s7, %s6790
      // Predicated region
      $region49: #{decoder_forward.1} parent=47 // pred_check
        %p6792 = pneg %p188
      $region50: #{decoder_forward.1} parent=47 // pred_check_branch
        %6794 = sbr.rel (%p6792) target = $region52
      $region51: #{decoder_forward.1} parent=47 // pred_region
        _
      $region52: #{decoder_forward.1} parent=47 // pred_fallthru
        _
    $region48: #{decoder_forward.1} parent=5 // pred_fallthru
      _
    %p6795 = scmp.le.s32.totalorder 2, %s13
    // Predicated region
    $region53: #{decoder_forward.1} parent=5 // pred_check
      %p6796 = pneg %p6795
    $region54: #{decoder_forward.1} parent=5 // pred_check_branch
      %6798 = sbr.rel (%p6796) target = $region56
    $region55: #{decoder_forward.1} parent=5 // pred_region
      %s6799 = ssub.s32 %s13, 2
      // Predicated region
      $region57: #{decoder_forward.1} parent=55 // pred_check
        %p6800 = pneg %p194
      $region58: #{decoder_forward.1} parent=55 // pred_check_branch
        %6802 = sbr.rel (%p6800) target = $region60
      $region59: #{decoder_forward.1} parent=55 // pred_region
        %p6803 = scmp.lt.s32.totalorder %s19, 1
        %s6804 = scalar_select %p6803, %s19, 1
        %s6805 = smul.addr %s6804, 64
        %s6806 = smul.addr %s6805, 4
        %s6807 = scalar_lea.vmem %s7, %s6806
      $region60: #{decoder_forward.1} parent=55 // pred_fallthru
        _
    $region56: #{decoder_forward.1} parent=5 // pred_fallthru
      _
  $region6: #{decoder_forward.1} parent=0 // loop_footer
    %s17 = sadd.s32 1, %s13
  $region7: #{decoder_forward.1} parent=0 // loop_footer_branch
    %12 = sbr.rel target = $region3
  $region8: #{decoder_forward.1} parent=0 // loop_exit
    _

</llo_original>
